<compile_context>
chip_gen: v5e
topology: v5e:2x2
jax: 0.10.0
libtpu: 0.0.40
codegen_flags: <defaults>
</compile_context>

<pallas_src>
import functools
import math

import jax
import jax.numpy as jnp
from jax import lax
from jax.experimental import pallas as pl
from jax.experimental.pallas import tpu as pltpu


# ---------------------------------------------------------------------------
# Tiling / padding helpers
# ---------------------------------------------------------------------------

_TM_CAP = 256
_VMEM_LIMIT = 32 * 1024 * 1024


def _round_up(x, m):
    return ((x + m - 1) // m) * m


def _row_tiles(M, cap=_TM_CAP, align=16, min_blocks=2):
    """Row tile (multiple of `align`) and padded row count; >=2 blocks when possible."""
    mp0 = _round_up(M, align)
    tm = min(mp0, cap)
    if mp0 // tm < min_blocks and mp0 >= min_blocks * align:
        tm = _round_up(-(-mp0 // min_blocks), align)
    Mp = _round_up(M, tm)
    return tm, Mp


def _masked_layernorm(y, gamma, beta, d_true, eps):
    """LayerNorm over the first d_true columns; padded columns of y must be 0."""
    n_cols = y.shape[-1]
    inv_d = 1.0 / float(d_true)
    mean = jnp.sum(y, axis=-1, keepdims=True) * inv_d
    cen = y - mean
    if d_true != n_cols:
        col = lax.broadcasted_iota(jnp.int32, y.shape, 1)
        cen = jnp.where(col < d_true, cen, 0.0)
    var = jnp.sum(cen * cen, axis=-1, keepdims=True) * inv_d
    return cen * lax.rsqrt(var + eps) * gamma + beta


# ---------------------------------------------------------------------------
# Pallas kernels
# ---------------------------------------------------------------------------

def _matmul_kernel(x_ref, w_ref, b_ref, o_ref, acc_ref, *, n_k):
    @pl.when(pl.program_id(2) == 0)
    def _():
        acc_ref[...] = jnp.zeros_like(acc_ref)

    acc_ref[...] += jnp.dot(x_ref[...], w_ref[...],
                            preferred_element_type=jnp.float32)

    @pl.when(pl.program_id(2) == n_k - 1)
    def _():
        o_ref[...] = (acc_ref[...] + b_ref[...]).astype(o_ref.dtype)


def _linear_res_ln_kernel(x_ref, w_ref, b_ref, r_ref, g_ref, bb_ref, o_ref, acc_ref,
                          *, n_k, d_true, eps):
    @pl.when(pl.program_id(1) == 0)
    def _():
        acc_ref[...] = jnp.zeros_like(acc_ref)

    acc_ref[...] += jnp.dot(x_ref[...], w_ref[...],
                            preferred_element_type=jnp.float32)

    @pl.when(pl.program_id(1) == n_k - 1)
    def _():
        y = acc_ref[...] + b_ref[...] + r_ref[...].astype(jnp.float32)
        o_ref[...] = _masked_layernorm(y, g_ref[...], bb_ref[...],
                                       d_true, eps).astype(o_ref.dtype)


def _ffn_kernel(x_ref, w1_ref, b1_ref, w2_ref, b2_ref, g_ref, bb_ref, o_ref, acc_ref,
                *, n_f, d_true, eps):
    f = pl.program_id(1)

    @pl.when(f == 0)
    def _():
        acc_ref[...] = jnp.zeros_like(acc_ref)

    h = jnp.dot(x_ref[...], w1_ref[...], preferred_element_type=jnp.float32)
    h = jnp.maximum(h + b1_ref[...], 0.0)
    acc_ref[...] += jnp.dot(h.astype(jnp.bfloat16), w2_ref[...],
                            preferred_element_type=jnp.float32)

    @pl.when(f == n_f - 1)
    def _():
        y = acc_ref[...] + b2_ref[...] + x_ref[...].astype(jnp.float32)
        o_ref[...] = _masked_layernorm(y, g_ref[...], bb_ref[...],
                                       d_true, eps).astype(o_ref.dtype)


def _fused_self_attn_kernel(qin_ref, tgt_ref, wq_ref, wk_ref, wv_ref,
                            bq_ref, bk_ref, bv_ref, wo_ref, bo_ref, g_ref, bb_ref,
                            o_ref, acc_ref, *, n_head, scale, l_true, d_true, eps):
    x = qin_ref[0]          # (Lp, Dp) bf16   (target + pos)
    t = tgt_ref[0]          # (Lp, Dp) bf16   (residual / V source)
    Lp = x.shape[0]
    need_mask = (Lp != l_true)
    if need_mask:
        kmask = lax.broadcasted_iota(jnp.int32, (Lp, Lp), 1) < l_true

    for h in range(n_head):
        q_h = jnp.dot(x, wq_ref[h], preferred_element_type=jnp.float32) + bq_ref[h]
        k_h = jnp.dot(x, wk_ref[h], preferred_element_type=jnp.float32) + bk_ref[h]
        v_h = jnp.dot(t, wv_ref[h], preferred_element_type=jnp.float32) + bv_ref[h]

        s = lax.dot_general(q_h.astype(jnp.bfloat16), k_h.astype(jnp.bfloat16),
                            (((1,), (1,)), ((), ())),
                            preferred_element_type=jnp.float32) * scale
        if need_mask:
            s = jnp.where(kmask, s, -1e30)
        s = s - jnp.max(s, axis=-1, keepdims=True)
        p = jnp.exp(s)
        p = p * pl.reciprocal(jnp.sum(p, axis=-1, keepdims=True), approx=True)

        pv = jnp.dot(p.astype(jnp.bfloat16), v_h.astype(jnp.bfloat16),
                     preferred_element_type=jnp.float32)
        contrib = jnp.dot(pv.astype(jnp.bfloat16), wo_ref[h],
                          preferred_element_type=jnp.float32)
        if h == 0:
            acc_ref[...] = contrib
        else:
            acc_ref[...] += contrib

    y = acc_ref[...] + bo_ref[...] + t.astype(jnp.float32)
    o_ref[0] = _masked_layernorm(y, g_ref[...], bb_ref[...],
                                 d_true, eps).astype(o_ref.dtype)


# ---------------------------------------------------------------------------
# Kernel wrappers (weights are pre-padded / pre-cast by prepare_params)
# ---------------------------------------------------------------------------

def linear(x, lin):
    """y = x @ W + b (bf16 I/O, fp32 accumulation)."""
    orig_shape = x.shape
    K, N = lin["k"], lin["n"]
    Kp, Np = lin["w"].shape
    M = int(math.prod(orig_shape[:-1]))
    tm, Mp = _row_tiles(M)
    tn = 128
    tk = 256 if Kp % 256 == 0 else 128
    n_k = Kp // tk

    x2 = jnp.pad(x.astype(jnp.bfloat16).reshape(M, K), ((0, Mp - M), (0, Kp - K)))

    out = pl.pallas_call(
        functools.partial(_matmul_kernel, n_k=n_k),
        out_shape=jax.ShapeDtypeStruct((Mp, Np), jnp.bfloat16),
        grid=(Mp // tm, Np // tn, n_k),
        in_specs=[
            pl.BlockSpec((tm, tk), lambda m, n, k: (m, k)),
            pl.BlockSpec((tk, tn), lambda m, n, k: (k, n)),
            pl.BlockSpec((1, tn), lambda m, n, k: (0, n)),
        ],
        out_specs=pl.BlockSpec((tm, tn), lambda m, n, k: (m, n)),
        scratch_shapes=[pltpu.VMEM((tm, tn), jnp.float32)],
        compiler_params=pltpu.CompilerParams(
            dimension_semantics=("parallel", "parallel", "arbitrary"),
            vmem_limit_bytes=_VMEM_LIMIT),
    )(x2, lin["w"], lin["b"])
    return out[:M, :N].reshape(orig_shape[:-1] + (N,))


def linear_residual_ln(x, lin, residual, nrm, eps=1e-5):
    """LayerNorm(residual + x @ W + b) fused in one kernel (full N row resident)."""
    orig_shape = residual.shape
    K, N = lin["k"], lin["n"]
    Kp, Np = lin["w"].shape
    M = int(math.prod(orig_shape[:-1]))
    tm, Mp = _row_tiles(M)
    tk = 256 if Kp % 256 == 0 else 128
    n_k = Kp // tk

    x2 = jnp.pad(x.astype(jnp.bfloat16).reshape(M, K), ((0, Mp - M), (0, Kp - K)))
    rp = jnp.pad(residual.astype(jnp.bfloat16).reshape(M, N),
                 ((0, Mp - M), (0, Np - N)))

    out = pl.pallas_call(
        functools.partial(_linear_res_ln_kernel, n_k=n_k, d_true=N, eps=eps),
        out_shape=jax.ShapeDtypeStruct((Mp, Np), jnp.bfloat16),
        grid=(Mp // tm, n_k),
        in_specs=[
            pl.BlockSpec((tm, tk), lambda m, k: (m, k)),
            pl.BlockSpec((tk, Np), lambda m, k: (k, 0)),
            pl.BlockSpec((1, Np), lambda m, k: (0, 0)),
            pl.BlockSpec((tm, Np), lambda m, k: (m, 0)),
            pl.BlockSpec((1, Np), lambda m, k: (0, 0)),
            pl.BlockSpec((1, Np), lambda m, k: (0, 0)),
        ],
        out_specs=pl.BlockSpec((tm, Np), lambda m, k: (m, 0)),
        scratch_shapes=[pltpu.VMEM((tm, Np), jnp.float32)],
        compiler_params=pltpu.CompilerParams(
            dimension_semantics=("parallel", "arbitrary"),
            vmem_limit_bytes=_VMEM_LIMIT),
    )(x2, lin["w"], lin["b"], rp, nrm["g"], nrm["b"])
    return out[:M, :N].reshape(orig_shape)


def ffn_residual_ln(x, ffn, eps=1e-5):
    """LayerNorm(x + W2 @ relu(W1 @ x + b1) + b2), dim_ff tiled as a reduction axis."""
    orig_shape = x.shape
    D, F = ffn["d"], ffn["f"]
    Dp, Fp = ffn["w1"].shape
    M = int(math.prod(orig_shape[:-1]))
    tm, Mp = _row_tiles(M, cap=128)
    tf = 256 if Fp % 256 == 0 else 128
    n_f = Fp // tf

    x2 = jnp.pad(x.astype(jnp.bfloat16).reshape(M, D), ((0, Mp - M), (0, Dp - D)))

    out = pl.pallas_call(
        functools.partial(_ffn_kernel, n_f=n_f, d_true=D, eps=eps),
        out_shape=jax.ShapeDtypeStruct((Mp, Dp), jnp.bfloat16),
        grid=(Mp // tm, n_f),
        in_specs=[
            pl.BlockSpec((tm, Dp), lambda m, f: (m, 0)),
            pl.BlockSpec((Dp, tf), lambda m, f: (0, f)),
            pl.BlockSpec((1, tf), lambda m, f: (0, f)),
            pl.BlockSpec((tf, Dp), lambda m, f: (f, 0)),
            pl.BlockSpec((1, Dp), lambda m, f: (0, 0)),
            pl.BlockSpec((1, Dp), lambda m, f: (0, 0)),
            pl.BlockSpec((1, Dp), lambda m, f: (0, 0)),
        ],
        out_specs=pl.BlockSpec((tm, Dp), lambda m, f: (m, 0)),
        scratch_shapes=[pltpu.VMEM((tm, Dp), jnp.float32)],
        compiler_params=pltpu.CompilerParams(
            dimension_semantics=("parallel", "arbitrary"),
            vmem_limit_bytes=_VMEM_LIMIT),
    )(x2, ffn["w1"], ffn["b1"], ffn["w2"], ffn["b2"], ffn["g"], ffn["b"])
    return out[:M, :D].reshape(orig_shape)


def fused_self_attention(q_in, target, sa, cfg, eps=1e-5):
    """QKV proj + MHSA + out-proj + residual + LayerNorm in one per-batch kernel."""
    B, L, D = target.shape
    H = cfg["n_head"]
    dh = sa["dh"]
    Hn, Dp, dhp = sa["wq"].shape
    Lp = _round_up(L, 16)

    def pad(a):
        return jnp.pad(a.astype(jnp.bfloat16), ((0, 0), (0, Lp - L), (0, Dp - D)))

    qp, tp = pad(q_in), pad(target)

    act_spec = pl.BlockSpec((1, Lp, Dp), lambda b: (b, 0, 0))
    w_in_spec = pl.BlockSpec((Hn, Dp, dhp), lambda b: (0, 0, 0))
    b_in_spec = pl.BlockSpec((Hn, 1, dhp), lambda b: (0, 0, 0))
    vec_spec = pl.BlockSpec((1, Dp), lambda b: (0, 0))

    out = pl.pallas_call(
        functools.partial(_fused_self_attn_kernel, n_head=H,
                          scale=1.0 / math.sqrt(dh), l_true=L, d_true=D, eps=eps),
        out_shape=jax.ShapeDtypeStruct((B, Lp, Dp), jnp.bfloat16),
        grid=(B,),
        in_specs=[act_spec, act_spec, w_in_spec, w_in_spec, w_in_spec,
                  b_in_spec, b_in_spec, b_in_spec,
                  pl.BlockSpec((Hn, dhp, Dp), lambda b: (0, 0, 0)),
                  vec_spec, vec_spec, vec_spec],
        out_specs=act_spec,
        scratch_shapes=[pltpu.VMEM((Lp, Dp), jnp.float32)],
        compiler_params=pltpu.CompilerParams(
            dimension_semantics=("parallel",), vmem_limit_bytes=_VMEM_LIMIT),
    )(qp, tp, sa["wq"], sa["wk"], sa["wv"], sa["bq"], sa["bk"], sa["bv"],
      sa["wo"], sa["bo"], sa["g"], sa["b"])
    return out[:, :L, :D]


# ---------------------------------------------------------------------------
# Plain-JAX glue (tiny heads, sigmoid math, bilinear gather)
# ---------------------------------------------------------------------------

def inverse_sigmoid(x, eps=1e-5):
    x = jnp.clip(x, 0.0, 1.0)
    return jnp.log(jnp.clip(x, eps, None) / jnp.clip(1.0 - x, eps, None))


def mlp_jax(x, layers):
    # TODO(synk): tiny heads (K or N of 4..num_classes) left to XLA per perf guidance.
    n = len(layers)
    for i, p in enumerate(layers):
        x = x @ p["w"] + p["b"]
        if i < n - 1:
            x = jax.nn.relu(x)
    return x


def grid_sample_bilinear_cl(value, grid, Hh, Ww):
    """F.grid_sample (bilinear, zeros padding, align_corners=False), channels-last.

    value: (N, Hh*Ww, C);  grid: (N, Q, P, 2) in [-1, 1];  returns (N, Q, P, C) f32.
    """
    # TODO(synk): data-dependent bilinear gather has no clean BlockSpec expression; kept in JAX.
    x = grid[..., 0]
    y = grid[..., 1]
    ix = ((x + 1.0) * Ww - 1.0) / 2.0
    iy = ((y + 1.0) * Hh - 1.0) / 2.0
    ix0 = jnp.floor(ix)
    iy0 = jnp.floor(iy)
    ix1 = ix0 + 1.0
    iy1 = iy0 + 1.0
    wx1 = ix - ix0
    wx0 = 1.0 - wx1
    wy1 = iy - iy0
    wy0 = 1.0 - wy1
    vf = value.astype(jnp.float32)

    def corner(iy_, ix_, wt):
        valid = (ix_ >= 0) & (ix_ <= Ww - 1) & (iy_ >= 0) & (iy_ <= Hh - 1)
        idx = (jnp.clip(iy_, 0, Hh - 1).astype(jnp.int32) * Ww
               + jnp.clip(ix_, 0, Ww - 1).astype(jnp.int32))        # (N, Q, P)
        vals = jax.vmap(lambda v, i: v[i])(vf, idx)                  # (N, Q, P, C)
        return vals * (wt * valid.astype(jnp.float32))[..., None]

    return (corner(iy0, ix0, wy0 * wx0) + corner(iy0, ix1, wy0 * wx1)
            + corner(iy1, ix0, wy1 * wx0) + corner(iy1, ix1, wy1 * wx1))


def ms_deformable_attention(query, reference_points, memory, spatial_shapes, prep, cfg,
                            offset_scale=0.5):
    """MSDeformableAttention (method='default'); returns pre-output_proj features (f32)."""
    B, Q, D = query.shape
    H = cfg["n_head"]
    n_levels, n_points = cfg["n_levels"], cfg["n_points"]
    dh = D // H
    num_points_list = [n_points] * n_levels
    sum_points = sum(num_points_list)
    Lv = memory.shape[1]

    value = linear(memory, prep["value_proj"])                       # (B, Lv, D) bf16

    # fused sampling_offsets + attention_weights projection; softmax over n_points in JAX
    ow = linear(query, prep["off_w"]).astype(jnp.float32)            # (B, Q, n_off + n_aw)
    n_off = H * sum_points * 2
    sampling_offsets = ow[..., :n_off].reshape(B, Q, H, sum_points, 2)
    attention_weights = jax.nn.softmax(
        ow[..., n_off:].reshape(B, Q, H, sum_points), axis=-1)

    num_points_scale = jnp.array([1.0 / n for n in num_points_list for _ in range(n)],
                                 jnp.float32)[:, None]               # (sum_points, 1)
    offset = (sampling_offsets * num_points_scale
              * reference_points[:, :, None, :, 2:] * offset_scale)
    sampling_locations = reference_points[:, :, None, :, :2] + offset  # (B,Q,H,P,2)

    # small head-major transposes (B*Q*H*P elements)
    locs = sampling_locations.transpose(0, 2, 1, 3, 4).reshape(B * H, Q, sum_points, 2)
    attn_w = attention_weights.transpose(0, 2, 1, 3).reshape(B * H, Q, sum_points)
    # TODO(synk): value head-major layout could be emitted directly by the value_proj
    # kernel out_specs to avoid this transpose; left to XLA here.
    value_bh = value.reshape(B, Lv, H, dh).transpose(0, 2, 1, 3).reshape(B * H, Lv, dh)

    sampled = []
    start = 0
    pt = 0
    for lvl, (hh, ww) in enumerate(spatial_shapes):
        npl = num_points_list[lvl]
        v_l = value_bh[:, start:start + hh * ww, :]
        g_l = 2.0 * locs[:, :, pt:pt + npl, :] - 1.0
        sampled.append(grid_sample_bilinear_cl(v_l, g_l, hh, ww))   # (BH, Q, npl, dh)
        start += hh * ww
        pt += npl
    sampled = jnp.concatenate(sampled, axis=2)                       # (BH, Q, P, dh)

    out = jnp.einsum("nqp,nqpc->nqc", attn_w, sampled)               # (BH, Q, dh)
    out = out.reshape(B, H, Q, dh).transpose(0, 2, 1, 3).reshape(B, Q, D)
    return out                                                       # output_proj fused by caller


# ---------------------------------------------------------------------------
# Decoder layer / decoder
# ---------------------------------------------------------------------------

def decoder_layer_forward(output, ref_points_input, memory, spatial_shapes,
                          query_pos_embed, prep, cfg):
    # --- self attention (fully fused kernel: qkv proj + sdpa + out proj + res + LN) ---
    q_in = (output.astype(jnp.float32) + query_pos_embed).astype(jnp.bfloat16)
    output = fused_self_attention(q_in, output, prep["self_attn"], cfg)

    # --- deformable cross attention; output_proj + residual + LN fused ---
    q2 = (output.astype(jnp.float32) + query_pos_embed).astype(jnp.bfloat16)
    cross = ms_deformable_attention(q2, ref_points_input, memory, spatial_shapes,
                                    prep["cross_attn"], cfg)
    output = linear_residual_ln(cross.astype(jnp.bfloat16),
                                prep["cross_attn"]["output_proj"],
                                output, prep["norm2"])

    # --- FFN (dim_ff tiled) + residual + LN fused ---
    output = ffn_residual_ln(output, prep["ffn"])
    return output


def transformer_decoder_forward(target, ref_points_unact, memory, spatial_shapes,
                                params, cfg):
    """Eval-mode TransformerDecoder.forward (training=False)."""
    num_layers = cfg["num_layers"]
    eval_idx = cfg["eval_idx"] if cfg["eval_idx"] >= 0 else num_layers + cfg["eval_idx"]

    dec_out_bboxes = []
    dec_out_logits = []
    ref_points_detach = jax.nn.sigmoid(ref_points_unact)
    output = target.astype(jnp.bfloat16)
    memory_bf = memory.astype(jnp.bfloat16)

    for i in range(num_layers):
        ref_points_input = ref_points_detach[:, :, None, :]          # (B, Q, 1, 4)
        query_pos_embed = mlp_jax(ref_points_detach, params["query_pos_head"])
        output = decoder_layer_forward(output, ref_points_input, memory_bf,
                                       spatial_shapes, query_pos_embed,
                                       params["layers"][i], cfg)
        out_f32 = output.astype(jnp.float32)
        inter_ref_bbox = jax.nn.sigmoid(mlp_jax(out_f32, params["bbox_head"][i])
                                        + inverse_sigmoid(ref_points_detach))
        if i == eval_idx:
            sh = params["score_head"][i]
            dec_out_logits.append(out_f32 @ sh["w"] + sh["b"])
            dec_out_bboxes.append(inter_ref_bbox)
            break
        ref_points_detach = inter_ref_bbox

    return jnp.stack(dec_out_bboxes), jnp.stack(dec_out_logits)


# ---------------------------------------------------------------------------
# Parameter init (raw fp32, natural layouts) + one-time prep (padded bf16)
# ---------------------------------------------------------------------------

def _keys(key):
    while True:
        key, sub = jax.random.split(key)
        yield sub


def init_linear(key, fan_in, fan_out, scale=0.05):
    kw, kb = jax.random.split(key)
    return {"w": jax.random.normal(kw, (fan_in, fan_out), jnp.float32) * scale,
            "b": jax.random.normal(kb, (fan_out,), jnp.float32) * scale}


def init_norm(D):
    return {"g": jnp.ones((D,), jnp.float32), "b": jnp.zeros((D,), jnp.float32)}


def init_decoder_layer(ks, cfg):
    D, dim_ff = cfg["D"], cfg["dim_ff"]
    total_points = cfg["n_head"] * cfg["n_levels"] * cfg["n_points"]
    q, k, v, o = (init_linear(next(ks), D, D) for _ in range(4))
    return {
        "self_attn": {"wq": q["w"], "bq": q["b"], "wk": k["w"], "bk": k["b"],
                      "wv": v["w"], "bv": v["b"], "wo": o["w"], "bo": o["b"]},
        "norm1": init_norm(D),
        "cross_attn": {
            "sampling_offsets": init_linear(next(ks), D, total_points * 2),
            "attention_weights": init_linear(next(ks), D, total_points),
            "value_proj": init_linear(next(ks), D, D),
            "output_proj": init_linear(next(ks), D, D),
        },
        "norm2": init_norm(D),
        "linear1": init_linear(next(ks), D, dim_ff),
        "linear2": init_linear(next(ks), dim_ff, D),
        "norm3": init_norm(D),
    }


def init_params(key, cfg):
    ks = _keys(key)
    D = cfg["D"]
    return {
        "layers": [init_decoder_layer(ks, cfg) for _ in range(cfg["num_layers"])],
        "query_pos_head": [init_linear(next(ks), 4, 2 * D),
                           init_linear(next(ks), 2 * D, D)],
        "bbox_head": [[init_linear(next(ks), D, D), init_linear(next(ks), D, D),
                       init_linear(next(ks), D, 4)] for _ in range(cfg["num_layers"])],
        "score_head": [init_linear(next(ks), D, cfg["num_classes"])
                       for _ in range(cfg["num_layers"])],
    }


def _prep_linear(lin):
    K, N = lin["w"].shape
    Kp, Np = _round_up(K, 128), _round_up(N, 128)
    return {"w": jnp.pad(lin["w"], ((0, Kp - K), (0, Np - N))).astype(jnp.bfloat16),
            "b": jnp.pad(lin["b"], (0, Np - N)).reshape(1, Np).astype(jnp.float32),
            "k": K, "n": N}


def _prep_norm(nrm, Dp):
    D = nrm["g"].shape[0]
    return {"g": jnp.pad(nrm["g"], (0, Dp - D)).reshape(1, Dp).astype(jnp.float32),
            "b": jnp.pad(nrm["b"], (0, Dp - D)).reshape(1, Dp).astype(jnp.float32)}


def _prep_self_attn(sa, norm1, D, H):
    dh = D // H
    Dp, dhp = _round_up(D, 128), _round_up(dh, 128)

    def hm_in(w):                      # (D, D) -> (H, Dp, dhp): per-head output columns
        w = w.reshape(D, H, dh).transpose(1, 0, 2)
        return jnp.pad(w, ((0, 0), (0, Dp - D), (0, dhp - dh))).astype(jnp.bfloat16)

    def hm_bias(b):                    # (D,) -> (H, 1, dhp)
        b = b.reshape(H, 1, dh)
        return jnp.pad(b, ((0, 0), (0, 0), (0, dhp - dh))).astype(jnp.float32)

    wo = sa["wo"].reshape(H, dh, D)    # per-head input rows of the out projection
    wo = jnp.pad(wo, ((0, 0), (0, dhp - dh), (0, Dp - D))).astype(jnp.bfloat16)
    nrm = _prep_norm(norm1, Dp)
    return {"wq": hm_in(sa["wq"]), "wk": hm_in(sa["wk"]), "wv": hm_in(sa["wv"]),
            "bq": hm_bias(sa["bq"]), "bk": hm_bias(sa["bk"]), "bv": hm_bias(sa["bv"]),
            "wo": wo,
            "bo": jnp.pad(sa["bo"], (0, Dp - D)).reshape(1, Dp).astype(jnp.float32),
            "g": nrm["g"], "b": nrm["b"], "dh": dh}


def _prep_ffn(l1, l2, norm3, D, F):
    Dp, Fp = _round_up(D, 128), _round_up(F, 128)
    nrm = _prep_norm(norm3, Dp)
    return {"w1": jnp.pad(l1["w"], ((0, Dp - D), (0, Fp - F))).astype(jnp.bfloat16),
            "b1": jnp.pad(l1["b"], (0, Fp - F)).reshape(1, Fp).astype(jnp.float32),
            "w2": jnp.pad(l2["w"], ((0, Fp - F), (0, Dp - D))).astype(jnp.bfloat16),
            "b2": jnp.pad(l2["b"], (0, Dp - D)).reshape(1, Dp).astype(jnp.float32),
            "g": nrm["g"], "b": nrm["b"], "d": D, "f": F}


def prepare_params(params, cfg):
    """One-time pad-to-128 + bf16 cast of all weights used inside Pallas kernels."""
    D, H = cfg["D"], cfg["n_head"]
    Dp = _round_up(D, 128)
    layers = []
    for lp in params["layers"]:
        ca = lp["cross_attn"]
        layers.append({
            "self_attn": _prep_self_attn(lp["self_attn"], lp["norm1"], D, H),
            "cross_attn": {
                "value_proj": _prep_linear(ca["value_proj"]),
                "off_w": _prep_linear({
                    "w": jnp.concatenate([ca["sampling_offsets"]["w"],
                                          ca["attention_weights"]["w"]], axis=1),
                    "b": jnp.concatenate([ca["sampling_offsets"]["b"],
                                          ca["attention_weights"]["b"]], axis=0)}),
                "output_proj": _prep_linear(ca["output_proj"]),
            },
            "norm2": _prep_norm(lp["norm2"], Dp),
            "ffn": _prep_ffn(lp["linear1"], lp["linear2"], lp["norm3"],
                             D, cfg["dim_ff"]),
        })
    return {"layers": layers,
            "query_pos_head": params["query_pos_head"],
            "bbox_head": params["bbox_head"],
            "score_head": params["score_head"]}


# ---------------------------------------------------------------------------
# Main
# ---------------------------------------------------------------------------

if __name__ == "__main__":
    cfg = dict(B=2, Q=8, D=32, n_head=4, dim_ff=64, n_levels=2, n_points=2,
               num_classes=5, num_layers=2, eval_idx=-1)
    spatial_shapes = ((8, 8), (4, 4))                      # per-level (H, W)
    Lv = sum(h * w for h, w in spatial_shapes)             # 80

    key = jax.random.PRNGKey(0)
    k_par, k_t, k_r, k_m = jax.random.split(key, 4)

    raw_params = init_params(k_par, cfg)
    prep = prepare_params(raw_params, cfg)

    target = jax.random.normal(k_t, (cfg["B"], cfg["Q"], cfg["D"]), jnp.float32)
    ref_points_unact = jax.random.normal(k_r, (cfg["B"], cfg["Q"], 4), jnp.float32)
    memory = jax.random.normal(k_m, (cfg["B"], Lv, cfg["D"]), jnp.float32)

    fwd = jax.jit(lambda t, r, m: transformer_decoder_forward(
        t, r, m, spatial_shapes, prep, cfg))
    bboxes, logits = fwd(target, ref_points_unact, memory)
    jax.block_until_ready((bboxes, logits))

    assert bboxes.shape == (1, cfg["B"], cfg["Q"], 4), bboxes.shape
    assert logits.shape == (1, cfg["B"], cfg["Q"], cfg["num_classes"]), logits.shape
    assert bool(jnp.all(jnp.isfinite(bboxes))) and bool(jnp.all(jnp.isfinite(logits)))
    print("KERNEL_OK")
</pallas_src>

<mosaic_0001>
module attributes {stable_mosaic.version = 11 : i64} {
  func.func @_fused_self_attn_kernel(%arg0: i32, %arg1: memref<1x16x128xbf16, #tpu.memory_space<vmem>>, %arg2: memref<1x16x128xbf16, #tpu.memory_space<vmem>>, %arg3: memref<4x128x128xbf16, #tpu.memory_space<vmem>>, %arg4: memref<4x128x128xbf16, #tpu.memory_space<vmem>>, %arg5: memref<4x128x128xbf16, #tpu.memory_space<vmem>>, %arg6: memref<4x1x128xf32, #tpu.memory_space<vmem>>, %arg7: memref<4x1x128xf32, #tpu.memory_space<vmem>>, %arg8: memref<4x1x128xf32, #tpu.memory_space<vmem>>, %arg9: memref<4x128x128xbf16, #tpu.memory_space<vmem>>, %arg10: memref<1x128xf32, #tpu.memory_space<vmem>>, %arg11: memref<1x128xf32, #tpu.memory_space<vmem>>, %arg12: memref<1x128xf32, #tpu.memory_space<vmem>>, %arg13: memref<1x16x128xbf16, #tpu.memory_space<vmem>>, %arg14: memref<16x128xf32, #tpu.memory_space<vmem>>) attributes {dimension_semantics = [#tpu.dimension_semantics<parallel>], iteration_bounds = array<i64: 2>, scalar_prefetch = 0 : i64, scratch_operands = 1 : i64, tpu.core_type = #tpu.core_type<tc>, window_params = [{transform_indices = @transform_0, window_bounds = array<i64: 1, 16, 128>}, {transform_indices = @transform_1, window_bounds = array<i64: 1, 16, 128>}, {pipeline_mode = #tpu.pipeline_mode<synchronous>, transform_indices = @transform_2, window_bounds = array<i64: 4, 128, 128>}, {pipeline_mode = #tpu.pipeline_mode<synchronous>, transform_indices = @transform_3, window_bounds = array<i64: 4, 128, 128>}, {pipeline_mode = #tpu.pipeline_mode<synchronous>, transform_indices = @transform_4, window_bounds = array<i64: 4, 128, 128>}, {pipeline_mode = #tpu.pipeline_mode<synchronous>, transform_indices = @transform_5, window_bounds = array<i64: 4, 1, 128>}, {pipeline_mode = #tpu.pipeline_mode<synchronous>, transform_indices = @transform_6, window_bounds = array<i64: 4, 1, 128>}, {pipeline_mode = #tpu.pipeline_mode<synchronous>, transform_indices = @transform_7, window_bounds = array<i64: 4, 1, 128>}, {pipeline_mode = #tpu.pipeline_mode<synchronous>, transform_indices = @transform_8, window_bounds = array<i64: 4, 128, 128>}, {pipeline_mode = #tpu.pipeline_mode<synchronous>, transform_indices = @transform_9, window_bounds = array<i64: 1, 128>}, {pipeline_mode = #tpu.pipeline_mode<synchronous>, transform_indices = @transform_10, window_bounds = array<i64: 1, 128>}, {pipeline_mode = #tpu.pipeline_mode<synchronous>, transform_indices = @transform_11, window_bounds = array<i64: 1, 128>}, {transform_indices = @transform_12, window_bounds = array<i64: 1, 16, 128>}]} {
    %c0 = arith.constant 0 : index
    %c0_0 = arith.constant 0 : index
    %c0_1 = arith.constant 0 : index
    %0 = vector.load %arg1[%c0, %c0_0, %c0_1] : memref<1x16x128xbf16, #tpu.memory_space<vmem>>, vector<1x16x128xbf16>
    %1 = vector.shape_cast %0 : vector<1x16x128xbf16> to vector<16x128xbf16>
    %c0_2 = arith.constant 0 : index
    %c0_3 = arith.constant 0 : index
    %c0_4 = arith.constant 0 : index
    %2 = vector.load %arg2[%c0_2, %c0_3, %c0_4] : memref<1x16x128xbf16, #tpu.memory_space<vmem>>, vector<1x16x128xbf16>
    %3 = vector.shape_cast %2 : vector<1x16x128xbf16> to vector<16x128xbf16>
    %4 = tpu.iota {dimensions = array<i32: 1>} : vector<16x16xi32>
    %c8_i32 = arith.constant 8 : i32
    %5 = vector.broadcast %c8_i32 : i32 to vector<16x16xi32>
    %6 = arith.cmpi slt, %4, %5 : vector<16x16xi32>
    %c0_5 = arith.constant 0 : index
    %c0_6 = arith.constant 0 : index
    %c0_7 = arith.constant 0 : index
    %7 = vector.load %arg3[%c0_5, %c0_6, %c0_7] : memref<4x128x128xbf16, #tpu.memory_space<vmem>>, vector<1x128x128xbf16>
    %8 = vector.shape_cast %7 : vector<1x128x128xbf16> to vector<128x128xbf16>
    %cst = arith.constant dense<0.000000e+00> : vector<16x128xf32>
    %9 = tpu.matmul %1, %8, %cst {dimension_numbers = #tpu.dot_dimension_numbers<[1], [0], [0], [1], [0, 0, 1, 1], [], []>} : vector<16x128xbf16>, vector<128x128xbf16>, vector<16x128xf32> -> vector<16x128xf32>
    %c0_8 = arith.constant 0 : index
    %c0_9 = arith.constant 0 : index
    %c0_10 = arith.constant 0 : index
    %10 = vector.load %arg6[%c0_8, %c0_9, %c0_10] : memref<4x1x128xf32, #tpu.memory_space<vmem>>, vector<1x1x128xf32>
    %11 = vector.shape_cast %10 : vector<1x1x128xf32> to vector<1x128xf32>
    %12 = vector.broadcast %11 : vector<1x128xf32> to vector<16x128xf32>
    %13 = arith.addf %9, %12 : vector<16x128xf32>
    %c0_11 = arith.constant 0 : index
    %c0_12 = arith.constant 0 : index
    %c0_13 = arith.constant 0 : index
    %14 = vector.load %arg4[%c0_11, %c0_12, %c0_13] : memref<4x128x128xbf16, #tpu.memory_space<vmem>>, vector<1x128x128xbf16>
    %15 = vector.shape_cast %14 : vector<1x128x128xbf16> to vector<128x128xbf16>
    %cst_14 = arith.constant dense<0.000000e+00> : vector<16x128xf32>
    %16 = tpu.matmul %1, %15, %cst_14 {dimension_numbers = #tpu.dot_dimension_numbers<[1], [0], [0], [1], [0, 0, 1, 1], [], []>} : vector<16x128xbf16>, vector<128x128xbf16>, vector<16x128xf32> -> vector<16x128xf32>
    %c0_15 = arith.constant 0 : index
    %c0_16 = arith.constant 0 : index
    %c0_17 = arith.constant 0 : index
    %17 = vector.load %arg7[%c0_15, %c0_16, %c0_17] : memref<4x1x128xf32, #tpu.memory_space<vmem>>, vector<1x1x128xf32>
    %18 = vector.shape_cast %17 : vector<1x1x128xf32> to vector<1x128xf32>
    %19 = vector.broadcast %18 : vector<1x128xf32> to vector<16x128xf32>
    %20 = arith.addf %16, %19 : vector<16x128xf32>
    %c0_18 = arith.constant 0 : index
    %c0_19 = arith.constant 0 : index
    %c0_20 = arith.constant 0 : index
    %21 = vector.load %arg5[%c0_18, %c0_19, %c0_20] : memref<4x128x128xbf16, #tpu.memory_space<vmem>>, vector<1x128x128xbf16>
    %22 = vector.shape_cast %21 : vector<1x128x128xbf16> to vector<128x128xbf16>
    %cst_21 = arith.constant dense<0.000000e+00> : vector<16x128xf32>
    %23 = tpu.matmul %3, %22, %cst_21 {dimension_numbers = #tpu.dot_dimension_numbers<[1], [0], [0], [1], [0, 0, 1, 1], [], []>} : vector<16x128xbf16>, vector<128x128xbf16>, vector<16x128xf32> -> vector<16x128xf32>
    %c0_22 = arith.constant 0 : index
    %c0_23 = arith.constant 0 : index
    %c0_24 = arith.constant 0 : index
    %24 = vector.load %arg8[%c0_22, %c0_23, %c0_24] : memref<4x1x128xf32, #tpu.memory_space<vmem>>, vector<1x1x128xf32>
    %25 = vector.shape_cast %24 : vector<1x1x128xf32> to vector<1x128xf32>
    %26 = vector.broadcast %25 : vector<1x128xf32> to vector<16x128xf32>
    %27 = arith.addf %23, %26 : vector<16x128xf32>
    %28 = arith.truncf %13 : vector<16x128xf32> to vector<16x128xbf16>
    %29 = arith.truncf %20 : vector<16x128xf32> to vector<16x128xbf16>
    %cst_25 = arith.constant dense<0.000000e+00> : vector<16x16xf32>
    %30 = tpu.matmul %28, %29, %cst_25 {dimension_numbers = #tpu.dot_dimension_numbers<[1], [1], [0], [0], [0, 0, 1, 0], [], []>} : vector<16x128xbf16>, vector<16x128xbf16>, vector<16x16xf32> -> vector<16x16xf32>
    %cst_26 = arith.constant 0.353553385 : f32
    %31 = vector.broadcast %cst_26 : f32 to vector<16x16xf32>
    %32 = arith.mulf %30, %31 : vector<16x16xf32>
    %cst_27 = arith.constant -1.000000e+30 : f32
    %33 = vector.broadcast %cst_27 : f32 to vector<16x16xf32>
    %34 = arith.select %6, %32, %33 : vector<16x16xi1>, vector<16x16xf32>
    %cst_28 = arith.constant dense<0xFF800000> : vector<16xf32>
    %35 = vector.multi_reduction <maximumf>, %34, %cst_28 [1] : vector<16x16xf32> to vector<16xf32>
    %36 = vector.shape_cast %35 : vector<16xf32> to vector<16x1xf32>
    %37 = vector.broadcast %36 : vector<16x1xf32> to vector<16x16xf32>
    %38 = arith.subf %34, %37 : vector<16x16xf32>
    %39 = math.exp %38 : vector<16x16xf32>
    %cst_29 = arith.constant dense<0.000000e+00> : vector<16xf32>
    %40 = vector.multi_reduction <add>, %39, %cst_29 [1] : vector<16x16xf32> to vector<16xf32>
    %41 = vector.shape_cast %40 : vector<16xf32> to vector<16x1xf32>
    %42 = tpu.reciprocal %41 {approx = true} : vector<16x1xf32> -> vector<16x1xf32>
    %43 = vector.broadcast %42 : vector<16x1xf32> to vector<16x16xf32>
    %44 = arith.mulf %39, %43 : vector<16x16xf32>
    %45 = arith.truncf %44 : vector<16x16xf32> to vector<16x16xbf16>
    %46 = arith.truncf %27 : vector<16x128xf32> to vector<16x128xbf16>
    %cst_30 = arith.constant dense<0.000000e+00> : vector<16x128xf32>
    %47 = tpu.matmul %45, %46, %cst_30 {dimension_numbers = #tpu.dot_dimension_numbers<[1], [0], [0], [1], [0, 0, 1, 1], [], []>} : vector<16x16xbf16>, vector<16x128xbf16>, vector<16x128xf32> -> vector<16x128xf32>
    %48 = arith.truncf %47 : vector<16x128xf32> to vector<16x128xbf16>
    %c0_31 = arith.constant 0 : index
    %c0_32 = arith.constant 0 : index
    %c0_33 = arith.constant 0 : index
    %49 = vector.load %arg9[%c0_31, %c0_32, %c0_33] : memref<4x128x128xbf16, #tpu.memory_space<vmem>>, vector<1x128x128xbf16>
    %50 = vector.shape_cast %49 : vector<1x128x128xbf16> to vector<128x128xbf16>
    %cst_34 = arith.constant dense<0.000000e+00> : vector<16x128xf32>
    %51 = tpu.matmul %48, %50, %cst_34 {dimension_numbers = #tpu.dot_dimension_numbers<[1], [0], [0], [1], [0, 0, 1, 1], [], []>} : vector<16x128xbf16>, vector<128x128xbf16>, vector<16x128xf32> -> vector<16x128xf32>
    %c0_35 = arith.constant 0 : index
    %c0_36 = arith.constant 0 : index
    %52 = vector.load %arg14[%c0_35, %c0_36] : memref<16x128xf32, #tpu.memory_space<vmem>>, vector<16x128xf32>
    tpu.vector_store %arg14[%c0_35, %c0_36], %51 {strides = array<i32>} : memref<16x128xf32, #tpu.memory_space<vmem>>, vector<16x128xf32>,
    %c1 = arith.constant 1 : index
    %c0_37 = arith.constant 0 : index
    %c0_38 = arith.constant 0 : index
    %53 = vector.load %arg3[%c1, %c0_37, %c0_38] : memref<4x128x128xbf16, #tpu.memory_space<vmem>>, vector<1x128x128xbf16>
    %54 = vector.shape_cast %53 : vector<1x128x128xbf16> to vector<128x128xbf16>
    %cst_39 = arith.constant dense<0.000000e+00> : vector<16x128xf32>
    %55 = tpu.matmul %1, %54, %cst_39 {dimension_numbers = #tpu.dot_dimension_numbers<[1], [0], [0], [1], [0, 0, 1, 1], [], []>} : vector<16x128xbf16>, vector<128x128xbf16>, vector<16x128xf32> -> vector<16x128xf32>
    %c1_40 = arith.constant 1 : index
    %c0_41 = arith.constant 0 : index
    %c0_42 = arith.constant 0 : index
    %56 = vector.load %arg6[%c1_40, %c0_41, %c0_42] : memref<4x1x128xf32, #tpu.memory_space<vmem>>, vector<1x1x128xf32>
    %57 = vector.shape_cast %56 : vector<1x1x128xf32> to vector<1x128xf32>
    %58 = vector.broadcast %57 : vector<1x128xf32> to vector<16x128xf32>
    %59 = arith.addf %55, %58 : vector<16x128xf32>
    %c1_43 = arith.constant 1 : index
    %c0_44 = arith.constant 0 : index
    %c0_45 = arith.constant 0 : index
    %60 = vector.load %arg4[%c1_43, %c0_44, %c0_45] : memref<4x128x128xbf16, #tpu.memory_space<vmem>>, vector<1x128x128xbf16>
    %61 = vector.shape_cast %60 : vector<1x128x128xbf16> to vector<128x128xbf16>
    %cst_46 = arith.constant dense<0.000000e+00> : vector<16x128xf32>
    %62 = tpu.matmul %1, %61, %cst_46 {dimension_numbers = #tpu.dot_dimension_numbers<[1], [0], [0], [1], [0, 0, 1, 1], [], []>} : vector<16x128xbf16>, vector<128x128xbf16>, vector<16x128xf32> -> vector<16x128xf32>
    %c1_47 = arith.constant 1 : index
    %c0_48 = arith.constant 0 : index
    %c0_49 = arith.constant 0 : index
    %63 = vector.load %arg7[%c1_47, %c0_48, %c0_49] : memref<4x1x128xf32, #tpu.memory_space<vmem>>, vector<1x1x128xf32>
    %64 = vector.shape_cast %63 : vector<1x1x128xf32> to vector<1x128xf32>
    %65 = vector.broadcast %64 : vector<1x128xf32> to vector<16x128xf32>
    %66 = arith.addf %62, %65 : vector<16x128xf32>
    %c1_50 = arith.constant 1 : index
    %c0_51 = arith.constant 0 : index
    %c0_52 = arith.constant 0 : index
    %67 = vector.load %arg5[%c1_50, %c0_51, %c0_52] : memref<4x128x128xbf16, #tpu.memory_space<vmem>>, vector<1x128x128xbf16>
    %68 = vector.shape_cast %67 : vector<1x128x128xbf16> to vector<128x128xbf16>
    %cst_53 = arith.constant dense<0.000000e+00> : vector<16x128xf32>
    %69 = tpu.matmul %3, %68, %cst_53 {dimension_numbers = #tpu.dot_dimension_numbers<[1], [0], [0], [1], [0, 0, 1, 1], [], []>} : vector<16x128xbf16>, vector<128x128xbf16>, vector<16x128xf32> -> vector<16x128xf32>
    %c1_54 = arith.constant 1 : index
    %c0_55 = arith.constant 0 : index
    %c0_56 = arith.constant 0 : index
    %70 = vector.load %arg8[%c1_54, %c0_55, %c0_56] : memref<4x1x128xf32, #tpu.memory_space<vmem>>, vector<1x1x128xf32>
    %71 = vector.shape_cast %70 : vector<1x1x128xf32> to vector<1x128xf32>
    %72 = vector.broadcast %71 : vector<1x128xf32> to vector<16x128xf32>
    %73 = arith.addf %69, %72 : vector<16x128xf32>
    %74 = arith.truncf %59 : vector<16x128xf32> to vector<16x128xbf16>
    %75 = arith.truncf %66 : vector<16x128xf32> to vector<16x128xbf16>
    %cst_57 = arith.constant dense<0.000000e+00> : vector<16x16xf32>
    %76 = tpu.matmul %74, %75, %cst_57 {dimension_numbers = #tpu.dot_dimension_numbers<[1], [1], [0], [0], [0, 0, 1, 0], [], []>} : vector<16x128xbf16>, vector<16x128xbf16>, vector<16x16xf32> -> vector<16x16xf32>
    %cst_58 = arith.constant 0.353553385 : f32
    %77 = vector.broadcast %cst_58 : f32 to vector<16x16xf32>
    %78 = arith.mulf %76, %77 : vector<16x16xf32>
    %cst_59 = arith.constant -1.000000e+30 : f32
    %79 = vector.broadcast %cst_59 : f32 to vector<16x16xf32>
    %80 = arith.select %6, %78, %79 : vector<16x16xi1>, vector<16x16xf32>
    %cst_60 = arith.constant dense<0xFF800000> : vector<16xf32>
    %81 = vector.multi_reduction <maximumf>, %80, %cst_60 [1] : vector<16x16xf32> to vector<16xf32>
    %82 = vector.shape_cast %81 : vector<16xf32> to vector<16x1xf32>
    %83 = vector.broadcast %82 : vector<16x1xf32> to vector<16x16xf32>
    %84 = arith.subf %80, %83 : vector<16x16xf32>
    %85 = math.exp %84 : vector<16x16xf32>
    %cst_61 = arith.constant dense<0.000000e+00> : vector<16xf32>
    %86 = vector.multi_reduction <add>, %85, %cst_61 [1] : vector<16x16xf32> to vector<16xf32>
    %87 = vector.shape_cast %86 : vector<16xf32> to vector<16x1xf32>
    %88 = tpu.reciprocal %87 {approx = true} : vector<16x1xf32> -> vector<16x1xf32>
    %89 = vector.broadcast %88 : vector<16x1xf32> to vector<16x16xf32>
    %90 = arith.mulf %85, %89 : vector<16x16xf32>
    %91 = arith.truncf %90 : vector<16x16xf32> to vector<16x16xbf16>
    %92 = arith.truncf %73 : vector<16x128xf32> to vector<16x128xbf16>
    %cst_62 = arith.constant dense<0.000000e+00> : vector<16x128xf32>
    %93 = tpu.matmul %91, %92, %cst_62 {dimension_numbers = #tpu.dot_dimension_numbers<[1], [0], [0], [1], [0, 0, 1, 1], [], []>} : vector<16x16xbf16>, vector<16x128xbf16>, vector<16x128xf32> -> vector<16x128xf32>
    %94 = arith.truncf %93 : vector<16x128xf32> to vector<16x128xbf16>
    %c1_63 = arith.constant 1 : index
    %c0_64 = arith.constant 0 : index
    %c0_65 = arith.constant 0 : index
    %95 = vector.load %arg9[%c1_63, %c0_64, %c0_65] : memref<4x128x128xbf16, #tpu.memory_space<vmem>>, vector<1x128x128xbf16>
    %96 = vector.shape_cast %95 : vector<1x128x128xbf16> to vector<128x128xbf16>
    %cst_66 = arith.constant dense<0.000000e+00> : vector<16x128xf32>
    %97 = tpu.matmul %94, %96, %cst_66 {dimension_numbers = #tpu.dot_dimension_numbers<[1], [0], [0], [1], [0, 0, 1, 1], [], []>} : vector<16x128xbf16>, vector<128x128xbf16>, vector<16x128xf32> -> vector<16x128xf32>
    %c0_67 = arith.constant 0 : index
    %c0_68 = arith.constant 0 : index
    %98 = vector.load %arg14[%c0_67, %c0_68] : memref<16x128xf32, #tpu.memory_space<vmem>>, vector<16x128xf32>
    %99 = arith.addf %98, %97 : vector<16x128xf32>
    %c0_69 = arith.constant 0 : index
    %c0_70 = arith.constant 0 : index
    %100 = vector.load %arg14[%c0_69, %c0_70] : memref<16x128xf32, #tpu.memory_space<vmem>>, vector<16x128xf32>
    tpu.vector_store %arg14[%c0_69, %c0_70], %99 {strides = array<i32>} : memref<16x128xf32, #tpu.memory_space<vmem>>, vector<16x128xf32>,
    %c2 = arith.constant 2 : index
    %c0_71 = arith.constant 0 : index
    %c0_72 = arith.constant 0 : index
    %101 = vector.load %arg3[%c2, %c0_71, %c0_72] : memref<4x128x128xbf16, #tpu.memory_space<vmem>>, vector<1x128x128xbf16>
    %102 = vector.shape_cast %101 : vector<1x128x128xbf16> to vector<128x128xbf16>
    %cst_73 = arith.constant dense<0.000000e+00> : vector<16x128xf32>
    %103 = tpu.matmul %1, %102, %cst_73 {dimension_numbers = #tpu.dot_dimension_numbers<[1], [0], [0], [1], [0, 0, 1, 1], [], []>} : vector<16x128xbf16>, vector<128x128xbf16>, vector<16x128xf32> -> vector<16x128xf32>
    %c2_74 = arith.constant 2 : index
    %c0_75 = arith.constant 0 : index
    %c0_76 = arith.constant 0 : index
    %104 = vector.load %arg6[%c2_74, %c0_75, %c0_76] : memref<4x1x128xf32, #tpu.memory_space<vmem>>, vector<1x1x128xf32>
    %105 = vector.shape_cast %104 : vector<1x1x128xf32> to vector<1x128xf32>
    %106 = vector.broadcast %105 : vector<1x128xf32> to vector<16x128xf32>
    %107 = arith.addf %103, %106 : vector<16x128xf32>
    %c2_77 = arith.constant 2 : index
    %c0_78 = arith.constant 0 : index
    %c0_79 = arith.constant 0 : index
    %108 = vector.load %arg4[%c2_77, %c0_78, %c0_79] : memref<4x128x128xbf16, #tpu.memory_space<vmem>>, vector<1x128x128xbf16>
    %109 = vector.shape_cast %108 : vector<1x128x128xbf16> to vector<128x128xbf16>
    %cst_80 = arith.constant dense<0.000000e+00> : vector<16x128xf32>
    %110 = tpu.matmul %1, %109, %cst_80 {dimension_numbers = #tpu.dot_dimension_numbers<[1], [0], [0], [1], [0, 0, 1, 1], [], []>} : vector<16x128xbf16>, vector<128x128xbf16>, vector<16x128xf32> -> vector<16x128xf32>
    %c2_81 = arith.constant 2 : index
    %c0_82 = arith.constant 0 : index
    %c0_83 = arith.constant 0 : index
    %111 = vector.load %arg7[%c2_81, %c0_82, %c0_83] : memref<4x1x128xf32, #tpu.memory_space<vmem>>, vector<1x1x128xf32>
    %112 = vector.shape_cast %111 : vector<1x1x128xf32> to vector<1x128xf32>
    %113 = vector.broadcast %112 : vector<1x128xf32> to vector<16x128xf32>
    %114 = arith.addf %110, %113 : vector<16x128xf32>
    %c2_84 = arith.constant 2 : index
    %c0_85 = arith.constant 0 : index
    %c0_86 = arith.constant 0 : index
    %115 = vector.load %arg5[%c2_84, %c0_85, %c0_86] : memref<4x128x128xbf16, #tpu.memory_space<vmem>>, vector<1x128x128xbf16>
    %116 = vector.shape_cast %115 : vector<1x128x128xbf16> to vector<128x128xbf16>
    %cst_87 = arith.constant dense<0.000000e+00> : vector<16x128xf32>
    %117 = tpu.matmul %3, %116, %cst_87 {dimension_numbers = #tpu.dot_dimension_numbers<[1], [0], [0], [1], [0, 0, 1, 1], [], []>} : vector<16x128xbf16>, vector<128x128xbf16>, vector<16x128xf32> -> vector<16x128xf32>
    %c2_88 = arith.constant 2 : index
    %c0_89 = arith.constant 0 : index
    %c0_90 = arith.constant 0 : index
    %118 = vector.load %arg8[%c2_88, %c0_89, %c0_90] : memref<4x1x128xf32, #tpu.memory_space<vmem>>, vector<1x1x128xf32>
    %119 = vector.shape_cast %118 : vector<1x1x128xf32> to vector<1x128xf32>
    %120 = vector.broadcast %119 : vector<1x128xf32> to vector<16x128xf32>
    %121 = arith.addf %117, %120 : vector<16x128xf32>
    %122 = arith.truncf %107 : vector<16x128xf32> to vector<16x128xbf16>
    %123 = arith.truncf %114 : vector<16x128xf32> to vector<16x128xbf16>
    %cst_91 = arith.constant dense<0.000000e+00> : vector<16x16xf32>
    %124 = tpu.matmul %122, %123, %cst_91 {dimension_numbers = #tpu.dot_dimension_numbers<[1], [1], [0], [0], [0, 0, 1, 0], [], []>} : vector<16x128xbf16>, vector<16x128xbf16>, vector<16x16xf32> -> vector<16x16xf32>
    %cst_92 = arith.constant 0.353553385 : f32
    %125 = vector.broadcast %cst_92 : f32 to vector<16x16xf32>
    %126 = arith.mulf %124, %125 : vector<16x16xf32>
    %cst_93 = arith.constant -1.000000e+30 : f32
    %127 = vector.broadcast %cst_93 : f32 to vector<16x16xf32>
    %128 = arith.select %6, %126, %127 : vector<16x16xi1>, vector<16x16xf32>
    %cst_94 = arith.constant dense<0xFF800000> : vector<16xf32>
    %129 = vector.multi_reduction <maximumf>, %128, %cst_94 [1] : vector<16x16xf32> to vector<16xf32>
    %130 = vector.shape_cast %129 : vector<16xf32> to vector<16x1xf32>
    %131 = vector.broadcast %130 : vector<16x1xf32> to vector<16x16xf32>
    %132 = arith.subf %128, %131 : vector<16x16xf32>
    %133 = math.exp %132 : vector<16x16xf32>
    %cst_95 = arith.constant dense<0.000000e+00> : vector<16xf32>
    %134 = vector.multi_reduction <add>, %133, %cst_95 [1] : vector<16x16xf32> to vector<16xf32>
    %135 = vector.shape_cast %134 : vector<16xf32> to vector<16x1xf32>
    %136 = tpu.reciprocal %135 {approx = true} : vector<16x1xf32> -> vector<16x1xf32>
    %137 = vector.broadcast %136 : vector<16x1xf32> to vector<16x16xf32>
    %138 = arith.mulf %133, %137 : vector<16x16xf32>
    %139 = arith.truncf %138 : vector<16x16xf32> to vector<16x16xbf16>
    %140 = arith.truncf %121 : vector<16x128xf32> to vector<16x128xbf16>
    %cst_96 = arith.constant dense<0.000000e+00> : vector<16x128xf32>
    %141 = tpu.matmul %139, %140, %cst_96 {dimension_numbers = #tpu.dot_dimension_numbers<[1], [0], [0], [1], [0, 0, 1, 1], [], []>} : vector<16x16xbf16>, vector<16x128xbf16>, vector<16x128xf32> -> vector<16x128xf32>
    %142 = arith.truncf %141 : vector<16x128xf32> to vector<16x128xbf16>
    %c2_97 = arith.constant 2 : index
    %c0_98 = arith.constant 0 : index
    %c0_99 = arith.constant 0 : index
    %143 = vector.load %arg9[%c2_97, %c0_98, %c0_99] : memref<4x128x128xbf16, #tpu.memory_space<vmem>>, vector<1x128x128xbf16>
    %144 = vector.shape_cast %143 : vector<1x128x128xbf16> to vector<128x128xbf16>
    %cst_100 = arith.constant dense<0.000000e+00> : vector<16x128xf32>
    %145 = tpu.matmul %142, %144, %cst_100 {dimension_numbers = #tpu.dot_dimension_numbers<[1], [0], [0], [1], [0, 0, 1, 1], [], []>} : vector<16x128xbf16>, vector<128x128xbf16>, vector<16x128xf32> -> vector<16x128xf32>
    %c0_101 = arith.constant 0 : index
    %c0_102 = arith.constant 0 : index
    %146 = vector.load %arg14[%c0_101, %c0_102] : memref<16x128xf32, #tpu.memory_space<vmem>>, vector<16x128xf32>
    %147 = arith.addf %146, %145 : vector<16x128xf32>
    %c0_103 = arith.constant 0 : index
    %c0_104 = arith.constant 0 : index
    %148 = vector.load %arg14[%c0_103, %c0_104] : memref<16x128xf32, #tpu.memory_space<vmem>>, vector<16x128xf32>
    tpu.vector_store %arg14[%c0_103, %c0_104], %147 {strides = array<i32>} : memref<16x128xf32, #tpu.memory_space<vmem>>, vector<16x128xf32>,
    %c3 = arith.constant 3 : index
    %c0_105 = arith.constant 0 : index
    %c0_106 = arith.constant 0 : index
    %149 = vector.load %arg3[%c3, %c0_105, %c0_106] : memref<4x128x128xbf16, #tpu.memory_space<vmem>>, vector<1x128x128xbf16>
    %150 = vector.shape_cast %149 : vector<1x128x128xbf16> to vector<128x128xbf16>
    %cst_107 = arith.constant dense<0.000000e+00> : vector<16x128xf32>
    %151 = tpu.matmul %1, %150, %cst_107 {dimension_numbers = #tpu.dot_dimension_numbers<[1], [0], [0], [1], [0, 0, 1, 1], [], []>} : vector<16x128xbf16>, vector<128x128xbf16>, vector<16x128xf32> -> vector<16x128xf32>
    %c3_108 = arith.constant 3 : index
    %c0_109 = arith.constant 0 : index
    %c0_110 = arith.constant 0 : index
    %152 = vector.load %arg6[%c3_108, %c0_109, %c0_110] : memref<4x1x128xf32, #tpu.memory_space<vmem>>, vector<1x1x128xf32>
    %153 = vector.shape_cast %152 : vector<1x1x128xf32> to vector<1x128xf32>
    %154 = vector.broadcast %153 : vector<1x128xf32> to vector<16x128xf32>
    %155 = arith.addf %151, %154 : vector<16x128xf32>
    %c3_111 = arith.constant 3 : index
    %c0_112 = arith.constant 0 : index
    %c0_113 = arith.constant 0 : index
    %156 = vector.load %arg4[%c3_111, %c0_112, %c0_113] : memref<4x128x128xbf16, #tpu.memory_space<vmem>>, vector<1x128x128xbf16>
    %157 = vector.shape_cast %156 : vector<1x128x128xbf16> to vector<128x128xbf16>
    %cst_114 = arith.constant dense<0.000000e+00> : vector<16x128xf32>
    %158 = tpu.matmul %1, %157, %cst_114 {dimension_numbers = #tpu.dot_dimension_numbers<[1], [0], [0], [1], [0, 0, 1, 1], [], []>} : vector<16x128xbf16>, vector<128x128xbf16>, vector<16x128xf32> -> vector<16x128xf32>
    %c3_115 = arith.constant 3 : index
    %c0_116 = arith.constant 0 : index
    %c0_117 = arith.constant 0 : index
    %159 = vector.load %arg7[%c3_115, %c0_116, %c0_117] : memref<4x1x128xf32, #tpu.memory_space<vmem>>, vector<1x1x128xf32>
    %160 = vector.shape_cast %159 : vector<1x1x128xf32> to vector<1x128xf32>
    %161 = vector.broadcast %160 : vector<1x128xf32> to vector<16x128xf32>
    %162 = arith.addf %158, %161 : vector<16x128xf32>
    %c3_118 = arith.constant 3 : index
    %c0_119 = arith.constant 0 : index
    %c0_120 = arith.constant 0 : index
    %163 = vector.load %arg5[%c3_118, %c0_119, %c0_120] : memref<4x128x128xbf16, #tpu.memory_space<vmem>>, vector<1x128x128xbf16>
    %164 = vector.shape_cast %163 : vector<1x128x128xbf16> to vector<128x128xbf16>
    %cst_121 = arith.constant dense<0.000000e+00> : vector<16x128xf32>
    %165 = tpu.matmul %3, %164, %cst_121 {dimension_numbers = #tpu.dot_dimension_numbers<[1], [0], [0], [1], [0, 0, 1, 1], [], []>} : vector<16x128xbf16>, vector<128x128xbf16>, vector<16x128xf32> -> vector<16x128xf32>
    %c3_122 = arith.constant 3 : index
    %c0_123 = arith.constant 0 : index
    %c0_124 = arith.constant 0 : index
    %166 = vector.load %arg8[%c3_122, %c0_123, %c0_124] : memref<4x1x128xf32, #tpu.memory_space<vmem>>, vector<1x1x128xf32>
    %167 = vector.shape_cast %166 : vector<1x1x128xf32> to vector<1x128xf32>
    %168 = vector.broadcast %167 : vector<1x128xf32> to vector<16x128xf32>
    %169 = arith.addf %165, %168 : vector<16x128xf32>
    %170 = arith.truncf %155 : vector<16x128xf32> to vector<16x128xbf16>
    %171 = arith.truncf %162 : vector<16x128xf32> to vector<16x128xbf16>
    %cst_125 = arith.constant dense<0.000000e+00> : vector<16x16xf32>
    %172 = tpu.matmul %170, %171, %cst_125 {dimension_numbers = #tpu.dot_dimension_numbers<[1], [1], [0], [0], [0, 0, 1, 0], [], []>} : vector<16x128xbf16>, vector<16x128xbf16>, vector<16x16xf32> -> vector<16x16xf32>
    %cst_126 = arith.constant 0.353553385 : f32
    %173 = vector.broadcast %cst_126 : f32 to vector<16x16xf32>
    %174 = arith.mulf %172, %173 : vector<16x16xf32>
    %cst_127 = arith.constant -1.000000e+30 : f32
    %175 = vector.broadcast %cst_127 : f32 to vector<16x16xf32>
    %176 = arith.select %6, %174, %175 : vector<16x16xi1>, vector<16x16xf32>
    %cst_128 = arith.constant dense<0xFF800000> : vector<16xf32>
    %177 = vector.multi_reduction <maximumf>, %176, %cst_128 [1] : vector<16x16xf32> to vector<16xf32>
    %178 = vector.shape_cast %177 : vector<16xf32> to vector<16x1xf32>
    %179 = vector.broadcast %178 : vector<16x1xf32> to vector<16x16xf32>
    %180 = arith.subf %176, %179 : vector<16x16xf32>
    %181 = math.exp %180 : vector<16x16xf32>
    %cst_129 = arith.constant dense<0.000000e+00> : vector<16xf32>
    %182 = vector.multi_reduction <add>, %181, %cst_129 [1] : vector<16x16xf32> to vector<16xf32>
    %183 = vector.shape_cast %182 : vector<16xf32> to vector<16x1xf32>
    %184 = tpu.reciprocal %183 {approx = true} : vector<16x1xf32> -> vector<16x1xf32>
    %185 = vector.broadcast %184 : vector<16x1xf32> to vector<16x16xf32>
    %186 = arith.mulf %181, %185 : vector<16x16xf32>
    %187 = arith.truncf %186 : vector<16x16xf32> to vector<16x16xbf16>
    %188 = arith.truncf %169 : vector<16x128xf32> to vector<16x128xbf16>
    %cst_130 = arith.constant dense<0.000000e+00> : vector<16x128xf32>
    %189 = tpu.matmul %187, %188, %cst_130 {dimension_numbers = #tpu.dot_dimension_numbers<[1], [0], [0], [1], [0, 0, 1, 1], [], []>} : vector<16x16xbf16>, vector<16x128xbf16>, vector<16x128xf32> -> vector<16x128xf32>
    %190 = arith.truncf %189 : vector<16x128xf32> to vector<16x128xbf16>
    %c3_131 = arith.constant 3 : index
    %c0_132 = arith.constant 0 : index
    %c0_133 = arith.constant 0 : index
    %191 = vector.load %arg9[%c3_131, %c0_132, %c0_133] : memref<4x128x128xbf16, #tpu.memory_space<vmem>>, vector<1x128x128xbf16>
    %192 = vector.shape_cast %191 : vector<1x128x128xbf16> to vector<128x128xbf16>
    %cst_134 = arith.constant dense<0.000000e+00> : vector<16x128xf32>
    %193 = tpu.matmul %190, %192, %cst_134 {dimension_numbers = #tpu.dot_dimension_numbers<[1], [0], [0], [1], [0, 0, 1, 1], [], []>} : vector<16x128xbf16>, vector<128x128xbf16>, vector<16x128xf32> -> vector<16x128xf32>
    %c0_135 = arith.constant 0 : index
    %c0_136 = arith.constant 0 : index
    %194 = vector.load %arg14[%c0_135, %c0_136] : memref<16x128xf32, #tpu.memory_space<vmem>>, vector<16x128xf32>
    %195 = arith.addf %194, %193 : vector<16x128xf32>
    %c0_137 = arith.constant 0 : index
    %c0_138 = arith.constant 0 : index
    %196 = vector.load %arg14[%c0_137, %c0_138] : memref<16x128xf32, #tpu.memory_space<vmem>>, vector<16x128xf32>
    tpu.vector_store %arg14[%c0_137, %c0_138], %195 {strides = array<i32>} : memref<16x128xf32, #tpu.memory_space<vmem>>, vector<16x128xf32>,
    %c0_139 = arith.constant 0 : index
    %c0_140 = arith.constant 0 : index
    %197 = vector.load %arg14[%c0_139, %c0_140] : memref<16x128xf32, #tpu.memory_space<vmem>>, vector<16x128xf32>
    %c0_141 = arith.constant 0 : index
    %c0_142 = arith.constant 0 : index
    %198 = vector.load %arg10[%c0_141, %c0_142] : memref<1x128xf32, #tpu.memory_space<vmem>>, vector<1x128xf32>
    %199 = vector.broadcast %198 : vector<1x128xf32> to vector<16x128xf32>
    %200 = arith.addf %197, %199 : vector<16x128xf32>
    %201 = arith.extf %3 : vector<16x128xbf16> to vector<16x128xf32>
    %202 = arith.addf %200, %201 : vector<16x128xf32>
    %c0_143 = arith.constant 0 : index
    %c0_144 = arith.constant 0 : index
    %203 = vector.load %arg11[%c0_143, %c0_144] : memref<1x128xf32, #tpu.memory_space<vmem>>, vector<1x128xf32>
    %c0_145 = arith.constant 0 : index
    %c0_146 = arith.constant 0 : index
    %204 = vector.load %arg12[%c0_145, %c0_146] : memref<1x128xf32, #tpu.memory_space<vmem>>, vector<1x128xf32>
    %cst_147 = arith.constant dense<0.000000e+00> : vector<16xf32>
    %205 = vector.multi_reduction <add>, %202, %cst_147 [1] : vector<16x128xf32> to vector<16xf32>
    %206 = vector.shape_cast %205 : vector<16xf32> to vector<16x1xf32>
    %cst_148 = arith.constant 3.125000e-02 : f32
    %207 = vector.broadcast %cst_148 : f32 to vector<16x1xf32>
    %208 = arith.mulf %206, %207 : vector<16x1xf32>
    %209 = vector.broadcast %208 : vector<16x1xf32> to vector<16x128xf32>
    %210 = arith.subf %202, %209 : vector<16x128xf32>
    %211 = tpu.iota {dimensions = array<i32: 1>} : vector<16x128xi32>
    %c32_i32 = arith.constant 32 : i32
    %212 = vector.broadcast %c32_i32 : i32 to vector<16x128xi32>
    %213 = arith.cmpi slt, %211, %212 : vector<16x128xi32>
    %cst_149 = arith.constant 0.000000e+00 : f32
    %214 = vector.broadcast %cst_149 : f32 to vector<16x128xf32>
    %215 = arith.select %213, %210, %214 : vector<16x128xi1>, vector<16x128xf32>
    %216 = arith.mulf %215, %215 : vector<16x128xf32>
    %cst_150 = arith.constant dense<0.000000e+00> : vector<16xf32>
    %217 = vector.multi_reduction <add>, %216, %cst_150 [1] : vector<16x128xf32> to vector<16xf32>
    %218 = vector.shape_cast %217 : vector<16xf32> to vector<16x1xf32>
    %cst_151 = arith.constant 3.125000e-02 : f32
    %219 = vector.broadcast %cst_151 : f32 to vector<16x1xf32>
    %220 = arith.mulf %218, %219 : vector<16x1xf32>
    %cst_152 = arith.constant 9.99999974E-6 : f32
    %221 = vector.broadcast %cst_152 : f32 to vector<16x1xf32>
    %222 = arith.addf %220, %221 : vector<16x1xf32>
    %223 = math.rsqrt %222 : vector<16x1xf32>
    %224 = vector.broadcast %223 : vector<16x1xf32> to vector<16x128xf32>
    %225 = arith.mulf %215, %224 : vector<16x128xf32>
    %226 = vector.broadcast %203 : vector<1x128xf32> to vector<16x128xf32>
    %227 = arith.mulf %225, %226 : vector<16x128xf32>
    %228 = vector.broadcast %204 : vector<1x128xf32> to vector<16x128xf32>
    %229 = arith.addf %227, %228 : vector<16x128xf32>
    %230 = arith.truncf %229 : vector<16x128xf32> to vector<16x128xbf16>
    %c0_153 = arith.constant 0 : index
    %c0_154 = arith.constant 0 : index
    %c0_155 = arith.constant 0 : index
    %231 = vector.load %arg13[%c0_153, %c0_154, %c0_155] : memref<1x16x128xbf16, #tpu.memory_space<vmem>>, vector<1x16x128xbf16>
    %232 = vector.shape_cast %231 : vector<1x16x128xbf16> to vector<16x128xbf16>
    %233 = vector.shape_cast %230 : vector<16x128xbf16> to vector<1x16x128xbf16>
    tpu.vector_store %arg13[%c0_153, %c0_154, %c0_155], %233 {strides = array<i32>} : memref<1x16x128xbf16, #tpu.memory_space<vmem>>, vector<1x16x128xbf16>,
    return
  }
  func.func @transform_0(%arg0: i32) -> (i32, i32, i32) {
    %c0_i32 = arith.constant 0 : i32
    %c0_i32_0 = arith.constant 0 : i32
    %c0_i32_1 = arith.constant 0 : i32
    return %arg0, %c0_i32, %c0_i32_0 : i32, i32, i32
  }
  func.func @transform_1(%arg0: i32) -> (i32, i32, i32) {
    %c0_i32 = arith.constant 0 : i32
    %c0_i32_0 = arith.constant 0 : i32
    %c0_i32_1 = arith.constant 0 : i32
    return %arg0, %c0_i32, %c0_i32_0 : i32, i32, i32
  }
  func.func @transform_2(%arg0: i32) -> (i32, i32, i32) {
    %c0_i32 = arith.constant 0 : i32
    %c0_i32_0 = arith.constant 0 : i32
    %c0_i32_1 = arith.constant 0 : i32
    %c0_i32_2 = arith.constant 0 : i32
    return %c0_i32, %c0_i32_0, %c0_i32_1 : i32, i32, i32
  }
  func.func @transform_3(%arg0: i32) -> (i32, i32, i32) {
    %c0_i32 = arith.constant 0 : i32
    %c0_i32_0 = arith.constant 0 : i32
    %c0_i32_1 = arith.constant 0 : i32
    %c0_i32_2 = arith.constant 0 : i32
    return %c0_i32, %c0_i32_0, %c0_i32_1 : i32, i32, i32
  }
  func.func @transform_4(%arg0: i32) -> (i32, i32, i32) {
    %c0_i32 = arith.constant 0 : i32
    %c0_i32_0 = arith.constant 0 : i32
    %c0_i32_1 = arith.constant 0 : i32
    %c0_i32_2 = arith.constant 0 : i32
    return %c0_i32, %c0_i32_0, %c0_i32_1 : i32, i32, i32
  }
  func.func @transform_5(%arg0: i32) -> (i32, i32, i32) {
    %c0_i32 = arith.constant 0 : i32
    %c0_i32_0 = arith.constant 0 : i32
    %c0_i32_1 = arith.constant 0 : i32
    %c0_i32_2 = arith.constant 0 : i32
    return %c0_i32, %c0_i32_0, %c0_i32_1 : i32, i32, i32
  }
  func.func @transform_6(%arg0: i32) -> (i32, i32, i32) {
    %c0_i32 = arith.constant 0 : i32
    %c0_i32_0 = arith.constant 0 : i32
    %c0_i32_1 = arith.constant 0 : i32
    %c0_i32_2 = arith.constant 0 : i32
    return %c0_i32, %c0_i32_0, %c0_i32_1 : i32, i32, i32
  }
  func.func @transform_7(%arg0: i32) -> (i32, i32, i32) {
    %c0_i32 = arith.constant 0 : i32
    %c0_i32_0 = arith.constant 0 : i32
    %c0_i32_1 = arith.constant 0 : i32
    %c0_i32_2 = arith.constant 0 : i32
    return %c0_i32, %c0_i32_0, %c0_i32_1 : i32, i32, i32
  }
  func.func @transform_8(%arg0: i32) -> (i32, i32, i32) {
    %c0_i32 = arith.constant 0 : i32
    %c0_i32_0 = arith.constant 0 : i32
    %c0_i32_1 = arith.constant 0 : i32
    %c0_i32_2 = arith.constant 0 : i32
    return %c0_i32, %c0_i32_0, %c0_i32_1 : i32, i32, i32
  }
  func.func @transform_9(%arg0: i32) -> (i32, i32) {
    %c0_i32 = arith.constant 0 : i32
    %c0_i32_0 = arith.constant 0 : i32
    %c0_i32_1 = arith.constant 0 : i32
    return %c0_i32, %c0_i32_0 : i32, i32
  }
  func.func @transform_10(%arg0: i32) -> (i32, i32) {
    %c0_i32 = arith.constant 0 : i32
    %c0_i32_0 = arith.constant 0 : i32
    %c0_i32_1 = arith.constant 0 : i32
    return %c0_i32, %c0_i32_0 : i32, i32
  }
  func.func @transform_11(%arg0: i32) -> (i32, i32) {
    %c0_i32 = arith.constant 0 : i32
    %c0_i32_0 = arith.constant 0 : i32
    %c0_i32_1 = arith.constant 0 : i32
    return %c0_i32, %c0_i32_0 : i32, i32
  }
  func.func @transform_12(%arg0: i32) -> (i32, i32, i32) {
    %c0_i32 = arith.constant 0 : i32
    %c0_i32_0 = arith.constant 0 : i32
    %c0_i32_1 = arith.constant 0 : i32
    return %arg0, %c0_i32, %c0_i32_0 : i32, i32, i32
  }
}

module attributes {stable_mosaic.version = 11 : i64} {
  func.func @_matmul_kernel(%arg0: i32, %arg1: i32, %arg2: i32, %arg3: memref<16x128xbf16, #tpu.memory_space<vmem>>, %arg4: memref<128x128xbf16, #tpu.memory_space<vmem>>, %arg5: memref<1x128xf32, #tpu.memory_space<vmem>>, %arg6: memref<16x128xbf16, #tpu.memory_space<vmem>>, %arg7: memref<16x128xf32, #tpu.memory_space<vmem>>) attributes {dimension_semantics = [#tpu.dimension_semantics<parallel>, #tpu.dimension_semantics<parallel>, #tpu.dimension_semantics<arbitrary>], iteration_bounds = array<i64: 1, 1, 1>, scalar_prefetch = 0 : i64, scratch_operands = 1 : i64, tpu.core_type = #tpu.core_type<tc>, window_params = [{transform_indices = @transform_0, window_bounds = array<i64: 16, 128>}, {transform_indices = @transform_1, window_bounds = array<i64: 128, 128>}, {transform_indices = @transform_2, window_bounds = array<i64: 1, 128>}, {transform_indices = @transform_3, window_bounds = array<i64: 16, 128>}]} {
    %c0_i32 = arith.constant 0 : i32
    %0 = arith.cmpi eq, %arg2, %c0_i32 : i32
    %1 = arith.extui %0 : i1 to i32
    %c0_i32_0 = arith.constant 0 : i32
    %2 = arith.cmpi ne, %1, %c0_i32_0 : i32
    scf.if %2 {
      %cst_10 = arith.constant 0.000000e+00 : f32
      %12 = vector.broadcast %cst_10 : f32 to vector<16x128xf32>
      %c0_11 = arith.constant 0 : index
      %c0_12 = arith.constant 0 : index
      %13 = vector.load %arg7[%c0_11, %c0_12] : memref<16x128xf32, #tpu.memory_space<vmem>>, vector<16x128xf32>
      tpu.vector_store %arg7[%c0_11, %c0_12], %12 {strides = array<i32>} : memref<16x128xf32, #tpu.memory_space<vmem>>, vector<16x128xf32>,
    } else {
    }
    %c0 = arith.constant 0 : index
    %c0_1 = arith.constant 0 : index
    %3 = vector.load %arg7[%c0, %c0_1] : memref<16x128xf32, #tpu.memory_space<vmem>>, vector<16x128xf32>
    %c0_2 = arith.constant 0 : index
    %c0_3 = arith.constant 0 : index
    %4 = vector.load %arg3[%c0_2, %c0_3] : memref<16x128xbf16, #tpu.memory_space<vmem>>, vector<16x128xbf16>
    %c0_4 = arith.constant 0 : index
    %c0_5 = arith.constant 0 : index
    %5 = vector.load %arg4[%c0_4, %c0_5] : memref<128x128xbf16, #tpu.memory_space<vmem>>, vector<128x128xbf16>
    %cst = arith.constant dense<0.000000e+00> : vector<16x128xf32>
    %6 = tpu.matmul %4, %5, %cst {dimension_numbers = #tpu.dot_dimension_numbers<[1], [0], [0], [1], [0, 0, 1, 1], [], []>} : vector<16x128xbf16>, vector<128x128xbf16>, vector<16x128xf32> -> vector<16x128xf32>
    %7 = arith.addf %3, %6 : vector<16x128xf32>
    %c0_6 = arith.constant 0 : index
    %c0_7 = arith.constant 0 : index
    %8 = vector.load %arg7[%c0_6, %c0_7] : memref<16x128xf32, #tpu.memory_space<vmem>>, vector<16x128xf32>
    tpu.vector_store %arg7[%c0_6, %c0_7], %7 {strides = array<i32>} : memref<16x128xf32, #tpu.memory_space<vmem>>, vector<16x128xf32>,
    %c0_i32_8 = arith.constant 0 : i32
    %9 = arith.cmpi eq, %arg2, %c0_i32_8 : i32
    %10 = arith.extui %9 : i1 to i32
    %c0_i32_9 = arith.constant 0 : i32
    %11 = arith.cmpi ne, %10, %c0_i32_9 : i32
    scf.if %11 {
      %c0_10 = arith.constant 0 : index
      %c0_11 = arith.constant 0 : index
      %12 = vector.load %arg7[%c0_10, %c0_11] : memref<16x128xf32, #tpu.memory_space<vmem>>, vector<16x128xf32>
      %c0_12 = arith.constant 0 : index
      %c0_13 = arith.constant 0 : index
      %13 = vector.load %arg5[%c0_12, %c0_13] : memref<1x128xf32, #tpu.memory_space<vmem>>, vector<1x128xf32>
      %14 = vector.broadcast %13 : vector<1x128xf32> to vector<16x128xf32>
      %15 = arith.addf %12, %14 : vector<16x128xf32>
      %16 = arith.truncf %15 : vector<16x128xf32> to vector<16x128xbf16>
      %c0_14 = arith.constant 0 : index
      %c0_15 = arith.constant 0 : index
      %17 = vector.load %arg6[%c0_14, %c0_15] : memref<16x128xbf16, #tpu.memory_space<vmem>>, vector<16x128xbf16>
      tpu.vector_store %arg6[%c0_14, %c0_15], %16 {strides = array<i32>} : memref<16x128xbf16, #tpu.memory_space<vmem>>, vector<16x128xbf16>,
    } else {
    }
    return
  }
  func.func @transform_0(%arg0: i32, %arg1: i32, %arg2: i32) -> (i32, i32) {
    %c0_i32 = arith.constant 0 : i32
    return %arg0, %arg2 : i32, i32
  }
  func.func @transform_1(%arg0: i32, %arg1: i32, %arg2: i32) -> (i32, i32) {
    %c0_i32 = arith.constant 0 : i32
    return %arg2, %arg1 : i32, i32
  }
  func.func @transform_2(%arg0: i32, %arg1: i32, %arg2: i32) -> (i32, i32) {
    %c0_i32 = arith.constant 0 : i32
    %c0_i32_0 = arith.constant 0 : i32
    return %c0_i32, %arg1 : i32, i32
  }
  func.func @transform_3(%arg0: i32, %arg1: i32, %arg2: i32) -> (i32, i32) {
    %c0_i32 = arith.constant 0 : i32
    return %arg0, %arg1 : i32, i32
  }
}

module attributes {stable_mosaic.version = 11 : i64} {
  func.func @_matmul_kernel(%arg0: i32, %arg1: i32, %arg2: i32, %arg3: memref<80x128xbf16, #tpu.memory_space<vmem>>, %arg4: memref<128x128xbf16, #tpu.memory_space<vmem>>, %arg5: memref<1x128xf32, #tpu.memory_space<vmem>>, %arg6: memref<80x128xbf16, #tpu.memory_space<vmem>>, %arg7: memref<80x128xf32, #tpu.memory_space<vmem>>) attributes {dimension_semantics = [#tpu.dimension_semantics<parallel>, #tpu.dimension_semantics<parallel>, #tpu.dimension_semantics<arbitrary>], iteration_bounds = array<i64: 2, 1, 1>, scalar_prefetch = 0 : i64, scratch_operands = 1 : i64, tpu.core_type = #tpu.core_type<tc>, window_params = [{transform_indices = @transform_0, window_bounds = array<i64: 80, 128>}, {transform_indices = @transform_1, window_bounds = array<i64: 128, 128>}, {transform_indices = @transform_2, window_bounds = array<i64: 1, 128>}, {transform_indices = @transform_3, window_bounds = array<i64: 80, 128>}]} {
    %c0_i32 = arith.constant 0 : i32
    %0 = arith.cmpi eq, %arg2, %c0_i32 : i32
    %1 = arith.extui %0 : i1 to i32
    %c0_i32_0 = arith.constant 0 : i32
    %2 = arith.cmpi ne, %1, %c0_i32_0 : i32
    scf.if %2 {
      %cst_10 = arith.constant 0.000000e+00 : f32
      %12 = vector.broadcast %cst_10 : f32 to vector<80x128xf32>
      %c0_11 = arith.constant 0 : index
      %c0_12 = arith.constant 0 : index
      %13 = vector.load %arg7[%c0_11, %c0_12] : memref<80x128xf32, #tpu.memory_space<vmem>>, vector<80x128xf32>
      tpu.vector_store %arg7[%c0_11, %c0_12], %12 {strides = array<i32>} : memref<80x128xf32, #tpu.memory_space<vmem>>, vector<80x128xf32>,
    } else {
    }
    %c0 = arith.constant 0 : index
    %c0_1 = arith.constant 0 : index
    %3 = vector.load %arg7[%c0, %c0_1] : memref<80x128xf32, #tpu.memory_space<vmem>>, vector<80x128xf32>
    %c0_2 = arith.constant 0 : index
    %c0_3 = arith.constant 0 : index
    %4 = vector.load %arg3[%c0_2, %c0_3] : memref<80x128xbf16, #tpu.memory_space<vmem>>, vector<80x128xbf16>
    %c0_4 = arith.constant 0 : index
    %c0_5 = arith.constant 0 : index
    %5 = vector.load %arg4[%c0_4, %c0_5] : memref<128x128xbf16, #tpu.memory_space<vmem>>, vector<128x128xbf16>
    %cst = arith.constant dense<0.000000e+00> : vector<80x128xf32>
    %6 = tpu.matmul %4, %5, %cst {dimension_numbers = #tpu.dot_dimension_numbers<[1], [0], [0], [1], [0, 0, 1, 1], [], []>} : vector<80x128xbf16>, vector<128x128xbf16>, vector<80x128xf32> -> vector<80x128xf32>
    %7 = arith.addf %3, %6 : vector<80x128xf32>
    %c0_6 = arith.constant 0 : index
    %c0_7 = arith.constant 0 : index
    %8 = vector.load %arg7[%c0_6, %c0_7] : memref<80x128xf32, #tpu.memory_space<vmem>>, vector<80x128xf32>
    tpu.vector_store %arg7[%c0_6, %c0_7], %7 {strides = array<i32>} : memref<80x128xf32, #tpu.memory_space<vmem>>, vector<80x128xf32>,
    %c0_i32_8 = arith.constant 0 : i32
    %9 = arith.cmpi eq, %arg2, %c0_i32_8 : i32
    %10 = arith.extui %9 : i1 to i32
    %c0_i32_9 = arith.constant 0 : i32
    %11 = arith.cmpi ne, %10, %c0_i32_9 : i32
    scf.if %11 {
      %c0_10 = arith.constant 0 : index
      %c0_11 = arith.constant 0 : index
      %12 = vector.load %arg7[%c0_10, %c0_11] : memref<80x128xf32, #tpu.memory_space<vmem>>, vector<80x128xf32>
      %c0_12 = arith.constant 0 : index
      %c0_13 = arith.constant 0 : index
      %13 = vector.load %arg5[%c0_12, %c0_13] : memref<1x128xf32, #tpu.memory_space<vmem>>, vector<1x128xf32>
      %14 = vector.broadcast %13 : vector<1x128xf32> to vector<80x128xf32>
      %15 = arith.addf %12, %14 : vector<80x128xf32>
      %16 = arith.truncf %15 : vector<80x128xf32> to vector<80x128xbf16>
      %c0_14 = arith.constant 0 : index
      %c0_15 = arith.constant 0 : index
      %17 = vector.load %arg6[%c0_14, %c0_15] : memref<80x128xbf16, #tpu.memory_space<vmem>>, vector<80x128xbf16>
      tpu.vector_store %arg6[%c0_14, %c0_15], %16 {strides = array<i32>} : memref<80x128xbf16, #tpu.memory_space<vmem>>, vector<80x128xbf16>,
    } else {
    }
    return
  }
  func.func @transform_0(%arg0: i32, %arg1: i32, %arg2: i32) -> (i32, i32) {
    %c0_i32 = arith.constant 0 : i32
    return %arg0, %arg2 : i32, i32
  }
  func.func @transform_1(%arg0: i32, %arg1: i32, %arg2: i32) -> (i32, i32) {
    %c0_i32 = arith.constant 0 : i32
    return %arg2, %arg1 : i32, i32
  }
  func.func @transform_2(%arg0: i32, %arg1: i32, %arg2: i32) -> (i32, i32) {
    %c0_i32 = arith.constant 0 : i32
    %c0_i32_0 = arith.constant 0 : i32
    return %c0_i32, %arg1 : i32, i32
  }
  func.func @transform_3(%arg0: i32, %arg1: i32, %arg2: i32) -> (i32, i32) {
    %c0_i32 = arith.constant 0 : i32
    return %arg0, %arg1 : i32, i32
  }
}

module attributes {stable_mosaic.version = 11 : i64} {
  func.func @_linear_res_ln_kernel(%arg0: i32, %arg1: i32, %arg2: memref<16x128xbf16, #tpu.memory_space<vmem>>, %arg3: memref<128x128xbf16, #tpu.memory_space<vmem>>, %arg4: memref<1x128xf32, #tpu.memory_space<vmem>>, %arg5: memref<16x128xbf16, #tpu.memory_space<vmem>>, %arg6: memref<1x128xf32, #tpu.memory_space<vmem>>, %arg7: memref<1x128xf32, #tpu.memory_space<vmem>>, %arg8: memref<16x128xbf16, #tpu.memory_space<vmem>>, %arg9: memref<16x128xf32, #tpu.memory_space<vmem>>) attributes {dimension_semantics = [#tpu.dimension_semantics<parallel>, #tpu.dimension_semantics<arbitrary>], iteration_bounds = array<i64: 1, 1>, scalar_prefetch = 0 : i64, scratch_operands = 1 : i64, tpu.core_type = #tpu.core_type<tc>, window_params = [{transform_indices = @transform_0, window_bounds = array<i64: 16, 128>}, {transform_indices = @transform_1, window_bounds = array<i64: 128, 128>}, {pipeline_mode = #tpu.pipeline_mode<synchronous>, transform_indices = @transform_2, window_bounds = array<i64: 1, 128>}, {transform_indices = @transform_3, window_bounds = array<i64: 16, 128>}, {pipeline_mode = #tpu.pipeline_mode<synchronous>, transform_indices = @transform_4, window_bounds = array<i64: 1, 128>}, {pipeline_mode = #tpu.pipeline_mode<synchronous>, transform_indices = @transform_5, window_bounds = array<i64: 1, 128>}, {transform_indices = @transform_6, window_bounds = array<i64: 16, 128>}]} {
    %c0_i32 = arith.constant 0 : i32
    %0 = arith.cmpi eq, %arg1, %c0_i32 : i32
    %1 = arith.extui %0 : i1 to i32
    %c0_i32_0 = arith.constant 0 : i32
    %2 = arith.cmpi ne, %1, %c0_i32_0 : i32
    scf.if %2 {
      %cst_10 = arith.constant 0.000000e+00 : f32
      %12 = vector.broadcast %cst_10 : f32 to vector<16x128xf32>
      %c0_11 = arith.constant 0 : index
      %c0_12 = arith.constant 0 : index
      %13 = vector.load %arg9[%c0_11, %c0_12] : memref<16x128xf32, #tpu.memory_space<vmem>>, vector<16x128xf32>
      tpu.vector_store %arg9[%c0_11, %c0_12], %12 {strides = array<i32>} : memref<16x128xf32, #tpu.memory_space<vmem>>, vector<16x128xf32>,
    } else {
    }
    %c0 = arith.constant 0 : index
    %c0_1 = arith.constant 0 : index
    %3 = vector.load %arg9[%c0, %c0_1] : memref<16x128xf32, #tpu.memory_space<vmem>>, vector<16x128xf32>
    %c0_2 = arith.constant 0 : index
    %c0_3 = arith.constant 0 : index
    %4 = vector.load %arg2[%c0_2, %c0_3] : memref<16x128xbf16, #tpu.memory_space<vmem>>, vector<16x128xbf16>
    %c0_4 = arith.constant 0 : index
    %c0_5 = arith.constant 0 : index
    %5 = vector.load %arg3[%c0_4, %c0_5] : memref<128x128xbf16, #tpu.memory_space<vmem>>, vector<128x128xbf16>
    %cst = arith.constant dense<0.000000e+00> : vector<16x128xf32>
    %6 = tpu.matmul %4, %5, %cst {dimension_numbers = #tpu.dot_dimension_numbers<[1], [0], [0], [1], [0, 0, 1, 1], [], []>} : vector<16x128xbf16>, vector<128x128xbf16>, vector<16x128xf32> -> vector<16x128xf32>
    %7 = arith.addf %3, %6 : vector<16x128xf32>
    %c0_6 = arith.constant 0 : index
    %c0_7 = arith.constant 0 : index
    %8 = vector.load %arg9[%c0_6, %c0_7] : memref<16x128xf32, #tpu.memory_space<vmem>>, vector<16x128xf32>
    tpu.vector_store %arg9[%c0_6, %c0_7], %7 {strides = array<i32>} : memref<16x128xf32, #tpu.memory_space<vmem>>, vector<16x128xf32>,
    %c0_i32_8 = arith.constant 0 : i32
    %9 = arith.cmpi eq, %arg1, %c0_i32_8 : i32
    %10 = arith.extui %9 : i1 to i32
    %c0_i32_9 = arith.constant 0 : i32
    %11 = arith.cmpi ne, %10, %c0_i32_9 : i32
    scf.if %11 {
      %c0_10 = arith.constant 0 : index
      %c0_11 = arith.constant 0 : index
      %12 = vector.load %arg9[%c0_10, %c0_11] : memref<16x128xf32, #tpu.memory_space<vmem>>, vector<16x128xf32>
      %c0_12 = arith.constant 0 : index
      %c0_13 = arith.constant 0 : index
      %13 = vector.load %arg4[%c0_12, %c0_13] : memref<1x128xf32, #tpu.memory_space<vmem>>, vector<1x128xf32>
      %14 = vector.broadcast %13 : vector<1x128xf32> to vector<16x128xf32>
      %15 = arith.addf %12, %14 : vector<16x128xf32>
      %c0_14 = arith.constant 0 : index
      %c0_15 = arith.constant 0 : index
      %16 = vector.load %arg5[%c0_14, %c0_15] : memref<16x128xbf16, #tpu.memory_space<vmem>>, vector<16x128xbf16>
      %17 = arith.extf %16 : vector<16x128xbf16> to vector<16x128xf32>
      %18 = arith.addf %15, %17 : vector<16x128xf32>
      %c0_16 = arith.constant 0 : index
      %c0_17 = arith.constant 0 : index
      %19 = vector.load %arg6[%c0_16, %c0_17] : memref<1x128xf32, #tpu.memory_space<vmem>>, vector<1x128xf32>
      %c0_18 = arith.constant 0 : index
      %c0_19 = arith.constant 0 : index
      %20 = vector.load %arg7[%c0_18, %c0_19] : memref<1x128xf32, #tpu.memory_space<vmem>>, vector<1x128xf32>
      %cst_20 = arith.constant dense<0.000000e+00> : vector<16xf32>
      %21 = vector.multi_reduction <add>, %18, %cst_20 [1] : vector<16x128xf32> to vector<16xf32>
      %22 = vector.shape_cast %21 : vector<16xf32> to vector<16x1xf32>
      %cst_21 = arith.constant 3.125000e-02 : f32
      %23 = vector.broadcast %cst_21 : f32 to vector<16x1xf32>
      %24 = arith.mulf %22, %23 : vector<16x1xf32>
      %25 = vector.broadcast %24 : vector<16x1xf32> to vector<16x128xf32>
      %26 = arith.subf %18, %25 : vector<16x128xf32>
      %27 = tpu.iota {dimensions = array<i32: 1>} : vector<16x128xi32>
      %c32_i32 = arith.constant 32 : i32
      %28 = vector.broadcast %c32_i32 : i32 to vector<16x128xi32>
      %29 = arith.cmpi slt, %27, %28 : vector<16x128xi32>
      %cst_22 = arith.constant 0.000000e+00 : f32
      %30 = vector.broadcast %cst_22 : f32 to vector<16x128xf32>
      %31 = arith.select %29, %26, %30 : vector<16x128xi1>, vector<16x128xf32>
      %32 = arith.mulf %31, %31 : vector<16x128xf32>
      %cst_23 = arith.constant dense<0.000000e+00> : vector<16xf32>
      %33 = vector.multi_reduction <add>, %32, %cst_23 [1] : vector<16x128xf32> to vector<16xf32>
      %34 = vector.shape_cast %33 : vector<16xf32> to vector<16x1xf32>
      %cst_24 = arith.constant 3.125000e-02 : f32
      %35 = vector.broadcast %cst_24 : f32 to vector<16x1xf32>
      %36 = arith.mulf %34, %35 : vector<16x1xf32>
      %cst_25 = arith.constant 9.99999974E-6 : f32
      %37 = vector.broadcast %cst_25 : f32 to vector<16x1xf32>
      %38 = arith.addf %36, %37 : vector<16x1xf32>
      %39 = math.rsqrt %38 : vector<16x1xf32>
      %40 = vector.broadcast %39 : vector<16x1xf32> to vector<16x128xf32>
      %41 = arith.mulf %31, %40 : vector<16x128xf32>
      %42 = vector.broadcast %19 : vector<1x128xf32> to vector<16x128xf32>
      %43 = arith.mulf %41, %42 : vector<16x128xf32>
      %44 = vector.broadcast %20 : vector<1x128xf32> to vector<16x128xf32>
      %45 = arith.addf %43, %44 : vector<16x128xf32>
      %46 = arith.truncf %45 : vector<16x128xf32> to vector<16x128xbf16>
      %c0_26 = arith.constant 0 : index
      %c0_27 = arith.constant 0 : index
      %47 = vector.load %arg8[%c0_26, %c0_27] : memref<16x128xbf16, #tpu.memory_space<vmem>>, vector<16x128xbf16>
      tpu.vector_store %arg8[%c0_26, %c0_27], %46 {strides = array<i32>} : memref<16x128xbf16, #tpu.memory_space<vmem>>, vector<16x128xbf16>,
    } else {
    }
    return
  }
  func.func @transform_0(%arg0: i32, %arg1: i32) -> (i32, i32) {
    %c0_i32 = arith.constant 0 : i32
    return %arg0, %arg1 : i32, i32
  }
  func.func @transform_1(%arg0: i32, %arg1: i32) -> (i32, i32) {
    %c0_i32 = arith.constant 0 : i32
    %c0_i32_0 = arith.constant 0 : i32
    return %arg1, %c0_i32 : i32, i32
  }
  func.func @transform_2(%arg0: i32, %arg1: i32) -> (i32, i32) {
    %c0_i32 = arith.constant 0 : i32
    %c0_i32_0 = arith.constant 0 : i32
    %c0_i32_1 = arith.constant 0 : i32
    return %c0_i32, %c0_i32_0 : i32, i32
  }
  func.func @transform_3(%arg0: i32, %arg1: i32) -> (i32, i32) {
    %c0_i32 = arith.constant 0 : i32
    %c0_i32_0 = arith.constant 0 : i32
    return %arg0, %c0_i32 : i32, i32
  }
  func.func @transform_4(%arg0: i32, %arg1: i32) -> (i32, i32) {
    %c0_i32 = arith.constant 0 : i32
    %c0_i32_0 = arith.constant 0 : i32
    %c0_i32_1 = arith.constant 0 : i32
    return %c0_i32, %c0_i32_0 : i32, i32
  }
  func.func @transform_5(%arg0: i32, %arg1: i32) -> (i32, i32) {
    %c0_i32 = arith.constant 0 : i32
    %c0_i32_0 = arith.constant 0 : i32
    %c0_i32_1 = arith.constant 0 : i32
    return %c0_i32, %c0_i32_0 : i32, i32
  }
  func.func @transform_6(%arg0: i32, %arg1: i32) -> (i32, i32) {
    %c0_i32 = arith.constant 0 : i32
    %c0_i32_0 = arith.constant 0 : i32
    return %arg0, %c0_i32 : i32, i32
  }
}

module attributes {stable_mosaic.version = 11 : i64} {
  func.func @_ffn_kernel(%arg0: i32, %arg1: i32, %arg2: memref<16x128xbf16, #tpu.memory_space<vmem>>, %arg3: memref<128x128xbf16, #tpu.memory_space<vmem>>, %arg4: memref<1x128xf32, #tpu.memory_space<vmem>>, %arg5: memref<128x128xbf16, #tpu.memory_space<vmem>>, %arg6: memref<1x128xf32, #tpu.memory_space<vmem>>, %arg7: memref<1x128xf32, #tpu.memory_space<vmem>>, %arg8: memref<1x128xf32, #tpu.memory_space<vmem>>, %arg9: memref<16x128xbf16, #tpu.memory_space<vmem>>, %arg10: memref<16x128xf32, #tpu.memory_space<vmem>>) attributes {dimension_semantics = [#tpu.dimension_semantics<parallel>, #tpu.dimension_semantics<arbitrary>], iteration_bounds = array<i64: 1, 1>, scalar_prefetch = 0 : i64, scratch_operands = 1 : i64, tpu.core_type = #tpu.core_type<tc>, window_params = [{transform_indices = @transform_0, window_bounds = array<i64: 16, 128>}, {transform_indices = @transform_1, window_bounds = array<i64: 128, 128>}, {transform_indices = @transform_2, window_bounds = array<i64: 1, 128>}, {transform_indices = @transform_3, window_bounds = array<i64: 128, 128>}, {pipeline_mode = #tpu.pipeline_mode<synchronous>, transform_indices = @transform_4, window_bounds = array<i64: 1, 128>}, {pipeline_mode = #tpu.pipeline_mode<synchronous>, transform_indices = @transform_5, window_bounds = array<i64: 1, 128>}, {pipeline_mode = #tpu.pipeline_mode<synchronous>, transform_indices = @transform_6, window_bounds = array<i64: 1, 128>}, {transform_indices = @transform_7, window_bounds = array<i64: 16, 128>}]} {
    %c0_i32 = arith.constant 0 : i32
    %0 = arith.cmpi eq, %arg1, %c0_i32 : i32
    %1 = arith.extui %0 : i1 to i32
    %c0_i32_0 = arith.constant 0 : i32
    %2 = arith.cmpi ne, %1, %c0_i32_0 : i32
    scf.if %2 {
      %cst_16 = arith.constant 0.000000e+00 : f32
      %20 = vector.broadcast %cst_16 : f32 to vector<16x128xf32>
      %c0_17 = arith.constant 0 : index
      %c0_18 = arith.constant 0 : index
      %21 = vector.load %arg10[%c0_17, %c0_18] : memref<16x128xf32, #tpu.memory_space<vmem>>, vector<16x128xf32>
      tpu.vector_store %arg10[%c0_17, %c0_18], %20 {strides = array<i32>} : memref<16x128xf32, #tpu.memory_space<vmem>>, vector<16x128xf32>,
    } else {
    }
    %c0 = arith.constant 0 : index
    %c0_1 = arith.constant 0 : index
    %3 = vector.load %arg2[%c0, %c0_1] : memref<16x128xbf16, #tpu.memory_space<vmem>>, vector<16x128xbf16>
    %c0_2 = arith.constant 0 : index
    %c0_3 = arith.constant 0 : index
    %4 = vector.load %arg3[%c0_2, %c0_3] : memref<128x128xbf16, #tpu.memory_space<vmem>>, vector<128x128xbf16>
    %cst = arith.constant dense<0.000000e+00> : vector<16x128xf32>
    %5 = tpu.matmul %3, %4, %cst {dimension_numbers = #tpu.dot_dimension_numbers<[1], [0], [0], [1], [0, 0, 1, 1], [], []>} : vector<16x128xbf16>, vector<128x128xbf16>, vector<16x128xf32> -> vector<16x128xf32>
    %c0_4 = arith.constant 0 : index
    %c0_5 = arith.constant 0 : index
    %6 = vector.load %arg4[%c0_4, %c0_5] : memref<1x128xf32, #tpu.memory_space<vmem>>, vector<1x128xf32>
    %7 = vector.broadcast %6 : vector<1x128xf32> to vector<16x128xf32>
    %8 = arith.addf %5, %7 : vector<16x128xf32>
    %cst_6 = arith.constant 0.000000e+00 : f32
    %9 = vector.broadcast %cst_6 : f32 to vector<16x128xf32>
    %10 = arith.maximumf %8, %9 : vector<16x128xf32>
    %c0_7 = arith.constant 0 : index
    %c0_8 = arith.constant 0 : index
    %11 = vector.load %arg10[%c0_7, %c0_8] : memref<16x128xf32, #tpu.memory_space<vmem>>, vector<16x128xf32>
    %12 = arith.truncf %10 : vector<16x128xf32> to vector<16x128xbf16>
    %c0_9 = arith.constant 0 : index
    %c0_10 = arith.constant 0 : index
    %13 = vector.load %arg5[%c0_9, %c0_10] : memref<128x128xbf16, #tpu.memory_space<vmem>>, vector<128x128xbf16>
    %cst_11 = arith.constant dense<0.000000e+00> : vector<16x128xf32>
    %14 = tpu.matmul %12, %13, %cst_11 {dimension_numbers = #tpu.dot_dimension_numbers<[1], [0], [0], [1], [0, 0, 1, 1], [], []>} : vector<16x128xbf16>, vector<128x128xbf16>, vector<16x128xf32> -> vector<16x128xf32>
    %15 = arith.addf %11, %14 : vector<16x128xf32>
    %c0_12 = arith.constant 0 : index
    %c0_13 = arith.constant 0 : index
    %16 = vector.load %arg10[%c0_12, %c0_13] : memref<16x128xf32, #tpu.memory_space<vmem>>, vector<16x128xf32>
    tpu.vector_store %arg10[%c0_12, %c0_13], %15 {strides = array<i32>} : memref<16x128xf32, #tpu.memory_space<vmem>>, vector<16x128xf32>,
    %c0_i32_14 = arith.constant 0 : i32
    %17 = arith.cmpi eq, %arg1, %c0_i32_14 : i32
    %18 = arith.extui %17 : i1 to i32
    %c0_i32_15 = arith.constant 0 : i32
    %19 = arith.cmpi ne, %18, %c0_i32_15 : i32
    scf.if %19 {
      %c0_16 = arith.constant 0 : index
      %c0_17 = arith.constant 0 : index
      %20 = vector.load %arg10[%c0_16, %c0_17] : memref<16x128xf32, #tpu.memory_space<vmem>>, vector<16x128xf32>
      %c0_18 = arith.constant 0 : index
      %c0_19 = arith.constant 0 : index
      %21 = vector.load %arg6[%c0_18, %c0_19] : memref<1x128xf32, #tpu.memory_space<vmem>>, vector<1x128xf32>
      %22 = vector.broadcast %21 : vector<1x128xf32> to vector<16x128xf32>
      %23 = arith.addf %20, %22 : vector<16x128xf32>
      %c0_20 = arith.constant 0 : index
      %c0_21 = arith.constant 0 : index
      %24 = vector.load %arg2[%c0_20, %c0_21] : memref<16x128xbf16, #tpu.memory_space<vmem>>, vector<16x128xbf16>
      %25 = arith.extf %24 : vector<16x128xbf16> to vector<16x128xf32>
      %26 = arith.addf %23, %25 : vector<16x128xf32>
      %c0_22 = arith.constant 0 : index
      %c0_23 = arith.constant 0 : index
      %27 = vector.load %arg7[%c0_22, %c0_23] : memref<1x128xf32, #tpu.memory_space<vmem>>, vector<1x128xf32>
      %c0_24 = arith.constant 0 : index
      %c0_25 = arith.constant 0 : index
      %28 = vector.load %arg8[%c0_24, %c0_25] : memref<1x128xf32, #tpu.memory_space<vmem>>, vector<1x128xf32>
      %cst_26 = arith.constant dense<0.000000e+00> : vector<16xf32>
      %29 = vector.multi_reduction <add>, %26, %cst_26 [1] : vector<16x128xf32> to vector<16xf32>
      %30 = vector.shape_cast %29 : vector<16xf32> to vector<16x1xf32>
      %cst_27 = arith.constant 3.125000e-02 : f32
      %31 = vector.broadcast %cst_27 : f32 to vector<16x1xf32>
      %32 = arith.mulf %30, %31 : vector<16x1xf32>
      %33 = vector.broadcast %32 : vector<16x1xf32> to vector<16x128xf32>
      %34 = arith.subf %26, %33 : vector<16x128xf32>
      %35 = tpu.iota {dimensions = array<i32: 1>} : vector<16x128xi32>
      %c32_i32 = arith.constant 32 : i32
      %36 = vector.broadcast %c32_i32 : i32 to vector<16x128xi32>
      %37 = arith.cmpi slt, %35, %36 : vector<16x128xi32>
      %cst_28 = arith.constant 0.000000e+00 : f32
      %38 = vector.broadcast %cst_28 : f32 to vector<16x128xf32>
      %39 = arith.select %37, %34, %38 : vector<16x128xi1>, vector<16x128xf32>
      %40 = arith.mulf %39, %39 : vector<16x128xf32>
      %cst_29 = arith.constant dense<0.000000e+00> : vector<16xf32>
      %41 = vector.multi_reduction <add>, %40, %cst_29 [1] : vector<16x128xf32> to vector<16xf32>
      %42 = vector.shape_cast %41 : vector<16xf32> to vector<16x1xf32>
      %cst_30 = arith.constant 3.125000e-02 : f32
      %43 = vector.broadcast %cst_30 : f32 to vector<16x1xf32>
      %44 = arith.mulf %42, %43 : vector<16x1xf32>
      %cst_31 = arith.constant 9.99999974E-6 : f32
      %45 = vector.broadcast %cst_31 : f32 to vector<16x1xf32>
      %46 = arith.addf %44, %45 : vector<16x1xf32>
      %47 = math.rsqrt %46 : vector<16x1xf32>
      %48 = vector.broadcast %47 : vector<16x1xf32> to vector<16x128xf32>
      %49 = arith.mulf %39, %48 : vector<16x128xf32>
      %50 = vector.broadcast %27 : vector<1x128xf32> to vector<16x128xf32>
      %51 = arith.mulf %49, %50 : vector<16x128xf32>
      %52 = vector.broadcast %28 : vector<1x128xf32> to vector<16x128xf32>
      %53 = arith.addf %51, %52 : vector<16x128xf32>
      %54 = arith.truncf %53 : vector<16x128xf32> to vector<16x128xbf16>
      %c0_32 = arith.constant 0 : index
      %c0_33 = arith.constant 0 : index
      %55 = vector.load %arg9[%c0_32, %c0_33] : memref<16x128xbf16, #tpu.memory_space<vmem>>, vector<16x128xbf16>
      tpu.vector_store %arg9[%c0_32, %c0_33], %54 {strides = array<i32>} : memref<16x128xbf16, #tpu.memory_space<vmem>>, vector<16x128xbf16>,
    } else {
    }
    return
  }
  func.func @transform_0(%arg0: i32, %arg1: i32) -> (i32, i32) {
    %c0_i32 = arith.constant 0 : i32
    %c0_i32_0 = arith.constant 0 : i32
    return %arg0, %c0_i32 : i32, i32
  }
  func.func @transform_1(%arg0: i32, %arg1: i32) -> (i32, i32) {
    %c0_i32 = arith.constant 0 : i32
    %c0_i32_0 = arith.constant 0 : i32
    return %c0_i32, %arg1 : i32, i32
  }
  func.func @transform_2(%arg0: i32, %arg1: i32) -> (i32, i32) {
    %c0_i32 = arith.constant 0 : i32
    %c0_i32_0 = arith.constant 0 : i32
    return %c0_i32, %arg1 : i32, i32
  }
  func.func @transform_3(%arg0: i32, %arg1: i32) -> (i32, i32) {
    %c0_i32 = arith.constant 0 : i32
    %c0_i32_0 = arith.constant 0 : i32
    return %arg1, %c0_i32 : i32, i32
  }
  func.func @transform_4(%arg0: i32, %arg1: i32) -> (i32, i32) {
    %c0_i32 = arith.constant 0 : i32
    %c0_i32_0 = arith.constant 0 : i32
    %c0_i32_1 = arith.constant 0 : i32
    return %c0_i32, %c0_i32_0 : i32, i32
  }
  func.func @transform_5(%arg0: i32, %arg1: i32) -> (i32, i32) {
    %c0_i32 = arith.constant 0 : i32
    %c0_i32_0 = arith.constant 0 : i32
    %c0_i32_1 = arith.constant 0 : i32
    return %c0_i32, %c0_i32_0 : i32, i32
  }
  func.func @transform_6(%arg0: i32, %arg1: i32) -> (i32, i32) {
    %c0_i32 = arith.constant 0 : i32
    %c0_i32_0 = arith.constant 0 : i32
    %c0_i32_1 = arith.constant 0 : i32
    return %c0_i32, %c0_i32_0 : i32, i32
  }
  func.func @transform_7(%arg0: i32, %arg1: i32) -> (i32, i32) {
    %c0_i32 = arith.constant 0 : i32
    %c0_i32_0 = arith.constant 0 : i32
    return %arg0, %c0_i32 : i32, i32
  }
}

module attributes {stable_mosaic.version = 11 : i64} {
  func.func @_fused_self_attn_kernel(%arg0: i32, %arg1: memref<1x16x128xbf16, #tpu.memory_space<vmem>>, %arg2: memref<1x16x128xbf16, #tpu.memory_space<vmem>>, %arg3: memref<4x128x128xbf16, #tpu.memory_space<vmem>>, %arg4: memref<4x128x128xbf16, #tpu.memory_space<vmem>>, %arg5: memref<4x128x128xbf16, #tpu.memory_space<vmem>>, %arg6: memref<4x1x128xf32, #tpu.memory_space<vmem>>, %arg7: memref<4x1x128xf32, #tpu.memory_space<vmem>>, %arg8: memref<4x1x128xf32, #tpu.memory_space<vmem>>, %arg9: memref<4x128x128xbf16, #tpu.memory_space<vmem>>, %arg10: memref<1x128xf32, #tpu.memory_space<vmem>>, %arg11: memref<1x128xf32, #tpu.memory_space<vmem>>, %arg12: memref<1x128xf32, #tpu.memory_space<vmem>>, %arg13: memref<1x16x128xbf16, #tpu.memory_space<vmem>>, %arg14: memref<16x128xf32, #tpu.memory_space<vmem>>) attributes {dimension_semantics = [#tpu.dimension_semantics<parallel>], iteration_bounds = array<i64: 2>, scalar_prefetch = 0 : i64, scratch_operands = 1 : i64, tpu.core_type = #tpu.core_type<tc>, window_params = [{transform_indices = @transform_0, window_bounds = array<i64: 1, 16, 128>}, {transform_indices = @transform_1, window_bounds = array<i64: 1, 16, 128>}, {pipeline_mode = #tpu.pipeline_mode<synchronous>, transform_indices = @transform_2, window_bounds = array<i64: 4, 128, 128>}, {pipeline_mode = #tpu.pipeline_mode<synchronous>, transform_indices = @transform_3, window_bounds = array<i64: 4, 128, 128>}, {pipeline_mode = #tpu.pipeline_mode<synchronous>, transform_indices = @transform_4, window_bounds = array<i64: 4, 128, 128>}, {pipeline_mode = #tpu.pipeline_mode<synchronous>, transform_indices = @transform_5, window_bounds = array<i64: 4, 1, 128>}, {pipeline_mode = #tpu.pipeline_mode<synchronous>, transform_indices = @transform_6, window_bounds = array<i64: 4, 1, 128>}, {pipeline_mode = #tpu.pipeline_mode<synchronous>, transform_indices = @transform_7, window_bounds = array<i64: 4, 1, 128>}, {pipeline_mode = #tpu.pipeline_mode<synchronous>, transform_indices = @transform_8, window_bounds = array<i64: 4, 128, 128>}, {pipeline_mode = #tpu.pipeline_mode<synchronous>, transform_indices = @transform_9, window_bounds = array<i64: 1, 128>}, {pipeline_mode = #tpu.pipeline_mode<synchronous>, transform_indices = @transform_10, window_bounds = array<i64: 1, 128>}, {pipeline_mode = #tpu.pipeline_mode<synchronous>, transform_indices = @transform_11, window_bounds = array<i64: 1, 128>}, {transform_indices = @transform_12, window_bounds = array<i64: 1, 16, 128>}]} {
    %c0 = arith.constant 0 : index
    %c0_0 = arith.constant 0 : index
    %c0_1 = arith.constant 0 : index
    %0 = vector.load %arg1[%c0, %c0_0, %c0_1] : memref<1x16x128xbf16, #tpu.memory_space<vmem>>, vector<1x16x128xbf16>
    %1 = vector.shape_cast %0 : vector<1x16x128xbf16> to vector<16x128xbf16>
    %c0_2 = arith.constant 0 : index
    %c0_3 = arith.constant 0 : index
    %c0_4 = arith.constant 0 : index
    %2 = vector.load %arg2[%c0_2, %c0_3, %c0_4] : memref<1x16x128xbf16, #tpu.memory_space<vmem>>, vector<1x16x128xbf16>
    %3 = vector.shape_cast %2 : vector<1x16x128xbf16> to vector<16x128xbf16>
    %4 = tpu.iota {dimensions = array<i32: 1>} : vector<16x16xi32>
    %c8_i32 = arith.constant 8 : i32
    %5 = vector.broadcast %c8_i32 : i32 to vector<16x16xi32>
    %6 = arith.cmpi slt, %4, %5 : vector<16x16xi32>
    %c0_5 = arith.constant 0 : index
    %c0_6 = arith.constant 0 : index
    %c0_7 = arith.constant 0 : index
    %7 = vector.load %arg3[%c0_5, %c0_6, %c0_7] : memref<4x128x128xbf16, #tpu.memory_space<vmem>>, vector<1x128x128xbf16>
    %8 = vector.shape_cast %7 : vector<1x128x128xbf16> to vector<128x128xbf16>
    %cst = arith.constant dense<0.000000e+00> : vector<16x128xf32>
    %9 = tpu.matmul %1, %8, %cst {dimension_numbers = #tpu.dot_dimension_numbers<[1], [0], [0], [1], [0, 0, 1, 1], [], []>} : vector<16x128xbf16>, vector<128x128xbf16>, vector<16x128xf32> -> vector<16x128xf32>
    %c0_8 = arith.constant 0 : index
    %c0_9 = arith.constant 0 : index
    %c0_10 = arith.constant 0 : index
    %10 = vector.load %arg6[%c0_8, %c0_9, %c0_10] : memref<4x1x128xf32, #tpu.memory_space<vmem>>, vector<1x1x128xf32>
    %11 = vector.shape_cast %10 : vector<1x1x128xf32> to vector<1x128xf32>
    %12 = vector.broadcast %11 : vector<1x128xf32> to vector<16x128xf32>
    %13 = arith.addf %9, %12 : vector<16x128xf32>
    %c0_11 = arith.constant 0 : index
    %c0_12 = arith.constant 0 : index
    %c0_13 = arith.constant 0 : index
    %14 = vector.load %arg4[%c0_11, %c0_12, %c0_13] : memref<4x128x128xbf16, #tpu.memory_space<vmem>>, vector<1x128x128xbf16>
    %15 = vector.shape_cast %14 : vector<1x128x128xbf16> to vector<128x128xbf16>
    %cst_14 = arith.constant dense<0.000000e+00> : vector<16x128xf32>
    %16 = tpu.matmul %1, %15, %cst_14 {dimension_numbers = #tpu.dot_dimension_numbers<[1], [0], [0], [1], [0, 0, 1, 1], [], []>} : vector<16x128xbf16>, vector<128x128xbf16>, vector<16x128xf32> -> vector<16x128xf32>
    %c0_15 = arith.constant 0 : index
    %c0_16 = arith.constant 0 : index
    %c0_17 = arith.constant 0 : index
    %17 = vector.load %arg7[%c0_15, %c0_16, %c0_17] : memref<4x1x128xf32, #tpu.memory_space<vmem>>, vector<1x1x128xf32>
    %18 = vector.shape_cast %17 : vector<1x1x128xf32> to vector<1x128xf32>
    %19 = vector.broadcast %18 : vector<1x128xf32> to vector<16x128xf32>
    %20 = arith.addf %16, %19 : vector<16x128xf32>
    %c0_18 = arith.constant 0 : index
    %c0_19 = arith.constant 0 : index
    %c0_20 = arith.constant 0 : index
    %21 = vector.load %arg5[%c0_18, %c0_19, %c0_20] : memref<4x128x128xbf16, #tpu.memory_space<vmem>>, vector<1x128x128xbf16>
    %22 = vector.shape_cast %21 : vector<1x128x128xbf16> to vector<128x128xbf16>
    %cst_21 = arith.constant dense<0.000000e+00> : vector<16x128xf32>
    %23 = tpu.matmul %3, %22, %cst_21 {dimension_numbers = #tpu.dot_dimension_numbers<[1], [0], [0], [1], [0, 0, 1, 1], [], []>} : vector<16x128xbf16>, vector<128x128xbf16>, vector<16x128xf32> -> vector<16x128xf32>
    %c0_22 = arith.constant 0 : index
    %c0_23 = arith.constant 0 : index
    %c0_24 = arith.constant 0 : index
    %24 = vector.load %arg8[%c0_22, %c0_23, %c0_24] : memref<4x1x128xf32, #tpu.memory_space<vmem>>, vector<1x1x128xf32>
    %25 = vector.shape_cast %24 : vector<1x1x128xf32> to vector<1x128xf32>
    %26 = vector.broadcast %25 : vector<1x128xf32> to vector<16x128xf32>
    %27 = arith.addf %23, %26 : vector<16x128xf32>
    %28 = arith.truncf %13 : vector<16x128xf32> to vector<16x128xbf16>
    %29 = arith.truncf %20 : vector<16x128xf32> to vector<16x128xbf16>
    %cst_25 = arith.constant dense<0.000000e+00> : vector<16x16xf32>
    %30 = tpu.matmul %28, %29, %cst_25 {dimension_numbers = #tpu.dot_dimension_numbers<[1], [1], [0], [0], [0, 0, 1, 0], [], []>} : vector<16x128xbf16>, vector<16x128xbf16>, vector<16x16xf32> -> vector<16x16xf32>
    %cst_26 = arith.constant 0.353553385 : f32
    %31 = vector.broadcast %cst_26 : f32 to vector<16x16xf32>
    %32 = arith.mulf %30, %31 : vector<16x16xf32>
    %cst_27 = arith.constant -1.000000e+30 : f32
    %33 = vector.broadcast %cst_27 : f32 to vector<16x16xf32>
    %34 = arith.select %6, %32, %33 : vector<16x16xi1>, vector<16x16xf32>
    %cst_28 = arith.constant dense<0xFF800000> : vector<16xf32>
    %35 = vector.multi_reduction <maximumf>, %34, %cst_28 [1] : vector<16x16xf32> to vector<16xf32>
    %36 = vector.shape_cast %35 : vector<16xf32> to vector<16x1xf32>
    %37 = vector.broadcast %36 : vector<16x1xf32> to vector<16x16xf32>
    %38 = arith.subf %34, %37 : vector<16x16xf32>
    %39 = math.exp %38 : vector<16x16xf32>
    %cst_29 = arith.constant dense<0.000000e+00> : vector<16xf32>
    %40 = vector.multi_reduction <add>, %39, %cst_29 [1] : vector<16x16xf32> to vector<16xf32>
    %41 = vector.shape_cast %40 : vector<16xf32> to vector<16x1xf32>
    %42 = tpu.reciprocal %41 {approx = true} : vector<16x1xf32> -> vector<16x1xf32>
    %43 = vector.broadcast %42 : vector<16x1xf32> to vector<16x16xf32>
    %44 = arith.mulf %39, %43 : vector<16x16xf32>
    %45 = arith.truncf %44 : vector<16x16xf32> to vector<16x16xbf16>
    %46 = arith.truncf %27 : vector<16x128xf32> to vector<16x128xbf16>
    %cst_30 = arith.constant dense<0.000000e+00> : vector<16x128xf32>
    %47 = tpu.matmul %45, %46, %cst_30 {dimension_numbers = #tpu.dot_dimension_numbers<[1], [0], [0], [1], [0, 0, 1, 1], [], []>} : vector<16x16xbf16>, vector<16x128xbf16>, vector<16x128xf32> -> vector<16x128xf32>
    %48 = arith.truncf %47 : vector<16x128xf32> to vector<16x128xbf16>
    %c0_31 = arith.constant 0 : index
    %c0_32 = arith.constant 0 : index
    %c0_33 = arith.constant 0 : index
    %49 = vector.load %arg9[%c0_31, %c0_32, %c0_33] : memref<4x128x128xbf16, #tpu.memory_space<vmem>>, vector<1x128x128xbf16>
    %50 = vector.shape_cast %49 : vector<1x128x128xbf16> to vector<128x128xbf16>
    %cst_34 = arith.constant dense<0.000000e+00> : vector<16x128xf32>
    %51 = tpu.matmul %48, %50, %cst_34 {dimension_numbers = #tpu.dot_dimension_numbers<[1], [0], [0], [1], [0, 0, 1, 1], [], []>} : vector<16x128xbf16>, vector<128x128xbf16>, vector<16x128xf32> -> vector<16x128xf32>
    %c0_35 = arith.constant 0 : index
    %c0_36 = arith.constant 0 : index
    %52 = vector.load %arg14[%c0_35, %c0_36] : memref<16x128xf32, #tpu.memory_space<vmem>>, vector<16x128xf32>
    tpu.vector_store %arg14[%c0_35, %c0_36], %51 {strides = array<i32>} : memref<16x128xf32, #tpu.memory_space<vmem>>, vector<16x128xf32>,
    %c1 = arith.constant 1 : index
    %c0_37 = arith.constant 0 : index
    %c0_38 = arith.constant 0 : index
    %53 = vector.load %arg3[%c1, %c0_37, %c0_38] : memref<4x128x128xbf16, #tpu.memory_space<vmem>>, vector<1x128x128xbf16>
    %54 = vector.shape_cast %53 : vector<1x128x128xbf16> to vector<128x128xbf16>
    %cst_39 = arith.constant dense<0.000000e+00> : vector<16x128xf32>
    %55 = tpu.matmul %1, %54, %cst_39 {dimension_numbers = #tpu.dot_dimension_numbers<[1], [0], [0], [1], [0, 0, 1, 1], [], []>} : vector<16x128xbf16>, vector<128x128xbf16>, vector<16x128xf32> -> vector<16x128xf32>
    %c1_40 = arith.constant 1 : index
    %c0_41 = arith.constant 0 : index
    %c0_42 = arith.constant 0 : index
    %56 = vector.load %arg6[%c1_40, %c0_41, %c0_42] : memref<4x1x128xf32, #tpu.memory_space<vmem>>, vector<1x1x128xf32>
    %57 = vector.shape_cast %56 : vector<1x1x128xf32> to vector<1x128xf32>
    %58 = vector.broadcast %57 : vector<1x128xf32> to vector<16x128xf32>
    %59 = arith.addf %55, %58 : vector<16x128xf32>
    %c1_43 = arith.constant 1 : index
    %c0_44 = arith.constant 0 : index
    %c0_45 = arith.constant 0 : index
    %60 = vector.load %arg4[%c1_43, %c0_44, %c0_45] : memref<4x128x128xbf16, #tpu.memory_space<vmem>>, vector<1x128x128xbf16>
    %61 = vector.shape_cast %60 : vector<1x128x128xbf16> to vector<128x128xbf16>
    %cst_46 = arith.constant dense<0.000000e+00> : vector<16x128xf32>
    %62 = tpu.matmul %1, %61, %cst_46 {dimension_numbers = #tpu.dot_dimension_numbers<[1], [0], [0], [1], [0, 0, 1, 1], [], []>} : vector<16x128xbf16>, vector<128x128xbf16>, vector<16x128xf32> -> vector<16x128xf32>
    %c1_47 = arith.constant 1 : index
    %c0_48 = arith.constant 0 : index
    %c0_49 = arith.constant 0 : index
    %63 = vector.load %arg7[%c1_47, %c0_48, %c0_49] : memref<4x1x128xf32, #tpu.memory_space<vmem>>, vector<1x1x128xf32>
    %64 = vector.shape_cast %63 : vector<1x1x128xf32> to vector<1x128xf32>
    %65 = vector.broadcast %64 : vector<1x128xf32> to vector<16x128xf32>
    %66 = arith.addf %62, %65 : vector<16x128xf32>
    %c1_50 = arith.constant 1 : index
    %c0_51 = arith.constant 0 : index
    %c0_52 = arith.constant 0 : index
    %67 = vector.load %arg5[%c1_50, %c0_51, %c0_52] : memref<4x128x128xbf16, #tpu.memory_space<vmem>>, vector<1x128x128xbf16>
    %68 = vector.shape_cast %67 : vector<1x128x128xbf16> to vector<128x128xbf16>
    %cst_53 = arith.constant dense<0.000000e+00> : vector<16x128xf32>
    %69 = tpu.matmul %3, %68, %cst_53 {dimension_numbers = #tpu.dot_dimension_numbers<[1], [0], [0], [1], [0, 0, 1, 1], [], []>} : vector<16x128xbf16>, vector<128x128xbf16>, vector<16x128xf32> -> vector<16x128xf32>
    %c1_54 = arith.constant 1 : index
    %c0_55 = arith.constant 0 : index
    %c0_56 = arith.constant 0 : index
    %70 = vector.load %arg8[%c1_54, %c0_55, %c0_56] : memref<4x1x128xf32, #tpu.memory_space<vmem>>, vector<1x1x128xf32>
    %71 = vector.shape_cast %70 : vector<1x1x128xf32> to vector<1x128xf32>
    %72 = vector.broadcast %71 : vector<1x128xf32> to vector<16x128xf32>
    %73 = arith.addf %69, %72 : vector<16x128xf32>
    %74 = arith.truncf %59 : vector<16x128xf32> to vector<16x128xbf16>
    %75 = arith.truncf %66 : vector<16x128xf32> to vector<16x128xbf16>
    %cst_57 = arith.constant dense<0.000000e+00> : vector<16x16xf32>
    %76 = tpu.matmul %74, %75, %cst_57 {dimension_numbers = #tpu.dot_dimension_numbers<[1], [1], [0], [0], [0, 0, 1, 0], [], []>} : vector<16x128xbf16>, vector<16x128xbf16>, vector<16x16xf32> -> vector<16x16xf32>
    %cst_58 = arith.constant 0.353553385 : f32
    %77 = vector.broadcast %cst_58 : f32 to vector<16x16xf32>
    %78 = arith.mulf %76, %77 : vector<16x16xf32>
    %cst_59 = arith.constant -1.000000e+30 : f32
    %79 = vector.broadcast %cst_59 : f32 to vector<16x16xf32>
    %80 = arith.select %6, %78, %79 : vector<16x16xi1>, vector<16x16xf32>
    %cst_60 = arith.constant dense<0xFF800000> : vector<16xf32>
    %81 = vector.multi_reduction <maximumf>, %80, %cst_60 [1] : vector<16x16xf32> to vector<16xf32>
    %82 = vector.shape_cast %81 : vector<16xf32> to vector<16x1xf32>
    %83 = vector.broadcast %82 : vector<16x1xf32> to vector<16x16xf32>
    %84 = arith.subf %80, %83 : vector<16x16xf32>
    %85 = math.exp %84 : vector<16x16xf32>
    %cst_61 = arith.constant dense<0.000000e+00> : vector<16xf32>
    %86 = vector.multi_reduction <add>, %85, %cst_61 [1] : vector<16x16xf32> to vector<16xf32>
    %87 = vector.shape_cast %86 : vector<16xf32> to vector<16x1xf32>
    %88 = tpu.reciprocal %87 {approx = true} : vector<16x1xf32> -> vector<16x1xf32>
    %89 = vector.broadcast %88 : vector<16x1xf32> to vector<16x16xf32>
    %90 = arith.mulf %85, %89 : vector<16x16xf32>
    %91 = arith.truncf %90 : vector<16x16xf32> to vector<16x16xbf16>
    %92 = arith.truncf %73 : vector<16x128xf32> to vector<16x128xbf16>
    %cst_62 = arith.constant dense<0.000000e+00> : vector<16x128xf32>
    %93 = tpu.matmul %91, %92, %cst_62 {dimension_numbers = #tpu.dot_dimension_numbers<[1], [0], [0], [1], [0, 0, 1, 1], [], []>} : vector<16x16xbf16>, vector<16x128xbf16>, vector<16x128xf32> -> vector<16x128xf32>
    %94 = arith.truncf %93 : vector<16x128xf32> to vector<16x128xbf16>
    %c1_63 = arith.constant 1 : index
    %c0_64 = arith.constant 0 : index
    %c0_65 = arith.constant 0 : index
    %95 = vector.load %arg9[%c1_63, %c0_64, %c0_65] : memref<4x128x128xbf16, #tpu.memory_space<vmem>>, vector<1x128x128xbf16>
    %96 = vector.shape_cast %95 : vector<1x128x128xbf16> to vector<128x128xbf16>
    %cst_66 = arith.constant dense<0.000000e+00> : vector<16x128xf32>
    %97 = tpu.matmul %94, %96, %cst_66 {dimension_numbers = #tpu.dot_dimension_numbers<[1], [0], [0], [1], [0, 0, 1, 1], [], []>} : vector<16x128xbf16>, vector<128x128xbf16>, vector<16x128xf32> -> vector<16x128xf32>
    %c0_67 = arith.constant 0 : index
    %c0_68 = arith.constant 0 : index
    %98 = vector.load %arg14[%c0_67, %c0_68] : memref<16x128xf32, #tpu.memory_space<vmem>>, vector<16x128xf32>
    %99 = arith.addf %98, %97 : vector<16x128xf32>
    %c0_69 = arith.constant 0 : index
    %c0_70 = arith.constant 0 : index
    %100 = vector.load %arg14[%c0_69, %c0_70] : memref<16x128xf32, #tpu.memory_space<vmem>>, vector<16x128xf32>
    tpu.vector_store %arg14[%c0_69, %c0_70], %99 {strides = array<i32>} : memref<16x128xf32, #tpu.memory_space<vmem>>, vector<16x128xf32>,
    %c2 = arith.constant 2 : index
    %c0_71 = arith.constant 0 : index
    %c0_72 = arith.constant 0 : index
    %101 = vector.load %arg3[%c2, %c0_71, %c0_72] : memref<4x128x128xbf16, #tpu.memory_space<vmem>>, vector<1x128x128xbf16>
    %102 = vector.shape_cast %101 : vector<1x128x128xbf16> to vector<128x128xbf16>
    %cst_73 = arith.constant dense<0.000000e+00> : vector<16x128xf32>
    %103 = tpu.matmul %1, %102, %cst_73 {dimension_numbers = #tpu.dot_dimension_numbers<[1], [0], [0], [1], [0, 0, 1, 1], [], []>} : vector<16x128xbf16>, vector<128x128xbf16>, vector<16x128xf32> -> vector<16x128xf32>
    %c2_74 = arith.constant 2 : index
    %c0_75 = arith.constant 0 : index
    %c0_76 = arith.constant 0 : index
    %104 = vector.load %arg6[%c2_74, %c0_75, %c0_76] : memref<4x1x128xf32, #tpu.memory_space<vmem>>, vector<1x1x128xf32>
    %105 = vector.shape_cast %104 : vector<1x1x128xf32> to vector<1x128xf32>
    %106 = vector.broadcast %105 : vector<1x128xf32> to vector<16x128xf32>
    %107 = arith.addf %103, %106 : vector<16x128xf32>
    %c2_77 = arith.constant 2 : index
    %c0_78 = arith.constant 0 : index
    %c0_79 = arith.constant 0 : index
    %108 = vector.load %arg4[%c2_77, %c0_78, %c0_79] : memref<4x128x128xbf16, #tpu.memory_space<vmem>>, vector<1x128x128xbf16>
    %109 = vector.shape_cast %108 : vector<1x128x128xbf16> to vector<128x128xbf16>
    %cst_80 = arith.constant dense<0.000000e+00> : vector<16x128xf32>
    %110 = tpu.matmul %1, %109, %cst_80 {dimension_numbers = #tpu.dot_dimension_numbers<[1], [0], [0], [1], [0, 0, 1, 1], [], []>} : vector<16x128xbf16>, vector<128x128xbf16>, vector<16x128xf32> -> vector<16x128xf32>
    %c2_81 = arith.constant 2 : index
    %c0_82 = arith.constant 0 : index
    %c0_83 = arith.constant 0 : index
    %111 = vector.load %arg7[%c2_81, %c0_82, %c0_83] : memref<4x1x128xf32, #tpu.memory_space<vmem>>, vector<1x1x128xf32>
    %112 = vector.shape_cast %111 : vector<1x1x128xf32> to vector<1x128xf32>
    %113 = vector.broadcast %112 : vector<1x128xf32> to vector<16x128xf32>
    %114 = arith.addf %110, %113 : vector<16x128xf32>
    %c2_84 = arith.constant 2 : index
    %c0_85 = arith.constant 0 : index
    %c0_86 = arith.constant 0 : index
    %115 = vector.load %arg5[%c2_84, %c0_85, %c0_86] : memref<4x128x128xbf16, #tpu.memory_space<vmem>>, vector<1x128x128xbf16>
    %116 = vector.shape_cast %115 : vector<1x128x128xbf16> to vector<128x128xbf16>
    %cst_87 = arith.constant dense<0.000000e+00> : vector<16x128xf32>
    %117 = tpu.matmul %3, %116, %cst_87 {dimension_numbers = #tpu.dot_dimension_numbers<[1], [0], [0], [1], [0, 0, 1, 1], [], []>} : vector<16x128xbf16>, vector<128x128xbf16>, vector<16x128xf32> -> vector<16x128xf32>
    %c2_88 = arith.constant 2 : index
    %c0_89 = arith.constant 0 : index
    %c0_90 = arith.constant 0 : index
    %118 = vector.load %arg8[%c2_88, %c0_89, %c0_90] : memref<4x1x128xf32, #tpu.memory_space<vmem>>, vector<1x1x128xf32>
    %119 = vector.shape_cast %118 : vector<1x1x128xf32> to vector<1x128xf32>
    %120 = vector.broadcast %119 : vector<1x128xf32> to vector<16x128xf32>
    %121 = arith.addf %117, %120 : vector<16x128xf32>
    %122 = arith.truncf %107 : vector<16x128xf32> to vector<16x128xbf16>
    %123 = arith.truncf %114 : vector<16x128xf32> to vector<16x128xbf16>
    %cst_91 = arith.constant dense<0.000000e+00> : vector<16x16xf32>
    %124 = tpu.matmul %122, %123, %cst_91 {dimension_numbers = #tpu.dot_dimension_numbers<[1], [1], [0], [0], [0, 0, 1, 0], [], []>} : vector<16x128xbf16>, vector<16x128xbf16>, vector<16x16xf32> -> vector<16x16xf32>
    %cst_92 = arith.constant 0.353553385 : f32
    %125 = vector.broadcast %cst_92 : f32 to vector<16x16xf32>
    %126 = arith.mulf %124, %125 : vector<16x16xf32>
    %cst_93 = arith.constant -1.000000e+30 : f32
    %127 = vector.broadcast %cst_93 : f32 to vector<16x16xf32>
    %128 = arith.select %6, %126, %127 : vector<16x16xi1>, vector<16x16xf32>
    %cst_94 = arith.constant dense<0xFF800000> : vector<16xf32>
    %129 = vector.multi_reduction <maximumf>, %128, %cst_94 [1] : vector<16x16xf32> to vector<16xf32>
    %130 = vector.shape_cast %129 : vector<16xf32> to vector<16x1xf32>
    %131 = vector.broadcast %130 : vector<16x1xf32> to vector<16x16xf32>
    %132 = arith.subf %128, %131 : vector<16x16xf32>
    %133 = math.exp %132 : vector<16x16xf32>
    %cst_95 = arith.constant dense<0.000000e+00> : vector<16xf32>
    %134 = vector.multi_reduction <add>, %133, %cst_95 [1] : vector<16x16xf32> to vector<16xf32>
    %135 = vector.shape_cast %134 : vector<16xf32> to vector<16x1xf32>
    %136 = tpu.reciprocal %135 {approx = true} : vector<16x1xf32> -> vector<16x1xf32>
    %137 = vector.broadcast %136 : vector<16x1xf32> to vector<16x16xf32>
    %138 = arith.mulf %133, %137 : vector<16x16xf32>
    %139 = arith.truncf %138 : vector<16x16xf32> to vector<16x16xbf16>
    %140 = arith.truncf %121 : vector<16x128xf32> to vector<16x128xbf16>
    %cst_96 = arith.constant dense<0.000000e+00> : vector<16x128xf32>
    %141 = tpu.matmul %139, %140, %cst_96 {dimension_numbers = #tpu.dot_dimension_numbers<[1], [0], [0], [1], [0, 0, 1, 1], [], []>} : vector<16x16xbf16>, vector<16x128xbf16>, vector<16x128xf32> -> vector<16x128xf32>
    %142 = arith.truncf %141 : vector<16x128xf32> to vector<16x128xbf16>
    %c2_97 = arith.constant 2 : index
    %c0_98 = arith.constant 0 : index
    %c0_99 = arith.constant 0 : index
    %143 = vector.load %arg9[%c2_97, %c0_98, %c0_99] : memref<4x128x128xbf16, #tpu.memory_space<vmem>>, vector<1x128x128xbf16>
    %144 = vector.shape_cast %143 : vector<1x128x128xbf16> to vector<128x128xbf16>
    %cst_100 = arith.constant dense<0.000000e+00> : vector<16x128xf32>
    %145 = tpu.matmul %142, %144, %cst_100 {dimension_numbers = #tpu.dot_dimension_numbers<[1], [0], [0], [1], [0, 0, 1, 1], [], []>} : vector<16x128xbf16>, vector<128x128xbf16>, vector<16x128xf32> -> vector<16x128xf32>
    %c0_101 = arith.constant 0 : index
    %c0_102 = arith.constant 0 : index
    %146 = vector.load %arg14[%c0_101, %c0_102] : memref<16x128xf32, #tpu.memory_space<vmem>>, vector<16x128xf32>
    %147 = arith.addf %146, %145 : vector<16x128xf32>
    %c0_103 = arith.constant 0 : index
    %c0_104 = arith.constant 0 : index
    %148 = vector.load %arg14[%c0_103, %c0_104] : memref<16x128xf32, #tpu.memory_space<vmem>>, vector<16x128xf32>
    tpu.vector_store %arg14[%c0_103, %c0_104], %147 {strides = array<i32>} : memref<16x128xf32, #tpu.memory_space<vmem>>, vector<16x128xf32>,
    %c3 = arith.constant 3 : index
    %c0_105 = arith.constant 0 : index
    %c0_106 = arith.constant 0 : index
    %149 = vector.load %arg3[%c3, %c0_105, %c0_106] : memref<4x128x128xbf16, #tpu.memory_space<vmem>>, vector<1x128x128xbf16>
    %150 = vector.shape_cast %149 : vector<1x128x128xbf16> to vector<128x128xbf16>
    %cst_107 = arith.constant dense<0.000000e+00> : vector<16x128xf32>
    %151 = tpu.matmul %1, %150, %cst_107 {dimension_numbers = #tpu.dot_dimension_numbers<[1], [0], [0], [1], [0, 0, 1, 1], [], []>} : vector<16x128xbf16>, vector<128x128xbf16>, vector<16x128xf32> -> vector<16x128xf32>
    %c3_108 = arith.constant 3 : index
    %c0_109 = arith.constant 0 : index
    %c0_110 = arith.constant 0 : index
    %152 = vector.load %arg6[%c3_108, %c0_109, %c0_110] : memref<4x1x128xf32, #tpu.memory_space<vmem>>, vector<1x1x128xf32>
    %153 = vector.shape_cast %152 : vector<1x1x128xf32> to vector<1x128xf32>
    %154 = vector.broadcast %153 : vector<1x128xf32> to vector<16x128xf32>
    %155 = arith.addf %151, %154 : vector<16x128xf32>
    %c3_111 = arith.constant 3 : index
    %c0_112 = arith.constant 0 : index
    %c0_113 = arith.constant 0 : index
    %156 = vector.load %arg4[%c3_111, %c0_112, %c0_113] : memref<4x128x128xbf16, #tpu.memory_space<vmem>>, vector<1x128x128xbf16>
    %157 = vector.shape_cast %156 : vector<1x128x128xbf16> to vector<128x128xbf16>
    %cst_114 = arith.constant dense<0.000000e+00> : vector<16x128xf32>
    %158 = tpu.matmul %1, %157, %cst_114 {dimension_numbers = #tpu.dot_dimension_numbers<[1], [0], [0], [1], [0, 0, 1, 1], [], []>} : vector<16x128xbf16>, vector<128x128xbf16>, vector<16x128xf32> -> vector<16x128xf32>
    %c3_115 = arith.constant 3 : index
    %c0_116 = arith.constant 0 : index
    %c0_117 = arith.constant 0 : index
    %159 = vector.load %arg7[%c3_115, %c0_116, %c0_117] : memref<4x1x128xf32, #tpu.memory_space<vmem>>, vector<1x1x128xf32>
    %160 = vector.shape_cast %159 : vector<1x1x128xf32> to vector<1x128xf32>
    %161 = vector.broadcast %160 : vector<1x128xf32> to vector<16x128xf32>
    %162 = arith.addf %158, %161 : vector<16x128xf32>
    %c3_118 = arith.constant 3 : index
    %c0_119 = arith.constant 0 : index
    %c0_120 = arith.constant 0 : index
    %163 = vector.load %arg5[%c3_118, %c0_119, %c0_120] : memref<4x128x128xbf16, #tpu.memory_space<vmem>>, vector<1x128x128xbf16>
    %164 = vector.shape_cast %163 : vector<1x128x128xbf16> to vector<128x128xbf16>
    %cst_121 = arith.constant dense<0.000000e+00> : vector<16x128xf32>
    %165 = tpu.matmul %3, %164, %cst_121 {dimension_numbers = #tpu.dot_dimension_numbers<[1], [0], [0], [1], [0, 0, 1, 1], [], []>} : vector<16x128xbf16>, vector<128x128xbf16>, vector<16x128xf32> -> vector<16x128xf32>
    %c3_122 = arith.constant 3 : index
    %c0_123 = arith.constant 0 : index
    %c0_124 = arith.constant 0 : index
    %166 = vector.load %arg8[%c3_122, %c0_123, %c0_124] : memref<4x1x128xf32, #tpu.memory_space<vmem>>, vector<1x1x128xf32>
    %167 = vector.shape_cast %166 : vector<1x1x128xf32> to vector<1x128xf32>
    %168 = vector.broadcast %167 : vector<1x128xf32> to vector<16x128xf32>
    %169 = arith.addf %165, %168 : vector<16x128xf32>
    %170 = arith.truncf %155 : vector<16x128xf32> to vector<16x128xbf16>
    %171 = arith.truncf %162 : vector<16x128xf32> to vector<16x128xbf16>
    %cst_125 = arith.constant dense<0.000000e+00> : vector<16x16xf32>
    %172 = tpu.matmul %170, %171, %cst_125 {dimension_numbers = #tpu.dot_dimension_numbers<[1], [1], [0], [0], [0, 0, 1, 0], [], []>} : vector<16x128xbf16>, vector<16x128xbf16>, vector<16x16xf32> -> vector<16x16xf32>
    %cst_126 = arith.constant 0.353553385 : f32
    %173 = vector.broadcast %cst_126 : f32 to vector<16x16xf32>
    %174 = arith.mulf %172, %173 : vector<16x16xf32>
    %cst_127 = arith.constant -1.000000e+30 : f32
    %175 = vector.broadcast %cst_127 : f32 to vector<16x16xf32>
    %176 = arith.select %6, %174, %175 : vector<16x16xi1>, vector<16x16xf32>
    %cst_128 = arith.constant dense<0xFF800000> : vector<16xf32>
    %177 = vector.multi_reduction <maximumf>, %176, %cst_128 [1] : vector<16x16xf32> to vector<16xf32>
    %178 = vector.shape_cast %177 : vector<16xf32> to vector<16x1xf32>
    %179 = vector.broadcast %178 : vector<16x1xf32> to vector<16x16xf32>
    %180 = arith.subf %176, %179 : vector<16x16xf32>
    %181 = math.exp %180 : vector<16x16xf32>
    %cst_129 = arith.constant dense<0.000000e+00> : vector<16xf32>
    %182 = vector.multi_reduction <add>, %181, %cst_129 [1] : vector<16x16xf32> to vector<16xf32>
    %183 = vector.shape_cast %182 : vector<16xf32> to vector<16x1xf32>
    %184 = tpu.reciprocal %183 {approx = true} : vector<16x1xf32> -> vector<16x1xf32>
    %185 = vector.broadcast %184 : vector<16x1xf32> to vector<16x16xf32>
    %186 = arith.mulf %181, %185 : vector<16x16xf32>
    %187 = arith.truncf %186 : vector<16x16xf32> to vector<16x16xbf16>
    %188 = arith.truncf %169 : vector<16x128xf32> to vector<16x128xbf16>
    %cst_130 = arith.constant dense<0.000000e+00> : vector<16x128xf32>
    %189 = tpu.matmul %187, %188, %cst_130 {dimension_numbers = #tpu.dot_dimension_numbers<[1], [0], [0], [1], [0, 0, 1, 1], [], []>} : vector<16x16xbf16>, vector<16x128xbf16>, vector<16x128xf32> -> vector<16x128xf32>
    %190 = arith.truncf %189 : vector<16x128xf32> to vector<16x128xbf16>
    %c3_131 = arith.constant 3 : index
    %c0_132 = arith.constant 0 : index
    %c0_133 = arith.constant 0 : index
    %191 = vector.load %arg9[%c3_131, %c0_132, %c0_133] : memref<4x128x128xbf16, #tpu.memory_space<vmem>>, vector<1x128x128xbf16>
    %192 = vector.shape_cast %191 : vector<1x128x128xbf16> to vector<128x128xbf16>
    %cst_134 = arith.constant dense<0.000000e+00> : vector<16x128xf32>
    %193 = tpu.matmul %190, %192, %cst_134 {dimension_numbers = #tpu.dot_dimension_numbers<[1], [0], [0], [1], [0, 0, 1, 1], [], []>} : vector<16x128xbf16>, vector<128x128xbf16>, vector<16x128xf32> -> vector<16x128xf32>
    %c0_135 = arith.constant 0 : index
    %c0_136 = arith.constant 0 : index
    %194 = vector.load %arg14[%c0_135, %c0_136] : memref<16x128xf32, #tpu.memory_space<vmem>>, vector<16x128xf32>
    %195 = arith.addf %194, %193 : vector<16x128xf32>
    %c0_137 = arith.constant 0 : index
    %c0_138 = arith.constant 0 : index
    %196 = vector.load %arg14[%c0_137, %c0_138] : memref<16x128xf32, #tpu.memory_space<vmem>>, vector<16x128xf32>
    tpu.vector_store %arg14[%c0_137, %c0_138], %195 {strides = array<i32>} : memref<16x128xf32, #tpu.memory_space<vmem>>, vector<16x128xf32>,
    %c0_139 = arith.constant 0 : index
    %c0_140 = arith.constant 0 : index
    %197 = vector.load %arg14[%c0_139, %c0_140] : memref<16x128xf32, #tpu.memory_space<vmem>>, vector<16x128xf32>
    %c0_141 = arith.constant 0 : index
    %c0_142 = arith.constant 0 : index
    %198 = vector.load %arg10[%c0_141, %c0_142] : memref<1x128xf32, #tpu.memory_space<vmem>>, vector<1x128xf32>
    %199 = vector.broadcast %198 : vector<1x128xf32> to vector<16x128xf32>
    %200 = arith.addf %197, %199 : vector<16x128xf32>
    %201 = arith.extf %3 : vector<16x128xbf16> to vector<16x128xf32>
    %202 = arith.addf %200, %201 : vector<16x128xf32>
    %c0_143 = arith.constant 0 : index
    %c0_144 = arith.constant 0 : index
    %203 = vector.load %arg11[%c0_143, %c0_144] : memref<1x128xf32, #tpu.memory_space<vmem>>, vector<1x128xf32>
    %c0_145 = arith.constant 0 : index
    %c0_146 = arith.constant 0 : index
    %204 = vector.load %arg12[%c0_145, %c0_146] : memref<1x128xf32, #tpu.memory_space<vmem>>, vector<1x128xf32>
    %cst_147 = arith.constant dense<0.000000e+00> : vector<16xf32>
    %205 = vector.multi_reduction <add>, %202, %cst_147 [1] : vector<16x128xf32> to vector<16xf32>
    %206 = vector.shape_cast %205 : vector<16xf32> to vector<16x1xf32>
    %cst_148 = arith.constant 3.125000e-02 : f32
    %207 = vector.broadcast %cst_148 : f32 to vector<16x1xf32>
    %208 = arith.mulf %206, %207 : vector<16x1xf32>
    %209 = vector.broadcast %208 : vector<16x1xf32> to vector<16x128xf32>
    %210 = arith.subf %202, %209 : vector<16x128xf32>
    %211 = tpu.iota {dimensions = array<i32: 1>} : vector<16x128xi32>
    %c32_i32 = arith.constant 32 : i32
    %212 = vector.broadcast %c32_i32 : i32 to vector<16x128xi32>
    %213 = arith.cmpi slt, %211, %212 : vector<16x128xi32>
    %cst_149 = arith.constant 0.000000e+00 : f32
    %214 = vector.broadcast %cst_149 : f32 to vector<16x128xf32>
    %215 = arith.select %213, %210, %214 : vector<16x128xi1>, vector<16x128xf32>
    %216 = arith.mulf %215, %215 : vector<16x128xf32>
    %cst_150 = arith.constant dense<0.000000e+00> : vector<16xf32>
    %217 = vector.multi_reduction <add>, %216, %cst_150 [1] : vector<16x128xf32> to vector<16xf32>
    %218 = vector.shape_cast %217 : vector<16xf32> to vector<16x1xf32>
    %cst_151 = arith.constant 3.125000e-02 : f32
    %219 = vector.broadcast %cst_151 : f32 to vector<16x1xf32>
    %220 = arith.mulf %218, %219 : vector<16x1xf32>
    %cst_152 = arith.constant 9.99999974E-6 : f32
    %221 = vector.broadcast %cst_152 : f32 to vector<16x1xf32>
    %222 = arith.addf %220, %221 : vector<16x1xf32>
    %223 = math.rsqrt %222 : vector<16x1xf32>
    %224 = vector.broadcast %223 : vector<16x1xf32> to vector<16x128xf32>
    %225 = arith.mulf %215, %224 : vector<16x128xf32>
    %226 = vector.broadcast %203 : vector<1x128xf32> to vector<16x128xf32>
    %227 = arith.mulf %225, %226 : vector<16x128xf32>
    %228 = vector.broadcast %204 : vector<1x128xf32> to vector<16x128xf32>
    %229 = arith.addf %227, %228 : vector<16x128xf32>
    %230 = arith.truncf %229 : vector<16x128xf32> to vector<16x128xbf16>
    %c0_153 = arith.constant 0 : index
    %c0_154 = arith.constant 0 : index
    %c0_155 = arith.constant 0 : index
    %231 = vector.load %arg13[%c0_153, %c0_154, %c0_155] : memref<1x16x128xbf16, #tpu.memory_space<vmem>>, vector<1x16x128xbf16>
    %232 = vector.shape_cast %231 : vector<1x16x128xbf16> to vector<16x128xbf16>
    %233 = vector.shape_cast %230 : vector<16x128xbf16> to vector<1x16x128xbf16>
    tpu.vector_store %arg13[%c0_153, %c0_154, %c0_155], %233 {strides = array<i32>} : memref<1x16x128xbf16, #tpu.memory_space<vmem>>, vector<1x16x128xbf16>,
    return
  }
  func.func @transform_0(%arg0: i32) -> (i32, i32, i32) {
    %c0_i32 = arith.constant 0 : i32
    %c0_i32_0 = arith.constant 0 : i32
    %c0_i32_1 = arith.constant 0 : i32
    return %arg0, %c0_i32, %c0_i32_0 : i32, i32, i32
  }
  func.func @transform_1(%arg0: i32) -> (i32, i32, i32) {
    %c0_i32 = arith.constant 0 : i32
    %c0_i32_0 = arith.constant 0 : i32
    %c0_i32_1 = arith.constant 0 : i32
    return %arg0, %c0_i32, %c0_i32_0 : i32, i32, i32
  }
  func.func @transform_2(%arg0: i32) -> (i32, i32, i32) {
    %c0_i32 = arith.constant 0 : i32
    %c0_i32_0 = arith.constant 0 : i32
    %c0_i32_1 = arith.constant 0 : i32
    %c0_i32_2 = arith.constant 0 : i32
    return %c0_i32, %c0_i32_0, %c0_i32_1 : i32, i32, i32
  }
  func.func @transform_3(%arg0: i32) -> (i32, i32, i32) {
    %c0_i32 = arith.constant 0 : i32
    %c0_i32_0 = arith.constant 0 : i32
    %c0_i32_1 = arith.constant 0 : i32
    %c0_i32_2 = arith.constant 0 : i32
    return %c0_i32, %c0_i32_0, %c0_i32_1 : i32, i32, i32
  }
  func.func @transform_4(%arg0: i32) -> (i32, i32, i32) {
    %c0_i32 = arith.constant 0 : i32
    %c0_i32_0 = arith.constant 0 : i32
    %c0_i32_1 = arith.constant 0 : i32
    %c0_i32_2 = arith.constant 0 : i32
    return %c0_i32, %c0_i32_0, %c0_i32_1 : i32, i32, i32
  }
  func.func @transform_5(%arg0: i32) -> (i32, i32, i32) {
    %c0_i32 = arith.constant 0 : i32
    %c0_i32_0 = arith.constant 0 : i32
    %c0_i32_1 = arith.constant 0 : i32
    %c0_i32_2 = arith.constant 0 : i32
    return %c0_i32, %c0_i32_0, %c0_i32_1 : i32, i32, i32
  }
  func.func @transform_6(%arg0: i32) -> (i32, i32, i32) {
    %c0_i32 = arith.constant 0 : i32
    %c0_i32_0 = arith.constant 0 : i32
    %c0_i32_1 = arith.constant 0 : i32
    %c0_i32_2 = arith.constant 0 : i32
    return %c0_i32, %c0_i32_0, %c0_i32_1 : i32, i32, i32
  }
  func.func @transform_7(%arg0: i32) -> (i32, i32, i32) {
    %c0_i32 = arith.constant 0 : i32
    %c0_i32_0 = arith.constant 0 : i32
    %c0_i32_1 = arith.constant 0 : i32
    %c0_i32_2 = arith.constant 0 : i32
    return %c0_i32, %c0_i32_0, %c0_i32_1 : i32, i32, i32
  }
  func.func @transform_8(%arg0: i32) -> (i32, i32, i32) {
    %c0_i32 = arith.constant 0 : i32
    %c0_i32_0 = arith.constant 0 : i32
    %c0_i32_1 = arith.constant 0 : i32
    %c0_i32_2 = arith.constant 0 : i32
    return %c0_i32, %c0_i32_0, %c0_i32_1 : i32, i32, i32
  }
  func.func @transform_9(%arg0: i32) -> (i32, i32) {
    %c0_i32 = arith.constant 0 : i32
    %c0_i32_0 = arith.constant 0 : i32
    %c0_i32_1 = arith.constant 0 : i32
    return %c0_i32, %c0_i32_0 : i32, i32
  }
  func.func @transform_10(%arg0: i32) -> (i32, i32) {
    %c0_i32 = arith.constant 0 : i32
    %c0_i32_0 = arith.constant 0 : i32
    %c0_i32_1 = arith.constant 0 : i32
    return %c0_i32, %c0_i32_0 : i32, i32
  }
  func.func @transform_11(%arg0: i32) -> (i32, i32) {
    %c0_i32 = arith.constant 0 : i32
    %c0_i32_0 = arith.constant 0 : i32
    %c0_i32_1 = arith.constant 0 : i32
    return %c0_i32, %c0_i32_0 : i32, i32
  }
  func.func @transform_12(%arg0: i32) -> (i32, i32, i32) {
    %c0_i32 = arith.constant 0 : i32
    %c0_i32_0 = arith.constant 0 : i32
    %c0_i32_1 = arith.constant 0 : i32
    return %arg0, %c0_i32, %c0_i32_0 : i32, i32, i32
  }
}

</mosaic_0001>

<llo_original>
// kernel: _lambda_.12
$region0: #{_lambda_.12}
  #allocation0 [shape = 'u32[]', space=smem, size = 0x4, offset = 0x4, fixed_abs, tag = 'smem constant byte address 0x4 - core index']
  #allocation1 [shape = 'u32[72,128]{1,0:T(1,128)}', space=vmem, size = 0x9000, scoped, tag = 'internal scratch']
  #allocation2 [shape = 'f32[16,128]{1,0:T(8,128)}', space=vmem, size = 0x2000, scoped, tag = 'scratch operand']
  %s0 = inlined_call_operand.vmem [shape: bf16[16,128], index: 0, kind: input, shape index: {}]
  %s1 = inlined_call_operand.vmem [shape: bf16[128,128], index: 1, kind: input, shape index: {}]
  %s2 = inlined_call_operand.vmem [shape: f32[1,128], index: 2, kind: input, shape index: {}]
  %s3 = inlined_call_operand.vmem [shape: bf16[16,128], index: 3, kind: output, shape index: {}]
  %s4 = sld [smem:[#allocation0]]
  $region30: #{_lambda_.12} parent=0
    _
  %s6 = ssub.s32 1, %s4
  %s7 = scalar_select 0, %s6, %s4
  // Predicated region
  $region2: #{_lambda_.12} parent=0 // pred_check
    _
  $region3: #{_lambda_.12} parent=0 // pred_check_branch
    %9 = sbr.rel (0) target = $region5
  $region4: #{_lambda_.12} parent=0 // pred_region
    _
  $region5: #{_lambda_.12} parent=0 // pred_fallthru
    _
  // Predicated region
  $region6: #{_lambda_.12} parent=0 // pred_check
    _
  $region7: #{_lambda_.12} parent=0 // pred_check_branch
    %11 = sbr.rel (0) target = $region9
  $region8: #{_lambda_.12} parent=0 // pred_region
    _
  $region9: #{_lambda_.12} parent=0 // pred_fallthru
    _
  // Predicated region
  $region10: #{_lambda_.12} parent=0 // pred_check
    _
  $region11: #{_lambda_.12} parent=0 // pred_check_branch
    %13 = sbr.rel (0) target = $region13
  $region12: #{_lambda_.12} parent=0 // pred_region
    _
  $region13: #{_lambda_.12} parent=0 // pred_fallthru
    _
  %p14 = scmp.eq.s32.totalorder 0, 0
  // Predicated region
  $region14: #{_lambda_.12} parent=0 // pred_check
    %p15 = pneg %p14
  $region15: #{_lambda_.12} parent=0 // pred_check_branch
    %17 = sbr.rel (%p15) target = $region17
  $region16: #{_lambda_.12} parent=0 // pred_region
    %18 = vst [vmem:[#allocation2] sm:$0xff] 0.0
    %19 = vst [vmem:[#allocation2 + $0x8] sm:$0xff] 0.0
  $region17: #{_lambda_.12} parent=0 // pred_fallthru
    _
  %v20 = vld [vmem:[#allocation2] sm:$0xff]
  %v21 = vld [vmem:[#allocation2 + $0x8] sm:$0xff]
  %v22 = vld [vmem:[%s0] sm:$0xf]
  %v23 = vld [vmem:[%s0 + $0x4] sm:$0xf]
  %v24 = vld [vmem:[%s1] sm:$0xf]
  %v25 = vld [vmem:[%s1 + $0x4] sm:$0xf]
  %v26 = vld [vmem:[%s1 + $0x8] sm:$0xf]
  %v27 = vld [vmem:[%s1 + $0xc] sm:$0xf]
  %v28 = vld [vmem:[%s1 + $0x10] sm:$0xf]
  %v29 = vld [vmem:[%s1 + $0x14] sm:$0xf]
  %v30 = vld [vmem:[%s1 + $0x18] sm:$0xf]
  %v31 = vld [vmem:[%s1 + $0x1c] sm:$0xf]
  %v32 = vld [vmem:[%s1 + $0x20] sm:$0xf]
  %v33 = vld [vmem:[%s1 + $0x24] sm:$0xf]
  %v34 = vld [vmem:[%s1 + $0x28] sm:$0xf]
  %v35 = vld [vmem:[%s1 + $0x2c] sm:$0xf]
  %v36 = vld [vmem:[%s1 + $0x30] sm:$0xf]
  %v37 = vld [vmem:[%s1 + $0x34] sm:$0xf]
  %v38 = vld [vmem:[%s1 + $0x38] sm:$0xf]
  %v39 = vld [vmem:[%s1 + $0x3c] sm:$0xf]
  %v42 = vunpack.c.l.b16 %v22
  %v43 = vunpack.c.l.b16 %v23
  %v44 = vpack.c.b16 %v43, %v42
  %v62 = vunpack.c.l.b16 %v24
  %v63 = vunpack.c.l.b16 %v25
  %v64 = vunpack.c.l.b16 %v26
  %v65 = vunpack.c.l.b16 %v27
  %v66 = vunpack.c.l.b16 %v28
  %v67 = vunpack.c.l.b16 %v29
  %v68 = vunpack.c.l.b16 %v30
  %v69 = vunpack.c.l.b16 %v31
  %v70 = vunpack.c.l.b16 %v32
  %v71 = vunpack.c.l.b16 %v33
  %v72 = vunpack.c.l.b16 %v34
  %v73 = vunpack.c.l.b16 %v35
  %v74 = vunpack.c.l.b16 %v36
  %v75 = vunpack.c.l.b16 %v37
  %v76 = vunpack.c.l.b16 %v38
  %v77 = vunpack.c.l.b16 %v39
  %v78 = vpack.c.b16 %v63, %v62
  %v79 = vpack.c.b16 %v65, %v64
  %v80 = vpack.c.b16 %v67, %v66
  %v81 = vpack.c.b16 %v69, %v68
  %v82 = vpack.c.b16 %v71, %v70
  %v83 = vpack.c.b16 %v73, %v72
  %v84 = vpack.c.b16 %v75, %v74
  %v85 = vpack.c.b16 %v77, %v76
  %94 = vmatpush.bf16.msra.mxu0 %v85
  %95 = vmatpush.bf16.msra.mxu0 %v84
  %96 = vmatpush.bf16.msra.mxu0 %v83
  %97 = vmatpush.bf16.msra.mxu0 %v82
  %98 = vmatpush.bf16.msra.mxu0 %v81
  %99 = vmatpush.bf16.msra.mxu0 %v80
  %100 = vmatpush.bf16.msra.mxu0 %v79
  %101 = vmatpush.bf16.msra.mxu0 %v78
  %102 = vmatmul.bf16.gmra.mxu0 %v44
  %v103 = vpop.f32.mrf.mxu0
  %v104 = vadd.f32 0.0, %v103
  %v105 = vpop.f32.mrf.mxu0
  %v106 = vadd.f32 0.0, %v105
  %107 = vdwg.mxu0
  %v108 = vadd.f32 %v20, %v104
  %v109 = vadd.f32 %v21, %v106
  %110 = vst [vmem:[#allocation2] sm:$0xff] %v108
  %111 = vst [vmem:[#allocation2 + $0x8] sm:$0xff] %v109
  // Predicated region
  $region18: #{_lambda_.12} parent=0 // pred_check
    %p112 = pneg %p14
  $region19: #{_lambda_.12} parent=0 // pred_check_branch
    %114 = sbr.rel (%p112) target = $region21
  $region20: #{_lambda_.12} parent=0 // pred_region
    %v115 = vld [vmem:[#allocation2] sm:$0xff]
    %v116 = vld [vmem:[#allocation2 + $0x8] sm:$0xff]
    %v117 = vld [vmem:[%s2] sm:$0x1]
    %v119 = vperm.slane %v117, 0
    %v121 = vadd.f32 %v115, %v119
    %v122 = vadd.f32 %v116, %v119
    %v123 = vpack.c.bf16 %v121, %v121
    %v124 = vpack.c.bf16 %v122, %v122
    %125 = vst [vmem:[%s3] sm:$0xf] %v123
    %126 = vst [vmem:[%s3 + $0x4] sm:$0xf] %v124
  $region21: #{_lambda_.12} parent=0 // pred_fallthru
    _
  // Predicated region
  $region22: #{_lambda_.12} parent=0 // pred_check
    _
  $region23: #{_lambda_.12} parent=0 // pred_check_branch
    %128 = sbr.rel (0) target = $region25
  $region24: #{_lambda_.12} parent=0 // pred_region
    _
  $region25: #{_lambda_.12} parent=0 // pred_fallthru
    _
  // Predicated region
  $region26: #{_lambda_.12} parent=0 // pred_check
    _
  $region27: #{_lambda_.12} parent=0 // pred_check_branch
    %130 = sbr.rel (0) target = $region29
  $region28: #{_lambda_.12} parent=0 // pred_region
    _
  $region29: #{_lambda_.12} parent=0 // pred_fallthru
    _

// kernel: _lambda_.11
$region0: #{_lambda_.11}
  #allocation0 [shape = 'u32[]', space=smem, size = 0x4, offset = 0x4, fixed_abs, tag = 'smem constant byte address 0x4 - core index']
  #allocation1 [shape = 'u32[72,128]{1,0:T(1,128)}', space=vmem, size = 0x9000, scoped, tag = 'internal scratch']
  #allocation2 [shape = 'f32[80,128]{1,0:T(8,128)}', space=vmem, size = 0xa000, scoped, tag = 'scratch operand']
  %s0 = inlined_call_operand.vmem [shape: bf16[160,128], index: 0, kind: input, shape index: {}]
  %s1 = inlined_call_operand.vmem [shape: bf16[128,128], index: 1, kind: input, shape index: {}]
  %s2 = inlined_call_operand.vmem [shape: f32[1,128], index: 2, kind: input, shape index: {}]
  %s3 = inlined_call_operand.vmem [shape: bf16[160,128], index: 3, kind: output, shape index: {}]
  %s4 = sld [smem:[#allocation0]]
  $region53: #{_lambda_.11} parent=0
    _
  %s6 = ssub.s32 1, %s4
  %s7 = scalar_select 0, %s6, %s4
  loop: start=0, step=1, limit=4
  $region2: #{_lambda_.11} parent=0 // loop_pre_header
    _
  $region3: #{_lambda_.11} parent=0 // loop_header
    %s9 = sphi 0, %s13
    %p10 = scmp.ge.s32.totalorder %s9, 4
    %s16 = sphi 0, %s35
    %s17 = sphi 0, %s31
    %s18 = sphi 0, %s27
    %s19 = sphi 0, %s16
    %s20 = sphi 0, %s17
    %s21 = sphi 0, %s18
    %s22 = sphi 0, %s19
    %s23 = sphi 0, %s20
    %s24 = sphi 0, %s21
    %s40 = sphi 0, %s42
    %s43 = sphi 0, %s40
    %s44 = sphi 0, %s43
    %s60 = sphi 0, %s44
    %s68 = sphi 0, %s70
    %s71 = sphi 0, %s68
    %s72 = sphi 0, %s71
    %s88 = sphi 0, %s72
    %s94 = sphi 0, %s96
    %s97 = sphi 0, %s94
    %s98 = sphi 0, %s97
    %s114 = sphi 0, %s98
    %s122 = sphi 0, %s124
    %s125 = sphi 0, %s122
    %s126 = sphi 0, %s125
    %s142 = sphi 0, %s126
  $region4: #{_lambda_.11} parent=0 // loop_header_branch
    %12 = sbr.rel (%p10) target = $region8
  $region5: #{_lambda_.11} parent=0 // loop_body
    %s14 = ssub.s32 %s9, 1
    %s15 = ssub.s32 %s9, 2
    %s25 = sadd.s32 1, %s18
    %p26 = scmp.ge.s32.totalorder %s25, 1
    %s27 = scalar_select %p26, 0, %s25
    %s28 = sadd.s32 1, %s17
    %s29 = scalar_select %p26, %s28, %s17
    %p30 = scmp.ge.s32.totalorder %s29, 1
    %s31 = scalar_select %p30, 0, %s29
    %s32 = sadd.s32 1, %s16
    %s33 = scalar_select %p30, %s32, %s16
    %p34 = scmp.ge.s32.totalorder %s33, 2
    %s35 = scalar_select %p34, 0, %s33
    %s36 = ssub.s32 %s16, %s35
    %s37 = ssub.s32 %s18, %s27
    %s38 = sor.u32 %s36, %s37
    %p39 = scmp.eq.s32.totalorder %s38, 0
    %s41 = sadd.s32 %s40, 1
    %s42 = scalar_select %p39, %s40, %s41
    %p45 = pneg %p39
    %p46 = scmp.eq.s32.totalorder %s9, 1
    %p47 = por %p45, %p46
    %p48 = scmp.ne.s32.totalorder %s40, %s43
    %p49 = scmp.eq.s32.totalorder %s9, 0
    %p50 = por %p48, %p49
    %p51 = scmp.ne.s32.totalorder %s40, %s43
    %p52 = scmp.eq.s32.totalorder %s14, 1
    %p53 = por %p51, %p52
    %p54 = scmp.ne.s32.totalorder %s43, %s44
    %p55 = scmp.eq.s32.totalorder %s14, 0
    %p56 = por %p54, %p55
    %p57 = scmp.ne.s32.totalorder %s43, %s44
    %p58 = scmp.eq.s32.totalorder %s15, 1
    %p59 = por %p57, %p58
    %p61 = scmp.ne.s32.totalorder %s44, %s60
    %p62 = scmp.eq.s32.totalorder %s15, 0
    %p63 = por %p61, %p62
    %s64 = ssub.s32 %s18, %s27
    %s65 = ssub.s32 %s17, %s31
    %s66 = sor.u32 %s64, %s65
    %p67 = scmp.eq.s32.totalorder %s66, 0
    %s69 = sadd.s32 %s68, 1
    %s70 = scalar_select %p67, %s68, %s69
    %p73 = pneg %p67
    %p74 = scmp.eq.s32.totalorder %s9, 1
    %p75 = por %p73, %p74
    %p76 = scmp.ne.s32.totalorder %s68, %s71
    %p77 = scmp.eq.s32.totalorder %s9, 0
    %p78 = por %p76, %p77
    %p79 = scmp.ne.s32.totalorder %s68, %s71
    %p80 = scmp.eq.s32.totalorder %s14, 1
    %p81 = por %p79, %p80
    %p82 = scmp.ne.s32.totalorder %s71, %s72
    %p83 = scmp.eq.s32.totalorder %s14, 0
    %p84 = por %p82, %p83
    %p85 = scmp.ne.s32.totalorder %s71, %s72
    %p86 = scmp.eq.s32.totalorder %s15, 1
    %p87 = por %p85, %p86
    %p89 = scmp.ne.s32.totalorder %s72, %s88
    %p90 = scmp.eq.s32.totalorder %s15, 0
    %p91 = por %p89, %p90
    %s92 = ssub.s32 %s17, %s31
    %p93 = scmp.eq.s32.totalorder %s92, 0
    %s95 = sadd.s32 %s94, 1
    %s96 = scalar_select %p93, %s94, %s95
    %p99 = pneg %p93
    %p100 = scmp.eq.s32.totalorder %s9, 1
    %p101 = por %p99, %p100
    %p102 = scmp.ne.s32.totalorder %s94, %s97
    %p103 = scmp.eq.s32.totalorder %s9, 0
    %p104 = por %p102, %p103
    %p105 = scmp.ne.s32.totalorder %s94, %s97
    %p106 = scmp.eq.s32.totalorder %s14, 1
    %p107 = por %p105, %p106
    %p108 = scmp.ne.s32.totalorder %s97, %s98
    %p109 = scmp.eq.s32.totalorder %s14, 0
    %p110 = por %p108, %p109
    %p111 = scmp.ne.s32.totalorder %s97, %s98
    %p112 = scmp.eq.s32.totalorder %s15, 1
    %p113 = por %p111, %p112
    %p115 = scmp.ne.s32.totalorder %s98, %s114
    %p116 = scmp.eq.s32.totalorder %s15, 0
    %p117 = por %p115, %p116
    %s118 = ssub.s32 %s16, %s35
    %s119 = ssub.s32 %s17, %s31
    %s120 = sor.u32 %s118, %s119
    %p121 = scmp.eq.s32.totalorder %s120, 0
    %s123 = sadd.s32 %s122, 1
    %s124 = scalar_select %p121, %s122, %s123
    %p127 = pneg %p121
    %p128 = scmp.eq.s32.totalorder %s9, 1
    %p129 = por %p127, %p128
    %p130 = scmp.ne.s32.totalorder %s122, %s125
    %p131 = scmp.eq.s32.totalorder %s9, 0
    %p132 = por %p130, %p131
    %p133 = scmp.ne.s32.totalorder %s122, %s125
    %p134 = scmp.eq.s32.totalorder %s14, 1
    %p135 = por %p133, %p134
    %p136 = scmp.ne.s32.totalorder %s125, %s126
    %p137 = scmp.eq.s32.totalorder %s14, 0
    %p138 = por %p136, %p137
    %p139 = scmp.ne.s32.totalorder %s125, %s126
    %p140 = scmp.eq.s32.totalorder %s15, 1
    %p141 = por %p139, %p140
    %p143 = scmp.ne.s32.totalorder %s126, %s142
    %p144 = scmp.eq.s32.totalorder %s15, 0
    %p145 = por %p143, %p144
    %p146 = scmp.le.s32.totalorder 1, %s9
    %p147 = scmp.lt.s32.totalorder %s9, 3
    %p148 = pnand %p146, %p147
    %p149 = pneg %p148
    // Predicated region
    $region9: #{_lambda_.11} parent=5 // pred_check
      _
    $region10: #{_lambda_.11} parent=5 // pred_check_branch
      %151 = sbr.rel (%p148) target = $region12
    $region11: #{_lambda_.11} parent=5 // pred_region
      %s152 = ssub.s32 %s9, 1
      // Predicated region
      $region13: #{_lambda_.11} parent=11 // pred_check
        %p153 = pneg %p84
      $region14: #{_lambda_.11} parent=11 // pred_check_branch
        %155 = sbr.rel (%p153) target = $region16
      $region15: #{_lambda_.11} parent=11 // pred_region
        %s156 = smul.u32 16, %s21
        %p157 = scmp.lt.s32.totalorder %s156, 15
        %s158 = scalar_select %p157, %s156, 15
        %p159 = scmp.lt.s32.totalorder %s20, 0
        %s160 = scalar_select %p159, %s20, 0
        %s161 = sadd.s32 %s160, %s158
        %s162 = smul.addr %s161, 4
        %s163 = scalar_lea.vmem %s1, %s162
        %s164 = smul.u32 16, %s21
      $region16: #{_lambda_.11} parent=11 // pred_fallthru
        _
      // Predicated region
      $region17: #{_lambda_.11} parent=11 // pred_check
        %p165 = pneg %p110
      $region18: #{_lambda_.11} parent=11 // pred_check_branch
        %167 = sbr.rel (%p165) target = $region20
      $region19: #{_lambda_.11} parent=11 // pred_region
        %p168 = scmp.lt.s32.totalorder %s20, 0
        %s169 = scalar_select %p168, %s20, 0
        %s170 = scalar_lea.vmem %s2, %s169
      $region20: #{_lambda_.11} parent=11 // pred_fallthru
        _
    $region12: #{_lambda_.11} parent=5 // pred_fallthru
      _
    %p171 = scmp.lt.s32.totalorder %s9, 2
    // Predicated region
    $region21: #{_lambda_.11} parent=5 // pred_check
      %p172 = pneg %p171
    $region22: #{_lambda_.11} parent=5 // pred_check_branch
      %174 = sbr.rel (%p172) target = $region24
    $region23: #{_lambda_.11} parent=5 // pred_region
      // Predicated region
      $region25: #{_lambda_.11} parent=23 // pred_check
        %p175 = pneg %p50
      $region26: #{_lambda_.11} parent=23 // pred_check_branch
        %177 = sbr.rel (%p175) target = $region28
      $region27: #{_lambda_.11} parent=23 // pred_region
        %s178 = smul.u32 10, %s16
        %p179 = scmp.lt.s32.totalorder %s178, 19
        %s180 = scalar_select %p179, %s178, 19
        %p181 = scmp.lt.s32.totalorder %s18, 0
        %s182 = scalar_select %p181, %s18, 0
        %s183 = sadd.s32 %s182, %s180
        %s184 = smul.addr %s183, 4
        %s185 = scalar_lea.vmem %s0, %s184
        %s186 = smul.u32 10, %s16
      $region28: #{_lambda_.11} parent=23 // pred_fallthru
        _
    $region24: #{_lambda_.11} parent=5 // pred_fallthru
      _
    %p187 = scmp.le.s32.totalorder 1, %s9
    %p188 = scmp.lt.s32.totalorder %s9, 3
    %p189 = pnand %p187, %p188
    %p190 = pneg %p189
    // Predicated region
    $region29: #{_lambda_.11} parent=5 // pred_check
      _
    $region30: #{_lambda_.11} parent=5 // pred_check_branch
      %192 = sbr.rel (%p189) target = $region32
    $region31: #{_lambda_.11} parent=5 // pred_region
      %s193 = ssub.s32 %s9, 1
      %s194 = smul.u32 10, %s19
      %p195 = scmp.lt.s32.totalorder %s194, 19
      %s196 = scalar_select %p195, %s194, 19
      %p197 = scmp.lt.s32.totalorder %s21, 0
      %s198 = scalar_select %p197, %s21, 0
      %s199 = sadd.s32 %s198, %s196
      %s200 = smul.addr %s199, 4
      %s201 = scalar_lea.vmem %s0, %s200
      %p202 = pneg %p56
      %p203 = pneg %p53
      %s204 = smul.u32 16, %s21
      %p205 = scmp.lt.s32.totalorder %s204, 15
      %s206 = scalar_select %p205, %s204, 15
      %p207 = scmp.lt.s32.totalorder %s20, 0
      %s208 = scalar_select %p207, %s20, 0
      %s209 = sadd.s32 %s208, %s206
      %s210 = smul.addr %s209, 4
      %s211 = scalar_lea.vmem %s1, %s210
      %p212 = pneg %p84
      %p213 = pneg %p81
      %p214 = scmp.lt.s32.totalorder %s20, 0
      %s215 = scalar_select %p214, %s20, 0
      %s216 = scalar_lea.vmem %s2, %s215
      %p217 = pneg %p110
      %p218 = pneg %p107
      %p219 = pneg %p138
      %p220 = pneg %p135
      %s221 = smul.u32 10, %s19
      %p222 = scmp.lt.s32.totalorder %s221, 19
      %s223 = scalar_select %p222, %s221, 19
      %p224 = scmp.lt.s32.totalorder %s20, 0
      %s225 = scalar_select %p224, %s20, 0
      %s226 = sadd.s32 %s225, %s223
      %s227 = smul.addr %s226, 4
      %s228 = scalar_lea.vmem %s3, %s227
      %s229 = smul.u32 10, %s19
      %p230 = scmp.lt.s32.totalorder %s229, 19
      %s231 = scalar_select %p230, %s229, 19
      %p232 = scmp.lt.s32.totalorder %s21, 0
      %s233 = scalar_select %p232, %s21, 0
      %s234 = sadd.s32 %s233, %s231
      %s235 = smul.addr %s234, 4
      %s236 = scalar_lea.vmem %s0, %s235
      %s237 = smul.u32 10, %s19
      %s238 = smul.u32 16, %s21
      %p239 = scmp.lt.s32.totalorder %s238, 15
      %s240 = scalar_select %p239, %s238, 15
      %p241 = scmp.lt.s32.totalorder %s20, 0
      %s242 = scalar_select %p241, %s20, 0
      %s243 = sadd.s32 %s242, %s240
      %s244 = smul.addr %s243, 4
      %s245 = scalar_lea.vmem %s1, %s244
      %s246 = smul.u32 16, %s21
      %p247 = scmp.lt.s32.totalorder %s20, 0
      %s248 = scalar_select %p247, %s20, 0
      %s249 = scalar_lea.vmem %s2, %s248
      %s250 = smul.u32 10, %s19
      %p251 = scmp.lt.s32.totalorder %s250, 19
      %s252 = scalar_select %p251, %s250, 19
      %p253 = scmp.lt.s32.totalorder %s20, 0
      %s254 = scalar_select %p253, %s20, 0
      %s255 = sadd.s32 %s254, %s252
      %s256 = smul.addr %s255, 4
      %s257 = scalar_lea.vmem %s3, %s256
      %s258 = smul.u32 10, %s19
      %p259 = scmp.eq.s32.totalorder %s21, 0
      // Predicated region
      $region33: #{_lambda_.11} parent=31 // pred_check
        %p260 = pneg %p259
      $region34: #{_lambda_.11} parent=31 // pred_check_branch
        %262 = sbr.rel (%p260) target = $region36
      $region35: #{_lambda_.11} parent=31 // pred_region
        %263 = vst [vmem:[#allocation2] sm:$0xff] 0.0
        %264 = vst [vmem:[#allocation2 + $0x8] sm:$0xff] 0.0
        %265 = vst [vmem:[#allocation2 + $0x10] sm:$0xff] 0.0
        %266 = vst [vmem:[#allocation2 + $0x18] sm:$0xff] 0.0
        %267 = vst [vmem:[#allocation2 + $0x20] sm:$0xff] 0.0
        %268 = vst [vmem:[#allocation2 + $0x28] sm:$0xff] 0.0
        %269 = vst [vmem:[#allocation2 + $0x30] sm:$0xff] 0.0
        %270 = vst [vmem:[#allocation2 + $0x38] sm:$0xff] 0.0
        %271 = vst [vmem:[#allocation2 + $0x40] sm:$0xff] 0.0
        %272 = vst [vmem:[#allocation2 + $0x48] sm:$0xff] 0.0
      $region36: #{_lambda_.11} parent=31 // pred_fallthru
        _
      %v273 = vld [vmem:[#allocation2] sm:$0xff]
      %v274 = vld [vmem:[#allocation2 + $0x8] sm:$0xff]
      %v275 = vld [vmem:[#allocation2 + $0x10] sm:$0xff]
      %v276 = vld [vmem:[#allocation2 + $0x18] sm:$0xff]
      %v277 = vld [vmem:[#allocation2 + $0x20] sm:$0xff]
      %v278 = vld [vmem:[#allocation2 + $0x28] sm:$0xff]
      %v279 = vld [vmem:[#allocation2 + $0x30] sm:$0xff]
      %v280 = vld [vmem:[#allocation2 + $0x38] sm:$0xff]
      %v281 = vld [vmem:[#allocation2 + $0x40] sm:$0xff]
      %v282 = vld [vmem:[#allocation2 + $0x48] sm:$0xff]
      %v283 = vld [vmem:[%s236] sm:$0xf]
      %v284 = vld [vmem:[%s236 + $0x4] sm:$0xf]
      %v285 = vld [vmem:[%s236 + $0x8] sm:$0xf]
      %v286 = vld [vmem:[%s236 + $0xc] sm:$0xf]
      %v287 = vld [vmem:[%s236 + $0x10] sm:$0xf]
      %v288 = vld [vmem:[%s236 + $0x14] sm:$0xf]
      %v289 = vld [vmem:[%s236 + $0x18] sm:$0xf]
      %v290 = vld [vmem:[%s236 + $0x1c] sm:$0xf]
      %v291 = vld [vmem:[%s236 + $0x20] sm:$0xf]
      %v292 = vld [vmem:[%s236 + $0x24] sm:$0xf]
      %v293 = vld [vmem:[%s245] sm:$0xf]
      %v294 = vld [vmem:[%s245 + $0x4] sm:$0xf]
      %v295 = vld [vmem:[%s245 + $0x8] sm:$0xf]
      %v296 = vld [vmem:[%s245 + $0xc] sm:$0xf]
      %v297 = vld [vmem:[%s245 + $0x10] sm:$0xf]
      %v298 = vld [vmem:[%s245 + $0x14] sm:$0xf]
      %v299 = vld [vmem:[%s245 + $0x18] sm:$0xf]
      %v300 = vld [vmem:[%s245 + $0x1c] sm:$0xf]
      %v301 = vld [vmem:[%s245 + $0x20] sm:$0xf]
      %v302 = vld [vmem:[%s245 + $0x24] sm:$0xf]
      %v303 = vld [vmem:[%s245 + $0x28] sm:$0xf]
      %v304 = vld [vmem:[%s245 + $0x2c] sm:$0xf]
      %v305 = vld [vmem:[%s245 + $0x30] sm:$0xf]
      %v306 = vld [vmem:[%s245 + $0x34] sm:$0xf]
      %v307 = vld [vmem:[%s245 + $0x38] sm:$0xf]
      %v308 = vld [vmem:[%s245 + $0x3c] sm:$0xf]
      %v319 = vunpack.c.l.b16 %v283
      %v320 = vunpack.c.l.b16 %v284
      %v321 = vunpack.c.l.b16 %v285
      %v322 = vunpack.c.l.b16 %v286
      %v323 = vunpack.c.l.b16 %v287
      %v324 = vunpack.c.l.b16 %v288
      %v325 = vunpack.c.l.b16 %v289
      %v326 = vunpack.c.l.b16 %v290
      %v327 = vunpack.c.l.b16 %v291
      %v328 = vunpack.c.l.b16 %v292
      %v329 = vpack.c.b16 %v320, %v319
      %v330 = vpack.c.b16 %v322, %v321
      %v331 = vpack.c.b16 %v324, %v323
      %v332 = vpack.c.b16 %v326, %v325
      %v333 = vpack.c.b16 %v328, %v327
      %v355 = vunpack.c.l.b16 %v293
      %v356 = vunpack.c.l.b16 %v294
      %v357 = vunpack.c.l.b16 %v295
      %v358 = vunpack.c.l.b16 %v296
      %v359 = vunpack.c.l.b16 %v297
      %v360 = vunpack.c.l.b16 %v298
      %v361 = vunpack.c.l.b16 %v299
      %v362 = vunpack.c.l.b16 %v300
      %v363 = vunpack.c.l.b16 %v301
      %v364 = vunpack.c.l.b16 %v302
      %v365 = vunpack.c.l.b16 %v303
      %v366 = vunpack.c.l.b16 %v304
      %v367 = vunpack.c.l.b16 %v305
      %v368 = vunpack.c.l.b16 %v306
      %v369 = vunpack.c.l.b16 %v307
      %v370 = vunpack.c.l.b16 %v308
      %v371 = vpack.c.b16 %v356, %v355
      %v372 = vpack.c.b16 %v358, %v357
      %v373 = vpack.c.b16 %v360, %v359
      %v374 = vpack.c.b16 %v362, %v361
      %v375 = vpack.c.b16 %v364, %v363
      %v376 = vpack.c.b16 %v366, %v365
      %v377 = vpack.c.b16 %v368, %v367
      %v378 = vpack.c.b16 %v370, %v369
      %387 = vmatpush.bf16.msra.mxu0 %v378
      %388 = vmatpush.bf16.msra.mxu0 %v377
      %389 = vmatpush.bf16.msra.mxu0 %v376
      %390 = vmatpush.bf16.msra.mxu0 %v375
      %391 = vmatpush.bf16.msra.mxu0 %v374
      %392 = vmatpush.bf16.msra.mxu0 %v373
      %393 = vmatpush.bf16.msra.mxu0 %v372
      %394 = vmatpush.bf16.msra.mxu0 %v371
      %395 = vmatmul.bf16.gmra.mxu0 %v329
      %v396 = vpop.f32.mrf.mxu0
      %v397 = vadd.f32 0.0, %v396
      %v398 = vpop.f32.mrf.mxu0
      %v399 = vadd.f32 0.0, %v398
      %400 = vmatmul.bf16.gmra.mxu0 %v330
      %v401 = vpop.f32.mrf.mxu0
      %v402 = vadd.f32 0.0, %v401
      %v403 = vpop.f32.mrf.mxu0
      %v404 = vadd.f32 0.0, %v403
      %405 = vmatmul.bf16.gmra.mxu0 %v331
      %v406 = vpop.f32.mrf.mxu0
      %v407 = vadd.f32 0.0, %v406
      %v408 = vpop.f32.mrf.mxu0
      %v409 = vadd.f32 0.0, %v408
      %410 = vmatmul.bf16.gmra.mxu0 %v332
      %v411 = vpop.f32.mrf.mxu0
      %v412 = vadd.f32 0.0, %v411
      %v413 = vpop.f32.mrf.mxu0
      %v414 = vadd.f32 0.0, %v413
      %415 = vmatmul.bf16.gmra.mxu0 %v333
      %v416 = vpop.f32.mrf.mxu0
      %v417 = vadd.f32 0.0, %v416
      %v418 = vpop.f32.mrf.mxu0
      %v419 = vadd.f32 0.0, %v418
      %420 = vdwg.mxu0
      %v421 = vadd.f32 %v273, %v397
      %v422 = vadd.f32 %v274, %v399
      %v423 = vadd.f32 %v275, %v402
      %v424 = vadd.f32 %v276, %v404
      %v425 = vadd.f32 %v277, %v407
      %v426 = vadd.f32 %v278, %v409
      %v427 = vadd.f32 %v279, %v412
      %v428 = vadd.f32 %v280, %v414
      %v429 = vadd.f32 %v281, %v417
      %v430 = vadd.f32 %v282, %v419
      %431 = vst [vmem:[#allocation2] sm:$0xff] %v421
      %432 = vst [vmem:[#allocation2 + $0x8] sm:$0xff] %v422
      %433 = vst [vmem:[#allocation2 + $0x10] sm:$0xff] %v423
      %434 = vst [vmem:[#allocation2 + $0x18] sm:$0xff] %v424
      %435 = vst [vmem:[#allocation2 + $0x20] sm:$0xff] %v425
      %436 = vst [vmem:[#allocation2 + $0x28] sm:$0xff] %v426
      %437 = vst [vmem:[#allocation2 + $0x30] sm:$0xff] %v427
      %438 = vst [vmem:[#allocation2 + $0x38] sm:$0xff] %v428
      %439 = vst [vmem:[#allocation2 + $0x40] sm:$0xff] %v429
      %440 = vst [vmem:[#allocation2 + $0x48] sm:$0xff] %v430
      // Predicated region
      $region37: #{_lambda_.11} parent=31 // pred_check
        %p441 = pneg %p259
      $region38: #{_lambda_.11} parent=31 // pred_check_branch
        %443 = sbr.rel (%p441) target = $region40
      $region39: #{_lambda_.11} parent=31 // pred_region
        %v444 = vld [vmem:[#allocation2] sm:$0xff]
        %v445 = vld [vmem:[#allocation2 + $0x8] sm:$0xff]
        %v446 = vld [vmem:[#allocation2 + $0x10] sm:$0xff]
        %v447 = vld [vmem:[#allocation2 + $0x18] sm:$0xff]
        %v448 = vld [vmem:[#allocation2 + $0x20] sm:$0xff]
        %v449 = vld [vmem:[#allocation2 + $0x28] sm:$0xff]
        %v450 = vld [vmem:[#allocation2 + $0x30] sm:$0xff]
        %v451 = vld [vmem:[#allocation2 + $0x38] sm:$0xff]
        %v452 = vld [vmem:[#allocation2 + $0x40] sm:$0xff]
        %v453 = vld [vmem:[#allocation2 + $0x48] sm:$0xff]
        %v454 = vld [vmem:[%s249] sm:$0x1]
        %v456 = vperm.slane %v454, 0
        %v458 = vadd.f32 %v444, %v456
        %v459 = vadd.f32 %v445, %v456
        %v460 = vadd.f32 %v446, %v456
        %v461 = vadd.f32 %v447, %v456
        %v462 = vadd.f32 %v448, %v456
        %v463 = vadd.f32 %v449, %v456
        %v464 = vadd.f32 %v450, %v456
        %v465 = vadd.f32 %v451, %v456
        %v466 = vadd.f32 %v452, %v456
        %v467 = vadd.f32 %v453, %v456
        %v468 = vpack.c.bf16 %v458, %v458
        %v469 = vpack.c.bf16 %v459, %v459
        %v470 = vpack.c.bf16 %v460, %v460
        %v471 = vpack.c.bf16 %v461, %v461
        %v472 = vpack.c.bf16 %v462, %v462
        %v473 = vpack.c.bf16 %v463, %v463
        %v474 = vpack.c.bf16 %v464, %v464
        %v475 = vpack.c.bf16 %v465, %v465
        %v476 = vpack.c.bf16 %v466, %v466
        %v477 = vpack.c.bf16 %v467, %v467
        %478 = vst [vmem:[%s257] sm:$0xf] %v468
        %479 = vst [vmem:[%s257 + $0x4] sm:$0xf] %v469
        %480 = vst [vmem:[%s257 + $0x8] sm:$0xf] %v470
        %481 = vst [vmem:[%s257 + $0xc] sm:$0xf] %v471
        %482 = vst [vmem:[%s257 + $0x10] sm:$0xf] %v472
        %483 = vst [vmem:[%s257 + $0x14] sm:$0xf] %v473
        %484 = vst [vmem:[%s257 + $0x18] sm:$0xf] %v474
        %485 = vst [vmem:[%s257 + $0x1c] sm:$0xf] %v475
        %486 = vst [vmem:[%s257 + $0x20] sm:$0xf] %v476
        %487 = vst [vmem:[%s257 + $0x24] sm:$0xf] %v477
      $region40: #{_lambda_.11} parent=31 // pred_fallthru
        _
      %s488 = smul.u32 10, %s19
      %p489 = scmp.lt.s32.totalorder %s488, 19
      %s490 = scalar_select %p489, %s488, 19
      %p491 = scmp.lt.s32.totalorder %s20, 0
      %s492 = scalar_select %p491, %s20, 0
      %s493 = sadd.s32 %s492, %s490
      %s494 = smul.addr %s493, 4
      %s495 = scalar_lea.vmem %s3, %s494
      // Predicated region
      $region41: #{_lambda_.11} parent=31 // pred_check
        %p496 = pneg %p135
      $region42: #{_lambda_.11} parent=31 // pred_check_branch
        %498 = sbr.rel (%p496) target = $region44
      $region43: #{_lambda_.11} parent=31 // pred_region
        %s499 = smul.u32 10, %s19
      $region44: #{_lambda_.11} parent=31 // pred_fallthru
        _
    $region32: #{_lambda_.11} parent=5 // pred_fallthru
      _
    %p500 = scmp.le.s32.totalorder 2, %s9
    // Predicated region
    $region45: #{_lambda_.11} parent=5 // pred_check
      %p501 = pneg %p500
    $region46: #{_lambda_.11} parent=5 // pred_check_branch
      %503 = sbr.rel (%p501) target = $region48
    $region47: #{_lambda_.11} parent=5 // pred_region
      %s504 = ssub.s32 %s9, 2
      // Predicated region
      $region49: #{_lambda_.11} parent=47 // pred_check
        %p505 = pneg %p141
      $region50: #{_lambda_.11} parent=47 // pred_check_branch
        %507 = sbr.rel (%p505) target = $region52
      $region51: #{_lambda_.11} parent=47 // pred_region
        %s508 = smul.u32 10, %s22
        %p509 = scmp.lt.s32.totalorder %s508, 19
        %s510 = scalar_select %p509, %s508, 19
        %p511 = scmp.lt.s32.totalorder %s23, 0
        %s512 = scalar_select %p511, %s23, 0
        %s513 = sadd.s32 %s512, %s510
        %s514 = smul.addr %s513, 4
        %s515 = scalar_lea.vmem %s3, %s514
      $region52: #{_lambda_.11} parent=47 // pred_fallthru
        _
    $region48: #{_lambda_.11} parent=5 // pred_fallthru
      _
  $region6: #{_lambda_.11} parent=0 // loop_footer
    %s13 = sadd.s32 1, %s9
  $region7: #{_lambda_.11} parent=0 // loop_footer_branch
    %8 = sbr.rel target = $region3
  $region8: #{_lambda_.11} parent=0 // loop_exit
    _

// kernel: _lambda_.10
$region0: #{_lambda_.10}
  #allocation0 [shape = 'u32[]', space=smem, size = 0x4, offset = 0x4, fixed_abs, tag = 'smem constant byte address 0x4 - core index']
  #allocation1 [shape = 'u32[72,128]{1,0:T(1,128)}', space=vmem, size = 0x9000, scoped, tag = 'internal scratch']
  #allocation2 [shape = 'f32[16,128]{1,0:T(8,128)}', space=vmem, size = 0x2000, scoped, tag = 'scratch operand']
  %s0 = inlined_call_operand.vmem [shape: bf16[2,16,128], index: 0, kind: input, shape index: {}]
  %s1 = inlined_call_operand.vmem [shape: bf16[2,16,128], index: 1, kind: input, shape index: {}]
  %s2 = inlined_call_operand.hbm [shape: bf16[4,128,128], index: 2, kind: input, shape index: {}]
  %s3 = inlined_call_operand.hbm [shape: bf16[4,128,128], index: 3, kind: input, shape index: {}]
  %s4 = inlined_call_operand.hbm [shape: bf16[4,128,128], index: 4, kind: input, shape index: {}]
  %s5 = inlined_call_operand.vmem [shape: f32[4,1,128], index: 5, kind: input, shape index: {}]
  %s6 = inlined_call_operand.vmem [shape: f32[4,1,128], index: 6, kind: input, shape index: {}]
  %s7 = inlined_call_operand.vmem [shape: f32[4,1,128], index: 7, kind: input, shape index: {}]
  %s8 = inlined_call_operand.hbm [shape: bf16[4,128,128], index: 8, kind: input, shape index: {}]
  %s9 = inlined_call_operand.vmem [shape: f32[1,128], index: 9, kind: input, shape index: {}]
  %s10 = inlined_call_operand.vmem [shape: f32[1,128], index: 10, kind: input, shape index: {}]
  %s11 = inlined_call_operand.vmem [shape: f32[1,128], index: 11, kind: input, shape index: {}]
  %s12 = inlined_call_operand.vmem [shape: bf16[2,16,128], index: 12, kind: output, shape index: {}]
  %s13 = sld [smem:[#allocation0]]
  $region97: #{_lambda_.10} parent=0
    _
  %s15 = ssub.s32 1, %s13
  %s16 = scalar_select 0, %s15, %s13
  $region1: #{_lambda_.10} parent=0
    #allocation3 [shape = 'u8[131072]{0}', space=vmem, size = 0x20000, scoped, tag = 'input window, operand 2, single buffered']
    #allocation4 [shape = 's32[2]{0}', space=sflag, size = 0x8, scoped, tag = 'scoped memory for _lambda_.10']
    #allocation5 [shape = 'u8[131072]{0}', space=vmem, size = 0x20000, scoped, tag = 'input window, operand 3, single buffered']
    #allocation6 [shape = 's32[1]{0}', space=sflag, size = 0x4, scoped, tag = 'scoped memory for _lambda_.10']
    #allocation7 [shape = 'u8[131072]{0}', space=vmem, size = 0x20000, scoped, tag = 'input window, operand 4, single buffered']
    #allocation8 [shape = 'u8[131072]{0}', space=vmem, size = 0x20000, scoped, tag = 'input window, operand 8, single buffered']
    #allocation9 [shape = 's32[1]{0}', space=sflag, size = 0x4, scoped, tag = 'scoped memory for _lambda_.10']
    %17 = vsyncpa [#allocation4], 0
    %18 = vsyncpa [#allocation6], 0
    %19 = vsyncpa [#allocation9], 0
    loop: start=0, step=1, limit=4
    $region2: #{_lambda_.10} parent=1 // loop_pre_header
      _
    $region3: #{_lambda_.10} parent=1 // loop_header
      %s21 = sphi 0, %s25
      %p22 = scmp.ge.s32.totalorder %s21, 4
      %s31 = sphi 0, %s33
      %s34 = sphi 0, %s31
      %s35 = sphi 0, %s34
      %s51 = sphi 0, %s35
      %s57 = sphi 0, %s59
      %s60 = sphi 0, %s57
      %s61 = sphi 0, %s60
      %s77 = sphi 0, %s61
      %s81 = sphi 0, %s81
      %s83 = sphi 0, %s81
      %s84 = sphi 0, %s83
      %s98 = sphi 0, %s84
      %s102 = sphi 0, %s102
      %s104 = sphi 0, %s102
      %s105 = sphi 0, %s104
      %s119 = sphi 0, %s105
      %s123 = sphi 0, %s123
      %s125 = sphi 0, %s123
      %s126 = sphi 0, %s125
      %s140 = sphi 0, %s126
      %s144 = sphi 0, %s144
      %s146 = sphi 0, %s144
      %s147 = sphi 0, %s146
      %s161 = sphi 0, %s147
      %s165 = sphi 0, %s165
      %s167 = sphi 0, %s165
      %s168 = sphi 0, %s167
      %s182 = sphi 0, %s168
      %s186 = sphi 0, %s186
      %s188 = sphi 0, %s186
      %s189 = sphi 0, %s188
      %s203 = sphi 0, %s189
      %s207 = sphi 0, %s207
      %s209 = sphi 0, %s207
      %s210 = sphi 0, %s209
      %s224 = sphi 0, %s210
      %s228 = sphi 0, %s228
      %s230 = sphi 0, %s228
      %s231 = sphi 0, %s230
      %s245 = sphi 0, %s231
      %s249 = sphi 0, %s249
      %s251 = sphi 0, %s249
      %s252 = sphi 0, %s251
      %s266 = sphi 0, %s252
      %s270 = sphi 0, %s270
      %s272 = sphi 0, %s270
      %s273 = sphi 0, %s272
      %s287 = sphi 0, %s273
      %s293 = sphi 0, %s295
      %s296 = sphi 0, %s293
      %s297 = sphi 0, %s296
      %s313 = sphi 0, %s297
    $region4: #{_lambda_.10} parent=1 // loop_header_branch
      %24 = sbr.rel (%p22) target = $region8
    $region5: #{_lambda_.10} parent=1 // loop_body
      %s26 = ssub.s32 %s21, 1
      %s27 = ssub.s32 %s21, 2
      %s28 = sadd.s32 %s21, 1
      %s29 = ssub.s32 %s21, %s28
      %p30 = scmp.eq.s32.totalorder %s29, 0
      %s32 = sadd.s32 %s31, 1
      %s33 = scalar_select %p30, %s31, %s32
      %p36 = pneg %p30
      %p37 = scmp.eq.s32.totalorder %s21, 1
      %p38 = por %p36, %p37
      %p39 = scmp.ne.s32.totalorder %s31, %s34
      %p40 = scmp.eq.s32.totalorder %s21, 0
      %p41 = por %p39, %p40
      %p42 = scmp.ne.s32.totalorder %s31, %s34
      %p43 = scmp.eq.s32.totalorder %s26, 1
      %p44 = por %p42, %p43
      %p45 = scmp.ne.s32.totalorder %s34, %s35
      %p46 = scmp.eq.s32.totalorder %s26, 0
      %p47 = por %p45, %p46
      %p48 = scmp.ne.s32.totalorder %s34, %s35
      %p49 = scmp.eq.s32.totalorder %s27, 1
      %p50 = por %p48, %p49
      %p52 = scmp.ne.s32.totalorder %s35, %s51
      %p53 = scmp.eq.s32.totalorder %s27, 0
      %p54 = por %p52, %p53
      %s55 = ssub.s32 %s21, %s28
      %p56 = scmp.eq.s32.totalorder %s55, 0
      %s58 = sadd.s32 %s57, 1
      %s59 = scalar_select %p56, %s57, %s58
      %p62 = pneg %p56
      %p63 = scmp.eq.s32.totalorder %s21, 1
      %p64 = por %p62, %p63
      %p65 = scmp.ne.s32.totalorder %s57, %s60
      %p66 = scmp.eq.s32.totalorder %s21, 0
      %p67 = por %p65, %p66
      %p68 = scmp.ne.s32.totalorder %s57, %s60
      %p69 = scmp.eq.s32.totalorder %s26, 1
      %p70 = por %p68, %p69
      %p71 = scmp.ne.s32.totalorder %s60, %s61
      %p72 = scmp.eq.s32.totalorder %s26, 0
      %p73 = por %p71, %p72
      %p74 = scmp.ne.s32.totalorder %s60, %s61
      %p75 = scmp.eq.s32.totalorder %s27, 1
      %p76 = por %p74, %p75
      %p78 = scmp.ne.s32.totalorder %s61, %s77
      %p79 = scmp.eq.s32.totalorder %s27, 0
      %p80 = por %p78, %p79
      %s82 = sadd.s32 %s81, 1
      %p85 = scmp.eq.s32.totalorder %s21, 1
      %p86 = scmp.ne.s32.totalorder %s81, %s83
      %p87 = scmp.eq.s32.totalorder %s21, 0
      %p88 = por %p86, %p87
      %p89 = scmp.ne.s32.totalorder %s81, %s83
      %p90 = scmp.eq.s32.totalorder %s26, 1
      %p91 = por %p89, %p90
      %p92 = scmp.ne.s32.totalorder %s83, %s84
      %p93 = scmp.eq.s32.totalorder %s26, 0
      %p94 = por %p92, %p93
      %p95 = scmp.ne.s32.totalorder %s83, %s84
      %p96 = scmp.eq.s32.totalorder %s27, 1
      %p97 = por %p95, %p96
      %p99 = scmp.ne.s32.totalorder %s84, %s98
      %p100 = scmp.eq.s32.totalorder %s27, 0
      %p101 = por %p99, %p100
      %s103 = sadd.s32 %s102, 1
      %p106 = scmp.eq.s32.totalorder %s21, 1
      %p107 = scmp.ne.s32.totalorder %s102, %s104
      %p108 = scmp.eq.s32.totalorder %s21, 0
      %p109 = por %p107, %p108
      %p110 = scmp.ne.s32.totalorder %s102, %s104
      %p111 = scmp.eq.s32.totalorder %s26, 1
      %p112 = por %p110, %p111
      %p113 = scmp.ne.s32.totalorder %s104, %s105
      %p114 = scmp.eq.s32.totalorder %s26, 0
      %p115 = por %p113, %p114
      %p116 = scmp.ne.s32.totalorder %s104, %s105
      %p117 = scmp.eq.s32.totalorder %s27, 1
      %p118 = por %p116, %p117
      %p120 = scmp.ne.s32.totalorder %s105, %s119
      %p121 = scmp.eq.s32.totalorder %s27, 0
      %p122 = por %p120, %p121
      %s124 = sadd.s32 %s123, 1
      %p127 = scmp.eq.s32.totalorder %s21, 1
      %p128 = scmp.ne.s32.totalorder %s123, %s125
      %p129 = scmp.eq.s32.totalorder %s21, 0
      %p130 = por %p128, %p129
      %p131 = scmp.ne.s32.totalorder %s123, %s125
      %p132 = scmp.eq.s32.totalorder %s26, 1
      %p133 = por %p131, %p132
      %p134 = scmp.ne.s32.totalorder %s125, %s126
      %p135 = scmp.eq.s32.totalorder %s26, 0
      %p136 = por %p134, %p135
      %p137 = scmp.ne.s32.totalorder %s125, %s126
      %p138 = scmp.eq.s32.totalorder %s27, 1
      %p139 = por %p137, %p138
      %p141 = scmp.ne.s32.totalorder %s126, %s140
      %p142 = scmp.eq.s32.totalorder %s27, 0
      %p143 = por %p141, %p142
      %s145 = sadd.s32 %s144, 1
      %p148 = scmp.eq.s32.totalorder %s21, 1
      %p149 = scmp.ne.s32.totalorder %s144, %s146
      %p150 = scmp.eq.s32.totalorder %s21, 0
      %p151 = por %p149, %p150
      %p152 = scmp.ne.s32.totalorder %s144, %s146
      %p153 = scmp.eq.s32.totalorder %s26, 1
      %p154 = por %p152, %p153
      %p155 = scmp.ne.s32.totalorder %s146, %s147
      %p156 = scmp.eq.s32.totalorder %s26, 0
      %p157 = por %p155, %p156
      %p158 = scmp.ne.s32.totalorder %s146, %s147
      %p159 = scmp.eq.s32.totalorder %s27, 1
      %p160 = por %p158, %p159
      %p162 = scmp.ne.s32.totalorder %s147, %s161
      %p163 = scmp.eq.s32.totalorder %s27, 0
      %p164 = por %p162, %p163
      %s166 = sadd.s32 %s165, 1
      %p169 = scmp.eq.s32.totalorder %s21, 1
      %p170 = scmp.ne.s32.totalorder %s165, %s167
      %p171 = scmp.eq.s32.totalorder %s21, 0
      %p172 = por %p170, %p171
      %p173 = scmp.ne.s32.totalorder %s165, %s167
      %p174 = scmp.eq.s32.totalorder %s26, 1
      %p175 = por %p173, %p174
      %p176 = scmp.ne.s32.totalorder %s167, %s168
      %p177 = scmp.eq.s32.totalorder %s26, 0
      %p178 = por %p176, %p177
      %p179 = scmp.ne.s32.totalorder %s167, %s168
      %p180 = scmp.eq.s32.totalorder %s27, 1
      %p181 = por %p179, %p180
      %p183 = scmp.ne.s32.totalorder %s168, %s182
      %p184 = scmp.eq.s32.totalorder %s27, 0
      %p185 = por %p183, %p184
      %s187 = sadd.s32 %s186, 1
      %p190 = scmp.eq.s32.totalorder %s21, 1
      %p191 = scmp.ne.s32.totalorder %s186, %s188
      %p192 = scmp.eq.s32.totalorder %s21, 0
      %p193 = por %p191, %p192
      %p194 = scmp.ne.s32.totalorder %s186, %s188
      %p195 = scmp.eq.s32.totalorder %s26, 1
      %p196 = por %p194, %p195
      %p197 = scmp.ne.s32.totalorder %s188, %s189
      %p198 = scmp.eq.s32.totalorder %s26, 0
      %p199 = por %p197, %p198
      %p200 = scmp.ne.s32.totalorder %s188, %s189
      %p201 = scmp.eq.s32.totalorder %s27, 1
      %p202 = por %p200, %p201
      %p204 = scmp.ne.s32.totalorder %s189, %s203
      %p205 = scmp.eq.s32.totalorder %s27, 0
      %p206 = por %p204, %p205
      %s208 = sadd.s32 %s207, 1
      %p211 = scmp.eq.s32.totalorder %s21, 1
      %p212 = scmp.ne.s32.totalorder %s207, %s209
      %p213 = scmp.eq.s32.totalorder %s21, 0
      %p214 = por %p212, %p213
      %p215 = scmp.ne.s32.totalorder %s207, %s209
      %p216 = scmp.eq.s32.totalorder %s26, 1
      %p217 = por %p215, %p216
      %p218 = scmp.ne.s32.totalorder %s209, %s210
      %p219 = scmp.eq.s32.totalorder %s26, 0
      %p220 = por %p218, %p219
      %p221 = scmp.ne.s32.totalorder %s209, %s210
      %p222 = scmp.eq.s32.totalorder %s27, 1
      %p223 = por %p221, %p222
      %p225 = scmp.ne.s32.totalorder %s210, %s224
      %p226 = scmp.eq.s32.totalorder %s27, 0
      %p227 = por %p225, %p226
      %s229 = sadd.s32 %s228, 1
      %p232 = scmp.eq.s32.totalorder %s21, 1
      %p233 = scmp.ne.s32.totalorder %s228, %s230
      %p234 = scmp.eq.s32.totalorder %s21, 0
      %p235 = por %p233, %p234
      %p236 = scmp.ne.s32.totalorder %s228, %s230
      %p237 = scmp.eq.s32.totalorder %s26, 1
      %p238 = por %p236, %p237
      %p239 = scmp.ne.s32.totalorder %s230, %s231
      %p240 = scmp.eq.s32.totalorder %s26, 0
      %p241 = por %p239, %p240
      %p242 = scmp.ne.s32.totalorder %s230, %s231
      %p243 = scmp.eq.s32.totalorder %s27, 1
      %p244 = por %p242, %p243
      %p246 = scmp.ne.s32.totalorder %s231, %s245
      %p247 = scmp.eq.s32.totalorder %s27, 0
      %p248 = por %p246, %p247
      %s250 = sadd.s32 %s249, 1
      %p253 = scmp.eq.s32.totalorder %s21, 1
      %p254 = scmp.ne.s32.totalorder %s249, %s251
      %p255 = scmp.eq.s32.totalorder %s21, 0
      %p256 = por %p254, %p255
      %p257 = scmp.ne.s32.totalorder %s249, %s251
      %p258 = scmp.eq.s32.totalorder %s26, 1
      %p259 = por %p257, %p258
      %p260 = scmp.ne.s32.totalorder %s251, %s252
      %p261 = scmp.eq.s32.totalorder %s26, 0
      %p262 = por %p260, %p261
      %p263 = scmp.ne.s32.totalorder %s251, %s252
      %p264 = scmp.eq.s32.totalorder %s27, 1
      %p265 = por %p263, %p264
      %p267 = scmp.ne.s32.totalorder %s252, %s266
      %p268 = scmp.eq.s32.totalorder %s27, 0
      %p269 = por %p267, %p268
      %s271 = sadd.s32 %s270, 1
      %p274 = scmp.eq.s32.totalorder %s21, 1
      %p275 = scmp.ne.s32.totalorder %s270, %s272
      %p276 = scmp.eq.s32.totalorder %s21, 0
      %p277 = por %p275, %p276
      %p278 = scmp.ne.s32.totalorder %s270, %s272
      %p279 = scmp.eq.s32.totalorder %s26, 1
      %p280 = por %p278, %p279
      %p281 = scmp.ne.s32.totalorder %s272, %s273
      %p282 = scmp.eq.s32.totalorder %s26, 0
      %p283 = por %p281, %p282
      %p284 = scmp.ne.s32.totalorder %s272, %s273
      %p285 = scmp.eq.s32.totalorder %s27, 1
      %p286 = por %p284, %p285
      %p288 = scmp.ne.s32.totalorder %s273, %s287
      %p289 = scmp.eq.s32.totalorder %s27, 0
      %p290 = por %p288, %p289
      %s291 = ssub.s32 %s21, %s28
      %p292 = scmp.eq.s32.totalorder %s291, 0
      %s294 = sadd.s32 %s293, 1
      %s295 = scalar_select %p292, %s293, %s294
      %p298 = pneg %p292
      %p299 = scmp.eq.s32.totalorder %s21, 1
      %p300 = por %p298, %p299
      %p301 = scmp.ne.s32.totalorder %s293, %s296
      %p302 = scmp.eq.s32.totalorder %s21, 0
      %p303 = por %p301, %p302
      %p304 = scmp.ne.s32.totalorder %s293, %s296
      %p305 = scmp.eq.s32.totalorder %s26, 1
      %p306 = por %p304, %p305
      %p307 = scmp.ne.s32.totalorder %s296, %s297
      %p308 = scmp.eq.s32.totalorder %s26, 0
      %p309 = por %p307, %p308
      %p310 = scmp.ne.s32.totalorder %s296, %s297
      %p311 = scmp.eq.s32.totalorder %s27, 1
      %p312 = por %p310, %p311
      %p314 = scmp.ne.s32.totalorder %s297, %s313
      %p315 = scmp.eq.s32.totalorder %s27, 0
      %p316 = por %p314, %p315
      %p317 = scmp.le.s32.totalorder 1, %s21
      %p318 = scmp.lt.s32.totalorder %s21, 3
      %p319 = pnand %p317, %p318
      %p320 = pneg %p319
      // Predicated region
      $region9: #{_lambda_.10} parent=5 // pred_check
        _
      $region10: #{_lambda_.10} parent=5 // pred_check_branch
        %322 = sbr.rel (%p319) target = $region12
      $region11: #{_lambda_.10} parent=5 // pred_region
        %s323 = ssub.s32 %s21, 1
        // Predicated region
        $region13: #{_lambda_.10} parent=11 // pred_check
          %p324 = pneg %p94
        $region14: #{_lambda_.10} parent=11 // pred_check_branch
          %326 = sbr.rel (%p324) target = $region16
        $region15: #{_lambda_.10} parent=11 // pred_region
          %328 = vsyncadd [#allocation4], 0
          %s329 = sshll.u32 %s2, 4
          %s330 = int_to_ptr.hbm [resolvable:$true] %s329
          %s331 = sshll.u32 [#allocation3], 4
          %s332 = int_to_ptr.vmem [resolvable:$true] %s331
          %337 = dma.hbm_to_vmem [thread:$0]  %s330, 4096, %s332, [#allocation4], 64, 64, 4
        $region16: #{_lambda_.10} parent=11 // pred_fallthru
          _
        // Predicated region
        $region17: #{_lambda_.10} parent=11 // pred_check
          %p338 = pneg %p115
        $region18: #{_lambda_.10} parent=11 // pred_check_branch
          %340 = sbr.rel (%p338) target = $region20
        $region19: #{_lambda_.10} parent=11 // pred_region
          %342 = vsyncadd [#allocation6], 0
          %s343 = sshll.u32 %s3, 4
          %s344 = int_to_ptr.hbm [resolvable:$true] %s343
          %s345 = sshll.u32 [#allocation5], 4
          %s346 = int_to_ptr.vmem [resolvable:$true] %s345
          %351 = dma.hbm_to_vmem [thread:$0]  %s344, 4096, %s346, [#allocation6], 64, 64, 4
        $region20: #{_lambda_.10} parent=11 // pred_fallthru
          _
        // Predicated region
        $region21: #{_lambda_.10} parent=11 // pred_check
          %p352 = pneg %p136
        $region22: #{_lambda_.10} parent=11 // pred_check_branch
          %354 = sbr.rel (%p352) target = $region24
        $region23: #{_lambda_.10} parent=11 // pred_region
          %356 = vsyncadd [#allocation6], 0
          %s357 = sshll.u32 %s4, 4
          %s358 = int_to_ptr.hbm [resolvable:$true] %s357
          %s359 = sshll.u32 [#allocation7], 4
          %s360 = int_to_ptr.vmem [resolvable:$true] %s359
          %365 = dma.hbm_to_vmem [thread:$0]  %s358, 4096, %s360, [#allocation6], 64, 64, 4
        $region24: #{_lambda_.10} parent=11 // pred_fallthru
          _
        // Predicated region
        $region25: #{_lambda_.10} parent=11 // pred_check
          %p366 = pneg %p157
        $region26: #{_lambda_.10} parent=11 // pred_check_branch
          %368 = sbr.rel (%p366) target = $region28
        $region27: #{_lambda_.10} parent=11 // pred_region
          _
        $region28: #{_lambda_.10} parent=11 // pred_fallthru
          _
        // Predicated region
        $region29: #{_lambda_.10} parent=11 // pred_check
          %p369 = pneg %p178
        $region30: #{_lambda_.10} parent=11 // pred_check_branch
          %371 = sbr.rel (%p369) target = $region32
        $region31: #{_lambda_.10} parent=11 // pred_region
          _
        $region32: #{_lambda_.10} parent=11 // pred_fallthru
          _
        // Predicated region
        $region33: #{_lambda_.10} parent=11 // pred_check
          %p372 = pneg %p199
        $region34: #{_lambda_.10} parent=11 // pred_check_branch
          %374 = sbr.rel (%p372) target = $region36
        $region35: #{_lambda_.10} parent=11 // pred_region
          _
        $region36: #{_lambda_.10} parent=11 // pred_fallthru
          _
        // Predicated region
        $region37: #{_lambda_.10} parent=11 // pred_check
          %p375 = pneg %p220
        $region38: #{_lambda_.10} parent=11 // pred_check_branch
          %377 = sbr.rel (%p375) target = $region40
        $region39: #{_lambda_.10} parent=11 // pred_region
          %379 = vsyncadd [#allocation9], 0
          %s380 = sshll.u32 %s8, 4
          %s381 = int_to_ptr.hbm [resolvable:$true] %s380
          %s382 = sshll.u32 [#allocation8], 4
          %s383 = int_to_ptr.vmem [resolvable:$true] %s382
          %388 = dma.hbm_to_vmem [thread:$0]  %s381, 4096, %s383, [#allocation9], 64, 64, 4
        $region40: #{_lambda_.10} parent=11 // pred_fallthru
          _
        // Predicated region
        $region41: #{_lambda_.10} parent=11 // pred_check
          %p389 = pneg %p241
        $region42: #{_lambda_.10} parent=11 // pred_check_branch
          %391 = sbr.rel (%p389) target = $region44
        $region43: #{_lambda_.10} parent=11 // pred_region
          _
        $region44: #{_lambda_.10} parent=11 // pred_fallthru
          _
        // Predicated region
        $region45: #{_lambda_.10} parent=11 // pred_check
          %p392 = pneg %p262
        $region46: #{_lambda_.10} parent=11 // pred_check_branch
          %394 = sbr.rel (%p392) target = $region48
        $region47: #{_lambda_.10} parent=11 // pred_region
          _
        $region48: #{_lambda_.10} parent=11 // pred_fallthru
          _
        // Predicated region
        $region49: #{_lambda_.10} parent=11 // pred_check
          %p395 = pneg %p283
        $region50: #{_lambda_.10} parent=11 // pred_check_branch
          %397 = sbr.rel (%p395) target = $region52
        $region51: #{_lambda_.10} parent=11 // pred_region
          _
        $region52: #{_lambda_.10} parent=11 // pred_fallthru
          _
      $region12: #{_lambda_.10} parent=5 // pred_fallthru
        _
      %p398 = scmp.lt.s32.totalorder %s21, 2
      // Predicated region
      $region53: #{_lambda_.10} parent=5 // pred_check
        %p399 = pneg %p398
      $region54: #{_lambda_.10} parent=5 // pred_check_branch
        %401 = sbr.rel (%p399) target = $region56
      $region55: #{_lambda_.10} parent=5 // pred_region
        // Predicated region
        $region57: #{_lambda_.10} parent=55 // pred_check
          %p402 = pneg %p41
        $region58: #{_lambda_.10} parent=55 // pred_check_branch
          %404 = sbr.rel (%p402) target = $region60
        $region59: #{_lambda_.10} parent=55 // pred_region
          %p405 = scmp.lt.s32.totalorder %s21, 1
          %s406 = scalar_select %p405, %s21, 1
          %s407 = smul.addr %s406, 2
          %s408 = smul.addr %s407, 4
          %s409 = scalar_lea.vmem %s0, %s408
        $region60: #{_lambda_.10} parent=55 // pred_fallthru
          _
        // Predicated region
        $region61: #{_lambda_.10} parent=55 // pred_check
          %p410 = pneg %p67
        $region62: #{_lambda_.10} parent=55 // pred_check_branch
          %412 = sbr.rel (%p410) target = $region64
        $region63: #{_lambda_.10} parent=55 // pred_region
          %p413 = scmp.lt.s32.totalorder %s21, 1
          %s414 = scalar_select %p413, %s21, 1
          %s415 = smul.addr %s414, 2
          %s416 = smul.addr %s415, 4
          %s417 = scalar_lea.vmem %s1, %s416
        $region64: #{_lambda_.10} parent=55 // pred_fallthru
          _
      $region56: #{_lambda_.10} parent=5 // pred_fallthru
        _
      %p418 = scmp.le.s32.totalorder 1, %s21
      %p419 = scmp.lt.s32.totalorder %s21, 3
      %p420 = pnand %p418, %p419
      %p421 = pneg %p420
      // Predicated region
      $region65: #{_lambda_.10} parent=5 // pred_check
        _
      $region66: #{_lambda_.10} parent=5 // pred_check_branch
        %423 = sbr.rel (%p420) target = $region68
      $region67: #{_lambda_.10} parent=5 // pred_region
        %s424 = ssub.s32 %s21, 1
        // Predicated region
        $region69: #{_lambda_.10} parent=67 // pred_check
          %p425 = pneg %p94
        $region70: #{_lambda_.10} parent=67 // pred_check_branch
          %427 = sbr.rel (%p425) target = $region72
        $region71: #{_lambda_.10} parent=67 // pred_region
          %429 = dma.done [#allocation4], 4096
        $region72: #{_lambda_.10} parent=67 // pred_fallthru
          _
        // Predicated region
        $region73: #{_lambda_.10} parent=67 // pred_check
          %p430 = pneg %p115
        $region74: #{_lambda_.10} parent=67 // pred_check_branch
          %432 = sbr.rel (%p430) target = $region76
        $region75: #{_lambda_.10} parent=67 // pred_region
          %434 = dma.done [#allocation6], 4096
        $region76: #{_lambda_.10} parent=67 // pred_fallthru
          _
        // Predicated region
        $region77: #{_lambda_.10} parent=67 // pred_check
          %p435 = pneg %p136
        $region78: #{_lambda_.10} parent=67 // pred_check_branch
          %437 = sbr.rel (%p435) target = $region80
        $region79: #{_lambda_.10} parent=67 // pred_region
          %439 = dma.done [#allocation6], 4096
        $region80: #{_lambda_.10} parent=67 // pred_fallthru
          _
        // Predicated region
        $region81: #{_lambda_.10} parent=67 // pred_check
          %p440 = pneg %p220
        $region82: #{_lambda_.10} parent=67 // pred_check_branch
          %442 = sbr.rel (%p440) target = $region84
        $region83: #{_lambda_.10} parent=67 // pred_region
          %444 = dma.done [#allocation9], 4096
        $region84: #{_lambda_.10} parent=67 // pred_fallthru
          _
        %p445 = scmp.lt.s32.totalorder %s26, 1
        %s446 = scalar_select %p445, %s26, 1
        %s447 = smul.addr %s446, 2
        %s448 = smul.addr %s447, 4
        %s449 = scalar_lea.vmem %s0, %s448
        %p450 = pneg %p47
        %p451 = pneg %p44
        %p452 = scmp.lt.s32.totalorder %s26, 1
        %s453 = scalar_select %p452, %s26, 1
        %s454 = smul.addr %s453, 2
        %s455 = smul.addr %s454, 4
        %s456 = scalar_lea.vmem %s1, %s455
        %p457 = pneg %p73
        %p458 = pneg %p70
        %p459 = pneg %p94
        %p460 = pneg %p91
        %p461 = pneg %p115
        %p462 = pneg %p112
        %p463 = pneg %p136
        %p464 = pneg %p133
        %p465 = pneg %p157
        %p466 = pneg %p154
        %p467 = pneg %p178
        %p468 = pneg %p175
        %p469 = pneg %p199
        %p470 = pneg %p196
        %p471 = pneg %p220
        %p472 = pneg %p217
        %p473 = pneg %p241
        %p474 = pneg %p238
        %p475 = pneg %p262
        %p476 = pneg %p259
        %p477 = pneg %p283
        %p478 = pneg %p280
        %p479 = pneg %p309
        %p480 = pneg %p306
        %p481 = scmp.lt.s32.totalorder %s26, 1
        %s482 = scalar_select %p481, %s26, 1
        %s483 = smul.addr %s482, 2
        %s484 = smul.addr %s483, 4
        %s485 = scalar_lea.vmem %s12, %s484
        %p486 = scmp.lt.s32.totalorder %s26, 1
        %s487 = scalar_select %p486, %s26, 1
        %s488 = smul.addr %s487, 2
        %s489 = smul.addr %s488, 4
        %s490 = scalar_lea.vmem %s0, %s489
        %p491 = scmp.lt.s32.totalorder %s26, 1
        %s492 = scalar_select %p491, %s26, 1
        %s493 = smul.addr %s492, 2
        %s494 = smul.addr %s493, 4
        %s495 = scalar_lea.vmem %s1, %s494
        %p496 = scmp.lt.s32.totalorder %s26, 1
        %s497 = scalar_select %p496, %s26, 1
        %s498 = smul.addr %s497, 2
        %s499 = smul.addr %s498, 4
        %s500 = scalar_lea.vmem %s12, %s499
        %v502 = vld [vmem:[%s490] sm:$0xf]
        %v503 = vld [vmem:[%s490 + $0x4] sm:$0xf]
        %v504 = vld [vmem:[%s495] sm:$0xf]
        %v505 = vld [vmem:[%s495 + $0x4] sm:$0xf]
        %v506 = vlaneseq
        %v507 = vand.u32 %v506, 127
        %vm508 = vcmp.lt.s32.totalorder %v507, 8
        %v509 = vld [vmem:[#allocation3] sm:$0xf]
        %v510 = vld [vmem:[#allocation3 + $0x4] sm:$0xf]
        %v511 = vld [vmem:[#allocation3 + $0x8] sm:$0xf]
        %v512 = vld [vmem:[#allocation3 + $0xc] sm:$0xf]
        %v513 = vld [vmem:[#allocation3 + $0x10] sm:$0xf]
        %v514 = vld [vmem:[#allocation3 + $0x14] sm:$0xf]
        %v515 = vld [vmem:[#allocation3 + $0x18] sm:$0xf]
        %v516 = vld [vmem:[#allocation3 + $0x1c] sm:$0xf]
        %v517 = vld [vmem:[#allocation3 + $0x20] sm:$0xf]
        %v518 = vld [vmem:[#allocation3 + $0x24] sm:$0xf]
        %v519 = vld [vmem:[#allocation3 + $0x28] sm:$0xf]
        %v520 = vld [vmem:[#allocation3 + $0x2c] sm:$0xf]
        %v521 = vld [vmem:[#allocation3 + $0x30] sm:$0xf]
        %v522 = vld [vmem:[#allocation3 + $0x34] sm:$0xf]
        %v523 = vld [vmem:[#allocation3 + $0x38] sm:$0xf]
        %v524 = vld [vmem:[#allocation3 + $0x3c] sm:$0xf]
        %v525 = vld [vmem:[%s5] sm:$0x1]
        %v527 = vperm.slane %v525, 0
        %v531 = vunpack.c.l.b16 %v502
        %v532 = vunpack.c.l.b16 %v503
        %v533 = vpack.c.b16 %v532, %v531
        %v551 = vunpack.c.l.b16 %v509
        %v552 = vunpack.c.l.b16 %v510
        %v553 = vunpack.c.l.b16 %v511
        %v554 = vunpack.c.l.b16 %v512
        %v555 = vunpack.c.l.b16 %v513
        %v556 = vunpack.c.l.b16 %v514
        %v557 = vunpack.c.l.b16 %v515
        %v558 = vunpack.c.l.b16 %v516
        %v559 = vunpack.c.l.b16 %v517
        %v560 = vunpack.c.l.b16 %v518
        %v561 = vunpack.c.l.b16 %v519
        %v562 = vunpack.c.l.b16 %v520
        %v563 = vunpack.c.l.b16 %v521
        %v564 = vunpack.c.l.b16 %v522
        %v565 = vunpack.c.l.b16 %v523
        %v566 = vunpack.c.l.b16 %v524
        %v567 = vpack.c.b16 %v552, %v551
        %v568 = vpack.c.b16 %v554, %v553
        %v569 = vpack.c.b16 %v556, %v555
        %v570 = vpack.c.b16 %v558, %v557
        %v571 = vpack.c.b16 %v560, %v559
        %v572 = vpack.c.b16 %v562, %v561
        %v573 = vpack.c.b16 %v564, %v563
        %v574 = vpack.c.b16 %v566, %v565
        %583 = vmatpush.bf16.msra.mxu0 %v574
        %584 = vmatpush.bf16.msra.mxu0 %v573
        %585 = vmatpush.bf16.msra.mxu0 %v572
        %586 = vmatpush.bf16.msra.mxu0 %v571
        %587 = vmatpush.bf16.msra.mxu0 %v570
        %588 = vmatpush.bf16.msra.mxu0 %v569
        %589 = vmatpush.bf16.msra.mxu0 %v568
        %590 = vmatpush.bf16.msra.mxu0 %v567
        %591 = vmatmul.bf16.gmra.mxu0 %v533
        %v592 = vpop.f32.mrf.mxu0
        %v593 = vadd.f32 %v527, %v592
        %v594 = vpop.f32.mrf.mxu0
        %v595 = vadd.f32 %v527, %v594
        %596 = vdwg.mxu0
        %v597 = vld [vmem:[#allocation5] sm:$0xf]
        %v598 = vld [vmem:[#allocation5 + $0x4] sm:$0xf]
        %v599 = vld [vmem:[#allocation5 + $0x8] sm:$0xf]
        %v600 = vld [vmem:[#allocation5 + $0xc] sm:$0xf]
        %v601 = vld [vmem:[#allocation5 + $0x10] sm:$0xf]
        %v602 = vld [vmem:[#allocation5 + $0x14] sm:$0xf]
        %v603 = vld [vmem:[#allocation5 + $0x18] sm:$0xf]
        %v604 = vld [vmem:[#allocation5 + $0x1c] sm:$0xf]
        %v605 = vld [vmem:[#allocation5 + $0x20] sm:$0xf]
        %v606 = vld [vmem:[#allocation5 + $0x24] sm:$0xf]
        %v607 = vld [vmem:[#allocation5 + $0x28] sm:$0xf]
        %v608 = vld [vmem:[#allocation5 + $0x2c] sm:$0xf]
        %v609 = vld [vmem:[#allocation5 + $0x30] sm:$0xf]
        %v610 = vld [vmem:[#allocation5 + $0x34] sm:$0xf]
        %v611 = vld [vmem:[#allocation5 + $0x38] sm:$0xf]
        %v612 = vld [vmem:[#allocation5 + $0x3c] sm:$0xf]
        %v613 = vld [vmem:[%s6] sm:$0x1]
        %v615 = vperm.slane %v613, 0
        %v633 = vunpack.c.l.b16 %v597
        %v634 = vunpack.c.l.b16 %v598
        %v635 = vunpack.c.l.b16 %v599
        %v636 = vunpack.c.l.b16 %v600
        %v637 = vunpack.c.l.b16 %v601
        %v638 = vunpack.c.l.b16 %v602
        %v639 = vunpack.c.l.b16 %v603
        %v640 = vunpack.c.l.b16 %v604
        %v641 = vunpack.c.l.b16 %v605
        %v642 = vunpack.c.l.b16 %v606
        %v643 = vunpack.c.l.b16 %v607
        %v644 = vunpack.c.l.b16 %v608
        %v645 = vunpack.c.l.b16 %v609
        %v646 = vunpack.c.l.b16 %v610
        %v647 = vunpack.c.l.b16 %v611
        %v648 = vunpack.c.l.b16 %v612
        %v649 = vpack.c.b16 %v634, %v633
        %v650 = vpack.c.b16 %v636, %v635
        %v651 = vpack.c.b16 %v638, %v637
        %v652 = vpack.c.b16 %v640, %v639
        %v653 = vpack.c.b16 %v642, %v641
        %v654 = vpack.c.b16 %v644, %v643
        %v655 = vpack.c.b16 %v646, %v645
        %v656 = vpack.c.b16 %v648, %v647
        %665 = vmatpush.bf16.msra.mxu0 %v656
        %666 = vmatpush.bf16.msra.mxu0 %v655
        %667 = vmatpush.bf16.msra.mxu0 %v654
        %668 = vmatpush.bf16.msra.mxu0 %v653
        %669 = vmatpush.bf16.msra.mxu0 %v652
        %670 = vmatpush.bf16.msra.mxu0 %v651
        %671 = vmatpush.bf16.msra.mxu0 %v650
        %672 = vmatpush.bf16.msra.mxu0 %v649
        %673 = vmatmul.bf16.gmra.mxu0 %v533
        %v674 = vpop.f32.mrf.mxu0
        %v675 = vadd.f32 %v615, %v674
        %v676 = vpop.f32.mrf.mxu0
        %v677 = vadd.f32 %v615, %v676
        %678 = vdwg.mxu0
        %v679 = vld [vmem:[#allocation7] sm:$0xf]
        %v680 = vld [vmem:[#allocation7 + $0x4] sm:$0xf]
        %v681 = vld [vmem:[#allocation7 + $0x8] sm:$0xf]
        %v682 = vld [vmem:[#allocation7 + $0xc] sm:$0xf]
        %v683 = vld [vmem:[#allocation7 + $0x10] sm:$0xf]
        %v684 = vld [vmem:[#allocation7 + $0x14] sm:$0xf]
        %v685 = vld [vmem:[#allocation7 + $0x18] sm:$0xf]
        %v686 = vld [vmem:[#allocation7 + $0x1c] sm:$0xf]
        %v687 = vld [vmem:[#allocation7 + $0x20] sm:$0xf]
        %v688 = vld [vmem:[#allocation7 + $0x24] sm:$0xf]
        %v689 = vld [vmem:[#allocation7 + $0x28] sm:$0xf]
        %v690 = vld [vmem:[#allocation7 + $0x2c] sm:$0xf]
        %v691 = vld [vmem:[#allocation7 + $0x30] sm:$0xf]
        %v692 = vld [vmem:[#allocation7 + $0x34] sm:$0xf]
        %v693 = vld [vmem:[#allocation7 + $0x38] sm:$0xf]
        %v694 = vld [vmem:[#allocation7 + $0x3c] sm:$0xf]
        %v695 = vld [vmem:[%s7] sm:$0x1]
        %v697 = vperm.slane %v695, 0
        %v701 = vunpack.c.l.b16 %v504
        %v702 = vunpack.c.l.b16 %v505
        %v703 = vpack.c.b16 %v702, %v701
        %v721 = vunpack.c.l.b16 %v679
        %v722 = vunpack.c.l.b16 %v680
        %v723 = vunpack.c.l.b16 %v681
        %v724 = vunpack.c.l.b16 %v682
        %v725 = vunpack.c.l.b16 %v683
        %v726 = vunpack.c.l.b16 %v684
        %v727 = vunpack.c.l.b16 %v685
        %v728 = vunpack.c.l.b16 %v686
        %v729 = vunpack.c.l.b16 %v687
        %v730 = vunpack.c.l.b16 %v688
        %v731 = vunpack.c.l.b16 %v689
        %v732 = vunpack.c.l.b16 %v690
        %v733 = vunpack.c.l.b16 %v691
        %v734 = vunpack.c.l.b16 %v692
        %v735 = vunpack.c.l.b16 %v693
        %v736 = vunpack.c.l.b16 %v694
        %v737 = vpack.c.b16 %v722, %v721
        %v738 = vpack.c.b16 %v724, %v723
        %v739 = vpack.c.b16 %v726, %v725
        %v740 = vpack.c.b16 %v728, %v727
        %v741 = vpack.c.b16 %v730, %v729
        %v742 = vpack.c.b16 %v732, %v731
        %v743 = vpack.c.b16 %v734, %v733
        %v744 = vpack.c.b16 %v736, %v735
        %753 = vmatpush.bf16.msra.mxu0 %v744
        %754 = vmatpush.bf16.msra.mxu0 %v743
        %755 = vmatpush.bf16.msra.mxu0 %v742
        %756 = vmatpush.bf16.msra.mxu0 %v741
        %757 = vmatpush.bf16.msra.mxu0 %v740
        %758 = vmatpush.bf16.msra.mxu0 %v739
        %759 = vmatpush.bf16.msra.mxu0 %v738
        %760 = vmatpush.bf16.msra.mxu0 %v737
        %761 = vmatmul.bf16.gmra.mxu0 %v703
        %v762 = vpop.f32.mrf.mxu0
        %v763 = vadd.f32 %v697, %v762
        %v764 = vpop.f32.mrf.mxu0
        %v765 = vadd.f32 %v697, %v764
        %766 = vdwg.mxu0
        %v767 = vpack.c.bf16 %v595, %v593
        %v768 = vpack.c.bf16 %v677, %v675
        %769 = vmatpush.bf16.xpose.msra.mxu0 0
        %770 = vmatpush.bf16.xpose.msra.mxu0 0
        %771 = vmatpush.bf16.xpose.msra.mxu0 0
        %772 = vmatpush.bf16.xpose.msra.mxu0 0
        %773 = vmatpush.bf16.xpose.msra.mxu0 0
        %774 = vmatpush.bf16.xpose.msra.mxu0 0
        %775 = vmatpush.bf16.xpose.msra.mxu0 0
        %776 = vmatpush.bf16.xpose.msra.mxu0 %v768
        %777 = vmatmul.bf16.gmra.mxu0 %v767
        %v778 = vpop.f32.mrf.mxu0
        %v779 = vadd.f32 0.0, %v778
        %v780 = vpop.f32.mrf.mxu0
        %v781 = vadd.f32 0.0, %v780
        %782 = vdwg.mxu0
        %v783 = vmul.f32 %v779, 0.35355338
        %v784 = vmul.f32 %v781, 0.35355338
        %v785 = vsel %vm508, %v783, -1e+30
        %v786 = vsel %vm508, %v784, -1e+30
        %vm787 = vcmask 130048
        %v788 = vsel %vm787, %v785, -inf
        %789 = vmax.xlane.f32.xlu0 %v788
        %v790 = vpop.xlane.xlu0 %789
        %v791 = vsel %vm787, %v786, -inf
        %792 = vmax.xlane.f32.xlu0 %v791
        %v793 = vpop.xlane.xlu0 %792
        %v794 = vsub.f32 %v785, %v790
        %v795 = vsub.f32 %v786, %v793
        %v796 = vmul.f32 %v794, 1.442695
        %v797 = vpow.pop %v796
        %v798 = vmul.f32 %v795, 1.442695
        %v799 = vpow.pop %v798
        %v800 = vsel %vm787, %v797, 0.0
        %801 = vadd.xlane.f32.xlu0 %v800
        %v802 = vpop.xlane.xlu0 %801
        %v803 = vsel %vm787, %v799, 0.0
        %804 = vadd.xlane.f32.xlu0 %v803
        %v805 = vpop.xlane.xlu0 %804
        %v806 = vrcp.pop %v802
        %v807 = vrcp.pop %v805
        %v808 = vmul.f32 %v797, %v806
        %v809 = vmul.f32 %v799, %v807
        %v810 = vpack.c.bf16 %v809, %v808
        %v811 = vpack.c.bf16 %v765, %v763
        %v813 = vsel %vm787, %v810, 0
        %815 = vmatpush.bf16.msra.mxu0 0
        %816 = vmatpush.bf16.msra.mxu0 0
        %817 = vmatpush.bf16.msra.mxu0 0
        %818 = vmatpush.bf16.msra.mxu0 0
        %819 = vmatpush.bf16.msra.mxu0 0
        %820 = vmatpush.bf16.msra.mxu0 0
        %821 = vmatpush.bf16.msra.mxu0 0
        %822 = vmatpush.bf16.msra.mxu0 %v811
        %823 = vmatmul.bf16.gmra.mxu0 %v813
        %v824 = vpop.f32.mrf.mxu0
        %v825 = vadd.f32 0.0, %v824
        %v826 = vpop.f32.mrf.mxu0
        %v827 = vadd.f32 0.0, %v826
        %828 = vdwg.mxu0
        %v829 = vpack.c.bf16 %v827, %v825
        %v830 = vld [vmem:[#allocation8] sm:$0xf]
        %v831 = vld [vmem:[#allocation8 + $0x4] sm:$0xf]
        %v832 = vld [vmem:[#allocation8 + $0x8] sm:$0xf]
        %v833 = vld [vmem:[#allocation8 + $0xc] sm:$0xf]
        %v834 = vld [vmem:[#allocation8 + $0x10] sm:$0xf]
        %v835 = vld [vmem:[#allocation8 + $0x14] sm:$0xf]
        %v836 = vld [vmem:[#allocation8 + $0x18] sm:$0xf]
        %v837 = vld [vmem:[#allocation8 + $0x1c] sm:$0xf]
        %v838 = vld [vmem:[#allocation8 + $0x20] sm:$0xf]
        %v839 = vld [vmem:[#allocation8 + $0x24] sm:$0xf]
        %v840 = vld [vmem:[#allocation8 + $0x28] sm:$0xf]
        %v841 = vld [vmem:[#allocation8 + $0x2c] sm:$0xf]
        %v842 = vld [vmem:[#allocation8 + $0x30] sm:$0xf]
        %v843 = vld [vmem:[#allocation8 + $0x34] sm:$0xf]
        %v844 = vld [vmem:[#allocation8 + $0x38] sm:$0xf]
        %v845 = vld [vmem:[#allocation8 + $0x3c] sm:$0xf]
        %v862 = vunpack.c.l.b16 %v830
        %v863 = vunpack.c.l.b16 %v831
        %v864 = vunpack.c.l.b16 %v832
        %v865 = vunpack.c.l.b16 %v833
        %v866 = vunpack.c.l.b16 %v834
        %v867 = vunpack.c.l.b16 %v835
        %v868 = vunpack.c.l.b16 %v836
        %v869 = vunpack.c.l.b16 %v837
        %v870 = vunpack.c.l.b16 %v838
        %v871 = vunpack.c.l.b16 %v839
        %v872 = vunpack.c.l.b16 %v840
        %v873 = vunpack.c.l.b16 %v841
        %v874 = vunpack.c.l.b16 %v842
        %v875 = vunpack.c.l.b16 %v843
        %v876 = vunpack.c.l.b16 %v844
        %v877 = vunpack.c.l.b16 %v845
        %v878 = vpack.c.b16 %v863, %v862
        %v879 = vpack.c.b16 %v865, %v864
        %v880 = vpack.c.b16 %v867, %v866
        %v881 = vpack.c.b16 %v869, %v868
        %v882 = vpack.c.b16 %v871, %v870
        %v883 = vpack.c.b16 %v873, %v872
        %v884 = vpack.c.b16 %v875, %v874
        %v885 = vpack.c.b16 %v877, %v876
        %894 = vmatpush.bf16.msra.mxu0 %v885
        %895 = vmatpush.bf16.msra.mxu0 %v884
        %896 = vmatpush.bf16.msra.mxu0 %v883
        %897 = vmatpush.bf16.msra.mxu0 %v882
        %898 = vmatpush.bf16.msra.mxu0 %v881
        %899 = vmatpush.bf16.msra.mxu0 %v880
        %900 = vmatpush.bf16.msra.mxu0 %v879
        %901 = vmatpush.bf16.msra.mxu0 %v878
        %902 = vmatmul.bf16.gmra.mxu0 %v829
        %v903 = vpop.f32.mrf.mxu0
        %v904 = vadd.f32 0.0, %v903
        %v905 = vpop.f32.mrf.mxu0
        %v906 = vadd.f32 0.0, %v905
        %907 = vdwg.mxu0
        %908 = vst [vmem:[#allocation2] sm:$0xff] %v904
        %909 = vst [vmem:[#allocation2 + $0x8] sm:$0xff] %v906
        %s910 = scalar_lea.vmem [#allocation3], 64
        %v911 = vld [vmem:[%s910] sm:$0xf]
        %v912 = vld [vmem:[%s910 + $0x4] sm:$0xf]
        %v913 = vld [vmem:[%s910 + $0x8] sm:$0xf]
        %v914 = vld [vmem:[%s910 + $0xc] sm:$0xf]
        %v915 = vld [vmem:[%s910 + $0x10] sm:$0xf]
        %v916 = vld [vmem:[%s910 + $0x14] sm:$0xf]
        %v917 = vld [vmem:[%s910 + $0x18] sm:$0xf]
        %v918 = vld [vmem:[%s910 + $0x1c] sm:$0xf]
        %v919 = vld [vmem:[%s910 + $0x20] sm:$0xf]
        %v920 = vld [vmem:[%s910 + $0x24] sm:$0xf]
        %v921 = vld [vmem:[%s910 + $0x28] sm:$0xf]
        %v922 = vld [vmem:[%s910 + $0x2c] sm:$0xf]
        %v923 = vld [vmem:[%s910 + $0x30] sm:$0xf]
        %v924 = vld [vmem:[%s910 + $0x34] sm:$0xf]
        %v925 = vld [vmem:[%s910 + $0x38] sm:$0xf]
        %v926 = vld [vmem:[%s910 + $0x3c] sm:$0xf]
        %s927 = scalar_lea.vmem %s5, 1
        %v928 = vld [vmem:[%s927] sm:$0x1]
        %v930 = vperm.slane %v928, 0
        %v948 = vunpack.c.l.b16 %v911
        %v949 = vunpack.c.l.b16 %v912
        %v950 = vunpack.c.l.b16 %v913
        %v951 = vunpack.c.l.b16 %v914
        %v952 = vunpack.c.l.b16 %v915
        %v953 = vunpack.c.l.b16 %v916
        %v954 = vunpack.c.l.b16 %v917
        %v955 = vunpack.c.l.b16 %v918
        %v956 = vunpack.c.l.b16 %v919
        %v957 = vunpack.c.l.b16 %v920
        %v958 = vunpack.c.l.b16 %v921
        %v959 = vunpack.c.l.b16 %v922
        %v960 = vunpack.c.l.b16 %v923
        %v961 = vunpack.c.l.b16 %v924
        %v962 = vunpack.c.l.b16 %v925
        %v963 = vunpack.c.l.b16 %v926
        %v964 = vpack.c.b16 %v949, %v948
        %v965 = vpack.c.b16 %v951, %v950
        %v966 = vpack.c.b16 %v953, %v952
        %v967 = vpack.c.b16 %v955, %v954
        %v968 = vpack.c.b16 %v957, %v956
        %v969 = vpack.c.b16 %v959, %v958
        %v970 = vpack.c.b16 %v961, %v960
        %v971 = vpack.c.b16 %v963, %v962
        %980 = vmatpush.bf16.msra.mxu0 %v971
        %981 = vmatpush.bf16.msra.mxu0 %v970
        %982 = vmatpush.bf16.msra.mxu0 %v969
        %983 = vmatpush.bf16.msra.mxu0 %v968
        %984 = vmatpush.bf16.msra.mxu0 %v967
        %985 = vmatpush.bf16.msra.mxu0 %v966
        %986 = vmatpush.bf16.msra.mxu0 %v965
        %987 = vmatpush.bf16.msra.mxu0 %v964
        %988 = vmatmul.bf16.gmra.mxu0 %v533
        %v989 = vpop.f32.mrf.mxu0
        %v990 = vadd.f32 %v930, %v989
        %v991 = vpop.f32.mrf.mxu0
        %v992 = vadd.f32 %v930, %v991
        %993 = vdwg.mxu0
        %s994 = scalar_lea.vmem [#allocation5], 64
        %v995 = vld [vmem:[%s994] sm:$0xf]
        %v996 = vld [vmem:[%s994 + $0x4] sm:$0xf]
        %v997 = vld [vmem:[%s994 + $0x8] sm:$0xf]
        %v998 = vld [vmem:[%s994 + $0xc] sm:$0xf]
        %v999 = vld [vmem:[%s994 + $0x10] sm:$0xf]
        %v1000 = vld [vmem:[%s994 + $0x14] sm:$0xf]
        %v1001 = vld [vmem:[%s994 + $0x18] sm:$0xf]
        %v1002 = vld [vmem:[%s994 + $0x1c] sm:$0xf]
        %v1003 = vld [vmem:[%s994 + $0x20] sm:$0xf]
        %v1004 = vld [vmem:[%s994 + $0x24] sm:$0xf]
        %v1005 = vld [vmem:[%s994 + $0x28] sm:$0xf]
        %v1006 = vld [vmem:[%s994 + $0x2c] sm:$0xf]
        %v1007 = vld [vmem:[%s994 + $0x30] sm:$0xf]
        %v1008 = vld [vmem:[%s994 + $0x34] sm:$0xf]
        %v1009 = vld [vmem:[%s994 + $0x38] sm:$0xf]
        %v1010 = vld [vmem:[%s994 + $0x3c] sm:$0xf]
        %s1011 = scalar_lea.vmem %s6, 1
        %v1012 = vld [vmem:[%s1011] sm:$0x1]
        %v1014 = vperm.slane %v1012, 0
        %v1032 = vunpack.c.l.b16 %v995
        %v1033 = vunpack.c.l.b16 %v996
        %v1034 = vunpack.c.l.b16 %v997
        %v1035 = vunpack.c.l.b16 %v998
        %v1036 = vunpack.c.l.b16 %v999
        %v1037 = vunpack.c.l.b16 %v1000
        %v1038 = vunpack.c.l.b16 %v1001
        %v1039 = vunpack.c.l.b16 %v1002
        %v1040 = vunpack.c.l.b16 %v1003
        %v1041 = vunpack.c.l.b16 %v1004
        %v1042 = vunpack.c.l.b16 %v1005
        %v1043 = vunpack.c.l.b16 %v1006
        %v1044 = vunpack.c.l.b16 %v1007
        %v1045 = vunpack.c.l.b16 %v1008
        %v1046 = vunpack.c.l.b16 %v1009
        %v1047 = vunpack.c.l.b16 %v1010
        %v1048 = vpack.c.b16 %v1033, %v1032
        %v1049 = vpack.c.b16 %v1035, %v1034
        %v1050 = vpack.c.b16 %v1037, %v1036
        %v1051 = vpack.c.b16 %v1039, %v1038
        %v1052 = vpack.c.b16 %v1041, %v1040
        %v1053 = vpack.c.b16 %v1043, %v1042
        %v1054 = vpack.c.b16 %v1045, %v1044
        %v1055 = vpack.c.b16 %v1047, %v1046
        %1064 = vmatpush.bf16.msra.mxu0 %v1055
        %1065 = vmatpush.bf16.msra.mxu0 %v1054
        %1066 = vmatpush.bf16.msra.mxu0 %v1053
        %1067 = vmatpush.bf16.msra.mxu0 %v1052
        %1068 = vmatpush.bf16.msra.mxu0 %v1051
        %1069 = vmatpush.bf16.msra.mxu0 %v1050
        %1070 = vmatpush.bf16.msra.mxu0 %v1049
        %1071 = vmatpush.bf16.msra.mxu0 %v1048
        %1072 = vmatmul.bf16.gmra.mxu0 %v533
        %v1073 = vpop.f32.mrf.mxu0
        %v1074 = vadd.f32 %v1014, %v1073
        %v1075 = vpop.f32.mrf.mxu0
        %v1076 = vadd.f32 %v1014, %v1075
        %1077 = vdwg.mxu0
        %s1078 = scalar_lea.vmem [#allocation7], 64
        %v1079 = vld [vmem:[%s1078] sm:$0xf]
        %v1080 = vld [vmem:[%s1078 + $0x4] sm:$0xf]
        %v1081 = vld [vmem:[%s1078 + $0x8] sm:$0xf]
        %v1082 = vld [vmem:[%s1078 + $0xc] sm:$0xf]
        %v1083 = vld [vmem:[%s1078 + $0x10] sm:$0xf]
        %v1084 = vld [vmem:[%s1078 + $0x14] sm:$0xf]
        %v1085 = vld [vmem:[%s1078 + $0x18] sm:$0xf]
        %v1086 = vld [vmem:[%s1078 + $0x1c] sm:$0xf]
        %v1087 = vld [vmem:[%s1078 + $0x20] sm:$0xf]
        %v1088 = vld [vmem:[%s1078 + $0x24] sm:$0xf]
        %v1089 = vld [vmem:[%s1078 + $0x28] sm:$0xf]
        %v1090 = vld [vmem:[%s1078 + $0x2c] sm:$0xf]
        %v1091 = vld [vmem:[%s1078 + $0x30] sm:$0xf]
        %v1092 = vld [vmem:[%s1078 + $0x34] sm:$0xf]
        %v1093 = vld [vmem:[%s1078 + $0x38] sm:$0xf]
        %v1094 = vld [vmem:[%s1078 + $0x3c] sm:$0xf]
        %s1095 = scalar_lea.vmem %s7, 1
        %v1096 = vld [vmem:[%s1095] sm:$0x1]
        %v1098 = vperm.slane %v1096, 0
        %v1116 = vunpack.c.l.b16 %v1079
        %v1117 = vunpack.c.l.b16 %v1080
        %v1118 = vunpack.c.l.b16 %v1081
        %v1119 = vunpack.c.l.b16 %v1082
        %v1120 = vunpack.c.l.b16 %v1083
        %v1121 = vunpack.c.l.b16 %v1084
        %v1122 = vunpack.c.l.b16 %v1085
        %v1123 = vunpack.c.l.b16 %v1086
        %v1124 = vunpack.c.l.b16 %v1087
        %v1125 = vunpack.c.l.b16 %v1088
        %v1126 = vunpack.c.l.b16 %v1089
        %v1127 = vunpack.c.l.b16 %v1090
        %v1128 = vunpack.c.l.b16 %v1091
        %v1129 = vunpack.c.l.b16 %v1092
        %v1130 = vunpack.c.l.b16 %v1093
        %v1131 = vunpack.c.l.b16 %v1094
        %v1132 = vpack.c.b16 %v1117, %v1116
        %v1133 = vpack.c.b16 %v1119, %v1118
        %v1134 = vpack.c.b16 %v1121, %v1120
        %v1135 = vpack.c.b16 %v1123, %v1122
        %v1136 = vpack.c.b16 %v1125, %v1124
        %v1137 = vpack.c.b16 %v1127, %v1126
        %v1138 = vpack.c.b16 %v1129, %v1128
        %v1139 = vpack.c.b16 %v1131, %v1130
        %1148 = vmatpush.bf16.msra.mxu0 %v1139
        %1149 = vmatpush.bf16.msra.mxu0 %v1138
        %1150 = vmatpush.bf16.msra.mxu0 %v1137
        %1151 = vmatpush.bf16.msra.mxu0 %v1136
        %1152 = vmatpush.bf16.msra.mxu0 %v1135
        %1153 = vmatpush.bf16.msra.mxu0 %v1134
        %1154 = vmatpush.bf16.msra.mxu0 %v1133
        %1155 = vmatpush.bf16.msra.mxu0 %v1132
        %1156 = vmatmul.bf16.gmra.mxu0 %v703
        %v1157 = vpop.f32.mrf.mxu0
        %v1158 = vadd.f32 %v1098, %v1157
        %v1159 = vpop.f32.mrf.mxu0
        %v1160 = vadd.f32 %v1098, %v1159
        %1161 = vdwg.mxu0
        %v1162 = vpack.c.bf16 %v992, %v990
        %v1163 = vpack.c.bf16 %v1076, %v1074
        %1164 = vmatpush.bf16.xpose.msra.mxu0 0
        %1165 = vmatpush.bf16.xpose.msra.mxu0 0
        %1166 = vmatpush.bf16.xpose.msra.mxu0 0
        %1167 = vmatpush.bf16.xpose.msra.mxu0 0
        %1168 = vmatpush.bf16.xpose.msra.mxu0 0
        %1169 = vmatpush.bf16.xpose.msra.mxu0 0
        %1170 = vmatpush.bf16.xpose.msra.mxu0 0
        %1171 = vmatpush.bf16.xpose.msra.mxu0 %v1163
        %1172 = vmatmul.bf16.gmra.mxu0 %v1162
        %v1173 = vpop.f32.mrf.mxu0
        %v1174 = vadd.f32 0.0, %v1173
        %v1175 = vpop.f32.mrf.mxu0
        %v1176 = vadd.f32 0.0, %v1175
        %1177 = vdwg.mxu0
        %v1178 = vmul.f32 %v1174, 0.35355338
        %v1179 = vmul.f32 %v1176, 0.35355338
        %v1180 = vsel %vm508, %v1178, -1e+30
        %v1181 = vsel %vm508, %v1179, -1e+30
        %v1182 = vsel %vm787, %v1180, -inf
        %1183 = vmax.xlane.f32.xlu0 %v1182
        %v1184 = vpop.xlane.xlu0 %1183
        %v1185 = vsel %vm787, %v1181, -inf
        %1186 = vmax.xlane.f32.xlu0 %v1185
        %v1187 = vpop.xlane.xlu0 %1186
        %v1188 = vsub.f32 %v1180, %v1184
        %v1189 = vsub.f32 %v1181, %v1187
        %v1190 = vmul.f32 %v1188, 1.442695
        %v1191 = vpow.pop %v1190
        %v1192 = vmul.f32 %v1189, 1.442695
        %v1193 = vpow.pop %v1192
        %v1194 = vsel %vm787, %v1191, 0.0
        %1195 = vadd.xlane.f32.xlu0 %v1194
        %v1196 = vpop.xlane.xlu0 %1195
        %v1197 = vsel %vm787, %v1193, 0.0
        %1198 = vadd.xlane.f32.xlu0 %v1197
        %v1199 = vpop.xlane.xlu0 %1198
        %v1200 = vrcp.pop %v1196
        %v1201 = vrcp.pop %v1199
        %v1202 = vmul.f32 %v1191, %v1200
        %v1203 = vmul.f32 %v1193, %v1201
        %v1204 = vpack.c.bf16 %v1203, %v1202
        %v1205 = vpack.c.bf16 %v1160, %v1158
        %v1207 = vsel %vm787, %v1204, 0
        %1209 = vmatpush.bf16.msra.mxu0 0
        %1210 = vmatpush.bf16.msra.mxu0 0
        %1211 = vmatpush.bf16.msra.mxu0 0
        %1212 = vmatpush.bf16.msra.mxu0 0
        %1213 = vmatpush.bf16.msra.mxu0 0
        %1214 = vmatpush.bf16.msra.mxu0 0
        %1215 = vmatpush.bf16.msra.mxu0 0
        %1216 = vmatpush.bf16.msra.mxu0 %v1205
        %1217 = vmatmul.bf16.gmra.mxu0 %v1207
        %v1218 = vpop.f32.mrf.mxu0
        %v1219 = vadd.f32 0.0, %v1218
        %v1220 = vpop.f32.mrf.mxu0
        %v1221 = vadd.f32 0.0, %v1220
        %1222 = vdwg.mxu0
        %v1223 = vpack.c.bf16 %v1221, %v1219
        %s1224 = scalar_lea.vmem [#allocation8], 64
        %v1225 = vld [vmem:[%s1224] sm:$0xf]
        %v1226 = vld [vmem:[%s1224 + $0x4] sm:$0xf]
        %v1227 = vld [vmem:[%s1224 + $0x8] sm:$0xf]
        %v1228 = vld [vmem:[%s1224 + $0xc] sm:$0xf]
        %v1229 = vld [vmem:[%s1224 + $0x10] sm:$0xf]
        %v1230 = vld [vmem:[%s1224 + $0x14] sm:$0xf]
        %v1231 = vld [vmem:[%s1224 + $0x18] sm:$0xf]
        %v1232 = vld [vmem:[%s1224 + $0x1c] sm:$0xf]
        %v1233 = vld [vmem:[%s1224 + $0x20] sm:$0xf]
        %v1234 = vld [vmem:[%s1224 + $0x24] sm:$0xf]
        %v1235 = vld [vmem:[%s1224 + $0x28] sm:$0xf]
        %v1236 = vld [vmem:[%s1224 + $0x2c] sm:$0xf]
        %v1237 = vld [vmem:[%s1224 + $0x30] sm:$0xf]
        %v1238 = vld [vmem:[%s1224 + $0x34] sm:$0xf]
        %v1239 = vld [vmem:[%s1224 + $0x38] sm:$0xf]
        %v1240 = vld [vmem:[%s1224 + $0x3c] sm:$0xf]
        %v1257 = vunpack.c.l.b16 %v1225
        %v1258 = vunpack.c.l.b16 %v1226
        %v1259 = vunpack.c.l.b16 %v1227
        %v1260 = vunpack.c.l.b16 %v1228
        %v1261 = vunpack.c.l.b16 %v1229
        %v1262 = vunpack.c.l.b16 %v1230
        %v1263 = vunpack.c.l.b16 %v1231
        %v1264 = vunpack.c.l.b16 %v1232
        %v1265 = vunpack.c.l.b16 %v1233
        %v1266 = vunpack.c.l.b16 %v1234
        %v1267 = vunpack.c.l.b16 %v1235
        %v1268 = vunpack.c.l.b16 %v1236
        %v1269 = vunpack.c.l.b16 %v1237
        %v1270 = vunpack.c.l.b16 %v1238
        %v1271 = vunpack.c.l.b16 %v1239
        %v1272 = vunpack.c.l.b16 %v1240
        %v1273 = vpack.c.b16 %v1258, %v1257
        %v1274 = vpack.c.b16 %v1260, %v1259
        %v1275 = vpack.c.b16 %v1262, %v1261
        %v1276 = vpack.c.b16 %v1264, %v1263
        %v1277 = vpack.c.b16 %v1266, %v1265
        %v1278 = vpack.c.b16 %v1268, %v1267
        %v1279 = vpack.c.b16 %v1270, %v1269
        %v1280 = vpack.c.b16 %v1272, %v1271
        %1289 = vmatpush.bf16.msra.mxu0 %v1280
        %1290 = vmatpush.bf16.msra.mxu0 %v1279
        %1291 = vmatpush.bf16.msra.mxu0 %v1278
        %1292 = vmatpush.bf16.msra.mxu0 %v1277
        %1293 = vmatpush.bf16.msra.mxu0 %v1276
        %1294 = vmatpush.bf16.msra.mxu0 %v1275
        %1295 = vmatpush.bf16.msra.mxu0 %v1274
        %1296 = vmatpush.bf16.msra.mxu0 %v1273
        %1297 = vmatmul.bf16.gmra.mxu0 %v1223
        %v1298 = vpop.f32.mrf.mxu0
        %v1299 = vadd.f32 0.0, %v1298
        %v1300 = vpop.f32.mrf.mxu0
        %v1301 = vadd.f32 0.0, %v1300
        %1302 = vdwg.mxu0
        %v1303 = vld [vmem:[#allocation2] sm:$0xff]
        %v1304 = vld [vmem:[#allocation2 + $0x8] sm:$0xff]
        %v1305 = vadd.f32 %v1303, %v1299
        %v1306 = vadd.f32 %v1304, %v1301
        %1307 = vst [vmem:[#allocation2] sm:$0xff] %v1305
        %1308 = vst [vmem:[#allocation2 + $0x8] sm:$0xff] %v1306
        %s1309 = scalar_lea.vmem [#allocation3], 128
        %v1310 = vld [vmem:[%s1309] sm:$0xf]
        %v1311 = vld [vmem:[%s1309 + $0x4] sm:$0xf]
        %v1312 = vld [vmem:[%s1309 + $0x8] sm:$0xf]
        %v1313 = vld [vmem:[%s1309 + $0xc] sm:$0xf]
        %v1314 = vld [vmem:[%s1309 + $0x10] sm:$0xf]
        %v1315 = vld [vmem:[%s1309 + $0x14] sm:$0xf]
        %v1316 = vld [vmem:[%s1309 + $0x18] sm:$0xf]
        %v1317 = vld [vmem:[%s1309 + $0x1c] sm:$0xf]
        %v1318 = vld [vmem:[%s1309 + $0x20] sm:$0xf]
        %v1319 = vld [vmem:[%s1309 + $0x24] sm:$0xf]
        %v1320 = vld [vmem:[%s1309 + $0x28] sm:$0xf]
        %v1321 = vld [vmem:[%s1309 + $0x2c] sm:$0xf]
        %v1322 = vld [vmem:[%s1309 + $0x30] sm:$0xf]
        %v1323 = vld [vmem:[%s1309 + $0x34] sm:$0xf]
        %v1324 = vld [vmem:[%s1309 + $0x38] sm:$0xf]
        %v1325 = vld [vmem:[%s1309 + $0x3c] sm:$0xf]
        %s1326 = scalar_lea.vmem %s5, 2
        %v1327 = vld [vmem:[%s1326] sm:$0x1]
        %v1329 = vperm.slane %v1327, 0
        %v1347 = vunpack.c.l.b16 %v1310
        %v1348 = vunpack.c.l.b16 %v1311
        %v1349 = vunpack.c.l.b16 %v1312
        %v1350 = vunpack.c.l.b16 %v1313
        %v1351 = vunpack.c.l.b16 %v1314
        %v1352 = vunpack.c.l.b16 %v1315
        %v1353 = vunpack.c.l.b16 %v1316
        %v1354 = vunpack.c.l.b16 %v1317
        %v1355 = vunpack.c.l.b16 %v1318
        %v1356 = vunpack.c.l.b16 %v1319
        %v1357 = vunpack.c.l.b16 %v1320
        %v1358 = vunpack.c.l.b16 %v1321
        %v1359 = vunpack.c.l.b16 %v1322
        %v1360 = vunpack.c.l.b16 %v1323
        %v1361 = vunpack.c.l.b16 %v1324
        %v1362 = vunpack.c.l.b16 %v1325
        %v1363 = vpack.c.b16 %v1348, %v1347
        %v1364 = vpack.c.b16 %v1350, %v1349
        %v1365 = vpack.c.b16 %v1352, %v1351
        %v1366 = vpack.c.b16 %v1354, %v1353
        %v1367 = vpack.c.b16 %v1356, %v1355
        %v1368 = vpack.c.b16 %v1358, %v1357
        %v1369 = vpack.c.b16 %v1360, %v1359
        %v1370 = vpack.c.b16 %v1362, %v1361
        %1379 = vmatpush.bf16.msra.mxu0 %v1370
        %1380 = vmatpush.bf16.msra.mxu0 %v1369
        %1381 = vmatpush.bf16.msra.mxu0 %v1368
        %1382 = vmatpush.bf16.msra.mxu0 %v1367
        %1383 = vmatpush.bf16.msra.mxu0 %v1366
        %1384 = vmatpush.bf16.msra.mxu0 %v1365
        %1385 = vmatpush.bf16.msra.mxu0 %v1364
        %1386 = vmatpush.bf16.msra.mxu0 %v1363
        %1387 = vmatmul.bf16.gmra.mxu0 %v533
        %v1388 = vpop.f32.mrf.mxu0
        %v1389 = vadd.f32 %v1329, %v1388
        %v1390 = vpop.f32.mrf.mxu0
        %v1391 = vadd.f32 %v1329, %v1390
        %1392 = vdwg.mxu0
        %s1393 = scalar_lea.vmem [#allocation5], 128
        %v1394 = vld [vmem:[%s1393] sm:$0xf]
        %v1395 = vld [vmem:[%s1393 + $0x4] sm:$0xf]
        %v1396 = vld [vmem:[%s1393 + $0x8] sm:$0xf]
        %v1397 = vld [vmem:[%s1393 + $0xc] sm:$0xf]
        %v1398 = vld [vmem:[%s1393 + $0x10] sm:$0xf]
        %v1399 = vld [vmem:[%s1393 + $0x14] sm:$0xf]
        %v1400 = vld [vmem:[%s1393 + $0x18] sm:$0xf]
        %v1401 = vld [vmem:[%s1393 + $0x1c] sm:$0xf]
        %v1402 = vld [vmem:[%s1393 + $0x20] sm:$0xf]
        %v1403 = vld [vmem:[%s1393 + $0x24] sm:$0xf]
        %v1404 = vld [vmem:[%s1393 + $0x28] sm:$0xf]
        %v1405 = vld [vmem:[%s1393 + $0x2c] sm:$0xf]
        %v1406 = vld [vmem:[%s1393 + $0x30] sm:$0xf]
        %v1407 = vld [vmem:[%s1393 + $0x34] sm:$0xf]
        %v1408 = vld [vmem:[%s1393 + $0x38] sm:$0xf]
        %v1409 = vld [vmem:[%s1393 + $0x3c] sm:$0xf]
        %s1410 = scalar_lea.vmem %s6, 2
        %v1411 = vld [vmem:[%s1410] sm:$0x1]
        %v1413 = vperm.slane %v1411, 0
        %v1431 = vunpack.c.l.b16 %v1394
        %v1432 = vunpack.c.l.b16 %v1395
        %v1433 = vunpack.c.l.b16 %v1396
        %v1434 = vunpack.c.l.b16 %v1397
        %v1435 = vunpack.c.l.b16 %v1398
        %v1436 = vunpack.c.l.b16 %v1399
        %v1437 = vunpack.c.l.b16 %v1400
        %v1438 = vunpack.c.l.b16 %v1401
        %v1439 = vunpack.c.l.b16 %v1402
        %v1440 = vunpack.c.l.b16 %v1403
        %v1441 = vunpack.c.l.b16 %v1404
        %v1442 = vunpack.c.l.b16 %v1405
        %v1443 = vunpack.c.l.b16 %v1406
        %v1444 = vunpack.c.l.b16 %v1407
        %v1445 = vunpack.c.l.b16 %v1408
        %v1446 = vunpack.c.l.b16 %v1409
        %v1447 = vpack.c.b16 %v1432, %v1431
        %v1448 = vpack.c.b16 %v1434, %v1433
        %v1449 = vpack.c.b16 %v1436, %v1435
        %v1450 = vpack.c.b16 %v1438, %v1437
        %v1451 = vpack.c.b16 %v1440, %v1439
        %v1452 = vpack.c.b16 %v1442, %v1441
        %v1453 = vpack.c.b16 %v1444, %v1443
        %v1454 = vpack.c.b16 %v1446, %v1445
        %1463 = vmatpush.bf16.msra.mxu0 %v1454
        %1464 = vmatpush.bf16.msra.mxu0 %v1453
        %1465 = vmatpush.bf16.msra.mxu0 %v1452
        %1466 = vmatpush.bf16.msra.mxu0 %v1451
        %1467 = vmatpush.bf16.msra.mxu0 %v1450
        %1468 = vmatpush.bf16.msra.mxu0 %v1449
        %1469 = vmatpush.bf16.msra.mxu0 %v1448
        %1470 = vmatpush.bf16.msra.mxu0 %v1447
        %1471 = vmatmul.bf16.gmra.mxu0 %v533
        %v1472 = vpop.f32.mrf.mxu0
        %v1473 = vadd.f32 %v1413, %v1472
        %v1474 = vpop.f32.mrf.mxu0
        %v1475 = vadd.f32 %v1413, %v1474
        %1476 = vdwg.mxu0
        %s1477 = scalar_lea.vmem [#allocation7], 128
        %v1478 = vld [vmem:[%s1477] sm:$0xf]
        %v1479 = vld [vmem:[%s1477 + $0x4] sm:$0xf]
        %v1480 = vld [vmem:[%s1477 + $0x8] sm:$0xf]
        %v1481 = vld [vmem:[%s1477 + $0xc] sm:$0xf]
        %v1482 = vld [vmem:[%s1477 + $0x10] sm:$0xf]
        %v1483 = vld [vmem:[%s1477 + $0x14] sm:$0xf]
        %v1484 = vld [vmem:[%s1477 + $0x18] sm:$0xf]
        %v1485 = vld [vmem:[%s1477 + $0x1c] sm:$0xf]
        %v1486 = vld [vmem:[%s1477 + $0x20] sm:$0xf]
        %v1487 = vld [vmem:[%s1477 + $0x24] sm:$0xf]
        %v1488 = vld [vmem:[%s1477 + $0x28] sm:$0xf]
        %v1489 = vld [vmem:[%s1477 + $0x2c] sm:$0xf]
        %v1490 = vld [vmem:[%s1477 + $0x30] sm:$0xf]
        %v1491 = vld [vmem:[%s1477 + $0x34] sm:$0xf]
        %v1492 = vld [vmem:[%s1477 + $0x38] sm:$0xf]
        %v1493 = vld [vmem:[%s1477 + $0x3c] sm:$0xf]
        %s1494 = scalar_lea.vmem %s7, 2
        %v1495 = vld [vmem:[%s1494] sm:$0x1]
        %v1497 = vperm.slane %v1495, 0
        %v1515 = vunpack.c.l.b16 %v1478
        %v1516 = vunpack.c.l.b16 %v1479
        %v1517 = vunpack.c.l.b16 %v1480
        %v1518 = vunpack.c.l.b16 %v1481
        %v1519 = vunpack.c.l.b16 %v1482
        %v1520 = vunpack.c.l.b16 %v1483
        %v1521 = vunpack.c.l.b16 %v1484
        %v1522 = vunpack.c.l.b16 %v1485
        %v1523 = vunpack.c.l.b16 %v1486
        %v1524 = vunpack.c.l.b16 %v1487
        %v1525 = vunpack.c.l.b16 %v1488
        %v1526 = vunpack.c.l.b16 %v1489
        %v1527 = vunpack.c.l.b16 %v1490
        %v1528 = vunpack.c.l.b16 %v1491
        %v1529 = vunpack.c.l.b16 %v1492
        %v1530 = vunpack.c.l.b16 %v1493
        %v1531 = vpack.c.b16 %v1516, %v1515
        %v1532 = vpack.c.b16 %v1518, %v1517
        %v1533 = vpack.c.b16 %v1520, %v1519
        %v1534 = vpack.c.b16 %v1522, %v1521
        %v1535 = vpack.c.b16 %v1524, %v1523
        %v1536 = vpack.c.b16 %v1526, %v1525
        %v1537 = vpack.c.b16 %v1528, %v1527
        %v1538 = vpack.c.b16 %v1530, %v1529
        %1547 = vmatpush.bf16.msra.mxu0 %v1538
        %1548 = vmatpush.bf16.msra.mxu0 %v1537
        %1549 = vmatpush.bf16.msra.mxu0 %v1536
        %1550 = vmatpush.bf16.msra.mxu0 %v1535
        %1551 = vmatpush.bf16.msra.mxu0 %v1534
        %1552 = vmatpush.bf16.msra.mxu0 %v1533
        %1553 = vmatpush.bf16.msra.mxu0 %v1532
        %1554 = vmatpush.bf16.msra.mxu0 %v1531
        %1555 = vmatmul.bf16.gmra.mxu0 %v703
        %v1556 = vpop.f32.mrf.mxu0
        %v1557 = vadd.f32 %v1497, %v1556
        %v1558 = vpop.f32.mrf.mxu0
        %v1559 = vadd.f32 %v1497, %v1558
        %1560 = vdwg.mxu0
        %v1561 = vpack.c.bf16 %v1391, %v1389
        %v1562 = vpack.c.bf16 %v1475, %v1473
        %1563 = vmatpush.bf16.xpose.msra.mxu0 0
        %1564 = vmatpush.bf16.xpose.msra.mxu0 0
        %1565 = vmatpush.bf16.xpose.msra.mxu0 0
        %1566 = vmatpush.bf16.xpose.msra.mxu0 0
        %1567 = vmatpush.bf16.xpose.msra.mxu0 0
        %1568 = vmatpush.bf16.xpose.msra.mxu0 0
        %1569 = vmatpush.bf16.xpose.msra.mxu0 0
        %1570 = vmatpush.bf16.xpose.msra.mxu0 %v1562
        %1571 = vmatmul.bf16.gmra.mxu0 %v1561
        %v1572 = vpop.f32.mrf.mxu0
        %v1573 = vadd.f32 0.0, %v1572
        %v1574 = vpop.f32.mrf.mxu0
        %v1575 = vadd.f32 0.0, %v1574
        %1576 = vdwg.mxu0
        %v1577 = vmul.f32 %v1573, 0.35355338
        %v1578 = vmul.f32 %v1575, 0.35355338
        %v1579 = vsel %vm508, %v1577, -1e+30
        %v1580 = vsel %vm508, %v1578, -1e+30
        %v1581 = vsel %vm787, %v1579, -inf
        %1582 = vmax.xlane.f32.xlu0 %v1581
        %v1583 = vpop.xlane.xlu0 %1582
        %v1584 = vsel %vm787, %v1580, -inf
        %1585 = vmax.xlane.f32.xlu0 %v1584
        %v1586 = vpop.xlane.xlu0 %1585
        %v1587 = vsub.f32 %v1579, %v1583
        %v1588 = vsub.f32 %v1580, %v1586
        %v1589 = vmul.f32 %v1587, 1.442695
        %v1590 = vpow.pop %v1589
        %v1591 = vmul.f32 %v1588, 1.442695
        %v1592 = vpow.pop %v1591
        %v1593 = vsel %vm787, %v1590, 0.0
        %1594 = vadd.xlane.f32.xlu0 %v1593
        %v1595 = vpop.xlane.xlu0 %1594
        %v1596 = vsel %vm787, %v1592, 0.0
        %1597 = vadd.xlane.f32.xlu0 %v1596
        %v1598 = vpop.xlane.xlu0 %1597
        %v1599 = vrcp.pop %v1595
        %v1600 = vrcp.pop %v1598
        %v1601 = vmul.f32 %v1590, %v1599
        %v1602 = vmul.f32 %v1592, %v1600
        %v1603 = vpack.c.bf16 %v1602, %v1601
        %v1604 = vpack.c.bf16 %v1559, %v1557
        %v1606 = vsel %vm787, %v1603, 0
        %1608 = vmatpush.bf16.msra.mxu0 0
        %1609 = vmatpush.bf16.msra.mxu0 0
        %1610 = vmatpush.bf16.msra.mxu0 0
        %1611 = vmatpush.bf16.msra.mxu0 0
        %1612 = vmatpush.bf16.msra.mxu0 0
        %1613 = vmatpush.bf16.msra.mxu0 0
        %1614 = vmatpush.bf16.msra.mxu0 0
        %1615 = vmatpush.bf16.msra.mxu0 %v1604
        %1616 = vmatmul.bf16.gmra.mxu0 %v1606
        %v1617 = vpop.f32.mrf.mxu0
        %v1618 = vadd.f32 0.0, %v1617
        %v1619 = vpop.f32.mrf.mxu0
        %v1620 = vadd.f32 0.0, %v1619
        %1621 = vdwg.mxu0
        %v1622 = vpack.c.bf16 %v1620, %v1618
        %s1623 = scalar_lea.vmem [#allocation8], 128
        %v1624 = vld [vmem:[%s1623] sm:$0xf]
        %v1625 = vld [vmem:[%s1623 + $0x4] sm:$0xf]
        %v1626 = vld [vmem:[%s1623 + $0x8] sm:$0xf]
        %v1627 = vld [vmem:[%s1623 + $0xc] sm:$0xf]
        %v1628 = vld [vmem:[%s1623 + $0x10] sm:$0xf]
        %v1629 = vld [vmem:[%s1623 + $0x14] sm:$0xf]
        %v1630 = vld [vmem:[%s1623 + $0x18] sm:$0xf]
        %v1631 = vld [vmem:[%s1623 + $0x1c] sm:$0xf]
        %v1632 = vld [vmem:[%s1623 + $0x20] sm:$0xf]
        %v1633 = vld [vmem:[%s1623 + $0x24] sm:$0xf]
        %v1634 = vld [vmem:[%s1623 + $0x28] sm:$0xf]
        %v1635 = vld [vmem:[%s1623 + $0x2c] sm:$0xf]
        %v1636 = vld [vmem:[%s1623 + $0x30] sm:$0xf]
        %v1637 = vld [vmem:[%s1623 + $0x34] sm:$0xf]
        %v1638 = vld [vmem:[%s1623 + $0x38] sm:$0xf]
        %v1639 = vld [vmem:[%s1623 + $0x3c] sm:$0xf]
        %v1656 = vunpack.c.l.b16 %v1624
        %v1657 = vunpack.c.l.b16 %v1625
        %v1658 = vunpack.c.l.b16 %v1626
        %v1659 = vunpack.c.l.b16 %v1627
        %v1660 = vunpack.c.l.b16 %v1628
        %v1661 = vunpack.c.l.b16 %v1629
        %v1662 = vunpack.c.l.b16 %v1630
        %v1663 = vunpack.c.l.b16 %v1631
        %v1664 = vunpack.c.l.b16 %v1632
        %v1665 = vunpack.c.l.b16 %v1633
        %v1666 = vunpack.c.l.b16 %v1634
        %v1667 = vunpack.c.l.b16 %v1635
        %v1668 = vunpack.c.l.b16 %v1636
        %v1669 = vunpack.c.l.b16 %v1637
        %v1670 = vunpack.c.l.b16 %v1638
        %v1671 = vunpack.c.l.b16 %v1639
        %v1672 = vpack.c.b16 %v1657, %v1656
        %v1673 = vpack.c.b16 %v1659, %v1658
        %v1674 = vpack.c.b16 %v1661, %v1660
        %v1675 = vpack.c.b16 %v1663, %v1662
        %v1676 = vpack.c.b16 %v1665, %v1664
        %v1677 = vpack.c.b16 %v1667, %v1666
        %v1678 = vpack.c.b16 %v1669, %v1668
        %v1679 = vpack.c.b16 %v1671, %v1670
        %1688 = vmatpush.bf16.msra.mxu0 %v1679
        %1689 = vmatpush.bf16.msra.mxu0 %v1678
        %1690 = vmatpush.bf16.msra.mxu0 %v1677
        %1691 = vmatpush.bf16.msra.mxu0 %v1676
        %1692 = vmatpush.bf16.msra.mxu0 %v1675
        %1693 = vmatpush.bf16.msra.mxu0 %v1674
        %1694 = vmatpush.bf16.msra.mxu0 %v1673
        %1695 = vmatpush.bf16.msra.mxu0 %v1672
        %1696 = vmatmul.bf16.gmra.mxu0 %v1622
        %v1697 = vpop.f32.mrf.mxu0
        %v1698 = vadd.f32 0.0, %v1697
        %v1699 = vpop.f32.mrf.mxu0
        %v1700 = vadd.f32 0.0, %v1699
        %1701 = vdwg.mxu0
        %v1702 = vld [vmem:[#allocation2] sm:$0xff]
        %v1703 = vld [vmem:[#allocation2 + $0x8] sm:$0xff]
        %v1704 = vadd.f32 %v1702, %v1698
        %v1705 = vadd.f32 %v1703, %v1700
        %1706 = vst [vmem:[#allocation2] sm:$0xff] %v1704
        %1707 = vst [vmem:[#allocation2 + $0x8] sm:$0xff] %v1705
        %s1708 = scalar_lea.vmem [#allocation3], 192
        %v1709 = vld [vmem:[%s1708] sm:$0xf]
        %v1710 = vld [vmem:[%s1708 + $0x4] sm:$0xf]
        %v1711 = vld [vmem:[%s1708 + $0x8] sm:$0xf]
        %v1712 = vld [vmem:[%s1708 + $0xc] sm:$0xf]
        %v1713 = vld [vmem:[%s1708 + $0x10] sm:$0xf]
        %v1714 = vld [vmem:[%s1708 + $0x14] sm:$0xf]
        %v1715 = vld [vmem:[%s1708 + $0x18] sm:$0xf]
        %v1716 = vld [vmem:[%s1708 + $0x1c] sm:$0xf]
        %v1717 = vld [vmem:[%s1708 + $0x20] sm:$0xf]
        %v1718 = vld [vmem:[%s1708 + $0x24] sm:$0xf]
        %v1719 = vld [vmem:[%s1708 + $0x28] sm:$0xf]
        %v1720 = vld [vmem:[%s1708 + $0x2c] sm:$0xf]
        %v1721 = vld [vmem:[%s1708 + $0x30] sm:$0xf]
        %v1722 = vld [vmem:[%s1708 + $0x34] sm:$0xf]
        %v1723 = vld [vmem:[%s1708 + $0x38] sm:$0xf]
        %v1724 = vld [vmem:[%s1708 + $0x3c] sm:$0xf]
        %s1725 = scalar_lea.vmem %s5, 3
        %v1726 = vld [vmem:[%s1725] sm:$0x1]
        %v1728 = vperm.slane %v1726, 0
        %v1746 = vunpack.c.l.b16 %v1709
        %v1747 = vunpack.c.l.b16 %v1710
        %v1748 = vunpack.c.l.b16 %v1711
        %v1749 = vunpack.c.l.b16 %v1712
        %v1750 = vunpack.c.l.b16 %v1713
        %v1751 = vunpack.c.l.b16 %v1714
        %v1752 = vunpack.c.l.b16 %v1715
        %v1753 = vunpack.c.l.b16 %v1716
        %v1754 = vunpack.c.l.b16 %v1717
        %v1755 = vunpack.c.l.b16 %v1718
        %v1756 = vunpack.c.l.b16 %v1719
        %v1757 = vunpack.c.l.b16 %v1720
        %v1758 = vunpack.c.l.b16 %v1721
        %v1759 = vunpack.c.l.b16 %v1722
        %v1760 = vunpack.c.l.b16 %v1723
        %v1761 = vunpack.c.l.b16 %v1724
        %v1762 = vpack.c.b16 %v1747, %v1746
        %v1763 = vpack.c.b16 %v1749, %v1748
        %v1764 = vpack.c.b16 %v1751, %v1750
        %v1765 = vpack.c.b16 %v1753, %v1752
        %v1766 = vpack.c.b16 %v1755, %v1754
        %v1767 = vpack.c.b16 %v1757, %v1756
        %v1768 = vpack.c.b16 %v1759, %v1758
        %v1769 = vpack.c.b16 %v1761, %v1760
        %1778 = vmatpush.bf16.msra.mxu0 %v1769
        %1779 = vmatpush.bf16.msra.mxu0 %v1768
        %1780 = vmatpush.bf16.msra.mxu0 %v1767
        %1781 = vmatpush.bf16.msra.mxu0 %v1766
        %1782 = vmatpush.bf16.msra.mxu0 %v1765
        %1783 = vmatpush.bf16.msra.mxu0 %v1764
        %1784 = vmatpush.bf16.msra.mxu0 %v1763
        %1785 = vmatpush.bf16.msra.mxu0 %v1762
        %1786 = vmatmul.bf16.gmra.mxu0 %v533
        %v1787 = vpop.f32.mrf.mxu0
        %v1788 = vadd.f32 %v1728, %v1787
        %v1789 = vpop.f32.mrf.mxu0
        %v1790 = vadd.f32 %v1728, %v1789
        %1791 = vdwg.mxu0
        %s1792 = scalar_lea.vmem [#allocation5], 192
        %v1793 = vld [vmem:[%s1792] sm:$0xf]
        %v1794 = vld [vmem:[%s1792 + $0x4] sm:$0xf]
        %v1795 = vld [vmem:[%s1792 + $0x8] sm:$0xf]
        %v1796 = vld [vmem:[%s1792 + $0xc] sm:$0xf]
        %v1797 = vld [vmem:[%s1792 + $0x10] sm:$0xf]
        %v1798 = vld [vmem:[%s1792 + $0x14] sm:$0xf]
        %v1799 = vld [vmem:[%s1792 + $0x18] sm:$0xf]
        %v1800 = vld [vmem:[%s1792 + $0x1c] sm:$0xf]
        %v1801 = vld [vmem:[%s1792 + $0x20] sm:$0xf]
        %v1802 = vld [vmem:[%s1792 + $0x24] sm:$0xf]
        %v1803 = vld [vmem:[%s1792 + $0x28] sm:$0xf]
        %v1804 = vld [vmem:[%s1792 + $0x2c] sm:$0xf]
        %v1805 = vld [vmem:[%s1792 + $0x30] sm:$0xf]
        %v1806 = vld [vmem:[%s1792 + $0x34] sm:$0xf]
        %v1807 = vld [vmem:[%s1792 + $0x38] sm:$0xf]
        %v1808 = vld [vmem:[%s1792 + $0x3c] sm:$0xf]
        %s1809 = scalar_lea.vmem %s6, 3
        %v1810 = vld [vmem:[%s1809] sm:$0x1]
        %v1812 = vperm.slane %v1810, 0
        %v1830 = vunpack.c.l.b16 %v1793
        %v1831 = vunpack.c.l.b16 %v1794
        %v1832 = vunpack.c.l.b16 %v1795
        %v1833 = vunpack.c.l.b16 %v1796
        %v1834 = vunpack.c.l.b16 %v1797
        %v1835 = vunpack.c.l.b16 %v1798
        %v1836 = vunpack.c.l.b16 %v1799
        %v1837 = vunpack.c.l.b16 %v1800
        %v1838 = vunpack.c.l.b16 %v1801
        %v1839 = vunpack.c.l.b16 %v1802
        %v1840 = vunpack.c.l.b16 %v1803
        %v1841 = vunpack.c.l.b16 %v1804
        %v1842 = vunpack.c.l.b16 %v1805
        %v1843 = vunpack.c.l.b16 %v1806
        %v1844 = vunpack.c.l.b16 %v1807
        %v1845 = vunpack.c.l.b16 %v1808
        %v1846 = vpack.c.b16 %v1831, %v1830
        %v1847 = vpack.c.b16 %v1833, %v1832
        %v1848 = vpack.c.b16 %v1835, %v1834
        %v1849 = vpack.c.b16 %v1837, %v1836
        %v1850 = vpack.c.b16 %v1839, %v1838
        %v1851 = vpack.c.b16 %v1841, %v1840
        %v1852 = vpack.c.b16 %v1843, %v1842
        %v1853 = vpack.c.b16 %v1845, %v1844
        %1862 = vmatpush.bf16.msra.mxu0 %v1853
        %1863 = vmatpush.bf16.msra.mxu0 %v1852
        %1864 = vmatpush.bf16.msra.mxu0 %v1851
        %1865 = vmatpush.bf16.msra.mxu0 %v1850
        %1866 = vmatpush.bf16.msra.mxu0 %v1849
        %1867 = vmatpush.bf16.msra.mxu0 %v1848
        %1868 = vmatpush.bf16.msra.mxu0 %v1847
        %1869 = vmatpush.bf16.msra.mxu0 %v1846
        %1870 = vmatmul.bf16.gmra.mxu0 %v533
        %v1871 = vpop.f32.mrf.mxu0
        %v1872 = vadd.f32 %v1812, %v1871
        %v1873 = vpop.f32.mrf.mxu0
        %v1874 = vadd.f32 %v1812, %v1873
        %1875 = vdwg.mxu0
        %s1876 = scalar_lea.vmem [#allocation7], 192
        %v1877 = vld [vmem:[%s1876] sm:$0xf]
        %v1878 = vld [vmem:[%s1876 + $0x4] sm:$0xf]
        %v1879 = vld [vmem:[%s1876 + $0x8] sm:$0xf]
        %v1880 = vld [vmem:[%s1876 + $0xc] sm:$0xf]
        %v1881 = vld [vmem:[%s1876 + $0x10] sm:$0xf]
        %v1882 = vld [vmem:[%s1876 + $0x14] sm:$0xf]
        %v1883 = vld [vmem:[%s1876 + $0x18] sm:$0xf]
        %v1884 = vld [vmem:[%s1876 + $0x1c] sm:$0xf]
        %v1885 = vld [vmem:[%s1876 + $0x20] sm:$0xf]
        %v1886 = vld [vmem:[%s1876 + $0x24] sm:$0xf]
        %v1887 = vld [vmem:[%s1876 + $0x28] sm:$0xf]
        %v1888 = vld [vmem:[%s1876 + $0x2c] sm:$0xf]
        %v1889 = vld [vmem:[%s1876 + $0x30] sm:$0xf]
        %v1890 = vld [vmem:[%s1876 + $0x34] sm:$0xf]
        %v1891 = vld [vmem:[%s1876 + $0x38] sm:$0xf]
        %v1892 = vld [vmem:[%s1876 + $0x3c] sm:$0xf]
        %s1893 = scalar_lea.vmem %s7, 3
        %v1894 = vld [vmem:[%s1893] sm:$0x1]
        %v1896 = vperm.slane %v1894, 0
        %v1914 = vunpack.c.l.b16 %v1877
        %v1915 = vunpack.c.l.b16 %v1878
        %v1916 = vunpack.c.l.b16 %v1879
        %v1917 = vunpack.c.l.b16 %v1880
        %v1918 = vunpack.c.l.b16 %v1881
        %v1919 = vunpack.c.l.b16 %v1882
        %v1920 = vunpack.c.l.b16 %v1883
        %v1921 = vunpack.c.l.b16 %v1884
        %v1922 = vunpack.c.l.b16 %v1885
        %v1923 = vunpack.c.l.b16 %v1886
        %v1924 = vunpack.c.l.b16 %v1887
        %v1925 = vunpack.c.l.b16 %v1888
        %v1926 = vunpack.c.l.b16 %v1889
        %v1927 = vunpack.c.l.b16 %v1890
        %v1928 = vunpack.c.l.b16 %v1891
        %v1929 = vunpack.c.l.b16 %v1892
        %v1930 = vpack.c.b16 %v1915, %v1914
        %v1931 = vpack.c.b16 %v1917, %v1916
        %v1932 = vpack.c.b16 %v1919, %v1918
        %v1933 = vpack.c.b16 %v1921, %v1920
        %v1934 = vpack.c.b16 %v1923, %v1922
        %v1935 = vpack.c.b16 %v1925, %v1924
        %v1936 = vpack.c.b16 %v1927, %v1926
        %v1937 = vpack.c.b16 %v1929, %v1928
        %1946 = vmatpush.bf16.msra.mxu0 %v1937
        %1947 = vmatpush.bf16.msra.mxu0 %v1936
        %1948 = vmatpush.bf16.msra.mxu0 %v1935
        %1949 = vmatpush.bf16.msra.mxu0 %v1934
        %1950 = vmatpush.bf16.msra.mxu0 %v1933
        %1951 = vmatpush.bf16.msra.mxu0 %v1932
        %1952 = vmatpush.bf16.msra.mxu0 %v1931
        %1953 = vmatpush.bf16.msra.mxu0 %v1930
        %1954 = vmatmul.bf16.gmra.mxu0 %v703
        %v1955 = vpop.f32.mrf.mxu0
        %v1956 = vadd.f32 %v1896, %v1955
        %v1957 = vpop.f32.mrf.mxu0
        %v1958 = vadd.f32 %v1896, %v1957
        %1959 = vdwg.mxu0
        %v1960 = vpack.c.bf16 %v1790, %v1788
        %v1961 = vpack.c.bf16 %v1874, %v1872
        %1962 = vmatpush.bf16.xpose.msra.mxu0 0
        %1963 = vmatpush.bf16.xpose.msra.mxu0 0
        %1964 = vmatpush.bf16.xpose.msra.mxu0 0
        %1965 = vmatpush.bf16.xpose.msra.mxu0 0
        %1966 = vmatpush.bf16.xpose.msra.mxu0 0
        %1967 = vmatpush.bf16.xpose.msra.mxu0 0
        %1968 = vmatpush.bf16.xpose.msra.mxu0 0
        %1969 = vmatpush.bf16.xpose.msra.mxu0 %v1961
        %1970 = vmatmul.bf16.gmra.mxu0 %v1960
        %v1971 = vpop.f32.mrf.mxu0
        %v1972 = vadd.f32 0.0, %v1971
        %v1973 = vpop.f32.mrf.mxu0
        %v1974 = vadd.f32 0.0, %v1973
        %1975 = vdwg.mxu0
        %v1976 = vmul.f32 %v1972, 0.35355338
        %v1977 = vmul.f32 %v1974, 0.35355338
        %v1978 = vsel %vm508, %v1976, -1e+30
        %v1979 = vsel %vm508, %v1977, -1e+30
        %v1980 = vsel %vm787, %v1978, -inf
        %1981 = vmax.xlane.f32.xlu0 %v1980
        %v1982 = vpop.xlane.xlu0 %1981
        %v1983 = vsel %vm787, %v1979, -inf
        %1984 = vmax.xlane.f32.xlu0 %v1983
        %v1985 = vpop.xlane.xlu0 %1984
        %v1986 = vsub.f32 %v1978, %v1982
        %v1987 = vsub.f32 %v1979, %v1985
        %v1988 = vmul.f32 %v1986, 1.442695
        %v1989 = vpow.pop %v1988
        %v1990 = vmul.f32 %v1987, 1.442695
        %v1991 = vpow.pop %v1990
        %v1992 = vsel %vm787, %v1989, 0.0
        %1993 = vadd.xlane.f32.xlu0 %v1992
        %v1994 = vpop.xlane.xlu0 %1993
        %v1995 = vsel %vm787, %v1991, 0.0
        %1996 = vadd.xlane.f32.xlu0 %v1995
        %v1997 = vpop.xlane.xlu0 %1996
        %v1998 = vrcp.pop %v1994
        %v1999 = vrcp.pop %v1997
        %v2000 = vmul.f32 %v1989, %v1998
        %v2001 = vmul.f32 %v1991, %v1999
        %v2002 = vpack.c.bf16 %v2001, %v2000
        %v2003 = vpack.c.bf16 %v1958, %v1956
        %v2005 = vsel %vm787, %v2002, 0
        %2007 = vmatpush.bf16.msra.mxu0 0
        %2008 = vmatpush.bf16.msra.mxu0 0
        %2009 = vmatpush.bf16.msra.mxu0 0
        %2010 = vmatpush.bf16.msra.mxu0 0
        %2011 = vmatpush.bf16.msra.mxu0 0
        %2012 = vmatpush.bf16.msra.mxu0 0
        %2013 = vmatpush.bf16.msra.mxu0 0
        %2014 = vmatpush.bf16.msra.mxu0 %v2003
        %2015 = vmatmul.bf16.gmra.mxu0 %v2005
        %v2016 = vpop.f32.mrf.mxu0
        %v2017 = vadd.f32 0.0, %v2016
        %v2018 = vpop.f32.mrf.mxu0
        %v2019 = vadd.f32 0.0, %v2018
        %2020 = vdwg.mxu0
        %v2021 = vpack.c.bf16 %v2019, %v2017
        %s2022 = scalar_lea.vmem [#allocation8], 192
        %v2023 = vld [vmem:[%s2022] sm:$0xf]
        %v2024 = vld [vmem:[%s2022 + $0x4] sm:$0xf]
        %v2025 = vld [vmem:[%s2022 + $0x8] sm:$0xf]
        %v2026 = vld [vmem:[%s2022 + $0xc] sm:$0xf]
        %v2027 = vld [vmem:[%s2022 + $0x10] sm:$0xf]
        %v2028 = vld [vmem:[%s2022 + $0x14] sm:$0xf]
        %v2029 = vld [vmem:[%s2022 + $0x18] sm:$0xf]
        %v2030 = vld [vmem:[%s2022 + $0x1c] sm:$0xf]
        %v2031 = vld [vmem:[%s2022 + $0x20] sm:$0xf]
        %v2032 = vld [vmem:[%s2022 + $0x24] sm:$0xf]
        %v2033 = vld [vmem:[%s2022 + $0x28] sm:$0xf]
        %v2034 = vld [vmem:[%s2022 + $0x2c] sm:$0xf]
        %v2035 = vld [vmem:[%s2022 + $0x30] sm:$0xf]
        %v2036 = vld [vmem:[%s2022 + $0x34] sm:$0xf]
        %v2037 = vld [vmem:[%s2022 + $0x38] sm:$0xf]
        %v2038 = vld [vmem:[%s2022 + $0x3c] sm:$0xf]
        %v2055 = vunpack.c.l.b16 %v2023
        %v2056 = vunpack.c.l.b16 %v2024
        %v2057 = vunpack.c.l.b16 %v2025
        %v2058 = vunpack.c.l.b16 %v2026
        %v2059 = vunpack.c.l.b16 %v2027
        %v2060 = vunpack.c.l.b16 %v2028
        %v2061 = vunpack.c.l.b16 %v2029
        %v2062 = vunpack.c.l.b16 %v2030
        %v2063 = vunpack.c.l.b16 %v2031
        %v2064 = vunpack.c.l.b16 %v2032
        %v2065 = vunpack.c.l.b16 %v2033
        %v2066 = vunpack.c.l.b16 %v2034
        %v2067 = vunpack.c.l.b16 %v2035
        %v2068 = vunpack.c.l.b16 %v2036
        %v2069 = vunpack.c.l.b16 %v2037
        %v2070 = vunpack.c.l.b16 %v2038
        %v2071 = vpack.c.b16 %v2056, %v2055
        %v2072 = vpack.c.b16 %v2058, %v2057
        %v2073 = vpack.c.b16 %v2060, %v2059
        %v2074 = vpack.c.b16 %v2062, %v2061
        %v2075 = vpack.c.b16 %v2064, %v2063
        %v2076 = vpack.c.b16 %v2066, %v2065
        %v2077 = vpack.c.b16 %v2068, %v2067
        %v2078 = vpack.c.b16 %v2070, %v2069
        %2087 = vmatpush.bf16.msra.mxu0 %v2078
        %2088 = vmatpush.bf16.msra.mxu0 %v2077
        %2089 = vmatpush.bf16.msra.mxu0 %v2076
        %2090 = vmatpush.bf16.msra.mxu0 %v2075
        %2091 = vmatpush.bf16.msra.mxu0 %v2074
        %2092 = vmatpush.bf16.msra.mxu0 %v2073
        %2093 = vmatpush.bf16.msra.mxu0 %v2072
        %2094 = vmatpush.bf16.msra.mxu0 %v2071
        %2095 = vmatmul.bf16.gmra.mxu0 %v2021
        %v2096 = vpop.f32.mrf.mxu0
        %v2097 = vadd.f32 0.0, %v2096
        %v2098 = vpop.f32.mrf.mxu0
        %v2099 = vadd.f32 0.0, %v2098
        %2100 = vdwg.mxu0
        %v2101 = vld [vmem:[#allocation2] sm:$0xff]
        %v2102 = vld [vmem:[#allocation2 + $0x8] sm:$0xff]
        %v2103 = vadd.f32 %v2101, %v2097
        %v2104 = vadd.f32 %v2102, %v2099
        %2105 = vst [vmem:[#allocation2] sm:$0xff] %v2103
        %2106 = vst [vmem:[#allocation2 + $0x8] sm:$0xff] %v2104
        %v2107 = vld [vmem:[#allocation2] sm:$0xff]
        %v2108 = vld [vmem:[#allocation2 + $0x8] sm:$0xff]
        %v2109 = vld [vmem:[%s9] sm:$0x1]
        %v2111 = vperm.slane %v2109, 0
        %v2113 = vadd.f32 %v2107, %v2111
        %v2114 = vadd.f32 %v2108, %v2111
        %v2115 = vunpack.c.l.bf16 %v504
        %v2116 = vunpack.c.l.bf16 %v505
        %v2117 = vadd.f32 %v2113, %v2115
        %v2118 = vadd.f32 %v2114, %v2116
        %v2119 = vld [vmem:[%s10] sm:$0x1]
        %v2120 = vld [vmem:[%s11] sm:$0x1]
        %2121 = vadd.xlane.f32.xlu0 %v2117
        %v2122 = vpop.xlane.xlu0 %2121
        %2123 = vadd.xlane.f32.xlu0 %v2118
        %v2124 = vpop.xlane.xlu0 %2123
        %v2125 = vmul.f32 %v2122, 0.03125
        %v2126 = vmul.f32 %v2124, 0.03125
        %v2127 = vsub.f32 %v2117, %v2125
        %v2128 = vsub.f32 %v2118, %v2126
        %vm2129 = vcmp.lt.s32.totalorder %v507, 32
        %v2130 = vsel %vm2129, %v2127, 0.0
        %v2131 = vsel %vm2129, %v2128, 0.0
        %v2132 = vmul.f32 %v2130, %v2130
        %v2133 = vmul.f32 %v2131, %v2131
        %2134 = vadd.xlane.f32.xlu0 %v2132
        %v2135 = vpop.xlane.xlu0 %2134
        %2136 = vadd.xlane.f32.xlu0 %v2133
        %v2137 = vpop.xlane.xlu0 %2136
        %v2138 = vmul.f32 %v2135, 0.03125
        %v2139 = vmul.f32 %v2137, 0.03125
        %v2140 = vadd.f32 %v2138, 1e-05
        %v2141 = vadd.f32 %v2139, 1e-05
        %v2142 = vrsqrt.pop %v2140
        %v2143 = vmul.f32 %v2142, %v2140
        %v2144 = vmul.f32 %v2143, %v2142
        %v2145 = vmul.f32 0.5, %v2144
        %v2146 = vsub.f32 1.5, %v2145
        %v2147 = vmul.f32 %v2142, %v2146
        %vm2148 = vweird.f32 %v2140
        %vm2149 = vweird.f32 %v2142
        %vm2150 = vmor %vm2148, %vm2149
        %v2151 = vsel %vm2150, %v2142, %v2147
        %v2152 = vrsqrt.pop %v2141
        %v2153 = vmul.f32 %v2152, %v2141
        %v2154 = vmul.f32 %v2153, %v2152
        %v2155 = vmul.f32 0.5, %v2154
        %v2156 = vsub.f32 1.5, %v2155
        %v2157 = vmul.f32 %v2152, %v2156
        %vm2158 = vweird.f32 %v2141
        %vm2159 = vweird.f32 %v2152
        %vm2160 = vmor %vm2158, %vm2159
        %v2161 = vsel %vm2160, %v2152, %v2157
        %v2162 = vmul.f32 %v2130, %v2151
        %v2163 = vmul.f32 %v2131, %v2161
        %v2165 = vperm.slane %v2119, 0
        %v2167 = vmul.f32 %v2162, %v2165
        %v2168 = vmul.f32 %v2163, %v2165
        %v2170 = vperm.slane %v2120, 0
        %v2172 = vadd.f32 %v2167, %v2170
        %v2173 = vadd.f32 %v2168, %v2170
        %v2174 = vpack.c.bf16 %v2172, %v2172
        %v2175 = vpack.c.bf16 %v2173, %v2173
        %2176 = vst [vmem:[%s500] sm:$0xf] %v2174
        %2177 = vst [vmem:[%s500 + $0x4] sm:$0xf] %v2175
        %p2178 = scmp.lt.s32.totalorder %s26, 1
        %s2179 = scalar_select %p2178, %s26, 1
        %s2180 = smul.addr %s2179, 2
        %s2181 = smul.addr %s2180, 4
        %s2182 = scalar_lea.vmem %s12, %s2181
        // Predicated region
        $region85: #{_lambda_.10} parent=67 // pred_check
          %p2183 = pneg %p306
        $region86: #{_lambda_.10} parent=67 // pred_check_branch
          %2185 = sbr.rel (%p2183) target = $region88
        $region87: #{_lambda_.10} parent=67 // pred_region
          _
        $region88: #{_lambda_.10} parent=67 // pred_fallthru
          _
      $region68: #{_lambda_.10} parent=5 // pred_fallthru
        _
      %p2186 = scmp.le.s32.totalorder 2, %s21
      // Predicated region
      $region89: #{_lambda_.10} parent=5 // pred_check
        %p2187 = pneg %p2186
      $region90: #{_lambda_.10} parent=5 // pred_check_branch
        %2189 = sbr.rel (%p2187) target = $region92
      $region91: #{_lambda_.10} parent=5 // pred_region
        %s2190 = ssub.s32 %s21, 2
        // Predicated region
        $region93: #{_lambda_.10} parent=91 // pred_check
          %p2191 = pneg %p312
        $region94: #{_lambda_.10} parent=91 // pred_check_branch
          %2193 = sbr.rel (%p2191) target = $region96
        $region95: #{_lambda_.10} parent=91 // pred_region
          %p2194 = scmp.lt.s32.totalorder %s27, 1
          %s2195 = scalar_select %p2194, %s27, 1
          %s2196 = smul.addr %s2195, 2
          %s2197 = smul.addr %s2196, 4
          %s2198 = scalar_lea.vmem %s12, %s2197
        $region96: #{_lambda_.10} parent=91 // pred_fallthru
          _
      $region92: #{_lambda_.10} parent=5 // pred_fallthru
        _
    $region6: #{_lambda_.10} parent=1 // loop_footer
      %s25 = sadd.s32 1, %s21
    $region7: #{_lambda_.10} parent=1 // loop_footer_branch
      %20 = sbr.rel target = $region3
    $region8: #{_lambda_.10} parent=1 // loop_exit
      _
    %2199 = vsyncpa [#allocation4], 1
    %s2200 = scalar_lea.sflag [#allocation4], 1
    %2201 = vsyncpa %s2200, 1
    %2202 = vsyncpa [#allocation6], 1
    %2203 = vsyncpa [#allocation9], 1

// kernel: _lambda_.13
$region0: #{_lambda_.13}
  #allocation0 [shape = 'u32[]', space=smem, size = 0x4, offset = 0x4, fixed_abs, tag = 'smem constant byte address 0x4 - core index']
  #allocation1 [shape = 'u32[72,128]{1,0:T(1,128)}', space=vmem, size = 0x9000, scoped, tag = 'internal scratch']
  #allocation2 [shape = 'f32[16,128]{1,0:T(8,128)}', space=vmem, size = 0x2000, scoped, tag = 'scratch operand']
  %s0 = inlined_call_operand.vmem [shape: bf16[16,128], index: 0, kind: input, shape index: {}]
  %s1 = inlined_call_operand.vmem [shape: bf16[128,128], index: 1, kind: input, shape index: {}]
  %s2 = inlined_call_operand.vmem [shape: f32[1,128], index: 2, kind: input, shape index: {}]
  %s3 = inlined_call_operand.vmem [shape: bf16[16,128], index: 3, kind: input, shape index: {}]
  %s4 = inlined_call_operand.vmem [shape: f32[1,128], index: 4, kind: input, shape index: {}]
  %s5 = inlined_call_operand.vmem [shape: f32[1,128], index: 5, kind: input, shape index: {}]
  %s6 = inlined_call_operand.vmem [shape: bf16[16,128], index: 6, kind: output, shape index: {}]
  %s7 = sld [smem:[#allocation0]]
  $region42: #{_lambda_.13} parent=0
    _
  %s9 = ssub.s32 1, %s7
  %s10 = scalar_select 0, %s9, %s7
  // Predicated region
  $region2: #{_lambda_.13} parent=0 // pred_check
    _
  $region3: #{_lambda_.13} parent=0 // pred_check_branch
    %12 = sbr.rel (0) target = $region5
  $region4: #{_lambda_.13} parent=0 // pred_region
    _
  $region5: #{_lambda_.13} parent=0 // pred_fallthru
    _
  // Predicated region
  $region6: #{_lambda_.13} parent=0 // pred_check
    _
  $region7: #{_lambda_.13} parent=0 // pred_check_branch
    %14 = sbr.rel (0) target = $region9
  $region8: #{_lambda_.13} parent=0 // pred_region
    _
  $region9: #{_lambda_.13} parent=0 // pred_fallthru
    _
  // Predicated region
  $region10: #{_lambda_.13} parent=0 // pred_check
    _
  $region11: #{_lambda_.13} parent=0 // pred_check_branch
    %16 = sbr.rel (0) target = $region13
  $region12: #{_lambda_.13} parent=0 // pred_region
    _
  $region13: #{_lambda_.13} parent=0 // pred_fallthru
    _
  // Predicated region
  $region14: #{_lambda_.13} parent=0 // pred_check
    _
  $region15: #{_lambda_.13} parent=0 // pred_check_branch
    %18 = sbr.rel (0) target = $region17
  $region16: #{_lambda_.13} parent=0 // pred_region
    _
  $region17: #{_lambda_.13} parent=0 // pred_fallthru
    _
  // Predicated region
  $region18: #{_lambda_.13} parent=0 // pred_check
    _
  $region19: #{_lambda_.13} parent=0 // pred_check_branch
    %20 = sbr.rel (0) target = $region21
  $region20: #{_lambda_.13} parent=0 // pred_region
    _
  $region21: #{_lambda_.13} parent=0 // pred_fallthru
    _
  // Predicated region
  $region22: #{_lambda_.13} parent=0 // pred_check
    _
  $region23: #{_lambda_.13} parent=0 // pred_check_branch
    %22 = sbr.rel (0) target = $region25
  $region24: #{_lambda_.13} parent=0 // pred_region
    _
  $region25: #{_lambda_.13} parent=0 // pred_fallthru
    _
  %p23 = scmp.eq.s32.totalorder 0, 0
  // Predicated region
  $region26: #{_lambda_.13} parent=0 // pred_check
    %p24 = pneg %p23
  $region27: #{_lambda_.13} parent=0 // pred_check_branch
    %26 = sbr.rel (%p24) target = $region29
  $region28: #{_lambda_.13} parent=0 // pred_region
    %27 = vst [vmem:[#allocation2] sm:$0xff] 0.0
    %28 = vst [vmem:[#allocation2 + $0x8] sm:$0xff] 0.0
  $region29: #{_lambda_.13} parent=0 // pred_fallthru
    _
  %v29 = vld [vmem:[#allocation2] sm:$0xff]
  %v30 = vld [vmem:[#allocation2 + $0x8] sm:$0xff]
  %v31 = vld [vmem:[%s0] sm:$0xf]
  %v32 = vld [vmem:[%s0 + $0x4] sm:$0xf]
  %v33 = vld [vmem:[%s1] sm:$0xf]
  %v34 = vld [vmem:[%s1 + $0x4] sm:$0xf]
  %v35 = vld [vmem:[%s1 + $0x8] sm:$0xf]
  %v36 = vld [vmem:[%s1 + $0xc] sm:$0xf]
  %v37 = vld [vmem:[%s1 + $0x10] sm:$0xf]
  %v38 = vld [vmem:[%s1 + $0x14] sm:$0xf]
  %v39 = vld [vmem:[%s1 + $0x18] sm:$0xf]
  %v40 = vld [vmem:[%s1 + $0x1c] sm:$0xf]
  %v41 = vld [vmem:[%s1 + $0x20] sm:$0xf]
  %v42 = vld [vmem:[%s1 + $0x24] sm:$0xf]
  %v43 = vld [vmem:[%s1 + $0x28] sm:$0xf]
  %v44 = vld [vmem:[%s1 + $0x2c] sm:$0xf]
  %v45 = vld [vmem:[%s1 + $0x30] sm:$0xf]
  %v46 = vld [vmem:[%s1 + $0x34] sm:$0xf]
  %v47 = vld [vmem:[%s1 + $0x38] sm:$0xf]
  %v48 = vld [vmem:[%s1 + $0x3c] sm:$0xf]
  %v51 = vunpack.c.l.b16 %v31
  %v52 = vunpack.c.l.b16 %v32
  %v53 = vpack.c.b16 %v52, %v51
  %v71 = vunpack.c.l.b16 %v33
  %v72 = vunpack.c.l.b16 %v34
  %v73 = vunpack.c.l.b16 %v35
  %v74 = vunpack.c.l.b16 %v36
  %v75 = vunpack.c.l.b16 %v37
  %v76 = vunpack.c.l.b16 %v38
  %v77 = vunpack.c.l.b16 %v39
  %v78 = vunpack.c.l.b16 %v40
  %v79 = vunpack.c.l.b16 %v41
  %v80 = vunpack.c.l.b16 %v42
  %v81 = vunpack.c.l.b16 %v43
  %v82 = vunpack.c.l.b16 %v44
  %v83 = vunpack.c.l.b16 %v45
  %v84 = vunpack.c.l.b16 %v46
  %v85 = vunpack.c.l.b16 %v47
  %v86 = vunpack.c.l.b16 %v48
  %v87 = vpack.c.b16 %v72, %v71
  %v88 = vpack.c.b16 %v74, %v73
  %v89 = vpack.c.b16 %v76, %v75
  %v90 = vpack.c.b16 %v78, %v77
  %v91 = vpack.c.b16 %v80, %v79
  %v92 = vpack.c.b16 %v82, %v81
  %v93 = vpack.c.b16 %v84, %v83
  %v94 = vpack.c.b16 %v86, %v85
  %103 = vmatpush.bf16.msra.mxu0 %v94
  %104 = vmatpush.bf16.msra.mxu0 %v93
  %105 = vmatpush.bf16.msra.mxu0 %v92
  %106 = vmatpush.bf16.msra.mxu0 %v91
  %107 = vmatpush.bf16.msra.mxu0 %v90
  %108 = vmatpush.bf16.msra.mxu0 %v89
  %109 = vmatpush.bf16.msra.mxu0 %v88
  %110 = vmatpush.bf16.msra.mxu0 %v87
  %111 = vmatmul.bf16.gmra.mxu0 %v53
  %v112 = vpop.f32.mrf.mxu0
  %v113 = vadd.f32 0.0, %v112
  %v114 = vpop.f32.mrf.mxu0
  %v115 = vadd.f32 0.0, %v114
  %116 = vdwg.mxu0
  %v117 = vadd.f32 %v29, %v113
  %v118 = vadd.f32 %v30, %v115
  %119 = vst [vmem:[#allocation2] sm:$0xff] %v117
  %120 = vst [vmem:[#allocation2 + $0x8] sm:$0xff] %v118
  // Predicated region
  $region30: #{_lambda_.13} parent=0 // pred_check
    %p121 = pneg %p23
  $region31: #{_lambda_.13} parent=0 // pred_check_branch
    %123 = sbr.rel (%p121) target = $region33
  $region32: #{_lambda_.13} parent=0 // pred_region
    %v124 = vld [vmem:[#allocation2] sm:$0xff]
    %v125 = vld [vmem:[#allocation2 + $0x8] sm:$0xff]
    %v126 = vld [vmem:[%s2] sm:$0x1]
    %v128 = vperm.slane %v126, 0
    %v130 = vadd.f32 %v124, %v128
    %v131 = vadd.f32 %v125, %v128
    %v132 = vld [vmem:[%s3] sm:$0xf]
    %v133 = vld [vmem:[%s3 + $0x4] sm:$0xf]
    %v134 = vunpack.c.l.bf16 %v132
    %v135 = vunpack.c.l.bf16 %v133
    %v136 = vadd.f32 %v130, %v134
    %v137 = vadd.f32 %v131, %v135
    %v138 = vld [vmem:[%s4] sm:$0x1]
    %v139 = vld [vmem:[%s5] sm:$0x1]
    %140 = vadd.xlane.f32.xlu0 %v136
    %v141 = vpop.xlane.xlu0 %140
    %142 = vadd.xlane.f32.xlu0 %v137
    %v143 = vpop.xlane.xlu0 %142
    %v144 = vmul.f32 %v141, 0.03125
    %v145 = vmul.f32 %v143, 0.03125
    %v146 = vsub.f32 %v136, %v144
    %v147 = vsub.f32 %v137, %v145
    %v148 = vlaneseq
    %v149 = vand.u32 %v148, 127
    %vm150 = vcmp.lt.s32.totalorder %v149, 32
    %v151 = vsel %vm150, %v146, 0.0
    %v152 = vsel %vm150, %v147, 0.0
    %v153 = vmul.f32 %v151, %v151
    %v154 = vmul.f32 %v152, %v152
    %155 = vadd.xlane.f32.xlu0 %v153
    %v156 = vpop.xlane.xlu0 %155
    %157 = vadd.xlane.f32.xlu0 %v154
    %v158 = vpop.xlane.xlu0 %157
    %v159 = vmul.f32 %v156, 0.03125
    %v160 = vmul.f32 %v158, 0.03125
    %v161 = vadd.f32 %v159, 1e-05
    %v162 = vadd.f32 %v160, 1e-05
    %v163 = vrsqrt.pop %v161
    %v164 = vmul.f32 %v163, %v161
    %v165 = vmul.f32 %v164, %v163
    %v166 = vmul.f32 0.5, %v165
    %v167 = vsub.f32 1.5, %v166
    %v168 = vmul.f32 %v163, %v167
    %vm169 = vweird.f32 %v161
    %vm170 = vweird.f32 %v163
    %vm171 = vmor %vm169, %vm170
    %v172 = vsel %vm171, %v163, %v168
    %v173 = vrsqrt.pop %v162
    %v174 = vmul.f32 %v173, %v162
    %v175 = vmul.f32 %v174, %v173
    %v176 = vmul.f32 0.5, %v175
    %v177 = vsub.f32 1.5, %v176
    %v178 = vmul.f32 %v173, %v177
    %vm179 = vweird.f32 %v162
    %vm180 = vweird.f32 %v173
    %vm181 = vmor %vm179, %vm180
    %v182 = vsel %vm181, %v173, %v178
    %v183 = vmul.f32 %v151, %v172
    %v184 = vmul.f32 %v152, %v182
    %v186 = vperm.slane %v138, 0
    %v188 = vmul.f32 %v183, %v186
    %v189 = vmul.f32 %v184, %v186
    %v191 = vperm.slane %v139, 0
    %v193 = vadd.f32 %v188, %v191
    %v194 = vadd.f32 %v189, %v191
    %v195 = vpack.c.bf16 %v193, %v193
    %v196 = vpack.c.bf16 %v194, %v194
    %197 = vst [vmem:[%s6] sm:$0xf] %v195
    %198 = vst [vmem:[%s6 + $0x4] sm:$0xf] %v196
  $region33: #{_lambda_.13} parent=0 // pred_fallthru
    _
  // Predicated region
  $region34: #{_lambda_.13} parent=0 // pred_check
    _
  $region35: #{_lambda_.13} parent=0 // pred_check_branch
    %200 = sbr.rel (0) target = $region37
  $region36: #{_lambda_.13} parent=0 // pred_region
    _
  $region37: #{_lambda_.13} parent=0 // pred_fallthru
    _
  // Predicated region
  $region38: #{_lambda_.13} parent=0 // pred_check
    _
  $region39: #{_lambda_.13} parent=0 // pred_check_branch
    %202 = sbr.rel (0) target = $region41
  $region40: #{_lambda_.13} parent=0 // pred_region
    _
  $region41: #{_lambda_.13} parent=0 // pred_fallthru
    _

// kernel: _lambda_.14
$region0: #{_lambda_.14}
  #allocation0 [shape = 'u32[]', space=smem, size = 0x4, offset = 0x4, fixed_abs, tag = 'smem constant byte address 0x4 - core index']
  #allocation1 [shape = 'u32[72,128]{1,0:T(1,128)}', space=vmem, size = 0x9000, scoped, tag = 'internal scratch']
  #allocation2 [shape = 'f32[16,128]{1,0:T(8,128)}', space=vmem, size = 0x2000, scoped, tag = 'scratch operand']
  %s0 = inlined_call_operand.vmem [shape: bf16[16,128], index: 0, kind: input, shape index: {}]
  %s1 = inlined_call_operand.vmem [shape: bf16[128,128], index: 1, kind: input, shape index: {}]
  %s2 = inlined_call_operand.vmem [shape: f32[1,128], index: 2, kind: input, shape index: {}]
  %s3 = inlined_call_operand.vmem [shape: bf16[128,128], index: 3, kind: input, shape index: {}]
  %s4 = inlined_call_operand.vmem [shape: f32[1,128], index: 4, kind: input, shape index: {}]
  %s5 = inlined_call_operand.vmem [shape: f32[1,128], index: 5, kind: input, shape index: {}]
  %s6 = inlined_call_operand.vmem [shape: f32[1,128], index: 6, kind: input, shape index: {}]
  %s7 = inlined_call_operand.vmem [shape: bf16[16,128], index: 7, kind: output, shape index: {}]
  %s8 = sld [smem:[#allocation0]]
  $region46: #{_lambda_.14} parent=0
    _
  %s10 = ssub.s32 1, %s8
  %s11 = scalar_select 0, %s10, %s8
  // Predicated region
  $region2: #{_lambda_.14} parent=0 // pred_check
    _
  $region3: #{_lambda_.14} parent=0 // pred_check_branch
    %13 = sbr.rel (0) target = $region5
  $region4: #{_lambda_.14} parent=0 // pred_region
    _
  $region5: #{_lambda_.14} parent=0 // pred_fallthru
    _
  // Predicated region
  $region6: #{_lambda_.14} parent=0 // pred_check
    _
  $region7: #{_lambda_.14} parent=0 // pred_check_branch
    %15 = sbr.rel (0) target = $region9
  $region8: #{_lambda_.14} parent=0 // pred_region
    _
  $region9: #{_lambda_.14} parent=0 // pred_fallthru
    _
  // Predicated region
  $region10: #{_lambda_.14} parent=0 // pred_check
    _
  $region11: #{_lambda_.14} parent=0 // pred_check_branch
    %17 = sbr.rel (0) target = $region13
  $region12: #{_lambda_.14} parent=0 // pred_region
    _
  $region13: #{_lambda_.14} parent=0 // pred_fallthru
    _
  // Predicated region
  $region14: #{_lambda_.14} parent=0 // pred_check
    _
  $region15: #{_lambda_.14} parent=0 // pred_check_branch
    %19 = sbr.rel (0) target = $region17
  $region16: #{_lambda_.14} parent=0 // pred_region
    _
  $region17: #{_lambda_.14} parent=0 // pred_fallthru
    _
  // Predicated region
  $region18: #{_lambda_.14} parent=0 // pred_check
    _
  $region19: #{_lambda_.14} parent=0 // pred_check_branch
    %21 = sbr.rel (0) target = $region21
  $region20: #{_lambda_.14} parent=0 // pred_region
    _
  $region21: #{_lambda_.14} parent=0 // pred_fallthru
    _
  // Predicated region
  $region22: #{_lambda_.14} parent=0 // pred_check
    _
  $region23: #{_lambda_.14} parent=0 // pred_check_branch
    %23 = sbr.rel (0) target = $region25
  $region24: #{_lambda_.14} parent=0 // pred_region
    _
  $region25: #{_lambda_.14} parent=0 // pred_fallthru
    _
  // Predicated region
  $region26: #{_lambda_.14} parent=0 // pred_check
    _
  $region27: #{_lambda_.14} parent=0 // pred_check_branch
    %25 = sbr.rel (0) target = $region29
  $region28: #{_lambda_.14} parent=0 // pred_region
    _
  $region29: #{_lambda_.14} parent=0 // pred_fallthru
    _
  %p26 = scmp.eq.s32.totalorder 0, 0
  // Predicated region
  $region30: #{_lambda_.14} parent=0 // pred_check
    %p27 = pneg %p26
  $region31: #{_lambda_.14} parent=0 // pred_check_branch
    %29 = sbr.rel (%p27) target = $region33
  $region32: #{_lambda_.14} parent=0 // pred_region
    %30 = vst [vmem:[#allocation2] sm:$0xff] 0.0
    %31 = vst [vmem:[#allocation2 + $0x8] sm:$0xff] 0.0
  $region33: #{_lambda_.14} parent=0 // pred_fallthru
    _
  %v32 = vld [vmem:[%s0] sm:$0xf]
  %v33 = vld [vmem:[%s0 + $0x4] sm:$0xf]
  %v34 = vld [vmem:[%s1] sm:$0xf]
  %v35 = vld [vmem:[%s1 + $0x4] sm:$0xf]
  %v36 = vld [vmem:[%s1 + $0x8] sm:$0xf]
  %v37 = vld [vmem:[%s1 + $0xc] sm:$0xf]
  %v38 = vld [vmem:[%s1 + $0x10] sm:$0xf]
  %v39 = vld [vmem:[%s1 + $0x14] sm:$0xf]
  %v40 = vld [vmem:[%s1 + $0x18] sm:$0xf]
  %v41 = vld [vmem:[%s1 + $0x1c] sm:$0xf]
  %v42 = vld [vmem:[%s1 + $0x20] sm:$0xf]
  %v43 = vld [vmem:[%s1 + $0x24] sm:$0xf]
  %v44 = vld [vmem:[%s1 + $0x28] sm:$0xf]
  %v45 = vld [vmem:[%s1 + $0x2c] sm:$0xf]
  %v46 = vld [vmem:[%s1 + $0x30] sm:$0xf]
  %v47 = vld [vmem:[%s1 + $0x34] sm:$0xf]
  %v48 = vld [vmem:[%s1 + $0x38] sm:$0xf]
  %v49 = vld [vmem:[%s1 + $0x3c] sm:$0xf]
  %v50 = vld [vmem:[%s2] sm:$0x1]
  %v52 = vperm.slane %v50, 0
  %v56 = vunpack.c.l.b16 %v32
  %v57 = vunpack.c.l.b16 %v33
  %v58 = vpack.c.b16 %v57, %v56
  %v76 = vunpack.c.l.b16 %v34
  %v77 = vunpack.c.l.b16 %v35
  %v78 = vunpack.c.l.b16 %v36
  %v79 = vunpack.c.l.b16 %v37
  %v80 = vunpack.c.l.b16 %v38
  %v81 = vunpack.c.l.b16 %v39
  %v82 = vunpack.c.l.b16 %v40
  %v83 = vunpack.c.l.b16 %v41
  %v84 = vunpack.c.l.b16 %v42
  %v85 = vunpack.c.l.b16 %v43
  %v86 = vunpack.c.l.b16 %v44
  %v87 = vunpack.c.l.b16 %v45
  %v88 = vunpack.c.l.b16 %v46
  %v89 = vunpack.c.l.b16 %v47
  %v90 = vunpack.c.l.b16 %v48
  %v91 = vunpack.c.l.b16 %v49
  %v92 = vpack.c.b16 %v77, %v76
  %v93 = vpack.c.b16 %v79, %v78
  %v94 = vpack.c.b16 %v81, %v80
  %v95 = vpack.c.b16 %v83, %v82
  %v96 = vpack.c.b16 %v85, %v84
  %v97 = vpack.c.b16 %v87, %v86
  %v98 = vpack.c.b16 %v89, %v88
  %v99 = vpack.c.b16 %v91, %v90
  %108 = vmatpush.bf16.msra.mxu0 %v99
  %109 = vmatpush.bf16.msra.mxu0 %v98
  %110 = vmatpush.bf16.msra.mxu0 %v97
  %111 = vmatpush.bf16.msra.mxu0 %v96
  %112 = vmatpush.bf16.msra.mxu0 %v95
  %113 = vmatpush.bf16.msra.mxu0 %v94
  %114 = vmatpush.bf16.msra.mxu0 %v93
  %115 = vmatpush.bf16.msra.mxu0 %v92
  %116 = vmatmul.bf16.gmra.mxu0 %v58
  %v117 = vpop.f32.mrf.mxu0
  %v118 = vadd.f32 %v52, %v117
  %v119 = vpop.f32.mrf.mxu0
  %v120 = vadd.f32 %v52, %v119
  %121 = vdwg.mxu0
  %v122 = vmax.f32 %v118, 0.0
  %v123 = vmax.f32 %v120, 0.0
  %v124 = vld [vmem:[#allocation2] sm:$0xff]
  %v125 = vld [vmem:[#allocation2 + $0x8] sm:$0xff]
  %v126 = vpack.c.bf16 %v123, %v122
  %v127 = vld [vmem:[%s3] sm:$0xf]
  %v128 = vld [vmem:[%s3 + $0x4] sm:$0xf]
  %v129 = vld [vmem:[%s3 + $0x8] sm:$0xf]
  %v130 = vld [vmem:[%s3 + $0xc] sm:$0xf]
  %v131 = vld [vmem:[%s3 + $0x10] sm:$0xf]
  %v132 = vld [vmem:[%s3 + $0x14] sm:$0xf]
  %v133 = vld [vmem:[%s3 + $0x18] sm:$0xf]
  %v134 = vld [vmem:[%s3 + $0x1c] sm:$0xf]
  %v135 = vld [vmem:[%s3 + $0x20] sm:$0xf]
  %v136 = vld [vmem:[%s3 + $0x24] sm:$0xf]
  %v137 = vld [vmem:[%s3 + $0x28] sm:$0xf]
  %v138 = vld [vmem:[%s3 + $0x2c] sm:$0xf]
  %v139 = vld [vmem:[%s3 + $0x30] sm:$0xf]
  %v140 = vld [vmem:[%s3 + $0x34] sm:$0xf]
  %v141 = vld [vmem:[%s3 + $0x38] sm:$0xf]
  %v142 = vld [vmem:[%s3 + $0x3c] sm:$0xf]
  %v159 = vunpack.c.l.b16 %v127
  %v160 = vunpack.c.l.b16 %v128
  %v161 = vunpack.c.l.b16 %v129
  %v162 = vunpack.c.l.b16 %v130
  %v163 = vunpack.c.l.b16 %v131
  %v164 = vunpack.c.l.b16 %v132
  %v165 = vunpack.c.l.b16 %v133
  %v166 = vunpack.c.l.b16 %v134
  %v167 = vunpack.c.l.b16 %v135
  %v168 = vunpack.c.l.b16 %v136
  %v169 = vunpack.c.l.b16 %v137
  %v170 = vunpack.c.l.b16 %v138
  %v171 = vunpack.c.l.b16 %v139
  %v172 = vunpack.c.l.b16 %v140
  %v173 = vunpack.c.l.b16 %v141
  %v174 = vunpack.c.l.b16 %v142
  %v175 = vpack.c.b16 %v160, %v159
  %v176 = vpack.c.b16 %v162, %v161
  %v177 = vpack.c.b16 %v164, %v163
  %v178 = vpack.c.b16 %v166, %v165
  %v179 = vpack.c.b16 %v168, %v167
  %v180 = vpack.c.b16 %v170, %v169
  %v181 = vpack.c.b16 %v172, %v171
  %v182 = vpack.c.b16 %v174, %v173
  %191 = vmatpush.bf16.msra.mxu0 %v182
  %192 = vmatpush.bf16.msra.mxu0 %v181
  %193 = vmatpush.bf16.msra.mxu0 %v180
  %194 = vmatpush.bf16.msra.mxu0 %v179
  %195 = vmatpush.bf16.msra.mxu0 %v178
  %196 = vmatpush.bf16.msra.mxu0 %v177
  %197 = vmatpush.bf16.msra.mxu0 %v176
  %198 = vmatpush.bf16.msra.mxu0 %v175
  %199 = vmatmul.bf16.gmra.mxu0 %v126
  %v200 = vpop.f32.mrf.mxu0
  %v201 = vadd.f32 0.0, %v200
  %v202 = vpop.f32.mrf.mxu0
  %v203 = vadd.f32 0.0, %v202
  %204 = vdwg.mxu0
  %v205 = vadd.f32 %v124, %v201
  %v206 = vadd.f32 %v125, %v203
  %207 = vst [vmem:[#allocation2] sm:$0xff] %v205
  %208 = vst [vmem:[#allocation2 + $0x8] sm:$0xff] %v206
  // Predicated region
  $region34: #{_lambda_.14} parent=0 // pred_check
    %p209 = pneg %p26
  $region35: #{_lambda_.14} parent=0 // pred_check_branch
    %211 = sbr.rel (%p209) target = $region37
  $region36: #{_lambda_.14} parent=0 // pred_region
    %v212 = vld [vmem:[#allocation2] sm:$0xff]
    %v213 = vld [vmem:[#allocation2 + $0x8] sm:$0xff]
    %v214 = vld [vmem:[%s4] sm:$0x1]
    %v216 = vperm.slane %v214, 0
    %v218 = vadd.f32 %v212, %v216
    %v219 = vadd.f32 %v213, %v216
    %v220 = vld [vmem:[%s0] sm:$0xf]
    %v221 = vld [vmem:[%s0 + $0x4] sm:$0xf]
    %v222 = vunpack.c.l.bf16 %v220
    %v223 = vunpack.c.l.bf16 %v221
    %v224 = vadd.f32 %v218, %v222
    %v225 = vadd.f32 %v219, %v223
    %v226 = vld [vmem:[%s5] sm:$0x1]
    %v227 = vld [vmem:[%s6] sm:$0x1]
    %228 = vadd.xlane.f32.xlu0 %v224
    %v229 = vpop.xlane.xlu0 %228
    %230 = vadd.xlane.f32.xlu0 %v225
    %v231 = vpop.xlane.xlu0 %230
    %v232 = vmul.f32 %v229, 0.03125
    %v233 = vmul.f32 %v231, 0.03125
    %v234 = vsub.f32 %v224, %v232
    %v235 = vsub.f32 %v225, %v233
    %v236 = vlaneseq
    %v237 = vand.u32 %v236, 127
    %vm238 = vcmp.lt.s32.totalorder %v237, 32
    %v239 = vsel %vm238, %v234, 0.0
    %v240 = vsel %vm238, %v235, 0.0
    %v241 = vmul.f32 %v239, %v239
    %v242 = vmul.f32 %v240, %v240
    %243 = vadd.xlane.f32.xlu0 %v241
    %v244 = vpop.xlane.xlu0 %243
    %245 = vadd.xlane.f32.xlu0 %v242
    %v246 = vpop.xlane.xlu0 %245
    %v247 = vmul.f32 %v244, 0.03125
    %v248 = vmul.f32 %v246, 0.03125
    %v249 = vadd.f32 %v247, 1e-05
    %v250 = vadd.f32 %v248, 1e-05
    %v251 = vrsqrt.pop %v249
    %v252 = vmul.f32 %v251, %v249
    %v253 = vmul.f32 %v252, %v251
    %v254 = vmul.f32 0.5, %v253
    %v255 = vsub.f32 1.5, %v254
    %v256 = vmul.f32 %v251, %v255
    %vm257 = vweird.f32 %v249
    %vm258 = vweird.f32 %v251
    %vm259 = vmor %vm257, %vm258
    %v260 = vsel %vm259, %v251, %v256
    %v261 = vrsqrt.pop %v250
    %v262 = vmul.f32 %v261, %v250
    %v263 = vmul.f32 %v262, %v261
    %v264 = vmul.f32 0.5, %v263
    %v265 = vsub.f32 1.5, %v264
    %v266 = vmul.f32 %v261, %v265
    %vm267 = vweird.f32 %v250
    %vm268 = vweird.f32 %v261
    %vm269 = vmor %vm267, %vm268
    %v270 = vsel %vm269, %v261, %v266
    %v271 = vmul.f32 %v239, %v260
    %v272 = vmul.f32 %v240, %v270
    %v274 = vperm.slane %v226, 0
    %v276 = vmul.f32 %v271, %v274
    %v277 = vmul.f32 %v272, %v274
    %v279 = vperm.slane %v227, 0
    %v281 = vadd.f32 %v276, %v279
    %v282 = vadd.f32 %v277, %v279
    %v283 = vpack.c.bf16 %v281, %v281
    %v284 = vpack.c.bf16 %v282, %v282
    %285 = vst [vmem:[%s7] sm:$0xf] %v283
    %286 = vst [vmem:[%s7 + $0x4] sm:$0xf] %v284
  $region37: #{_lambda_.14} parent=0 // pred_fallthru
    _
  // Predicated region
  $region38: #{_lambda_.14} parent=0 // pred_check
    _
  $region39: #{_lambda_.14} parent=0 // pred_check_branch
    %288 = sbr.rel (0) target = $region41
  $region40: #{_lambda_.14} parent=0 // pred_region
    _
  $region41: #{_lambda_.14} parent=0 // pred_fallthru
    _
  // Predicated region
  $region42: #{_lambda_.14} parent=0 // pred_check
    _
  $region43: #{_lambda_.14} parent=0 // pred_check_branch
    %290 = sbr.rel (0) target = $region45
  $region44: #{_lambda_.14} parent=0 // pred_region
    _
  $region45: #{_lambda_.14} parent=0 // pred_fallthru
    _

// kernel: _lambda_.15
$region0: #{_lambda_.15}
  #allocation0 [shape = 'u32[]', space=smem, size = 0x4, offset = 0x4, fixed_abs, tag = 'smem constant byte address 0x4 - core index']
  #allocation1 [shape = 'u32[72,128]{1,0:T(1,128)}', space=vmem, size = 0x9000, scoped, tag = 'internal scratch']
  #allocation2 [shape = 'f32[16,128]{1,0:T(8,128)}', space=vmem, size = 0x2000, scoped, tag = 'scratch operand']
  %s0 = inlined_call_operand.vmem [shape: bf16[2,16,128], index: 0, kind: input, shape index: {}]
  %s1 = inlined_call_operand.vmem [shape: bf16[2,16,128], index: 1, kind: input, shape index: {}]
  %s2 = inlined_call_operand.vmem [shape: bf16[4,128,128], index: 2, kind: input, shape index: {}]
  %s3 = inlined_call_operand.vmem [shape: bf16[4,128,128], index: 3, kind: input, shape index: {}]
  %s4 = inlined_call_operand.vmem [shape: bf16[4,128,128], index: 4, kind: input, shape index: {}]
  %s5 = inlined_call_operand.vmem [shape: f32[4,1,128], index: 5, kind: input, shape index: {}]
  %s6 = inlined_call_operand.vmem [shape: f32[4,1,128], index: 6, kind: input, shape index: {}]
  %s7 = inlined_call_operand.vmem [shape: f32[4,1,128], index: 7, kind: input, shape index: {}]
  %s8 = inlined_call_operand.vmem [shape: bf16[4,128,128], index: 8, kind: input, shape index: {}]
  %s9 = inlined_call_operand.vmem [shape: f32[1,128], index: 9, kind: input, shape index: {}]
  %s10 = inlined_call_operand.vmem [shape: f32[1,128], index: 10, kind: input, shape index: {}]
  %s11 = inlined_call_operand.vmem [shape: f32[1,128], index: 11, kind: input, shape index: {}]
  %s12 = inlined_call_operand.vmem [shape: bf16[2,16,128], index: 12, kind: output, shape index: {}]
  %s13 = sld [smem:[#allocation0]]
  $region81: #{_lambda_.15} parent=0
    _
  %s15 = ssub.s32 1, %s13
  %s16 = scalar_select 0, %s15, %s13
  loop: start=0, step=1, limit=4
  $region2: #{_lambda_.15} parent=0 // loop_pre_header
    _
  $region3: #{_lambda_.15} parent=0 // loop_header
    %s18 = sphi 0, %s22
    %p19 = scmp.ge.s32.totalorder %s18, 4
    %s28 = sphi 0, %s30
    %s31 = sphi 0, %s28
    %s32 = sphi 0, %s31
    %s48 = sphi 0, %s32
    %s54 = sphi 0, %s56
    %s57 = sphi 0, %s54
    %s58 = sphi 0, %s57
    %s74 = sphi 0, %s58
    %s78 = sphi 0, %s78
    %s80 = sphi 0, %s78
    %s81 = sphi 0, %s80
    %s95 = sphi 0, %s81
    %s99 = sphi 0, %s99
    %s101 = sphi 0, %s99
    %s102 = sphi 0, %s101
    %s116 = sphi 0, %s102
    %s120 = sphi 0, %s120
    %s122 = sphi 0, %s120
    %s123 = sphi 0, %s122
    %s137 = sphi 0, %s123
    %s141 = sphi 0, %s141
    %s143 = sphi 0, %s141
    %s144 = sphi 0, %s143
    %s158 = sphi 0, %s144
    %s162 = sphi 0, %s162
    %s164 = sphi 0, %s162
    %s165 = sphi 0, %s164
    %s179 = sphi 0, %s165
    %s183 = sphi 0, %s183
    %s185 = sphi 0, %s183
    %s186 = sphi 0, %s185
    %s200 = sphi 0, %s186
    %s204 = sphi 0, %s204
    %s206 = sphi 0, %s204
    %s207 = sphi 0, %s206
    %s221 = sphi 0, %s207
    %s225 = sphi 0, %s225
    %s227 = sphi 0, %s225
    %s228 = sphi 0, %s227
    %s242 = sphi 0, %s228
    %s246 = sphi 0, %s246
    %s248 = sphi 0, %s246
    %s249 = sphi 0, %s248
    %s263 = sphi 0, %s249
    %s267 = sphi 0, %s267
    %s269 = sphi 0, %s267
    %s270 = sphi 0, %s269
    %s284 = sphi 0, %s270
    %s290 = sphi 0, %s292
    %s293 = sphi 0, %s290
    %s294 = sphi 0, %s293
    %s310 = sphi 0, %s294
  $region4: #{_lambda_.15} parent=0 // loop_header_branch
    %21 = sbr.rel (%p19) target = $region8
  $region5: #{_lambda_.15} parent=0 // loop_body
    %s23 = ssub.s32 %s18, 1
    %s24 = ssub.s32 %s18, 2
    %s25 = sadd.s32 %s18, 1
    %s26 = ssub.s32 %s18, %s25
    %p27 = scmp.eq.s32.totalorder %s26, 0
    %s29 = sadd.s32 %s28, 1
    %s30 = scalar_select %p27, %s28, %s29
    %p33 = pneg %p27
    %p34 = scmp.eq.s32.totalorder %s18, 1
    %p35 = por %p33, %p34
    %p36 = scmp.ne.s32.totalorder %s28, %s31
    %p37 = scmp.eq.s32.totalorder %s18, 0
    %p38 = por %p36, %p37
    %p39 = scmp.ne.s32.totalorder %s28, %s31
    %p40 = scmp.eq.s32.totalorder %s23, 1
    %p41 = por %p39, %p40
    %p42 = scmp.ne.s32.totalorder %s31, %s32
    %p43 = scmp.eq.s32.totalorder %s23, 0
    %p44 = por %p42, %p43
    %p45 = scmp.ne.s32.totalorder %s31, %s32
    %p46 = scmp.eq.s32.totalorder %s24, 1
    %p47 = por %p45, %p46
    %p49 = scmp.ne.s32.totalorder %s32, %s48
    %p50 = scmp.eq.s32.totalorder %s24, 0
    %p51 = por %p49, %p50
    %s52 = ssub.s32 %s18, %s25
    %p53 = scmp.eq.s32.totalorder %s52, 0
    %s55 = sadd.s32 %s54, 1
    %s56 = scalar_select %p53, %s54, %s55
    %p59 = pneg %p53
    %p60 = scmp.eq.s32.totalorder %s18, 1
    %p61 = por %p59, %p60
    %p62 = scmp.ne.s32.totalorder %s54, %s57
    %p63 = scmp.eq.s32.totalorder %s18, 0
    %p64 = por %p62, %p63
    %p65 = scmp.ne.s32.totalorder %s54, %s57
    %p66 = scmp.eq.s32.totalorder %s23, 1
    %p67 = por %p65, %p66
    %p68 = scmp.ne.s32.totalorder %s57, %s58
    %p69 = scmp.eq.s32.totalorder %s23, 0
    %p70 = por %p68, %p69
    %p71 = scmp.ne.s32.totalorder %s57, %s58
    %p72 = scmp.eq.s32.totalorder %s24, 1
    %p73 = por %p71, %p72
    %p75 = scmp.ne.s32.totalorder %s58, %s74
    %p76 = scmp.eq.s32.totalorder %s24, 0
    %p77 = por %p75, %p76
    %s79 = sadd.s32 %s78, 1
    %p82 = scmp.eq.s32.totalorder %s18, 1
    %p83 = scmp.ne.s32.totalorder %s78, %s80
    %p84 = scmp.eq.s32.totalorder %s18, 0
    %p85 = por %p83, %p84
    %p86 = scmp.ne.s32.totalorder %s78, %s80
    %p87 = scmp.eq.s32.totalorder %s23, 1
    %p88 = por %p86, %p87
    %p89 = scmp.ne.s32.totalorder %s80, %s81
    %p90 = scmp.eq.s32.totalorder %s23, 0
    %p91 = por %p89, %p90
    %p92 = scmp.ne.s32.totalorder %s80, %s81
    %p93 = scmp.eq.s32.totalorder %s24, 1
    %p94 = por %p92, %p93
    %p96 = scmp.ne.s32.totalorder %s81, %s95
    %p97 = scmp.eq.s32.totalorder %s24, 0
    %p98 = por %p96, %p97
    %s100 = sadd.s32 %s99, 1
    %p103 = scmp.eq.s32.totalorder %s18, 1
    %p104 = scmp.ne.s32.totalorder %s99, %s101
    %p105 = scmp.eq.s32.totalorder %s18, 0
    %p106 = por %p104, %p105
    %p107 = scmp.ne.s32.totalorder %s99, %s101
    %p108 = scmp.eq.s32.totalorder %s23, 1
    %p109 = por %p107, %p108
    %p110 = scmp.ne.s32.totalorder %s101, %s102
    %p111 = scmp.eq.s32.totalorder %s23, 0
    %p112 = por %p110, %p111
    %p113 = scmp.ne.s32.totalorder %s101, %s102
    %p114 = scmp.eq.s32.totalorder %s24, 1
    %p115 = por %p113, %p114
    %p117 = scmp.ne.s32.totalorder %s102, %s116
    %p118 = scmp.eq.s32.totalorder %s24, 0
    %p119 = por %p117, %p118
    %s121 = sadd.s32 %s120, 1
    %p124 = scmp.eq.s32.totalorder %s18, 1
    %p125 = scmp.ne.s32.totalorder %s120, %s122
    %p126 = scmp.eq.s32.totalorder %s18, 0
    %p127 = por %p125, %p126
    %p128 = scmp.ne.s32.totalorder %s120, %s122
    %p129 = scmp.eq.s32.totalorder %s23, 1
    %p130 = por %p128, %p129
    %p131 = scmp.ne.s32.totalorder %s122, %s123
    %p132 = scmp.eq.s32.totalorder %s23, 0
    %p133 = por %p131, %p132
    %p134 = scmp.ne.s32.totalorder %s122, %s123
    %p135 = scmp.eq.s32.totalorder %s24, 1
    %p136 = por %p134, %p135
    %p138 = scmp.ne.s32.totalorder %s123, %s137
    %p139 = scmp.eq.s32.totalorder %s24, 0
    %p140 = por %p138, %p139
    %s142 = sadd.s32 %s141, 1
    %p145 = scmp.eq.s32.totalorder %s18, 1
    %p146 = scmp.ne.s32.totalorder %s141, %s143
    %p147 = scmp.eq.s32.totalorder %s18, 0
    %p148 = por %p146, %p147
    %p149 = scmp.ne.s32.totalorder %s141, %s143
    %p150 = scmp.eq.s32.totalorder %s23, 1
    %p151 = por %p149, %p150
    %p152 = scmp.ne.s32.totalorder %s143, %s144
    %p153 = scmp.eq.s32.totalorder %s23, 0
    %p154 = por %p152, %p153
    %p155 = scmp.ne.s32.totalorder %s143, %s144
    %p156 = scmp.eq.s32.totalorder %s24, 1
    %p157 = por %p155, %p156
    %p159 = scmp.ne.s32.totalorder %s144, %s158
    %p160 = scmp.eq.s32.totalorder %s24, 0
    %p161 = por %p159, %p160
    %s163 = sadd.s32 %s162, 1
    %p166 = scmp.eq.s32.totalorder %s18, 1
    %p167 = scmp.ne.s32.totalorder %s162, %s164
    %p168 = scmp.eq.s32.totalorder %s18, 0
    %p169 = por %p167, %p168
    %p170 = scmp.ne.s32.totalorder %s162, %s164
    %p171 = scmp.eq.s32.totalorder %s23, 1
    %p172 = por %p170, %p171
    %p173 = scmp.ne.s32.totalorder %s164, %s165
    %p174 = scmp.eq.s32.totalorder %s23, 0
    %p175 = por %p173, %p174
    %p176 = scmp.ne.s32.totalorder %s164, %s165
    %p177 = scmp.eq.s32.totalorder %s24, 1
    %p178 = por %p176, %p177
    %p180 = scmp.ne.s32.totalorder %s165, %s179
    %p181 = scmp.eq.s32.totalorder %s24, 0
    %p182 = por %p180, %p181
    %s184 = sadd.s32 %s183, 1
    %p187 = scmp.eq.s32.totalorder %s18, 1
    %p188 = scmp.ne.s32.totalorder %s183, %s185
    %p189 = scmp.eq.s32.totalorder %s18, 0
    %p190 = por %p188, %p189
    %p191 = scmp.ne.s32.totalorder %s183, %s185
    %p192 = scmp.eq.s32.totalorder %s23, 1
    %p193 = por %p191, %p192
    %p194 = scmp.ne.s32.totalorder %s185, %s186
    %p195 = scmp.eq.s32.totalorder %s23, 0
    %p196 = por %p194, %p195
    %p197 = scmp.ne.s32.totalorder %s185, %s186
    %p198 = scmp.eq.s32.totalorder %s24, 1
    %p199 = por %p197, %p198
    %p201 = scmp.ne.s32.totalorder %s186, %s200
    %p202 = scmp.eq.s32.totalorder %s24, 0
    %p203 = por %p201, %p202
    %s205 = sadd.s32 %s204, 1
    %p208 = scmp.eq.s32.totalorder %s18, 1
    %p209 = scmp.ne.s32.totalorder %s204, %s206
    %p210 = scmp.eq.s32.totalorder %s18, 0
    %p211 = por %p209, %p210
    %p212 = scmp.ne.s32.totalorder %s204, %s206
    %p213 = scmp.eq.s32.totalorder %s23, 1
    %p214 = por %p212, %p213
    %p215 = scmp.ne.s32.totalorder %s206, %s207
    %p216 = scmp.eq.s32.totalorder %s23, 0
    %p217 = por %p215, %p216
    %p218 = scmp.ne.s32.totalorder %s206, %s207
    %p219 = scmp.eq.s32.totalorder %s24, 1
    %p220 = por %p218, %p219
    %p222 = scmp.ne.s32.totalorder %s207, %s221
    %p223 = scmp.eq.s32.totalorder %s24, 0
    %p224 = por %p222, %p223
    %s226 = sadd.s32 %s225, 1
    %p229 = scmp.eq.s32.totalorder %s18, 1
    %p230 = scmp.ne.s32.totalorder %s225, %s227
    %p231 = scmp.eq.s32.totalorder %s18, 0
    %p232 = por %p230, %p231
    %p233 = scmp.ne.s32.totalorder %s225, %s227
    %p234 = scmp.eq.s32.totalorder %s23, 1
    %p235 = por %p233, %p234
    %p236 = scmp.ne.s32.totalorder %s227, %s228
    %p237 = scmp.eq.s32.totalorder %s23, 0
    %p238 = por %p236, %p237
    %p239 = scmp.ne.s32.totalorder %s227, %s228
    %p240 = scmp.eq.s32.totalorder %s24, 1
    %p241 = por %p239, %p240
    %p243 = scmp.ne.s32.totalorder %s228, %s242
    %p244 = scmp.eq.s32.totalorder %s24, 0
    %p245 = por %p243, %p244
    %s247 = sadd.s32 %s246, 1
    %p250 = scmp.eq.s32.totalorder %s18, 1
    %p251 = scmp.ne.s32.totalorder %s246, %s248
    %p252 = scmp.eq.s32.totalorder %s18, 0
    %p253 = por %p251, %p252
    %p254 = scmp.ne.s32.totalorder %s246, %s248
    %p255 = scmp.eq.s32.totalorder %s23, 1
    %p256 = por %p254, %p255
    %p257 = scmp.ne.s32.totalorder %s248, %s249
    %p258 = scmp.eq.s32.totalorder %s23, 0
    %p259 = por %p257, %p258
    %p260 = scmp.ne.s32.totalorder %s248, %s249
    %p261 = scmp.eq.s32.totalorder %s24, 1
    %p262 = por %p260, %p261
    %p264 = scmp.ne.s32.totalorder %s249, %s263
    %p265 = scmp.eq.s32.totalorder %s24, 0
    %p266 = por %p264, %p265
    %s268 = sadd.s32 %s267, 1
    %p271 = scmp.eq.s32.totalorder %s18, 1
    %p272 = scmp.ne.s32.totalorder %s267, %s269
    %p273 = scmp.eq.s32.totalorder %s18, 0
    %p274 = por %p272, %p273
    %p275 = scmp.ne.s32.totalorder %s267, %s269
    %p276 = scmp.eq.s32.totalorder %s23, 1
    %p277 = por %p275, %p276
    %p278 = scmp.ne.s32.totalorder %s269, %s270
    %p279 = scmp.eq.s32.totalorder %s23, 0
    %p280 = por %p278, %p279
    %p281 = scmp.ne.s32.totalorder %s269, %s270
    %p282 = scmp.eq.s32.totalorder %s24, 1
    %p283 = por %p281, %p282
    %p285 = scmp.ne.s32.totalorder %s270, %s284
    %p286 = scmp.eq.s32.totalorder %s24, 0
    %p287 = por %p285, %p286
    %s288 = ssub.s32 %s18, %s25
    %p289 = scmp.eq.s32.totalorder %s288, 0
    %s291 = sadd.s32 %s290, 1
    %s292 = scalar_select %p289, %s290, %s291
    %p295 = pneg %p289
    %p296 = scmp.eq.s32.totalorder %s18, 1
    %p297 = por %p295, %p296
    %p298 = scmp.ne.s32.totalorder %s290, %s293
    %p299 = scmp.eq.s32.totalorder %s18, 0
    %p300 = por %p298, %p299
    %p301 = scmp.ne.s32.totalorder %s290, %s293
    %p302 = scmp.eq.s32.totalorder %s23, 1
    %p303 = por %p301, %p302
    %p304 = scmp.ne.s32.totalorder %s293, %s294
    %p305 = scmp.eq.s32.totalorder %s23, 0
    %p306 = por %p304, %p305
    %p307 = scmp.ne.s32.totalorder %s293, %s294
    %p308 = scmp.eq.s32.totalorder %s24, 1
    %p309 = por %p307, %p308
    %p311 = scmp.ne.s32.totalorder %s294, %s310
    %p312 = scmp.eq.s32.totalorder %s24, 0
    %p313 = por %p311, %p312
    %p314 = scmp.le.s32.totalorder 1, %s18
    %p315 = scmp.lt.s32.totalorder %s18, 3
    %p316 = pnand %p314, %p315
    %p317 = pneg %p316
    // Predicated region
    $region9: #{_lambda_.15} parent=5 // pred_check
      _
    $region10: #{_lambda_.15} parent=5 // pred_check_branch
      %319 = sbr.rel (%p316) target = $region12
    $region11: #{_lambda_.15} parent=5 // pred_region
      %s320 = ssub.s32 %s18, 1
      // Predicated region
      $region13: #{_lambda_.15} parent=11 // pred_check
        %p321 = pneg %p91
      $region14: #{_lambda_.15} parent=11 // pred_check_branch
        %323 = sbr.rel (%p321) target = $region16
      $region15: #{_lambda_.15} parent=11 // pred_region
        _
      $region16: #{_lambda_.15} parent=11 // pred_fallthru
        _
      // Predicated region
      $region17: #{_lambda_.15} parent=11 // pred_check
        %p324 = pneg %p112
      $region18: #{_lambda_.15} parent=11 // pred_check_branch
        %326 = sbr.rel (%p324) target = $region20
      $region19: #{_lambda_.15} parent=11 // pred_region
        _
      $region20: #{_lambda_.15} parent=11 // pred_fallthru
        _
      // Predicated region
      $region21: #{_lambda_.15} parent=11 // pred_check
        %p327 = pneg %p133
      $region22: #{_lambda_.15} parent=11 // pred_check_branch
        %329 = sbr.rel (%p327) target = $region24
      $region23: #{_lambda_.15} parent=11 // pred_region
        _
      $region24: #{_lambda_.15} parent=11 // pred_fallthru
        _
      // Predicated region
      $region25: #{_lambda_.15} parent=11 // pred_check
        %p330 = pneg %p154
      $region26: #{_lambda_.15} parent=11 // pred_check_branch
        %332 = sbr.rel (%p330) target = $region28
      $region27: #{_lambda_.15} parent=11 // pred_region
        _
      $region28: #{_lambda_.15} parent=11 // pred_fallthru
        _
      // Predicated region
      $region29: #{_lambda_.15} parent=11 // pred_check
        %p333 = pneg %p175
      $region30: #{_lambda_.15} parent=11 // pred_check_branch
        %335 = sbr.rel (%p333) target = $region32
      $region31: #{_lambda_.15} parent=11 // pred_region
        _
      $region32: #{_lambda_.15} parent=11 // pred_fallthru
        _
      // Predicated region
      $region33: #{_lambda_.15} parent=11 // pred_check
        %p336 = pneg %p196
      $region34: #{_lambda_.15} parent=11 // pred_check_branch
        %338 = sbr.rel (%p336) target = $region36
      $region35: #{_lambda_.15} parent=11 // pred_region
        _
      $region36: #{_lambda_.15} parent=11 // pred_fallthru
        _
      // Predicated region
      $region37: #{_lambda_.15} parent=11 // pred_check
        %p339 = pneg %p217
      $region38: #{_lambda_.15} parent=11 // pred_check_branch
        %341 = sbr.rel (%p339) target = $region40
      $region39: #{_lambda_.15} parent=11 // pred_region
        _
      $region40: #{_lambda_.15} parent=11 // pred_fallthru
        _
      // Predicated region
      $region41: #{_lambda_.15} parent=11 // pred_check
        %p342 = pneg %p238
      $region42: #{_lambda_.15} parent=11 // pred_check_branch
        %344 = sbr.rel (%p342) target = $region44
      $region43: #{_lambda_.15} parent=11 // pred_region
        _
      $region44: #{_lambda_.15} parent=11 // pred_fallthru
        _
      // Predicated region
      $region45: #{_lambda_.15} parent=11 // pred_check
        %p345 = pneg %p259
      $region46: #{_lambda_.15} parent=11 // pred_check_branch
        %347 = sbr.rel (%p345) target = $region48
      $region47: #{_lambda_.15} parent=11 // pred_region
        _
      $region48: #{_lambda_.15} parent=11 // pred_fallthru
        _
      // Predicated region
      $region49: #{_lambda_.15} parent=11 // pred_check
        %p348 = pneg %p280
      $region50: #{_lambda_.15} parent=11 // pred_check_branch
        %350 = sbr.rel (%p348) target = $region52
      $region51: #{_lambda_.15} parent=11 // pred_region
        _
      $region52: #{_lambda_.15} parent=11 // pred_fallthru
        _
    $region12: #{_lambda_.15} parent=5 // pred_fallthru
      _
    %p351 = scmp.lt.s32.totalorder %s18, 2
    // Predicated region
    $region53: #{_lambda_.15} parent=5 // pred_check
      %p352 = pneg %p351
    $region54: #{_lambda_.15} parent=5 // pred_check_branch
      %354 = sbr.rel (%p352) target = $region56
    $region55: #{_lambda_.15} parent=5 // pred_region
      // Predicated region
      $region57: #{_lambda_.15} parent=55 // pred_check
        %p355 = pneg %p38
      $region58: #{_lambda_.15} parent=55 // pred_check_branch
        %357 = sbr.rel (%p355) target = $region60
      $region59: #{_lambda_.15} parent=55 // pred_region
        %p358 = scmp.lt.s32.totalorder %s18, 1
        %s359 = scalar_select %p358, %s18, 1
        %s360 = smul.addr %s359, 2
        %s361 = smul.addr %s360, 4
        %s362 = scalar_lea.vmem %s0, %s361
      $region60: #{_lambda_.15} parent=55 // pred_fallthru
        _
      // Predicated region
      $region61: #{_lambda_.15} parent=55 // pred_check
        %p363 = pneg %p64
      $region62: #{_lambda_.15} parent=55 // pred_check_branch
        %365 = sbr.rel (%p363) target = $region64
      $region63: #{_lambda_.15} parent=55 // pred_region
        %p366 = scmp.lt.s32.totalorder %s18, 1
        %s367 = scalar_select %p366, %s18, 1
        %s368 = smul.addr %s367, 2
        %s369 = smul.addr %s368, 4
        %s370 = scalar_lea.vmem %s1, %s369
      $region64: #{_lambda_.15} parent=55 // pred_fallthru
        _
    $region56: #{_lambda_.15} parent=5 // pred_fallthru
      _
    %p371 = scmp.le.s32.totalorder 1, %s18
    %p372 = scmp.lt.s32.totalorder %s18, 3
    %p373 = pnand %p371, %p372
    %p374 = pneg %p373
    // Predicated region
    $region65: #{_lambda_.15} parent=5 // pred_check
      _
    $region66: #{_lambda_.15} parent=5 // pred_check_branch
      %376 = sbr.rel (%p373) target = $region68
    $region67: #{_lambda_.15} parent=5 // pred_region
      %s377 = ssub.s32 %s18, 1
      %p378 = scmp.lt.s32.totalorder %s23, 1
      %s379 = scalar_select %p378, %s23, 1
      %s380 = smul.addr %s379, 2
      %s381 = smul.addr %s380, 4
      %s382 = scalar_lea.vmem %s0, %s381
      %p383 = pneg %p44
      %p384 = pneg %p41
      %p385 = scmp.lt.s32.totalorder %s23, 1
      %s386 = scalar_select %p385, %s23, 1
      %s387 = smul.addr %s386, 2
      %s388 = smul.addr %s387, 4
      %s389 = scalar_lea.vmem %s1, %s388
      %p390 = pneg %p70
      %p391 = pneg %p67
      %p392 = pneg %p91
      %p393 = pneg %p88
      %p394 = pneg %p112
      %p395 = pneg %p109
      %p396 = pneg %p133
      %p397 = pneg %p130
      %p398 = pneg %p154
      %p399 = pneg %p151
      %p400 = pneg %p175
      %p401 = pneg %p172
      %p402 = pneg %p196
      %p403 = pneg %p193
      %p404 = pneg %p217
      %p405 = pneg %p214
      %p406 = pneg %p238
      %p407 = pneg %p235
      %p408 = pneg %p259
      %p409 = pneg %p256
      %p410 = pneg %p280
      %p411 = pneg %p277
      %p412 = pneg %p306
      %p413 = pneg %p303
      %p414 = scmp.lt.s32.totalorder %s23, 1
      %s415 = scalar_select %p414, %s23, 1
      %s416 = smul.addr %s415, 2
      %s417 = smul.addr %s416, 4
      %s418 = scalar_lea.vmem %s12, %s417
      %p419 = scmp.lt.s32.totalorder %s23, 1
      %s420 = scalar_select %p419, %s23, 1
      %s421 = smul.addr %s420, 2
      %s422 = smul.addr %s421, 4
      %s423 = scalar_lea.vmem %s0, %s422
      %p424 = scmp.lt.s32.totalorder %s23, 1
      %s425 = scalar_select %p424, %s23, 1
      %s426 = smul.addr %s425, 2
      %s427 = smul.addr %s426, 4
      %s428 = scalar_lea.vmem %s1, %s427
      %p429 = scmp.lt.s32.totalorder %s23, 1
      %s430 = scalar_select %p429, %s23, 1
      %s431 = smul.addr %s430, 2
      %s432 = smul.addr %s431, 4
      %s433 = scalar_lea.vmem %s12, %s432
      %v435 = vld [vmem:[%s423] sm:$0xf]
      %v436 = vld [vmem:[%s423 + $0x4] sm:$0xf]
      %v437 = vld [vmem:[%s428] sm:$0xf]
      %v438 = vld [vmem:[%s428 + $0x4] sm:$0xf]
      %v439 = vlaneseq
      %v440 = vand.u32 %v439, 127
      %vm441 = vcmp.lt.s32.totalorder %v440, 8
      %v442 = vld [vmem:[%s2] sm:$0xf]
      %v443 = vld [vmem:[%s2 + $0x4] sm:$0xf]
      %v444 = vld [vmem:[%s2 + $0x8] sm:$0xf]
      %v445 = vld [vmem:[%s2 + $0xc] sm:$0xf]
      %v446 = vld [vmem:[%s2 + $0x10] sm:$0xf]
      %v447 = vld [vmem:[%s2 + $0x14] sm:$0xf]
      %v448 = vld [vmem:[%s2 + $0x18] sm:$0xf]
      %v449 = vld [vmem:[%s2 + $0x1c] sm:$0xf]
      %v450 = vld [vmem:[%s2 + $0x20] sm:$0xf]
      %v451 = vld [vmem:[%s2 + $0x24] sm:$0xf]
      %v452 = vld [vmem:[%s2 + $0x28] sm:$0xf]
      %v453 = vld [vmem:[%s2 + $0x2c] sm:$0xf]
      %v454 = vld [vmem:[%s2 + $0x30] sm:$0xf]
      %v455 = vld [vmem:[%s2 + $0x34] sm:$0xf]
      %v456 = vld [vmem:[%s2 + $0x38] sm:$0xf]
      %v457 = vld [vmem:[%s2 + $0x3c] sm:$0xf]
      %v458 = vld [vmem:[%s5] sm:$0x1]
      %v460 = vperm.slane %v458, 0
      %v464 = vunpack.c.l.b16 %v435
      %v465 = vunpack.c.l.b16 %v436
      %v466 = vpack.c.b16 %v465, %v464
      %v484 = vunpack.c.l.b16 %v442
      %v485 = vunpack.c.l.b16 %v443
      %v486 = vunpack.c.l.b16 %v444
      %v487 = vunpack.c.l.b16 %v445
      %v488 = vunpack.c.l.b16 %v446
      %v489 = vunpack.c.l.b16 %v447
      %v490 = vunpack.c.l.b16 %v448
      %v491 = vunpack.c.l.b16 %v449
      %v492 = vunpack.c.l.b16 %v450
      %v493 = vunpack.c.l.b16 %v451
      %v494 = vunpack.c.l.b16 %v452
      %v495 = vunpack.c.l.b16 %v453
      %v496 = vunpack.c.l.b16 %v454
      %v497 = vunpack.c.l.b16 %v455
      %v498 = vunpack.c.l.b16 %v456
      %v499 = vunpack.c.l.b16 %v457
      %v500 = vpack.c.b16 %v485, %v484
      %v501 = vpack.c.b16 %v487, %v486
      %v502 = vpack.c.b16 %v489, %v488
      %v503 = vpack.c.b16 %v491, %v490
      %v504 = vpack.c.b16 %v493, %v492
      %v505 = vpack.c.b16 %v495, %v494
      %v506 = vpack.c.b16 %v497, %v496
      %v507 = vpack.c.b16 %v499, %v498
      %516 = vmatpush.bf16.msra.mxu0 %v507
      %517 = vmatpush.bf16.msra.mxu0 %v506
      %518 = vmatpush.bf16.msra.mxu0 %v505
      %519 = vmatpush.bf16.msra.mxu0 %v504
      %520 = vmatpush.bf16.msra.mxu0 %v503
      %521 = vmatpush.bf16.msra.mxu0 %v502
      %522 = vmatpush.bf16.msra.mxu0 %v501
      %523 = vmatpush.bf16.msra.mxu0 %v500
      %524 = vmatmul.bf16.gmra.mxu0 %v466
      %v525 = vpop.f32.mrf.mxu0
      %v526 = vadd.f32 %v460, %v525
      %v527 = vpop.f32.mrf.mxu0
      %v528 = vadd.f32 %v460, %v527
      %529 = vdwg.mxu0
      %v530 = vld [vmem:[%s3] sm:$0xf]
      %v531 = vld [vmem:[%s3 + $0x4] sm:$0xf]
      %v532 = vld [vmem:[%s3 + $0x8] sm:$0xf]
      %v533 = vld [vmem:[%s3 + $0xc] sm:$0xf]
      %v534 = vld [vmem:[%s3 + $0x10] sm:$0xf]
      %v535 = vld [vmem:[%s3 + $0x14] sm:$0xf]
      %v536 = vld [vmem:[%s3 + $0x18] sm:$0xf]
      %v537 = vld [vmem:[%s3 + $0x1c] sm:$0xf]
      %v538 = vld [vmem:[%s3 + $0x20] sm:$0xf]
      %v539 = vld [vmem:[%s3 + $0x24] sm:$0xf]
      %v540 = vld [vmem:[%s3 + $0x28] sm:$0xf]
      %v541 = vld [vmem:[%s3 + $0x2c] sm:$0xf]
      %v542 = vld [vmem:[%s3 + $0x30] sm:$0xf]
      %v543 = vld [vmem:[%s3 + $0x34] sm:$0xf]
      %v544 = vld [vmem:[%s3 + $0x38] sm:$0xf]
      %v545 = vld [vmem:[%s3 + $0x3c] sm:$0xf]
      %v546 = vld [vmem:[%s6] sm:$0x1]
      %v548 = vperm.slane %v546, 0
      %v566 = vunpack.c.l.b16 %v530
      %v567 = vunpack.c.l.b16 %v531
      %v568 = vunpack.c.l.b16 %v532
      %v569 = vunpack.c.l.b16 %v533
      %v570 = vunpack.c.l.b16 %v534
      %v571 = vunpack.c.l.b16 %v535
      %v572 = vunpack.c.l.b16 %v536
      %v573 = vunpack.c.l.b16 %v537
      %v574 = vunpack.c.l.b16 %v538
      %v575 = vunpack.c.l.b16 %v539
      %v576 = vunpack.c.l.b16 %v540
      %v577 = vunpack.c.l.b16 %v541
      %v578 = vunpack.c.l.b16 %v542
      %v579 = vunpack.c.l.b16 %v543
      %v580 = vunpack.c.l.b16 %v544
      %v581 = vunpack.c.l.b16 %v545
      %v582 = vpack.c.b16 %v567, %v566
      %v583 = vpack.c.b16 %v569, %v568
      %v584 = vpack.c.b16 %v571, %v570
      %v585 = vpack.c.b16 %v573, %v572
      %v586 = vpack.c.b16 %v575, %v574
      %v587 = vpack.c.b16 %v577, %v576
      %v588 = vpack.c.b16 %v579, %v578
      %v589 = vpack.c.b16 %v581, %v580
      %598 = vmatpush.bf16.msra.mxu0 %v589
      %599 = vmatpush.bf16.msra.mxu0 %v588
      %600 = vmatpush.bf16.msra.mxu0 %v587
      %601 = vmatpush.bf16.msra.mxu0 %v586
      %602 = vmatpush.bf16.msra.mxu0 %v585
      %603 = vmatpush.bf16.msra.mxu0 %v584
      %604 = vmatpush.bf16.msra.mxu0 %v583
      %605 = vmatpush.bf16.msra.mxu0 %v582
      %606 = vmatmul.bf16.gmra.mxu0 %v466
      %v607 = vpop.f32.mrf.mxu0
      %v608 = vadd.f32 %v548, %v607
      %v609 = vpop.f32.mrf.mxu0
      %v610 = vadd.f32 %v548, %v609
      %611 = vdwg.mxu0
      %v612 = vld [vmem:[%s4] sm:$0xf]
      %v613 = vld [vmem:[%s4 + $0x4] sm:$0xf]
      %v614 = vld [vmem:[%s4 + $0x8] sm:$0xf]
      %v615 = vld [vmem:[%s4 + $0xc] sm:$0xf]
      %v616 = vld [vmem:[%s4 + $0x10] sm:$0xf]
      %v617 = vld [vmem:[%s4 + $0x14] sm:$0xf]
      %v618 = vld [vmem:[%s4 + $0x18] sm:$0xf]
      %v619 = vld [vmem:[%s4 + $0x1c] sm:$0xf]
      %v620 = vld [vmem:[%s4 + $0x20] sm:$0xf]
      %v621 = vld [vmem:[%s4 + $0x24] sm:$0xf]
      %v622 = vld [vmem:[%s4 + $0x28] sm:$0xf]
      %v623 = vld [vmem:[%s4 + $0x2c] sm:$0xf]
      %v624 = vld [vmem:[%s4 + $0x30] sm:$0xf]
      %v625 = vld [vmem:[%s4 + $0x34] sm:$0xf]
      %v626 = vld [vmem:[%s4 + $0x38] sm:$0xf]
      %v627 = vld [vmem:[%s4 + $0x3c] sm:$0xf]
      %v628 = vld [vmem:[%s7] sm:$0x1]
      %v630 = vperm.slane %v628, 0
      %v634 = vunpack.c.l.b16 %v437
      %v635 = vunpack.c.l.b16 %v438
      %v636 = vpack.c.b16 %v635, %v634
      %v654 = vunpack.c.l.b16 %v612
      %v655 = vunpack.c.l.b16 %v613
      %v656 = vunpack.c.l.b16 %v614
      %v657 = vunpack.c.l.b16 %v615
      %v658 = vunpack.c.l.b16 %v616
      %v659 = vunpack.c.l.b16 %v617
      %v660 = vunpack.c.l.b16 %v618
      %v661 = vunpack.c.l.b16 %v619
      %v662 = vunpack.c.l.b16 %v620
      %v663 = vunpack.c.l.b16 %v621
      %v664 = vunpack.c.l.b16 %v622
      %v665 = vunpack.c.l.b16 %v623
      %v666 = vunpack.c.l.b16 %v624
      %v667 = vunpack.c.l.b16 %v625
      %v668 = vunpack.c.l.b16 %v626
      %v669 = vunpack.c.l.b16 %v627
      %v670 = vpack.c.b16 %v655, %v654
      %v671 = vpack.c.b16 %v657, %v656
      %v672 = vpack.c.b16 %v659, %v658
      %v673 = vpack.c.b16 %v661, %v660
      %v674 = vpack.c.b16 %v663, %v662
      %v675 = vpack.c.b16 %v665, %v664
      %v676 = vpack.c.b16 %v667, %v666
      %v677 = vpack.c.b16 %v669, %v668
      %686 = vmatpush.bf16.msra.mxu0 %v677
      %687 = vmatpush.bf16.msra.mxu0 %v676
      %688 = vmatpush.bf16.msra.mxu0 %v675
      %689 = vmatpush.bf16.msra.mxu0 %v674
      %690 = vmatpush.bf16.msra.mxu0 %v673
      %691 = vmatpush.bf16.msra.mxu0 %v672
      %692 = vmatpush.bf16.msra.mxu0 %v671
      %693 = vmatpush.bf16.msra.mxu0 %v670
      %694 = vmatmul.bf16.gmra.mxu0 %v636
      %v695 = vpop.f32.mrf.mxu0
      %v696 = vadd.f32 %v630, %v695
      %v697 = vpop.f32.mrf.mxu0
      %v698 = vadd.f32 %v630, %v697
      %699 = vdwg.mxu0
      %v700 = vpack.c.bf16 %v528, %v526
      %v701 = vpack.c.bf16 %v610, %v608
      %702 = vmatpush.bf16.xpose.msra.mxu0 0
      %703 = vmatpush.bf16.xpose.msra.mxu0 0
      %704 = vmatpush.bf16.xpose.msra.mxu0 0
      %705 = vmatpush.bf16.xpose.msra.mxu0 0
      %706 = vmatpush.bf16.xpose.msra.mxu0 0
      %707 = vmatpush.bf16.xpose.msra.mxu0 0
      %708 = vmatpush.bf16.xpose.msra.mxu0 0
      %709 = vmatpush.bf16.xpose.msra.mxu0 %v701
      %710 = vmatmul.bf16.gmra.mxu0 %v700
      %v711 = vpop.f32.mrf.mxu0
      %v712 = vadd.f32 0.0, %v711
      %v713 = vpop.f32.mrf.mxu0
      %v714 = vadd.f32 0.0, %v713
      %715 = vdwg.mxu0
      %v716 = vmul.f32 %v712, 0.35355338
      %v717 = vmul.f32 %v714, 0.35355338
      %v718 = vsel %vm441, %v716, -1e+30
      %v719 = vsel %vm441, %v717, -1e+30
      %vm720 = vcmask 130048
      %v721 = vsel %vm720, %v718, -inf
      %722 = vmax.xlane.f32.xlu0 %v721
      %v723 = vpop.xlane.xlu0 %722
      %v724 = vsel %vm720, %v719, -inf
      %725 = vmax.xlane.f32.xlu0 %v724
      %v726 = vpop.xlane.xlu0 %725
      %v727 = vsub.f32 %v718, %v723
      %v728 = vsub.f32 %v719, %v726
      %v729 = vmul.f32 %v727, 1.442695
      %v730 = vpow.pop %v729
      %v731 = vmul.f32 %v728, 1.442695
      %v732 = vpow.pop %v731
      %v733 = vsel %vm720, %v730, 0.0
      %734 = vadd.xlane.f32.xlu0 %v733
      %v735 = vpop.xlane.xlu0 %734
      %v736 = vsel %vm720, %v732, 0.0
      %737 = vadd.xlane.f32.xlu0 %v736
      %v738 = vpop.xlane.xlu0 %737
      %v739 = vrcp.pop %v735
      %v740 = vrcp.pop %v738
      %v741 = vmul.f32 %v730, %v739
      %v742 = vmul.f32 %v732, %v740
      %v743 = vpack.c.bf16 %v742, %v741
      %v744 = vpack.c.bf16 %v698, %v696
      %v746 = vsel %vm720, %v743, 0
      %748 = vmatpush.bf16.msra.mxu0 0
      %749 = vmatpush.bf16.msra.mxu0 0
      %750 = vmatpush.bf16.msra.mxu0 0
      %751 = vmatpush.bf16.msra.mxu0 0
      %752 = vmatpush.bf16.msra.mxu0 0
      %753 = vmatpush.bf16.msra.mxu0 0
      %754 = vmatpush.bf16.msra.mxu0 0
      %755 = vmatpush.bf16.msra.mxu0 %v744
      %756 = vmatmul.bf16.gmra.mxu0 %v746
      %v757 = vpop.f32.mrf.mxu0
      %v758 = vadd.f32 0.0, %v757
      %v759 = vpop.f32.mrf.mxu0
      %v760 = vadd.f32 0.0, %v759
      %761 = vdwg.mxu0
      %v762 = vpack.c.bf16 %v760, %v758
      %v763 = vld [vmem:[%s8] sm:$0xf]
      %v764 = vld [vmem:[%s8 + $0x4] sm:$0xf]
      %v765 = vld [vmem:[%s8 + $0x8] sm:$0xf]
      %v766 = vld [vmem:[%s8 + $0xc] sm:$0xf]
      %v767 = vld [vmem:[%s8 + $0x10] sm:$0xf]
      %v768 = vld [vmem:[%s8 + $0x14] sm:$0xf]
      %v769 = vld [vmem:[%s8 + $0x18] sm:$0xf]
      %v770 = vld [vmem:[%s8 + $0x1c] sm:$0xf]
      %v771 = vld [vmem:[%s8 + $0x20] sm:$0xf]
      %v772 = vld [vmem:[%s8 + $0x24] sm:$0xf]
      %v773 = vld [vmem:[%s8 + $0x28] sm:$0xf]
      %v774 = vld [vmem:[%s8 + $0x2c] sm:$0xf]
      %v775 = vld [vmem:[%s8 + $0x30] sm:$0xf]
      %v776 = vld [vmem:[%s8 + $0x34] sm:$0xf]
      %v777 = vld [vmem:[%s8 + $0x38] sm:$0xf]
      %v778 = vld [vmem:[%s8 + $0x3c] sm:$0xf]
      %v795 = vunpack.c.l.b16 %v763
      %v796 = vunpack.c.l.b16 %v764
      %v797 = vunpack.c.l.b16 %v765
      %v798 = vunpack.c.l.b16 %v766
      %v799 = vunpack.c.l.b16 %v767
      %v800 = vunpack.c.l.b16 %v768
      %v801 = vunpack.c.l.b16 %v769
      %v802 = vunpack.c.l.b16 %v770
      %v803 = vunpack.c.l.b16 %v771
      %v804 = vunpack.c.l.b16 %v772
      %v805 = vunpack.c.l.b16 %v773
      %v806 = vunpack.c.l.b16 %v774
      %v807 = vunpack.c.l.b16 %v775
      %v808 = vunpack.c.l.b16 %v776
      %v809 = vunpack.c.l.b16 %v777
      %v810 = vunpack.c.l.b16 %v778
      %v811 = vpack.c.b16 %v796, %v795
      %v812 = vpack.c.b16 %v798, %v797
      %v813 = vpack.c.b16 %v800, %v799
      %v814 = vpack.c.b16 %v802, %v801
      %v815 = vpack.c.b16 %v804, %v803
      %v816 = vpack.c.b16 %v806, %v805
      %v817 = vpack.c.b16 %v808, %v807
      %v818 = vpack.c.b16 %v810, %v809
      %827 = vmatpush.bf16.msra.mxu0 %v818
      %828 = vmatpush.bf16.msra.mxu0 %v817
      %829 = vmatpush.bf16.msra.mxu0 %v816
      %830 = vmatpush.bf16.msra.mxu0 %v815
      %831 = vmatpush.bf16.msra.mxu0 %v814
      %832 = vmatpush.bf16.msra.mxu0 %v813
      %833 = vmatpush.bf16.msra.mxu0 %v812
      %834 = vmatpush.bf16.msra.mxu0 %v811
      %835 = vmatmul.bf16.gmra.mxu0 %v762
      %v836 = vpop.f32.mrf.mxu0
      %v837 = vadd.f32 0.0, %v836
      %v838 = vpop.f32.mrf.mxu0
      %v839 = vadd.f32 0.0, %v838
      %840 = vdwg.mxu0
      %841 = vst [vmem:[#allocation2] sm:$0xff] %v837
      %842 = vst [vmem:[#allocation2 + $0x8] sm:$0xff] %v839
      %s843 = scalar_lea.vmem %s2, 64
      %v844 = vld [vmem:[%s843] sm:$0xf]
      %v845 = vld [vmem:[%s843 + $0x4] sm:$0xf]
      %v846 = vld [vmem:[%s843 + $0x8] sm:$0xf]
      %v847 = vld [vmem:[%s843 + $0xc] sm:$0xf]
      %v848 = vld [vmem:[%s843 + $0x10] sm:$0xf]
      %v849 = vld [vmem:[%s843 + $0x14] sm:$0xf]
      %v850 = vld [vmem:[%s843 + $0x18] sm:$0xf]
      %v851 = vld [vmem:[%s843 + $0x1c] sm:$0xf]
      %v852 = vld [vmem:[%s843 + $0x20] sm:$0xf]
      %v853 = vld [vmem:[%s843 + $0x24] sm:$0xf]
      %v854 = vld [vmem:[%s843 + $0x28] sm:$0xf]
      %v855 = vld [vmem:[%s843 + $0x2c] sm:$0xf]
      %v856 = vld [vmem:[%s843 + $0x30] sm:$0xf]
      %v857 = vld [vmem:[%s843 + $0x34] sm:$0xf]
      %v858 = vld [vmem:[%s843 + $0x38] sm:$0xf]
      %v859 = vld [vmem:[%s843 + $0x3c] sm:$0xf]
      %s860 = scalar_lea.vmem %s5, 1
      %v861 = vld [vmem:[%s860] sm:$0x1]
      %v863 = vperm.slane %v861, 0
      %v881 = vunpack.c.l.b16 %v844
      %v882 = vunpack.c.l.b16 %v845
      %v883 = vunpack.c.l.b16 %v846
      %v884 = vunpack.c.l.b16 %v847
      %v885 = vunpack.c.l.b16 %v848
      %v886 = vunpack.c.l.b16 %v849
      %v887 = vunpack.c.l.b16 %v850
      %v888 = vunpack.c.l.b16 %v851
      %v889 = vunpack.c.l.b16 %v852
      %v890 = vunpack.c.l.b16 %v853
      %v891 = vunpack.c.l.b16 %v854
      %v892 = vunpack.c.l.b16 %v855
      %v893 = vunpack.c.l.b16 %v856
      %v894 = vunpack.c.l.b16 %v857
      %v895 = vunpack.c.l.b16 %v858
      %v896 = vunpack.c.l.b16 %v859
      %v897 = vpack.c.b16 %v882, %v881
      %v898 = vpack.c.b16 %v884, %v883
      %v899 = vpack.c.b16 %v886, %v885
      %v900 = vpack.c.b16 %v888, %v887
      %v901 = vpack.c.b16 %v890, %v889
      %v902 = vpack.c.b16 %v892, %v891
      %v903 = vpack.c.b16 %v894, %v893
      %v904 = vpack.c.b16 %v896, %v895
      %913 = vmatpush.bf16.msra.mxu0 %v904
      %914 = vmatpush.bf16.msra.mxu0 %v903
      %915 = vmatpush.bf16.msra.mxu0 %v902
      %916 = vmatpush.bf16.msra.mxu0 %v901
      %917 = vmatpush.bf16.msra.mxu0 %v900
      %918 = vmatpush.bf16.msra.mxu0 %v899
      %919 = vmatpush.bf16.msra.mxu0 %v898
      %920 = vmatpush.bf16.msra.mxu0 %v897
      %921 = vmatmul.bf16.gmra.mxu0 %v466
      %v922 = vpop.f32.mrf.mxu0
      %v923 = vadd.f32 %v863, %v922
      %v924 = vpop.f32.mrf.mxu0
      %v925 = vadd.f32 %v863, %v924
      %926 = vdwg.mxu0
      %s927 = scalar_lea.vmem %s3, 64
      %v928 = vld [vmem:[%s927] sm:$0xf]
      %v929 = vld [vmem:[%s927 + $0x4] sm:$0xf]
      %v930 = vld [vmem:[%s927 + $0x8] sm:$0xf]
      %v931 = vld [vmem:[%s927 + $0xc] sm:$0xf]
      %v932 = vld [vmem:[%s927 + $0x10] sm:$0xf]
      %v933 = vld [vmem:[%s927 + $0x14] sm:$0xf]
      %v934 = vld [vmem:[%s927 + $0x18] sm:$0xf]
      %v935 = vld [vmem:[%s927 + $0x1c] sm:$0xf]
      %v936 = vld [vmem:[%s927 + $0x20] sm:$0xf]
      %v937 = vld [vmem:[%s927 + $0x24] sm:$0xf]
      %v938 = vld [vmem:[%s927 + $0x28] sm:$0xf]
      %v939 = vld [vmem:[%s927 + $0x2c] sm:$0xf]
      %v940 = vld [vmem:[%s927 + $0x30] sm:$0xf]
      %v941 = vld [vmem:[%s927 + $0x34] sm:$0xf]
      %v942 = vld [vmem:[%s927 + $0x38] sm:$0xf]
      %v943 = vld [vmem:[%s927 + $0x3c] sm:$0xf]
      %s944 = scalar_lea.vmem %s6, 1
      %v945 = vld [vmem:[%s944] sm:$0x1]
      %v947 = vperm.slane %v945, 0
      %v965 = vunpack.c.l.b16 %v928
      %v966 = vunpack.c.l.b16 %v929
      %v967 = vunpack.c.l.b16 %v930
      %v968 = vunpack.c.l.b16 %v931
      %v969 = vunpack.c.l.b16 %v932
      %v970 = vunpack.c.l.b16 %v933
      %v971 = vunpack.c.l.b16 %v934
      %v972 = vunpack.c.l.b16 %v935
      %v973 = vunpack.c.l.b16 %v936
      %v974 = vunpack.c.l.b16 %v937
      %v975 = vunpack.c.l.b16 %v938
      %v976 = vunpack.c.l.b16 %v939
      %v977 = vunpack.c.l.b16 %v940
      %v978 = vunpack.c.l.b16 %v941
      %v979 = vunpack.c.l.b16 %v942
      %v980 = vunpack.c.l.b16 %v943
      %v981 = vpack.c.b16 %v966, %v965
      %v982 = vpack.c.b16 %v968, %v967
      %v983 = vpack.c.b16 %v970, %v969
      %v984 = vpack.c.b16 %v972, %v971
      %v985 = vpack.c.b16 %v974, %v973
      %v986 = vpack.c.b16 %v976, %v975
      %v987 = vpack.c.b16 %v978, %v977
      %v988 = vpack.c.b16 %v980, %v979
      %997 = vmatpush.bf16.msra.mxu0 %v988
      %998 = vmatpush.bf16.msra.mxu0 %v987
      %999 = vmatpush.bf16.msra.mxu0 %v986
      %1000 = vmatpush.bf16.msra.mxu0 %v985
      %1001 = vmatpush.bf16.msra.mxu0 %v984
      %1002 = vmatpush.bf16.msra.mxu0 %v983
      %1003 = vmatpush.bf16.msra.mxu0 %v982
      %1004 = vmatpush.bf16.msra.mxu0 %v981
      %1005 = vmatmul.bf16.gmra.mxu0 %v466
      %v1006 = vpop.f32.mrf.mxu0
      %v1007 = vadd.f32 %v947, %v1006
      %v1008 = vpop.f32.mrf.mxu0
      %v1009 = vadd.f32 %v947, %v1008
      %1010 = vdwg.mxu0
      %s1011 = scalar_lea.vmem %s4, 64
      %v1012 = vld [vmem:[%s1011] sm:$0xf]
      %v1013 = vld [vmem:[%s1011 + $0x4] sm:$0xf]
      %v1014 = vld [vmem:[%s1011 + $0x8] sm:$0xf]
      %v1015 = vld [vmem:[%s1011 + $0xc] sm:$0xf]
      %v1016 = vld [vmem:[%s1011 + $0x10] sm:$0xf]
      %v1017 = vld [vmem:[%s1011 + $0x14] sm:$0xf]
      %v1018 = vld [vmem:[%s1011 + $0x18] sm:$0xf]
      %v1019 = vld [vmem:[%s1011 + $0x1c] sm:$0xf]
      %v1020 = vld [vmem:[%s1011 + $0x20] sm:$0xf]
      %v1021 = vld [vmem:[%s1011 + $0x24] sm:$0xf]
      %v1022 = vld [vmem:[%s1011 + $0x28] sm:$0xf]
      %v1023 = vld [vmem:[%s1011 + $0x2c] sm:$0xf]
      %v1024 = vld [vmem:[%s1011 + $0x30] sm:$0xf]
      %v1025 = vld [vmem:[%s1011 + $0x34] sm:$0xf]
      %v1026 = vld [vmem:[%s1011 + $0x38] sm:$0xf]
      %v1027 = vld [vmem:[%s1011 + $0x3c] sm:$0xf]
      %s1028 = scalar_lea.vmem %s7, 1
      %v1029 = vld [vmem:[%s1028] sm:$0x1]
      %v1031 = vperm.slane %v1029, 0
      %v1049 = vunpack.c.l.b16 %v1012
      %v1050 = vunpack.c.l.b16 %v1013
      %v1051 = vunpack.c.l.b16 %v1014
      %v1052 = vunpack.c.l.b16 %v1015
      %v1053 = vunpack.c.l.b16 %v1016
      %v1054 = vunpack.c.l.b16 %v1017
      %v1055 = vunpack.c.l.b16 %v1018
      %v1056 = vunpack.c.l.b16 %v1019
      %v1057 = vunpack.c.l.b16 %v1020
      %v1058 = vunpack.c.l.b16 %v1021
      %v1059 = vunpack.c.l.b16 %v1022
      %v1060 = vunpack.c.l.b16 %v1023
      %v1061 = vunpack.c.l.b16 %v1024
      %v1062 = vunpack.c.l.b16 %v1025
      %v1063 = vunpack.c.l.b16 %v1026
      %v1064 = vunpack.c.l.b16 %v1027
      %v1065 = vpack.c.b16 %v1050, %v1049
      %v1066 = vpack.c.b16 %v1052, %v1051
      %v1067 = vpack.c.b16 %v1054, %v1053
      %v1068 = vpack.c.b16 %v1056, %v1055
      %v1069 = vpack.c.b16 %v1058, %v1057
      %v1070 = vpack.c.b16 %v1060, %v1059
      %v1071 = vpack.c.b16 %v1062, %v1061
      %v1072 = vpack.c.b16 %v1064, %v1063
      %1081 = vmatpush.bf16.msra.mxu0 %v1072
      %1082 = vmatpush.bf16.msra.mxu0 %v1071
      %1083 = vmatpush.bf16.msra.mxu0 %v1070
      %1084 = vmatpush.bf16.msra.mxu0 %v1069
      %1085 = vmatpush.bf16.msra.mxu0 %v1068
      %1086 = vmatpush.bf16.msra.mxu0 %v1067
      %1087 = vmatpush.bf16.msra.mxu0 %v1066
      %1088 = vmatpush.bf16.msra.mxu0 %v1065
      %1089 = vmatmul.bf16.gmra.mxu0 %v636
      %v1090 = vpop.f32.mrf.mxu0
      %v1091 = vadd.f32 %v1031, %v1090
      %v1092 = vpop.f32.mrf.mxu0
      %v1093 = vadd.f32 %v1031, %v1092
      %1094 = vdwg.mxu0
      %v1095 = vpack.c.bf16 %v925, %v923
      %v1096 = vpack.c.bf16 %v1009, %v1007
      %1097 = vmatpush.bf16.xpose.msra.mxu0 0
      %1098 = vmatpush.bf16.xpose.msra.mxu0 0
      %1099 = vmatpush.bf16.xpose.msra.mxu0 0
      %1100 = vmatpush.bf16.xpose.msra.mxu0 0
      %1101 = vmatpush.bf16.xpose.msra.mxu0 0
      %1102 = vmatpush.bf16.xpose.msra.mxu0 0
      %1103 = vmatpush.bf16.xpose.msra.mxu0 0
      %1104 = vmatpush.bf16.xpose.msra.mxu0 %v1096
      %1105 = vmatmul.bf16.gmra.mxu0 %v1095
      %v1106 = vpop.f32.mrf.mxu0
      %v1107 = vadd.f32 0.0, %v1106
      %v1108 = vpop.f32.mrf.mxu0
      %v1109 = vadd.f32 0.0, %v1108
      %1110 = vdwg.mxu0
      %v1111 = vmul.f32 %v1107, 0.35355338
      %v1112 = vmul.f32 %v1109, 0.35355338
      %v1113 = vsel %vm441, %v1111, -1e+30
      %v1114 = vsel %vm441, %v1112, -1e+30
      %v1115 = vsel %vm720, %v1113, -inf
      %1116 = vmax.xlane.f32.xlu0 %v1115
      %v1117 = vpop.xlane.xlu0 %1116
      %v1118 = vsel %vm720, %v1114, -inf
      %1119 = vmax.xlane.f32.xlu0 %v1118
      %v1120 = vpop.xlane.xlu0 %1119
      %v1121 = vsub.f32 %v1113, %v1117
      %v1122 = vsub.f32 %v1114, %v1120
      %v1123 = vmul.f32 %v1121, 1.442695
      %v1124 = vpow.pop %v1123
      %v1125 = vmul.f32 %v1122, 1.442695
      %v1126 = vpow.pop %v1125
      %v1127 = vsel %vm720, %v1124, 0.0
      %1128 = vadd.xlane.f32.xlu0 %v1127
      %v1129 = vpop.xlane.xlu0 %1128
      %v1130 = vsel %vm720, %v1126, 0.0
      %1131 = vadd.xlane.f32.xlu0 %v1130
      %v1132 = vpop.xlane.xlu0 %1131
      %v1133 = vrcp.pop %v1129
      %v1134 = vrcp.pop %v1132
      %v1135 = vmul.f32 %v1124, %v1133
      %v1136 = vmul.f32 %v1126, %v1134
      %v1137 = vpack.c.bf16 %v1136, %v1135
      %v1138 = vpack.c.bf16 %v1093, %v1091
      %v1140 = vsel %vm720, %v1137, 0
      %1142 = vmatpush.bf16.msra.mxu0 0
      %1143 = vmatpush.bf16.msra.mxu0 0
      %1144 = vmatpush.bf16.msra.mxu0 0
      %1145 = vmatpush.bf16.msra.mxu0 0
      %1146 = vmatpush.bf16.msra.mxu0 0
      %1147 = vmatpush.bf16.msra.mxu0 0
      %1148 = vmatpush.bf16.msra.mxu0 0
      %1149 = vmatpush.bf16.msra.mxu0 %v1138
      %1150 = vmatmul.bf16.gmra.mxu0 %v1140
      %v1151 = vpop.f32.mrf.mxu0
      %v1152 = vadd.f32 0.0, %v1151
      %v1153 = vpop.f32.mrf.mxu0
      %v1154 = vadd.f32 0.0, %v1153
      %1155 = vdwg.mxu0
      %v1156 = vpack.c.bf16 %v1154, %v1152
      %s1157 = scalar_lea.vmem %s8, 64
      %v1158 = vld [vmem:[%s1157] sm:$0xf]
      %v1159 = vld [vmem:[%s1157 + $0x4] sm:$0xf]
      %v1160 = vld [vmem:[%s1157 + $0x8] sm:$0xf]
      %v1161 = vld [vmem:[%s1157 + $0xc] sm:$0xf]
      %v1162 = vld [vmem:[%s1157 + $0x10] sm:$0xf]
      %v1163 = vld [vmem:[%s1157 + $0x14] sm:$0xf]
      %v1164 = vld [vmem:[%s1157 + $0x18] sm:$0xf]
      %v1165 = vld [vmem:[%s1157 + $0x1c] sm:$0xf]
      %v1166 = vld [vmem:[%s1157 + $0x20] sm:$0xf]
      %v1167 = vld [vmem:[%s1157 + $0x24] sm:$0xf]
      %v1168 = vld [vmem:[%s1157 + $0x28] sm:$0xf]
      %v1169 = vld [vmem:[%s1157 + $0x2c] sm:$0xf]
      %v1170 = vld [vmem:[%s1157 + $0x30] sm:$0xf]
      %v1171 = vld [vmem:[%s1157 + $0x34] sm:$0xf]
      %v1172 = vld [vmem:[%s1157 + $0x38] sm:$0xf]
      %v1173 = vld [vmem:[%s1157 + $0x3c] sm:$0xf]
      %v1190 = vunpack.c.l.b16 %v1158
      %v1191 = vunpack.c.l.b16 %v1159
      %v1192 = vunpack.c.l.b16 %v1160
      %v1193 = vunpack.c.l.b16 %v1161
      %v1194 = vunpack.c.l.b16 %v1162
      %v1195 = vunpack.c.l.b16 %v1163
      %v1196 = vunpack.c.l.b16 %v1164
      %v1197 = vunpack.c.l.b16 %v1165
      %v1198 = vunpack.c.l.b16 %v1166
      %v1199 = vunpack.c.l.b16 %v1167
      %v1200 = vunpack.c.l.b16 %v1168
      %v1201 = vunpack.c.l.b16 %v1169
      %v1202 = vunpack.c.l.b16 %v1170
      %v1203 = vunpack.c.l.b16 %v1171
      %v1204 = vunpack.c.l.b16 %v1172
      %v1205 = vunpack.c.l.b16 %v1173
      %v1206 = vpack.c.b16 %v1191, %v1190
      %v1207 = vpack.c.b16 %v1193, %v1192
      %v1208 = vpack.c.b16 %v1195, %v1194
      %v1209 = vpack.c.b16 %v1197, %v1196
      %v1210 = vpack.c.b16 %v1199, %v1198
      %v1211 = vpack.c.b16 %v1201, %v1200
      %v1212 = vpack.c.b16 %v1203, %v1202
      %v1213 = vpack.c.b16 %v1205, %v1204
      %1222 = vmatpush.bf16.msra.mxu0 %v1213
      %1223 = vmatpush.bf16.msra.mxu0 %v1212
      %1224 = vmatpush.bf16.msra.mxu0 %v1211
      %1225 = vmatpush.bf16.msra.mxu0 %v1210
      %1226 = vmatpush.bf16.msra.mxu0 %v1209
      %1227 = vmatpush.bf16.msra.mxu0 %v1208
      %1228 = vmatpush.bf16.msra.mxu0 %v1207
      %1229 = vmatpush.bf16.msra.mxu0 %v1206
      %1230 = vmatmul.bf16.gmra.mxu0 %v1156
      %v1231 = vpop.f32.mrf.mxu0
      %v1232 = vadd.f32 0.0, %v1231
      %v1233 = vpop.f32.mrf.mxu0
      %v1234 = vadd.f32 0.0, %v1233
      %1235 = vdwg.mxu0
      %v1236 = vld [vmem:[#allocation2] sm:$0xff]
      %v1237 = vld [vmem:[#allocation2 + $0x8] sm:$0xff]
      %v1238 = vadd.f32 %v1236, %v1232
      %v1239 = vadd.f32 %v1237, %v1234
      %1240 = vst [vmem:[#allocation2] sm:$0xff] %v1238
      %1241 = vst [vmem:[#allocation2 + $0x8] sm:$0xff] %v1239
      %s1242 = scalar_lea.vmem %s2, 128
      %v1243 = vld [vmem:[%s1242] sm:$0xf]
      %v1244 = vld [vmem:[%s1242 + $0x4] sm:$0xf]
      %v1245 = vld [vmem:[%s1242 + $0x8] sm:$0xf]
      %v1246 = vld [vmem:[%s1242 + $0xc] sm:$0xf]
      %v1247 = vld [vmem:[%s1242 + $0x10] sm:$0xf]
      %v1248 = vld [vmem:[%s1242 + $0x14] sm:$0xf]
      %v1249 = vld [vmem:[%s1242 + $0x18] sm:$0xf]
      %v1250 = vld [vmem:[%s1242 + $0x1c] sm:$0xf]
      %v1251 = vld [vmem:[%s1242 + $0x20] sm:$0xf]
      %v1252 = vld [vmem:[%s1242 + $0x24] sm:$0xf]
      %v1253 = vld [vmem:[%s1242 + $0x28] sm:$0xf]
      %v1254 = vld [vmem:[%s1242 + $0x2c] sm:$0xf]
      %v1255 = vld [vmem:[%s1242 + $0x30] sm:$0xf]
      %v1256 = vld [vmem:[%s1242 + $0x34] sm:$0xf]
      %v1257 = vld [vmem:[%s1242 + $0x38] sm:$0xf]
      %v1258 = vld [vmem:[%s1242 + $0x3c] sm:$0xf]
      %s1259 = scalar_lea.vmem %s5, 2
      %v1260 = vld [vmem:[%s1259] sm:$0x1]
      %v1262 = vperm.slane %v1260, 0
      %v1280 = vunpack.c.l.b16 %v1243
      %v1281 = vunpack.c.l.b16 %v1244
      %v1282 = vunpack.c.l.b16 %v1245
      %v1283 = vunpack.c.l.b16 %v1246
      %v1284 = vunpack.c.l.b16 %v1247
      %v1285 = vunpack.c.l.b16 %v1248
      %v1286 = vunpack.c.l.b16 %v1249
      %v1287 = vunpack.c.l.b16 %v1250
      %v1288 = vunpack.c.l.b16 %v1251
      %v1289 = vunpack.c.l.b16 %v1252
      %v1290 = vunpack.c.l.b16 %v1253
      %v1291 = vunpack.c.l.b16 %v1254
      %v1292 = vunpack.c.l.b16 %v1255
      %v1293 = vunpack.c.l.b16 %v1256
      %v1294 = vunpack.c.l.b16 %v1257
      %v1295 = vunpack.c.l.b16 %v1258
      %v1296 = vpack.c.b16 %v1281, %v1280
      %v1297 = vpack.c.b16 %v1283, %v1282
      %v1298 = vpack.c.b16 %v1285, %v1284
      %v1299 = vpack.c.b16 %v1287, %v1286
      %v1300 = vpack.c.b16 %v1289, %v1288
      %v1301 = vpack.c.b16 %v1291, %v1290
      %v1302 = vpack.c.b16 %v1293, %v1292
      %v1303 = vpack.c.b16 %v1295, %v1294
      %1312 = vmatpush.bf16.msra.mxu0 %v1303
      %1313 = vmatpush.bf16.msra.mxu0 %v1302
      %1314 = vmatpush.bf16.msra.mxu0 %v1301
      %1315 = vmatpush.bf16.msra.mxu0 %v1300
      %1316 = vmatpush.bf16.msra.mxu0 %v1299
      %1317 = vmatpush.bf16.msra.mxu0 %v1298
      %1318 = vmatpush.bf16.msra.mxu0 %v1297
      %1319 = vmatpush.bf16.msra.mxu0 %v1296
      %1320 = vmatmul.bf16.gmra.mxu0 %v466
      %v1321 = vpop.f32.mrf.mxu0
      %v1322 = vadd.f32 %v1262, %v1321
      %v1323 = vpop.f32.mrf.mxu0
      %v1324 = vadd.f32 %v1262, %v1323
      %1325 = vdwg.mxu0
      %s1326 = scalar_lea.vmem %s3, 128
      %v1327 = vld [vmem:[%s1326] sm:$0xf]
      %v1328 = vld [vmem:[%s1326 + $0x4] sm:$0xf]
      %v1329 = vld [vmem:[%s1326 + $0x8] sm:$0xf]
      %v1330 = vld [vmem:[%s1326 + $0xc] sm:$0xf]
      %v1331 = vld [vmem:[%s1326 + $0x10] sm:$0xf]
      %v1332 = vld [vmem:[%s1326 + $0x14] sm:$0xf]
      %v1333 = vld [vmem:[%s1326 + $0x18] sm:$0xf]
      %v1334 = vld [vmem:[%s1326 + $0x1c] sm:$0xf]
      %v1335 = vld [vmem:[%s1326 + $0x20] sm:$0xf]
      %v1336 = vld [vmem:[%s1326 + $0x24] sm:$0xf]
      %v1337 = vld [vmem:[%s1326 + $0x28] sm:$0xf]
      %v1338 = vld [vmem:[%s1326 + $0x2c] sm:$0xf]
      %v1339 = vld [vmem:[%s1326 + $0x30] sm:$0xf]
      %v1340 = vld [vmem:[%s1326 + $0x34] sm:$0xf]
      %v1341 = vld [vmem:[%s1326 + $0x38] sm:$0xf]
      %v1342 = vld [vmem:[%s1326 + $0x3c] sm:$0xf]
      %s1343 = scalar_lea.vmem %s6, 2
      %v1344 = vld [vmem:[%s1343] sm:$0x1]
      %v1346 = vperm.slane %v1344, 0
      %v1364 = vunpack.c.l.b16 %v1327
      %v1365 = vunpack.c.l.b16 %v1328
      %v1366 = vunpack.c.l.b16 %v1329
      %v1367 = vunpack.c.l.b16 %v1330
      %v1368 = vunpack.c.l.b16 %v1331
      %v1369 = vunpack.c.l.b16 %v1332
      %v1370 = vunpack.c.l.b16 %v1333
      %v1371 = vunpack.c.l.b16 %v1334
      %v1372 = vunpack.c.l.b16 %v1335
      %v1373 = vunpack.c.l.b16 %v1336
      %v1374 = vunpack.c.l.b16 %v1337
      %v1375 = vunpack.c.l.b16 %v1338
      %v1376 = vunpack.c.l.b16 %v1339
      %v1377 = vunpack.c.l.b16 %v1340
      %v1378 = vunpack.c.l.b16 %v1341
      %v1379 = vunpack.c.l.b16 %v1342
      %v1380 = vpack.c.b16 %v1365, %v1364
      %v1381 = vpack.c.b16 %v1367, %v1366
      %v1382 = vpack.c.b16 %v1369, %v1368
      %v1383 = vpack.c.b16 %v1371, %v1370
      %v1384 = vpack.c.b16 %v1373, %v1372
      %v1385 = vpack.c.b16 %v1375, %v1374
      %v1386 = vpack.c.b16 %v1377, %v1376
      %v1387 = vpack.c.b16 %v1379, %v1378
      %1396 = vmatpush.bf16.msra.mxu0 %v1387
      %1397 = vmatpush.bf16.msra.mxu0 %v1386
      %1398 = vmatpush.bf16.msra.mxu0 %v1385
      %1399 = vmatpush.bf16.msra.mxu0 %v1384
      %1400 = vmatpush.bf16.msra.mxu0 %v1383
      %1401 = vmatpush.bf16.msra.mxu0 %v1382
      %1402 = vmatpush.bf16.msra.mxu0 %v1381
      %1403 = vmatpush.bf16.msra.mxu0 %v1380
      %1404 = vmatmul.bf16.gmra.mxu0 %v466
      %v1405 = vpop.f32.mrf.mxu0
      %v1406 = vadd.f32 %v1346, %v1405
      %v1407 = vpop.f32.mrf.mxu0
      %v1408 = vadd.f32 %v1346, %v1407
      %1409 = vdwg.mxu0
      %s1410 = scalar_lea.vmem %s4, 128
      %v1411 = vld [vmem:[%s1410] sm:$0xf]
      %v1412 = vld [vmem:[%s1410 + $0x4] sm:$0xf]
      %v1413 = vld [vmem:[%s1410 + $0x8] sm:$0xf]
      %v1414 = vld [vmem:[%s1410 + $0xc] sm:$0xf]
      %v1415 = vld [vmem:[%s1410 + $0x10] sm:$0xf]
      %v1416 = vld [vmem:[%s1410 + $0x14] sm:$0xf]
      %v1417 = vld [vmem:[%s1410 + $0x18] sm:$0xf]
      %v1418 = vld [vmem:[%s1410 + $0x1c] sm:$0xf]
      %v1419 = vld [vmem:[%s1410 + $0x20] sm:$0xf]
      %v1420 = vld [vmem:[%s1410 + $0x24] sm:$0xf]
      %v1421 = vld [vmem:[%s1410 + $0x28] sm:$0xf]
      %v1422 = vld [vmem:[%s1410 + $0x2c] sm:$0xf]
      %v1423 = vld [vmem:[%s1410 + $0x30] sm:$0xf]
      %v1424 = vld [vmem:[%s1410 + $0x34] sm:$0xf]
      %v1425 = vld [vmem:[%s1410 + $0x38] sm:$0xf]
      %v1426 = vld [vmem:[%s1410 + $0x3c] sm:$0xf]
      %s1427 = scalar_lea.vmem %s7, 2
      %v1428 = vld [vmem:[%s1427] sm:$0x1]
      %v1430 = vperm.slane %v1428, 0
      %v1448 = vunpack.c.l.b16 %v1411
      %v1449 = vunpack.c.l.b16 %v1412
      %v1450 = vunpack.c.l.b16 %v1413
      %v1451 = vunpack.c.l.b16 %v1414
      %v1452 = vunpack.c.l.b16 %v1415
      %v1453 = vunpack.c.l.b16 %v1416
      %v1454 = vunpack.c.l.b16 %v1417
      %v1455 = vunpack.c.l.b16 %v1418
      %v1456 = vunpack.c.l.b16 %v1419
      %v1457 = vunpack.c.l.b16 %v1420
      %v1458 = vunpack.c.l.b16 %v1421
      %v1459 = vunpack.c.l.b16 %v1422
      %v1460 = vunpack.c.l.b16 %v1423
      %v1461 = vunpack.c.l.b16 %v1424
      %v1462 = vunpack.c.l.b16 %v1425
      %v1463 = vunpack.c.l.b16 %v1426
      %v1464 = vpack.c.b16 %v1449, %v1448
      %v1465 = vpack.c.b16 %v1451, %v1450
      %v1466 = vpack.c.b16 %v1453, %v1452
      %v1467 = vpack.c.b16 %v1455, %v1454
      %v1468 = vpack.c.b16 %v1457, %v1456
      %v1469 = vpack.c.b16 %v1459, %v1458
      %v1470 = vpack.c.b16 %v1461, %v1460
      %v1471 = vpack.c.b16 %v1463, %v1462
      %1480 = vmatpush.bf16.msra.mxu0 %v1471
      %1481 = vmatpush.bf16.msra.mxu0 %v1470
      %1482 = vmatpush.bf16.msra.mxu0 %v1469
      %1483 = vmatpush.bf16.msra.mxu0 %v1468
      %1484 = vmatpush.bf16.msra.mxu0 %v1467
      %1485 = vmatpush.bf16.msra.mxu0 %v1466
      %1486 = vmatpush.bf16.msra.mxu0 %v1465
      %1487 = vmatpush.bf16.msra.mxu0 %v1464
      %1488 = vmatmul.bf16.gmra.mxu0 %v636
      %v1489 = vpop.f32.mrf.mxu0
      %v1490 = vadd.f32 %v1430, %v1489
      %v1491 = vpop.f32.mrf.mxu0
      %v1492 = vadd.f32 %v1430, %v1491
      %1493 = vdwg.mxu0
      %v1494 = vpack.c.bf16 %v1324, %v1322
      %v1495 = vpack.c.bf16 %v1408, %v1406
      %1496 = vmatpush.bf16.xpose.msra.mxu0 0
      %1497 = vmatpush.bf16.xpose.msra.mxu0 0
      %1498 = vmatpush.bf16.xpose.msra.mxu0 0
      %1499 = vmatpush.bf16.xpose.msra.mxu0 0
      %1500 = vmatpush.bf16.xpose.msra.mxu0 0
      %1501 = vmatpush.bf16.xpose.msra.mxu0 0
      %1502 = vmatpush.bf16.xpose.msra.mxu0 0
      %1503 = vmatpush.bf16.xpose.msra.mxu0 %v1495
      %1504 = vmatmul.bf16.gmra.mxu0 %v1494
      %v1505 = vpop.f32.mrf.mxu0
      %v1506 = vadd.f32 0.0, %v1505
      %v1507 = vpop.f32.mrf.mxu0
      %v1508 = vadd.f32 0.0, %v1507
      %1509 = vdwg.mxu0
      %v1510 = vmul.f32 %v1506, 0.35355338
      %v1511 = vmul.f32 %v1508, 0.35355338
      %v1512 = vsel %vm441, %v1510, -1e+30
      %v1513 = vsel %vm441, %v1511, -1e+30
      %v1514 = vsel %vm720, %v1512, -inf
      %1515 = vmax.xlane.f32.xlu0 %v1514
      %v1516 = vpop.xlane.xlu0 %1515
      %v1517 = vsel %vm720, %v1513, -inf
      %1518 = vmax.xlane.f32.xlu0 %v1517
      %v1519 = vpop.xlane.xlu0 %1518
      %v1520 = vsub.f32 %v1512, %v1516
      %v1521 = vsub.f32 %v1513, %v1519
      %v1522 = vmul.f32 %v1520, 1.442695
      %v1523 = vpow.pop %v1522
      %v1524 = vmul.f32 %v1521, 1.442695
      %v1525 = vpow.pop %v1524
      %v1526 = vsel %vm720, %v1523, 0.0
      %1527 = vadd.xlane.f32.xlu0 %v1526
      %v1528 = vpop.xlane.xlu0 %1527
      %v1529 = vsel %vm720, %v1525, 0.0
      %1530 = vadd.xlane.f32.xlu0 %v1529
      %v1531 = vpop.xlane.xlu0 %1530
      %v1532 = vrcp.pop %v1528
      %v1533 = vrcp.pop %v1531
      %v1534 = vmul.f32 %v1523, %v1532
      %v1535 = vmul.f32 %v1525, %v1533
      %v1536 = vpack.c.bf16 %v1535, %v1534
      %v1537 = vpack.c.bf16 %v1492, %v1490
      %v1539 = vsel %vm720, %v1536, 0
      %1541 = vmatpush.bf16.msra.mxu0 0
      %1542 = vmatpush.bf16.msra.mxu0 0
      %1543 = vmatpush.bf16.msra.mxu0 0
      %1544 = vmatpush.bf16.msra.mxu0 0
      %1545 = vmatpush.bf16.msra.mxu0 0
      %1546 = vmatpush.bf16.msra.mxu0 0
      %1547 = vmatpush.bf16.msra.mxu0 0
      %1548 = vmatpush.bf16.msra.mxu0 %v1537
      %1549 = vmatmul.bf16.gmra.mxu0 %v1539
      %v1550 = vpop.f32.mrf.mxu0
      %v1551 = vadd.f32 0.0, %v1550
      %v1552 = vpop.f32.mrf.mxu0
      %v1553 = vadd.f32 0.0, %v1552
      %1554 = vdwg.mxu0
      %v1555 = vpack.c.bf16 %v1553, %v1551
      %s1556 = scalar_lea.vmem %s8, 128
      %v1557 = vld [vmem:[%s1556] sm:$0xf]
      %v1558 = vld [vmem:[%s1556 + $0x4] sm:$0xf]
      %v1559 = vld [vmem:[%s1556 + $0x8] sm:$0xf]
      %v1560 = vld [vmem:[%s1556 + $0xc] sm:$0xf]
      %v1561 = vld [vmem:[%s1556 + $0x10] sm:$0xf]
      %v1562 = vld [vmem:[%s1556 + $0x14] sm:$0xf]
      %v1563 = vld [vmem:[%s1556 + $0x18] sm:$0xf]
      %v1564 = vld [vmem:[%s1556 + $0x1c] sm:$0xf]
      %v1565 = vld [vmem:[%s1556 + $0x20] sm:$0xf]
      %v1566 = vld [vmem:[%s1556 + $0x24] sm:$0xf]
      %v1567 = vld [vmem:[%s1556 + $0x28] sm:$0xf]
      %v1568 = vld [vmem:[%s1556 + $0x2c] sm:$0xf]
      %v1569 = vld [vmem:[%s1556 + $0x30] sm:$0xf]
      %v1570 = vld [vmem:[%s1556 + $0x34] sm:$0xf]
      %v1571 = vld [vmem:[%s1556 + $0x38] sm:$0xf]
      %v1572 = vld [vmem:[%s1556 + $0x3c] sm:$0xf]
      %v1589 = vunpack.c.l.b16 %v1557
      %v1590 = vunpack.c.l.b16 %v1558
      %v1591 = vunpack.c.l.b16 %v1559
      %v1592 = vunpack.c.l.b16 %v1560
      %v1593 = vunpack.c.l.b16 %v1561
      %v1594 = vunpack.c.l.b16 %v1562
      %v1595 = vunpack.c.l.b16 %v1563
      %v1596 = vunpack.c.l.b16 %v1564
      %v1597 = vunpack.c.l.b16 %v1565
      %v1598 = vunpack.c.l.b16 %v1566
      %v1599 = vunpack.c.l.b16 %v1567
      %v1600 = vunpack.c.l.b16 %v1568
      %v1601 = vunpack.c.l.b16 %v1569
      %v1602 = vunpack.c.l.b16 %v1570
      %v1603 = vunpack.c.l.b16 %v1571
      %v1604 = vunpack.c.l.b16 %v1572
      %v1605 = vpack.c.b16 %v1590, %v1589
      %v1606 = vpack.c.b16 %v1592, %v1591
      %v1607 = vpack.c.b16 %v1594, %v1593
      %v1608 = vpack.c.b16 %v1596, %v1595
      %v1609 = vpack.c.b16 %v1598, %v1597
      %v1610 = vpack.c.b16 %v1600, %v1599
      %v1611 = vpack.c.b16 %v1602, %v1601
      %v1612 = vpack.c.b16 %v1604, %v1603
      %1621 = vmatpush.bf16.msra.mxu0 %v1612
      %1622 = vmatpush.bf16.msra.mxu0 %v1611
      %1623 = vmatpush.bf16.msra.mxu0 %v1610
      %1624 = vmatpush.bf16.msra.mxu0 %v1609
      %1625 = vmatpush.bf16.msra.mxu0 %v1608
      %1626 = vmatpush.bf16.msra.mxu0 %v1607
      %1627 = vmatpush.bf16.msra.mxu0 %v1606
      %1628 = vmatpush.bf16.msra.mxu0 %v1605
      %1629 = vmatmul.bf16.gmra.mxu0 %v1555
      %v1630 = vpop.f32.mrf.mxu0
      %v1631 = vadd.f32 0.0, %v1630
      %v1632 = vpop.f32.mrf.mxu0
      %v1633 = vadd.f32 0.0, %v1632
      %1634 = vdwg.mxu0
      %v1635 = vld [vmem:[#allocation2] sm:$0xff]
      %v1636 = vld [vmem:[#allocation2 + $0x8] sm:$0xff]
      %v1637 = vadd.f32 %v1635, %v1631
      %v1638 = vadd.f32 %v1636, %v1633
      %1639 = vst [vmem:[#allocation2] sm:$0xff] %v1637
      %1640 = vst [vmem:[#allocation2 + $0x8] sm:$0xff] %v1638
      %s1641 = scalar_lea.vmem %s2, 192
      %v1642 = vld [vmem:[%s1641] sm:$0xf]
      %v1643 = vld [vmem:[%s1641 + $0x4] sm:$0xf]
      %v1644 = vld [vmem:[%s1641 + $0x8] sm:$0xf]
      %v1645 = vld [vmem:[%s1641 + $0xc] sm:$0xf]
      %v1646 = vld [vmem:[%s1641 + $0x10] sm:$0xf]
      %v1647 = vld [vmem:[%s1641 + $0x14] sm:$0xf]
      %v1648 = vld [vmem:[%s1641 + $0x18] sm:$0xf]
      %v1649 = vld [vmem:[%s1641 + $0x1c] sm:$0xf]
      %v1650 = vld [vmem:[%s1641 + $0x20] sm:$0xf]
      %v1651 = vld [vmem:[%s1641 + $0x24] sm:$0xf]
      %v1652 = vld [vmem:[%s1641 + $0x28] sm:$0xf]
      %v1653 = vld [vmem:[%s1641 + $0x2c] sm:$0xf]
      %v1654 = vld [vmem:[%s1641 + $0x30] sm:$0xf]
      %v1655 = vld [vmem:[%s1641 + $0x34] sm:$0xf]
      %v1656 = vld [vmem:[%s1641 + $0x38] sm:$0xf]
      %v1657 = vld [vmem:[%s1641 + $0x3c] sm:$0xf]
      %s1658 = scalar_lea.vmem %s5, 3
      %v1659 = vld [vmem:[%s1658] sm:$0x1]
      %v1661 = vperm.slane %v1659, 0
      %v1679 = vunpack.c.l.b16 %v1642
      %v1680 = vunpack.c.l.b16 %v1643
      %v1681 = vunpack.c.l.b16 %v1644
      %v1682 = vunpack.c.l.b16 %v1645
      %v1683 = vunpack.c.l.b16 %v1646
      %v1684 = vunpack.c.l.b16 %v1647
      %v1685 = vunpack.c.l.b16 %v1648
      %v1686 = vunpack.c.l.b16 %v1649
      %v1687 = vunpack.c.l.b16 %v1650
      %v1688 = vunpack.c.l.b16 %v1651
      %v1689 = vunpack.c.l.b16 %v1652
      %v1690 = vunpack.c.l.b16 %v1653
      %v1691 = vunpack.c.l.b16 %v1654
      %v1692 = vunpack.c.l.b16 %v1655
      %v1693 = vunpack.c.l.b16 %v1656
      %v1694 = vunpack.c.l.b16 %v1657
      %v1695 = vpack.c.b16 %v1680, %v1679
      %v1696 = vpack.c.b16 %v1682, %v1681
      %v1697 = vpack.c.b16 %v1684, %v1683
      %v1698 = vpack.c.b16 %v1686, %v1685
      %v1699 = vpack.c.b16 %v1688, %v1687
      %v1700 = vpack.c.b16 %v1690, %v1689
      %v1701 = vpack.c.b16 %v1692, %v1691
      %v1702 = vpack.c.b16 %v1694, %v1693
      %1711 = vmatpush.bf16.msra.mxu0 %v1702
      %1712 = vmatpush.bf16.msra.mxu0 %v1701
      %1713 = vmatpush.bf16.msra.mxu0 %v1700
      %1714 = vmatpush.bf16.msra.mxu0 %v1699
      %1715 = vmatpush.bf16.msra.mxu0 %v1698
      %1716 = vmatpush.bf16.msra.mxu0 %v1697
      %1717 = vmatpush.bf16.msra.mxu0 %v1696
      %1718 = vmatpush.bf16.msra.mxu0 %v1695
      %1719 = vmatmul.bf16.gmra.mxu0 %v466
      %v1720 = vpop.f32.mrf.mxu0
      %v1721 = vadd.f32 %v1661, %v1720
      %v1722 = vpop.f32.mrf.mxu0
      %v1723 = vadd.f32 %v1661, %v1722
      %1724 = vdwg.mxu0
      %s1725 = scalar_lea.vmem %s3, 192
      %v1726 = vld [vmem:[%s1725] sm:$0xf]
      %v1727 = vld [vmem:[%s1725 + $0x4] sm:$0xf]
      %v1728 = vld [vmem:[%s1725 + $0x8] sm:$0xf]
      %v1729 = vld [vmem:[%s1725 + $0xc] sm:$0xf]
      %v1730 = vld [vmem:[%s1725 + $0x10] sm:$0xf]
      %v1731 = vld [vmem:[%s1725 + $0x14] sm:$0xf]
      %v1732 = vld [vmem:[%s1725 + $0x18] sm:$0xf]
      %v1733 = vld [vmem:[%s1725 + $0x1c] sm:$0xf]
      %v1734 = vld [vmem:[%s1725 + $0x20] sm:$0xf]
      %v1735 = vld [vmem:[%s1725 + $0x24] sm:$0xf]
      %v1736 = vld [vmem:[%s1725 + $0x28] sm:$0xf]
      %v1737 = vld [vmem:[%s1725 + $0x2c] sm:$0xf]
      %v1738 = vld [vmem:[%s1725 + $0x30] sm:$0xf]
      %v1739 = vld [vmem:[%s1725 + $0x34] sm:$0xf]
      %v1740 = vld [vmem:[%s1725 + $0x38] sm:$0xf]
      %v1741 = vld [vmem:[%s1725 + $0x3c] sm:$0xf]
      %s1742 = scalar_lea.vmem %s6, 3
      %v1743 = vld [vmem:[%s1742] sm:$0x1]
      %v1745 = vperm.slane %v1743, 0
      %v1763 = vunpack.c.l.b16 %v1726
      %v1764 = vunpack.c.l.b16 %v1727
      %v1765 = vunpack.c.l.b16 %v1728
      %v1766 = vunpack.c.l.b16 %v1729
      %v1767 = vunpack.c.l.b16 %v1730
      %v1768 = vunpack.c.l.b16 %v1731
      %v1769 = vunpack.c.l.b16 %v1732
      %v1770 = vunpack.c.l.b16 %v1733
      %v1771 = vunpack.c.l.b16 %v1734
      %v1772 = vunpack.c.l.b16 %v1735
      %v1773 = vunpack.c.l.b16 %v1736
      %v1774 = vunpack.c.l.b16 %v1737
      %v1775 = vunpack.c.l.b16 %v1738
      %v1776 = vunpack.c.l.b16 %v1739
      %v1777 = vunpack.c.l.b16 %v1740
      %v1778 = vunpack.c.l.b16 %v1741
      %v1779 = vpack.c.b16 %v1764, %v1763
      %v1780 = vpack.c.b16 %v1766, %v1765
      %v1781 = vpack.c.b16 %v1768, %v1767
      %v1782 = vpack.c.b16 %v1770, %v1769
      %v1783 = vpack.c.b16 %v1772, %v1771
      %v1784 = vpack.c.b16 %v1774, %v1773
      %v1785 = vpack.c.b16 %v1776, %v1775
      %v1786 = vpack.c.b16 %v1778, %v1777
      %1795 = vmatpush.bf16.msra.mxu0 %v1786
      %1796 = vmatpush.bf16.msra.mxu0 %v1785
      %1797 = vmatpush.bf16.msra.mxu0 %v1784
      %1798 = vmatpush.bf16.msra.mxu0 %v1783
      %1799 = vmatpush.bf16.msra.mxu0 %v1782
      %1800 = vmatpush.bf16.msra.mxu0 %v1781
      %1801 = vmatpush.bf16.msra.mxu0 %v1780
      %1802 = vmatpush.bf16.msra.mxu0 %v1779
      %1803 = vmatmul.bf16.gmra.mxu0 %v466
      %v1804 = vpop.f32.mrf.mxu0
      %v1805 = vadd.f32 %v1745, %v1804
      %v1806 = vpop.f32.mrf.mxu0
      %v1807 = vadd.f32 %v1745, %v1806
      %1808 = vdwg.mxu0
      %s1809 = scalar_lea.vmem %s4, 192
      %v1810 = vld [vmem:[%s1809] sm:$0xf]
      %v1811 = vld [vmem:[%s1809 + $0x4] sm:$0xf]
      %v1812 = vld [vmem:[%s1809 + $0x8] sm:$0xf]
      %v1813 = vld [vmem:[%s1809 + $0xc] sm:$0xf]
      %v1814 = vld [vmem:[%s1809 + $0x10] sm:$0xf]
      %v1815 = vld [vmem:[%s1809 + $0x14] sm:$0xf]
      %v1816 = vld [vmem:[%s1809 + $0x18] sm:$0xf]
      %v1817 = vld [vmem:[%s1809 + $0x1c] sm:$0xf]
      %v1818 = vld [vmem:[%s1809 + $0x20] sm:$0xf]
      %v1819 = vld [vmem:[%s1809 + $0x24] sm:$0xf]
      %v1820 = vld [vmem:[%s1809 + $0x28] sm:$0xf]
      %v1821 = vld [vmem:[%s1809 + $0x2c] sm:$0xf]
      %v1822 = vld [vmem:[%s1809 + $0x30] sm:$0xf]
      %v1823 = vld [vmem:[%s1809 + $0x34] sm:$0xf]
      %v1824 = vld [vmem:[%s1809 + $0x38] sm:$0xf]
      %v1825 = vld [vmem:[%s1809 + $0x3c] sm:$0xf]
      %s1826 = scalar_lea.vmem %s7, 3
      %v1827 = vld [vmem:[%s1826] sm:$0x1]
      %v1829 = vperm.slane %v1827, 0
      %v1847 = vunpack.c.l.b16 %v1810
      %v1848 = vunpack.c.l.b16 %v1811
      %v1849 = vunpack.c.l.b16 %v1812
      %v1850 = vunpack.c.l.b16 %v1813
      %v1851 = vunpack.c.l.b16 %v1814
      %v1852 = vunpack.c.l.b16 %v1815
      %v1853 = vunpack.c.l.b16 %v1816
      %v1854 = vunpack.c.l.b16 %v1817
      %v1855 = vunpack.c.l.b16 %v1818
      %v1856 = vunpack.c.l.b16 %v1819
      %v1857 = vunpack.c.l.b16 %v1820
      %v1858 = vunpack.c.l.b16 %v1821
      %v1859 = vunpack.c.l.b16 %v1822
      %v1860 = vunpack.c.l.b16 %v1823
      %v1861 = vunpack.c.l.b16 %v1824
      %v1862 = vunpack.c.l.b16 %v1825
      %v1863 = vpack.c.b16 %v1848, %v1847
      %v1864 = vpack.c.b16 %v1850, %v1849
      %v1865 = vpack.c.b16 %v1852, %v1851
      %v1866 = vpack.c.b16 %v1854, %v1853
      %v1867 = vpack.c.b16 %v1856, %v1855
      %v1868 = vpack.c.b16 %v1858, %v1857
      %v1869 = vpack.c.b16 %v1860, %v1859
      %v1870 = vpack.c.b16 %v1862, %v1861
      %1879 = vmatpush.bf16.msra.mxu0 %v1870
      %1880 = vmatpush.bf16.msra.mxu0 %v1869
      %1881 = vmatpush.bf16.msra.mxu0 %v1868
      %1882 = vmatpush.bf16.msra.mxu0 %v1867
      %1883 = vmatpush.bf16.msra.mxu0 %v1866
      %1884 = vmatpush.bf16.msra.mxu0 %v1865
      %1885 = vmatpush.bf16.msra.mxu0 %v1864
      %1886 = vmatpush.bf16.msra.mxu0 %v1863
      %1887 = vmatmul.bf16.gmra.mxu0 %v636
      %v1888 = vpop.f32.mrf.mxu0
      %v1889 = vadd.f32 %v1829, %v1888
      %v1890 = vpop.f32.mrf.mxu0
      %v1891 = vadd.f32 %v1829, %v1890
      %1892 = vdwg.mxu0
      %v1893 = vpack.c.bf16 %v1723, %v1721
      %v1894 = vpack.c.bf16 %v1807, %v1805
      %1895 = vmatpush.bf16.xpose.msra.mxu0 0
      %1896 = vmatpush.bf16.xpose.msra.mxu0 0
      %1897 = vmatpush.bf16.xpose.msra.mxu0 0
      %1898 = vmatpush.bf16.xpose.msra.mxu0 0
      %1899 = vmatpush.bf16.xpose.msra.mxu0 0
      %1900 = vmatpush.bf16.xpose.msra.mxu0 0
      %1901 = vmatpush.bf16.xpose.msra.mxu0 0
      %1902 = vmatpush.bf16.xpose.msra.mxu0 %v1894
      %1903 = vmatmul.bf16.gmra.mxu0 %v1893
      %v1904 = vpop.f32.mrf.mxu0
      %v1905 = vadd.f32 0.0, %v1904
      %v1906 = vpop.f32.mrf.mxu0
      %v1907 = vadd.f32 0.0, %v1906
      %1908 = vdwg.mxu0
      %v1909 = vmul.f32 %v1905, 0.35355338
      %v1910 = vmul.f32 %v1907, 0.35355338
      %v1911 = vsel %vm441, %v1909, -1e+30
      %v1912 = vsel %vm441, %v1910, -1e+30
      %v1913 = vsel %vm720, %v1911, -inf
      %1914 = vmax.xlane.f32.xlu0 %v1913
      %v1915 = vpop.xlane.xlu0 %1914
      %v1916 = vsel %vm720, %v1912, -inf
      %1917 = vmax.xlane.f32.xlu0 %v1916
      %v1918 = vpop.xlane.xlu0 %1917
      %v1919 = vsub.f32 %v1911, %v1915
      %v1920 = vsub.f32 %v1912, %v1918
      %v1921 = vmul.f32 %v1919, 1.442695
      %v1922 = vpow.pop %v1921
      %v1923 = vmul.f32 %v1920, 1.442695
      %v1924 = vpow.pop %v1923
      %v1925 = vsel %vm720, %v1922, 0.0
      %1926 = vadd.xlane.f32.xlu0 %v1925
      %v1927 = vpop.xlane.xlu0 %1926
      %v1928 = vsel %vm720, %v1924, 0.0
      %1929 = vadd.xlane.f32.xlu0 %v1928
      %v1930 = vpop.xlane.xlu0 %1929
      %v1931 = vrcp.pop %v1927
      %v1932 = vrcp.pop %v1930
      %v1933 = vmul.f32 %v1922, %v1931
      %v1934 = vmul.f32 %v1924, %v1932
      %v1935 = vpack.c.bf16 %v1934, %v1933
      %v1936 = vpack.c.bf16 %v1891, %v1889
      %v1938 = vsel %vm720, %v1935, 0
      %1940 = vmatpush.bf16.msra.mxu0 0
      %1941 = vmatpush.bf16.msra.mxu0 0
      %1942 = vmatpush.bf16.msra.mxu0 0
      %1943 = vmatpush.bf16.msra.mxu0 0
      %1944 = vmatpush.bf16.msra.mxu0 0
      %1945 = vmatpush.bf16.msra.mxu0 0
      %1946 = vmatpush.bf16.msra.mxu0 0
      %1947 = vmatpush.bf16.msra.mxu0 %v1936
      %1948 = vmatmul.bf16.gmra.mxu0 %v1938
      %v1949 = vpop.f32.mrf.mxu0
      %v1950 = vadd.f32 0.0, %v1949
      %v1951 = vpop.f32.mrf.mxu0
      %v1952 = vadd.f32 0.0, %v1951
      %1953 = vdwg.mxu0
      %v1954 = vpack.c.bf16 %v1952, %v1950
      %s1955 = scalar_lea.vmem %s8, 192
      %v1956 = vld [vmem:[%s1955] sm:$0xf]
      %v1957 = vld [vmem:[%s1955 + $0x4] sm:$0xf]
      %v1958 = vld [vmem:[%s1955 + $0x8] sm:$0xf]
      %v1959 = vld [vmem:[%s1955 + $0xc] sm:$0xf]
      %v1960 = vld [vmem:[%s1955 + $0x10] sm:$0xf]
      %v1961 = vld [vmem:[%s1955 + $0x14] sm:$0xf]
      %v1962 = vld [vmem:[%s1955 + $0x18] sm:$0xf]
      %v1963 = vld [vmem:[%s1955 + $0x1c] sm:$0xf]
      %v1964 = vld [vmem:[%s1955 + $0x20] sm:$0xf]
      %v1965 = vld [vmem:[%s1955 + $0x24] sm:$0xf]
      %v1966 = vld [vmem:[%s1955 + $0x28] sm:$0xf]
      %v1967 = vld [vmem:[%s1955 + $0x2c] sm:$0xf]
      %v1968 = vld [vmem:[%s1955 + $0x30] sm:$0xf]
      %v1969 = vld [vmem:[%s1955 + $0x34] sm:$0xf]
      %v1970 = vld [vmem:[%s1955 + $0x38] sm:$0xf]
      %v1971 = vld [vmem:[%s1955 + $0x3c] sm:$0xf]
      %v1988 = vunpack.c.l.b16 %v1956
      %v1989 = vunpack.c.l.b16 %v1957
      %v1990 = vunpack.c.l.b16 %v1958
      %v1991 = vunpack.c.l.b16 %v1959
      %v1992 = vunpack.c.l.b16 %v1960
      %v1993 = vunpack.c.l.b16 %v1961
      %v1994 = vunpack.c.l.b16 %v1962
      %v1995 = vunpack.c.l.b16 %v1963
      %v1996 = vunpack.c.l.b16 %v1964
      %v1997 = vunpack.c.l.b16 %v1965
      %v1998 = vunpack.c.l.b16 %v1966
      %v1999 = vunpack.c.l.b16 %v1967
      %v2000 = vunpack.c.l.b16 %v1968
      %v2001 = vunpack.c.l.b16 %v1969
      %v2002 = vunpack.c.l.b16 %v1970
      %v2003 = vunpack.c.l.b16 %v1971
      %v2004 = vpack.c.b16 %v1989, %v1988
      %v2005 = vpack.c.b16 %v1991, %v1990
      %v2006 = vpack.c.b16 %v1993, %v1992
      %v2007 = vpack.c.b16 %v1995, %v1994
      %v2008 = vpack.c.b16 %v1997, %v1996
      %v2009 = vpack.c.b16 %v1999, %v1998
      %v2010 = vpack.c.b16 %v2001, %v2000
      %v2011 = vpack.c.b16 %v2003, %v2002
      %2020 = vmatpush.bf16.msra.mxu0 %v2011
      %2021 = vmatpush.bf16.msra.mxu0 %v2010
      %2022 = vmatpush.bf16.msra.mxu0 %v2009
      %2023 = vmatpush.bf16.msra.mxu0 %v2008
      %2024 = vmatpush.bf16.msra.mxu0 %v2007
      %2025 = vmatpush.bf16.msra.mxu0 %v2006
      %2026 = vmatpush.bf16.msra.mxu0 %v2005
      %2027 = vmatpush.bf16.msra.mxu0 %v2004
      %2028 = vmatmul.bf16.gmra.mxu0 %v1954
      %v2029 = vpop.f32.mrf.mxu0
      %v2030 = vadd.f32 0.0, %v2029
      %v2031 = vpop.f32.mrf.mxu0
      %v2032 = vadd.f32 0.0, %v2031
      %2033 = vdwg.mxu0
      %v2034 = vld [vmem:[#allocation2] sm:$0xff]
      %v2035 = vld [vmem:[#allocation2 + $0x8] sm:$0xff]
      %v2036 = vadd.f32 %v2034, %v2030
      %v2037 = vadd.f32 %v2035, %v2032
      %2038 = vst [vmem:[#allocation2] sm:$0xff] %v2036
      %2039 = vst [vmem:[#allocation2 + $0x8] sm:$0xff] %v2037
      %v2040 = vld [vmem:[#allocation2] sm:$0xff]
      %v2041 = vld [vmem:[#allocation2 + $0x8] sm:$0xff]
      %v2042 = vld [vmem:[%s9] sm:$0x1]
      %v2044 = vperm.slane %v2042, 0
      %v2046 = vadd.f32 %v2040, %v2044
      %v2047 = vadd.f32 %v2041, %v2044
      %v2048 = vunpack.c.l.bf16 %v437
      %v2049 = vunpack.c.l.bf16 %v438
      %v2050 = vadd.f32 %v2046, %v2048
      %v2051 = vadd.f32 %v2047, %v2049
      %v2052 = vld [vmem:[%s10] sm:$0x1]
      %v2053 = vld [vmem:[%s11] sm:$0x1]
      %2054 = vadd.xlane.f32.xlu0 %v2050
      %v2055 = vpop.xlane.xlu0 %2054
      %2056 = vadd.xlane.f32.xlu0 %v2051
      %v2057 = vpop.xlane.xlu0 %2056
      %v2058 = vmul.f32 %v2055, 0.03125
      %v2059 = vmul.f32 %v2057, 0.03125
      %v2060 = vsub.f32 %v2050, %v2058
      %v2061 = vsub.f32 %v2051, %v2059
      %vm2062 = vcmp.lt.s32.totalorder %v440, 32
      %v2063 = vsel %vm2062, %v2060, 0.0
      %v2064 = vsel %vm2062, %v2061, 0.0
      %v2065 = vmul.f32 %v2063, %v2063
      %v2066 = vmul.f32 %v2064, %v2064
      %2067 = vadd.xlane.f32.xlu0 %v2065
      %v2068 = vpop.xlane.xlu0 %2067
      %2069 = vadd.xlane.f32.xlu0 %v2066
      %v2070 = vpop.xlane.xlu0 %2069
      %v2071 = vmul.f32 %v2068, 0.03125
      %v2072 = vmul.f32 %v2070, 0.03125
      %v2073 = vadd.f32 %v2071, 1e-05
      %v2074 = vadd.f32 %v2072, 1e-05
      %v2075 = vrsqrt.pop %v2073
      %v2076 = vmul.f32 %v2075, %v2073
      %v2077 = vmul.f32 %v2076, %v2075
      %v2078 = vmul.f32 0.5, %v2077
      %v2079 = vsub.f32 1.5, %v2078
      %v2080 = vmul.f32 %v2075, %v2079
      %vm2081 = vweird.f32 %v2073
      %vm2082 = vweird.f32 %v2075
      %vm2083 = vmor %vm2081, %vm2082
      %v2084 = vsel %vm2083, %v2075, %v2080
      %v2085 = vrsqrt.pop %v2074
      %v2086 = vmul.f32 %v2085, %v2074
      %v2087 = vmul.f32 %v2086, %v2085
      %v2088 = vmul.f32 0.5, %v2087
      %v2089 = vsub.f32 1.5, %v2088
      %v2090 = vmul.f32 %v2085, %v2089
      %vm2091 = vweird.f32 %v2074
      %vm2092 = vweird.f32 %v2085
      %vm2093 = vmor %vm2091, %vm2092
      %v2094 = vsel %vm2093, %v2085, %v2090
      %v2095 = vmul.f32 %v2063, %v2084
      %v2096 = vmul.f32 %v2064, %v2094
      %v2098 = vperm.slane %v2052, 0
      %v2100 = vmul.f32 %v2095, %v2098
      %v2101 = vmul.f32 %v2096, %v2098
      %v2103 = vperm.slane %v2053, 0
      %v2105 = vadd.f32 %v2100, %v2103
      %v2106 = vadd.f32 %v2101, %v2103
      %v2107 = vpack.c.bf16 %v2105, %v2105
      %v2108 = vpack.c.bf16 %v2106, %v2106
      %2109 = vst [vmem:[%s433] sm:$0xf] %v2107
      %2110 = vst [vmem:[%s433 + $0x4] sm:$0xf] %v2108
      %p2111 = scmp.lt.s32.totalorder %s23, 1
      %s2112 = scalar_select %p2111, %s23, 1
      %s2113 = smul.addr %s2112, 2
      %s2114 = smul.addr %s2113, 4
      %s2115 = scalar_lea.vmem %s12, %s2114
      // Predicated region
      $region69: #{_lambda_.15} parent=67 // pred_check
        %p2116 = pneg %p303
      $region70: #{_lambda_.15} parent=67 // pred_check_branch
        %2118 = sbr.rel (%p2116) target = $region72
      $region71: #{_lambda_.15} parent=67 // pred_region
        _
      $region72: #{_lambda_.15} parent=67 // pred_fallthru
        _
    $region68: #{_lambda_.15} parent=5 // pred_fallthru
      _
    %p2119 = scmp.le.s32.totalorder 2, %s18
    // Predicated region
    $region73: #{_lambda_.15} parent=5 // pred_check
      %p2120 = pneg %p2119
    $region74: #{_lambda_.15} parent=5 // pred_check_branch
      %2122 = sbr.rel (%p2120) target = $region76
    $region75: #{_lambda_.15} parent=5 // pred_region
      %s2123 = ssub.s32 %s18, 2
      // Predicated region
      $region77: #{_lambda_.15} parent=75 // pred_check
        %p2124 = pneg %p309
      $region78: #{_lambda_.15} parent=75 // pred_check_branch
        %2126 = sbr.rel (%p2124) target = $region80
      $region79: #{_lambda_.15} parent=75 // pred_region
        %p2127 = scmp.lt.s32.totalorder %s24, 1
        %s2128 = scalar_select %p2127, %s24, 1
        %s2129 = smul.addr %s2128, 2
        %s2130 = smul.addr %s2129, 4
        %s2131 = scalar_lea.vmem %s12, %s2130
      $region80: #{_lambda_.15} parent=75 // pred_fallthru
        _
    $region76: #{_lambda_.15} parent=5 // pred_fallthru
      _
  $region6: #{_lambda_.15} parent=0 // loop_footer
    %s22 = sadd.s32 1, %s18
  $region7: #{_lambda_.15} parent=0 // loop_footer_branch
    %17 = sbr.rel target = $region3
  $region8: #{_lambda_.15} parent=0 // loop_exit
    _

</llo_original>
